<compile_context>
chip_gen: v5e
topology: v5e:2x2
jax: 0.10.0
libtpu: 0.0.40
codegen_flags: <defaults>
</compile_context>

<pallas_src>
import functools

import numpy as np
import jax
import jax.numpy as jnp
from jax.experimental import pallas as pl
from jax.experimental.pallas import tpu as pltpu

_EPS = 1e-8
_VMEM_LIMIT = 64 * 1024 * 1024     # explicit scoped-VMEM limit (v5e default is 16 MiB)


def _pixnorm(x):
    return x * jax.lax.rsqrt(jnp.mean(x * x, axis=-1, keepdims=True) + _EPS)


def _lrelu(x):
    return jnp.maximum(x, 0.2 * x)


def _pick_m_tile(M, cap):
    """Largest tile <= cap that divides M and is a multiple of 8; else the full M."""
    if M <= cap:
        return M
    for t in range(cap, 7, -1):
        if M % t == 0 and t % 8 == 0:
            return t
    return M                                   # single full-extent tile (always legal)


def _pick_row_tile(H, W):
    th = min(H, max(8, 128 // max(W, 1)))
    while H % th:
        th -= 1
    return th


# ---------------------------------------------------------------------------
# Kernel 1: M-tiled, weight-resident fused matmul.
# bf16 MXU inputs, f32 accumulation; fused bias / LeakyReLU / PixelNorm epilogue.
# pixnorm_group=C normalizes each aligned group of C lanes (used to fuse the
# per-pixel PixelNorm of the initial dense directly into the matmul epilogue).
# ---------------------------------------------------------------------------
def fused_matmul(x, w_bf16, b, *, in_pixnorm=False, act=False, pixnorm_group=None,
                 out_dtype=jnp.float32, tm_cap=512):
    M, K = x.shape
    N = w_bf16.shape[1]
    tm = _pick_m_tile(M, tm_cap)
    grid = (M // tm,)
    if pixnorm_group is not None:
        assert N % pixnorm_group == 0

    def kernel(x_ref, w_ref, b_ref, o_ref):
        xv = x_ref[...]
        if in_pixnorm:                              # PixelNorm over the full K axis
            xv = _pixnorm(xv.astype(jnp.float32))
        y = jnp.dot(xv.astype(jnp.bfloat16), w_ref[...],
                    preferred_element_type=jnp.float32)        # bf16 MXU, f32 acc
        y = y + b_ref[...]
        if act:
            y = _lrelu(y)
        if pixnorm_group is None:
            o_ref[...] = y.astype(o_ref.dtype)
        else:
            g = pixnorm_group                       # static, 128-aligned lane groups
            for gi in range(N // g):
                yg = y[:, gi * g:(gi + 1) * g]
                yg = yg * jax.lax.rsqrt(jnp.mean(yg * yg, axis=-1, keepdims=True) + _EPS)
                o_ref[:, gi * g:(gi + 1) * g] = yg.astype(o_ref.dtype)

    # TODO(synk): tile K (grid axis "arbitrary" + f32 acc scratch) for real-scale K.
    return pl.pallas_call(
        kernel,
        out_shape=jax.ShapeDtypeStruct((M, N), out_dtype),
        grid=grid,
        in_specs=[pl.BlockSpec((tm, K), lambda i: (i, 0)),     # M-tiled activations
                  pl.BlockSpec((K, N), lambda i: (0, 0)),      # weights VMEM-resident
                  pl.BlockSpec((1, N), lambda i: (0, 0))],     # bias resident
        out_specs=pl.BlockSpec((tm, N), lambda i: (i, 0)),
        compiler_params=pltpu.CompilerParams(
            dimension_semantics=("parallel",),
            vmem_limit_bytes=_VMEM_LIMIT),
    )(x, w_bf16, b)


# ---------------------------------------------------------------------------
# Kernel 2: fused SAME 3x3 conv + bias + LeakyReLU(0.2) + PixelNorm.
#   x        : (B, H, W, Cin)   bf16, UNPADDED (zero pad is built in VMEM scratch)
#   w3_bf16  : (3, 3*Cin, Cout) bf16  (tap row dy; dx and cin flattened into K)
#   b        : (1, Cout)        f32
# grid = (batch, output-row tiles); the image stays VMEM-resident across the row
# tiles of one batch element; weights/bias resident for the whole grid.
# ---------------------------------------------------------------------------
def conv3x3_fused(x, w3_bf16, b, *, out_dtype=jnp.bfloat16):
    B, H, W, Cin = x.shape
    Cout = w3_bf16.shape[-1]
    th = _pick_row_tile(H, W)
    nri = H // th
    Hp, Wp = H + 2, W + 2
    grid = (B, nri)

    def kernel(x_ref, w_ref, b_ref, o_ref, xpad):
        ri = pl.program_id(1)

        # Build the zero-padded copy of this image in VMEM once per batch element.
        # TODO(synk): halo row tiling (overlapping-row DMA) instead of full residency
        # for the real 256^2 / C=512 config; at this scale residency is the fast path.
        @pl.when(ri == 0)
        def _():
            xpad[...] = jnp.zeros_like(xpad)
            xpad[1:H + 1, 1:W + 1, :] = x_ref[0]

        r0 = ri * th
        acc = None
        for dy in range(3):
            band = xpad[pl.ds(r0 + dy, th), :, :]                     # (th, Wp, Cin)
            # Fold the 3 dx taps into a single K = 3*Cin matmul per dy.
            taps = jnp.concatenate([band[:, dx:dx + W, :] for dx in range(3)], axis=-1)
            d = jnp.dot(taps.reshape(th * W, 3 * Cin), w_ref[dy],
                        preferred_element_type=jnp.float32)           # bf16 MXU, f32 acc
            acc = d if acc is None else acc + d
        y = _pixnorm(_lrelu(acc + b_ref[...]))
        o_ref[0] = y.reshape(th, W, Cout).astype(o_ref.dtype)

    return pl.pallas_call(
        kernel,
        out_shape=jax.ShapeDtypeStruct((B, H, W, Cout), out_dtype),
        grid=grid,
        in_specs=[
            # full (unpadded) image per batch element; constant over row tiles
            pl.BlockSpec((1, H, W, Cin), lambda bi, ri: (bi, 0, 0, 0)),
            pl.BlockSpec((3, 3 * Cin, Cout), lambda bi, ri: (0, 0, 0)),  # weights resident
            pl.BlockSpec((1, Cout), lambda bi, ri: (0, 0)),              # bias resident
        ],
        out_specs=pl.BlockSpec((1, th, W, Cout), lambda bi, ri: (bi, ri, 0, 0)),
        scratch_shapes=[pltpu.VMEM((Hp, Wp, Cin), x.dtype)],
        compiler_params=pltpu.CompilerParams(
            # Only the batch axis is "parallel": a v7x megacore split of the row axis
            # would force each core to hold its own copy of the resident image.
            dimension_semantics=("parallel", "arbitrary"),
            vmem_limit_bytes=_VMEM_LIMIT),
    )(x, w3_bf16, b)


# ---------------------------------------------------------------------------
# Plain-JAX glue (single XLA passes over bf16 tensors)
# ---------------------------------------------------------------------------
def upsample2x(x):
    # TODO(synk): fold the 2x nearest upsample into conv3x3_fused (needs an in-VMEM
    # sublane interleave / strided store); kept as one XLA pass on the bf16 tensor.
    return jnp.repeat(jnp.repeat(x, 2, axis=1), 2, axis=2)


# ---------------------------------------------------------------------------
# Generator forward (Progan_gen.forward equivalent)
# ---------------------------------------------------------------------------
@functools.partial(jax.jit, static_argnames=("curr_depth",))
def progan_gen_forward(z, params, curr_depth):
    B = z.shape[0]
    C = params["init_conv_b"].shape[-1]

    # Initial 4x4 block: latent PixelNorm + ConvTranspose2d(latent, C, 4) as a dense
    # matmul; the per-pixel bias + LReLU + PixelNorm is fused into the epilogue
    # (groups of C lanes) and the result is stored directly in bf16.
    y = fused_matmul(z, params["init_w"], params["init_b_full"],
                     in_pixnorm=True, act=True, pixnorm_group=C,
                     out_dtype=jnp.bfloat16)                           # (B, 16*C) bf16
    y = y.reshape(B, 4, 4, C)                                          # free reshape

    # Initial 3x3 conv at 4x4 resolution (same fused conv kernel; pad built in VMEM).
    y = conv3x3_fused(y, params["init_conv_w"], params["init_conv_b"])

    # Growth blocks: 2x nearest upsample + two fused 3x3 convs, bf16 activations.
    for d in range(curr_depth - 1):
        (w1, b1), (w2, b2) = params["blocks"][d]
        y = conv3x3_fused(upsample2x(y), w1, b1)
        y = conv3x3_fused(y, w2, b2)
        # TODO(synk): fuse the two convs of a block into one kernel (halo recompute)
        # once halo row tiling is in place, removing the inter-conv HBM round trip.

    # toRGB: 1x1 conv == per-pixel matmul to 3 channels (linear).  The lane-sparse
    # (N=3) store is negligible next to the C-wide input read at this layer.
    Bo, Ho, Wo, _ = y.shape
    rgb = fused_matmul(y.reshape(Bo * Ho * Wo, C), params["rgb_w"], params["rgb_b"],
                       act=False, out_dtype=jnp.float32)
    rgb = rgb.reshape(Bo, Ho, Wo, 3)
    # TODO(synk): fuse the NHWC->NCHW transpose into the toRGB kernel (lane-dense W
    # stores); the remaining XLA transpose only touches the 3-channel image.
    return jnp.transpose(rgb, (0, 3, 1, 2))     # matches PyTorch NCHW output


def gen_shifted(z, shift, params, curr_depth):
    return progan_gen_forward(z + shift, params, curr_depth)


# ---------------------------------------------------------------------------
# Pure-JAX reference (same math: bf16 matmul inputs / storage, f32 accumulation)
# ---------------------------------------------------------------------------
def ref_forward(z, params, curr_depth):
    def mm(a, w):
        return jnp.dot(a.astype(jnp.bfloat16), w.astype(jnp.bfloat16),
                       preferred_element_type=jnp.float32)

    B = z.shape[0]
    C = params["init_conv_b"].shape[-1]
    y = mm(_pixnorm(z), params["init_w"]) + params["init_b_full"]
    y = _lrelu(y).reshape(B * 16, C)
    y = _pixnorm(y).reshape(B, 4, 4, C).astype(jnp.bfloat16)

    def conv(x, w3, b, act=True, pn=True):
        Bn, H, W, Cin = x.shape
        xp = jnp.pad(x, ((0, 0), (1, 1), (1, 1), (0, 0)))
        cols = jnp.concatenate(
            [xp[:, dy:dy + H, dx:dx + W, :] for dy in range(3) for dx in range(3)],
            axis=-1)
        y2 = mm(cols.reshape(Bn * H * W, 9 * Cin), w3.reshape(9 * Cin, -1)) + b
        if act:
            y2 = _lrelu(y2)
        if pn:
            y2 = _pixnorm(y2)
        return y2.reshape(Bn, H, W, -1).astype(jnp.bfloat16)

    y = conv(y, params["init_conv_w"], params["init_conv_b"])
    for d in range(curr_depth - 1):
        y = jnp.repeat(jnp.repeat(y, 2, axis=1), 2, axis=2)
        (w1, b1), (w2, b2) = params["blocks"][d]
        y = conv(y, w1, b1)
        y = conv(y, w2, b2)
    Bo, Ho, Wo, _ = y.shape
    rgb = mm(y.reshape(Bo * Ho * Wo, C), params["rgb_w"]) + params["rgb_b"]
    return jnp.transpose(rgb.reshape(Bo, Ho, Wo, 3), (0, 3, 1, 2))


# ---------------------------------------------------------------------------
# Deterministic synthetic parameters (He-style scaling; no checkpoint I/O).
# Weights are pre-cast to bf16 and conv weights pre-reshaped to (3, 3*Cin, Cout).
# ---------------------------------------------------------------------------
def init_params(key, latent, C, curr_depth):
    bf16 = jnp.bfloat16

    def nxt():
        nonlocal key
        key, sub = jax.random.split(key)
        return sub

    def wgt(shape, fan_in):
        return (jax.random.normal(nxt(), shape, jnp.float32)
                * np.float32(np.sqrt(2.0 / fan_in)))

    def bias(n):
        return jax.random.normal(nxt(), (1, n), jnp.float32) * np.float32(0.1)

    def conv_w():
        return wgt((9 * C, C), 9 * C).reshape(3, 3 * C, C).astype(bf16)

    init_b = bias(C)
    params = {
        "init_w": wgt((latent, 16 * C), latent).astype(bf16),
        "init_b_full": jnp.tile(init_b, (1, 16)),        # per-pixel bias, (1, 16*C) f32
        "init_conv_w": conv_w(),
        "init_conv_b": bias(C),
        "blocks": [],
        "rgb_w": wgt((C, 3), C).astype(bf16),
        "rgb_b": bias(3),
    }
    for _ in range(curr_depth - 1):
        params["blocks"].append(((conv_w(), bias(C)), (conv_w(), bias(C))))
    return params


if __name__ == "__main__":
    key = jax.random.PRNGKey(0)
    kz, ks, kp = jax.random.split(key, 3)

    B, latent, C = 2, 128, 128   # C=128 keeps the channel (lane) dim MXU/vreg dense
    curr_depth = 3               # small-scale stand-in for G_curr_depth=7; res = 4*2**(d-1)

    params = init_params(kp, latent, C, curr_depth)
    z = jax.random.normal(kz, (B, latent), jnp.float32)

    out = jax.block_until_ready(progan_gen_forward(z, params, curr_depth))
    res = 4 * 2 ** (curr_depth - 1)
    assert out.shape == (B, 3, res, res), out.shape

    ref = np.asarray(ref_forward(z, params, curr_depth))
    np.testing.assert_allclose(np.asarray(out), ref, rtol=2e-2, atol=2e-2)

    # gen_shifted path (forward of z + shift)
    shift = 0.1 * jax.random.normal(ks, (B, latent), jnp.float32)
    out2 = jax.block_until_ready(gen_shifted(z, shift, params, curr_depth))
    assert out2.shape == out.shape

    print("KERNEL_OK")
</pallas_src>

<mosaic_0001>
module attributes {stable_mosaic.version = 11 : i64} {
  func.func @kernel(%arg0: i32, %arg1: memref<2x128xf32, #tpu.memory_space<vmem>>, %arg2: memref<128x2048xbf16, #tpu.memory_space<vmem>>, %arg3: memref<1x2048xf32, #tpu.memory_space<vmem>>, %arg4: memref<2x2048xbf16, #tpu.memory_space<vmem>>) attributes {dimension_semantics = [#tpu.dimension_semantics<parallel>], iteration_bounds = array<i64: 1>, scalar_prefetch = 0 : i64, scratch_operands = 0 : i64, tpu.core_type = #tpu.core_type<tc>, window_params = [{transform_indices = @transform_0, window_bounds = array<i64: 2, 128>}, {pipeline_mode = #tpu.pipeline_mode<synchronous>, transform_indices = @transform_1, window_bounds = array<i64: 128, 2048>}, {pipeline_mode = #tpu.pipeline_mode<synchronous>, transform_indices = @transform_2, window_bounds = array<i64: 1, 2048>}, {transform_indices = @transform_3, window_bounds = array<i64: 2, 2048>}]} {
    %c0 = arith.constant 0 : index
    %c0_0 = arith.constant 0 : index
    %0 = vector.load %arg1[%c0, %c0_0] : memref<2x128xf32, #tpu.memory_space<vmem>>, vector<2x128xf32>
    %1 = arith.mulf %0, %0 : vector<2x128xf32>
    %cst = arith.constant dense<0.000000e+00> : vector<2xf32>
    %2 = vector.multi_reduction <add>, %1, %cst [1] : vector<2x128xf32> to vector<2xf32>
    %3 = vector.shape_cast %2 : vector<2xf32> to vector<2x1xf32>
    %cst_1 = arith.constant 1.280000e+02 : f32
    %4 = vector.broadcast %cst_1 : f32 to vector<2x1xf32>
    %5 = arith.divf %3, %4 : vector<2x1xf32>
    %cst_2 = arith.constant 9.99999993E-9 : f32
    %6 = vector.broadcast %cst_2 : f32 to vector<2x1xf32>
    %7 = arith.addf %5, %6 : vector<2x1xf32>
    %8 = math.rsqrt %7 : vector<2x1xf32>
    %9 = vector.broadcast %8 : vector<2x1xf32> to vector<2x128xf32>
    %10 = arith.mulf %0, %9 : vector<2x128xf32>
    %11 = arith.truncf %10 : vector<2x128xf32> to vector<2x128xbf16>
    %c0_3 = arith.constant 0 : index
    %c0_4 = arith.constant 0 : index
    %12 = vector.load %arg2[%c0_3, %c0_4] : memref<128x2048xbf16, #tpu.memory_space<vmem>>, vector<128x2048xbf16>
    %cst_5 = arith.constant dense<0.000000e+00> : vector<2x2048xf32>
    %13 = tpu.matmul %11, %12, %cst_5 {dimension_numbers = #tpu.dot_dimension_numbers<[1], [0], [0], [1], [0, 0, 1, 1], [], []>} : vector<2x128xbf16>, vector<128x2048xbf16>, vector<2x2048xf32> -> vector<2x2048xf32>
    %c0_6 = arith.constant 0 : index
    %c0_7 = arith.constant 0 : index
    %14 = vector.load %arg3[%c0_6, %c0_7] : memref<1x2048xf32, #tpu.memory_space<vmem>>, vector<1x2048xf32>
    %15 = vector.broadcast %14 : vector<1x2048xf32> to vector<2x2048xf32>
    %16 = arith.addf %13, %15 : vector<2x2048xf32>
    %cst_8 = arith.constant 2.000000e-01 : f32
    %17 = vector.broadcast %cst_8 : f32 to vector<2x2048xf32>
    %18 = arith.mulf %17, %16 : vector<2x2048xf32>
    %19 = arith.maximumf %16, %18 : vector<2x2048xf32>
    %20 = vector.extract_strided_slice %19 {offsets = [0, 0], sizes = [2, 128], strides = [1, 1]} : vector<2x2048xf32> to vector<2x128xf32>
    %21 = arith.mulf %20, %20 : vector<2x128xf32>
    %cst_9 = arith.constant dense<0.000000e+00> : vector<2xf32>
    %22 = vector.multi_reduction <add>, %21, %cst_9 [1] : vector<2x128xf32> to vector<2xf32>
    %23 = vector.shape_cast %22 : vector<2xf32> to vector<2x1xf32>
    %cst_10 = arith.constant 1.280000e+02 : f32
    %24 = vector.broadcast %cst_10 : f32 to vector<2x1xf32>
    %25 = arith.divf %23, %24 : vector<2x1xf32>
    %cst_11 = arith.constant 9.99999993E-9 : f32
    %26 = vector.broadcast %cst_11 : f32 to vector<2x1xf32>
    %27 = arith.addf %25, %26 : vector<2x1xf32>
    %28 = math.rsqrt %27 : vector<2x1xf32>
    %29 = vector.broadcast %28 : vector<2x1xf32> to vector<2x128xf32>
    %30 = arith.mulf %20, %29 : vector<2x128xf32>
    %31 = arith.truncf %30 : vector<2x128xf32> to vector<2x128xbf16>
    %c0_12 = arith.constant 0 : index
    %c0_13 = arith.constant 0 : index
    %32 = vector.load %arg4[%c0_12, %c0_13] : memref<2x2048xbf16, #tpu.memory_space<vmem>>, vector<2x128xbf16>
    tpu.vector_store %arg4[%c0_12, %c0_13], %31 {strides = array<i32>} : memref<2x2048xbf16, #tpu.memory_space<vmem>>, vector<2x128xbf16>,
    %33 = vector.extract_strided_slice %19 {offsets = [0, 128], sizes = [2, 128], strides = [1, 1]} : vector<2x2048xf32> to vector<2x128xf32>
    %34 = arith.mulf %33, %33 : vector<2x128xf32>
    %cst_14 = arith.constant dense<0.000000e+00> : vector<2xf32>
    %35 = vector.multi_reduction <add>, %34, %cst_14 [1] : vector<2x128xf32> to vector<2xf32>
    %36 = vector.shape_cast %35 : vector<2xf32> to vector<2x1xf32>
    %cst_15 = arith.constant 1.280000e+02 : f32
    %37 = vector.broadcast %cst_15 : f32 to vector<2x1xf32>
    %38 = arith.divf %36, %37 : vector<2x1xf32>
    %cst_16 = arith.constant 9.99999993E-9 : f32
    %39 = vector.broadcast %cst_16 : f32 to vector<2x1xf32>
    %40 = arith.addf %38, %39 : vector<2x1xf32>
    %41 = math.rsqrt %40 : vector<2x1xf32>
    %42 = vector.broadcast %41 : vector<2x1xf32> to vector<2x128xf32>
    %43 = arith.mulf %33, %42 : vector<2x128xf32>
    %44 = arith.truncf %43 : vector<2x128xf32> to vector<2x128xbf16>
    %c0_17 = arith.constant 0 : index
    %c128 = arith.constant 128 : index
    %45 = vector.load %arg4[%c0_17, %c128] : memref<2x2048xbf16, #tpu.memory_space<vmem>>, vector<2x128xbf16>
    tpu.vector_store %arg4[%c0_17, %c128], %44 {strides = array<i32>} : memref<2x2048xbf16, #tpu.memory_space<vmem>>, vector<2x128xbf16>,
    %46 = vector.extract_strided_slice %19 {offsets = [0, 256], sizes = [2, 128], strides = [1, 1]} : vector<2x2048xf32> to vector<2x128xf32>
    %47 = arith.mulf %46, %46 : vector<2x128xf32>
    %cst_18 = arith.constant dense<0.000000e+00> : vector<2xf32>
    %48 = vector.multi_reduction <add>, %47, %cst_18 [1] : vector<2x128xf32> to vector<2xf32>
    %49 = vector.shape_cast %48 : vector<2xf32> to vector<2x1xf32>
    %cst_19 = arith.constant 1.280000e+02 : f32
    %50 = vector.broadcast %cst_19 : f32 to vector<2x1xf32>
    %51 = arith.divf %49, %50 : vector<2x1xf32>
    %cst_20 = arith.constant 9.99999993E-9 : f32
    %52 = vector.broadcast %cst_20 : f32 to vector<2x1xf32>
    %53 = arith.addf %51, %52 : vector<2x1xf32>
    %54 = math.rsqrt %53 : vector<2x1xf32>
    %55 = vector.broadcast %54 : vector<2x1xf32> to vector<2x128xf32>
    %56 = arith.mulf %46, %55 : vector<2x128xf32>
    %57 = arith.truncf %56 : vector<2x128xf32> to vector<2x128xbf16>
    %c0_21 = arith.constant 0 : index
    %c256 = arith.constant 256 : index
    %58 = vector.load %arg4[%c0_21, %c256] : memref<2x2048xbf16, #tpu.memory_space<vmem>>, vector<2x128xbf16>
    tpu.vector_store %arg4[%c0_21, %c256], %57 {strides = array<i32>} : memref<2x2048xbf16, #tpu.memory_space<vmem>>, vector<2x128xbf16>,
    %59 = vector.extract_strided_slice %19 {offsets = [0, 384], sizes = [2, 128], strides = [1, 1]} : vector<2x2048xf32> to vector<2x128xf32>
    %60 = arith.mulf %59, %59 : vector<2x128xf32>
    %cst_22 = arith.constant dense<0.000000e+00> : vector<2xf32>
    %61 = vector.multi_reduction <add>, %60, %cst_22 [1] : vector<2x128xf32> to vector<2xf32>
    %62 = vector.shape_cast %61 : vector<2xf32> to vector<2x1xf32>
    %cst_23 = arith.constant 1.280000e+02 : f32
    %63 = vector.broadcast %cst_23 : f32 to vector<2x1xf32>
    %64 = arith.divf %62, %63 : vector<2x1xf32>
    %cst_24 = arith.constant 9.99999993E-9 : f32
    %65 = vector.broadcast %cst_24 : f32 to vector<2x1xf32>
    %66 = arith.addf %64, %65 : vector<2x1xf32>
    %67 = math.rsqrt %66 : vector<2x1xf32>
    %68 = vector.broadcast %67 : vector<2x1xf32> to vector<2x128xf32>
    %69 = arith.mulf %59, %68 : vector<2x128xf32>
    %70 = arith.truncf %69 : vector<2x128xf32> to vector<2x128xbf16>
    %c0_25 = arith.constant 0 : index
    %c384 = arith.constant 384 : index
    %71 = vector.load %arg4[%c0_25, %c384] : memref<2x2048xbf16, #tpu.memory_space<vmem>>, vector<2x128xbf16>
    tpu.vector_store %arg4[%c0_25, %c384], %70 {strides = array<i32>} : memref<2x2048xbf16, #tpu.memory_space<vmem>>, vector<2x128xbf16>,
    %72 = vector.extract_strided_slice %19 {offsets = [0, 512], sizes = [2, 128], strides = [1, 1]} : vector<2x2048xf32> to vector<2x128xf32>
    %73 = arith.mulf %72, %72 : vector<2x128xf32>
    %cst_26 = arith.constant dense<0.000000e+00> : vector<2xf32>
    %74 = vector.multi_reduction <add>, %73, %cst_26 [1] : vector<2x128xf32> to vector<2xf32>
    %75 = vector.shape_cast %74 : vector<2xf32> to vector<2x1xf32>
    %cst_27 = arith.constant 1.280000e+02 : f32
    %76 = vector.broadcast %cst_27 : f32 to vector<2x1xf32>
    %77 = arith.divf %75, %76 : vector<2x1xf32>
    %cst_28 = arith.constant 9.99999993E-9 : f32
    %78 = vector.broadcast %cst_28 : f32 to vector<2x1xf32>
    %79 = arith.addf %77, %78 : vector<2x1xf32>
    %80 = math.rsqrt %79 : vector<2x1xf32>
    %81 = vector.broadcast %80 : vector<2x1xf32> to vector<2x128xf32>
    %82 = arith.mulf %72, %81 : vector<2x128xf32>
    %83 = arith.truncf %82 : vector<2x128xf32> to vector<2x128xbf16>
    %c0_29 = arith.constant 0 : index
    %c512 = arith.constant 512 : index
    %84 = vector.load %arg4[%c0_29, %c512] : memref<2x2048xbf16, #tpu.memory_space<vmem>>, vector<2x128xbf16>
    tpu.vector_store %arg4[%c0_29, %c512], %83 {strides = array<i32>} : memref<2x2048xbf16, #tpu.memory_space<vmem>>, vector<2x128xbf16>,
    %85 = vector.extract_strided_slice %19 {offsets = [0, 640], sizes = [2, 128], strides = [1, 1]} : vector<2x2048xf32> to vector<2x128xf32>
    %86 = arith.mulf %85, %85 : vector<2x128xf32>
    %cst_30 = arith.constant dense<0.000000e+00> : vector<2xf32>
    %87 = vector.multi_reduction <add>, %86, %cst_30 [1] : vector<2x128xf32> to vector<2xf32>
    %88 = vector.shape_cast %87 : vector<2xf32> to vector<2x1xf32>
    %cst_31 = arith.constant 1.280000e+02 : f32
    %89 = vector.broadcast %cst_31 : f32 to vector<2x1xf32>
    %90 = arith.divf %88, %89 : vector<2x1xf32>
    %cst_32 = arith.constant 9.99999993E-9 : f32
    %91 = vector.broadcast %cst_32 : f32 to vector<2x1xf32>
    %92 = arith.addf %90, %91 : vector<2x1xf32>
    %93 = math.rsqrt %92 : vector<2x1xf32>
    %94 = vector.broadcast %93 : vector<2x1xf32> to vector<2x128xf32>
    %95 = arith.mulf %85, %94 : vector<2x128xf32>
    %96 = arith.truncf %95 : vector<2x128xf32> to vector<2x128xbf16>
    %c0_33 = arith.constant 0 : index
    %c640 = arith.constant 640 : index
    %97 = vector.load %arg4[%c0_33, %c640] : memref<2x2048xbf16, #tpu.memory_space<vmem>>, vector<2x128xbf16>
    tpu.vector_store %arg4[%c0_33, %c640], %96 {strides = array<i32>} : memref<2x2048xbf16, #tpu.memory_space<vmem>>, vector<2x128xbf16>,
    %98 = vector.extract_strided_slice %19 {offsets = [0, 768], sizes = [2, 128], strides = [1, 1]} : vector<2x2048xf32> to vector<2x128xf32>
    %99 = arith.mulf %98, %98 : vector<2x128xf32>
    %cst_34 = arith.constant dense<0.000000e+00> : vector<2xf32>
    %100 = vector.multi_reduction <add>, %99, %cst_34 [1] : vector<2x128xf32> to vector<2xf32>
    %101 = vector.shape_cast %100 : vector<2xf32> to vector<2x1xf32>
    %cst_35 = arith.constant 1.280000e+02 : f32
    %102 = vector.broadcast %cst_35 : f32 to vector<2x1xf32>
    %103 = arith.divf %101, %102 : vector<2x1xf32>
    %cst_36 = arith.constant 9.99999993E-9 : f32
    %104 = vector.broadcast %cst_36 : f32 to vector<2x1xf32>
    %105 = arith.addf %103, %104 : vector<2x1xf32>
    %106 = math.rsqrt %105 : vector<2x1xf32>
    %107 = vector.broadcast %106 : vector<2x1xf32> to vector<2x128xf32>
    %108 = arith.mulf %98, %107 : vector<2x128xf32>
    %109 = arith.truncf %108 : vector<2x128xf32> to vector<2x128xbf16>
    %c0_37 = arith.constant 0 : index
    %c768 = arith.constant 768 : index
    %110 = vector.load %arg4[%c0_37, %c768] : memref<2x2048xbf16, #tpu.memory_space<vmem>>, vector<2x128xbf16>
    tpu.vector_store %arg4[%c0_37, %c768], %109 {strides = array<i32>} : memref<2x2048xbf16, #tpu.memory_space<vmem>>, vector<2x128xbf16>,
    %111 = vector.extract_strided_slice %19 {offsets = [0, 896], sizes = [2, 128], strides = [1, 1]} : vector<2x2048xf32> to vector<2x128xf32>
    %112 = arith.mulf %111, %111 : vector<2x128xf32>
    %cst_38 = arith.constant dense<0.000000e+00> : vector<2xf32>
    %113 = vector.multi_reduction <add>, %112, %cst_38 [1] : vector<2x128xf32> to vector<2xf32>
    %114 = vector.shape_cast %113 : vector<2xf32> to vector<2x1xf32>
    %cst_39 = arith.constant 1.280000e+02 : f32
    %115 = vector.broadcast %cst_39 : f32 to vector<2x1xf32>
    %116 = arith.divf %114, %115 : vector<2x1xf32>
    %cst_40 = arith.constant 9.99999993E-9 : f32
    %117 = vector.broadcast %cst_40 : f32 to vector<2x1xf32>
    %118 = arith.addf %116, %117 : vector<2x1xf32>
    %119 = math.rsqrt %118 : vector<2x1xf32>
    %120 = vector.broadcast %119 : vector<2x1xf32> to vector<2x128xf32>
    %121 = arith.mulf %111, %120 : vector<2x128xf32>
    %122 = arith.truncf %121 : vector<2x128xf32> to vector<2x128xbf16>
    %c0_41 = arith.constant 0 : index
    %c896 = arith.constant 896 : index
    %123 = vector.load %arg4[%c0_41, %c896] : memref<2x2048xbf16, #tpu.memory_space<vmem>>, vector<2x128xbf16>
    tpu.vector_store %arg4[%c0_41, %c896], %122 {strides = array<i32>} : memref<2x2048xbf16, #tpu.memory_space<vmem>>, vector<2x128xbf16>,
    %124 = vector.extract_strided_slice %19 {offsets = [0, 1024], sizes = [2, 128], strides = [1, 1]} : vector<2x2048xf32> to vector<2x128xf32>
    %125 = arith.mulf %124, %124 : vector<2x128xf32>
    %cst_42 = arith.constant dense<0.000000e+00> : vector<2xf32>
    %126 = vector.multi_reduction <add>, %125, %cst_42 [1] : vector<2x128xf32> to vector<2xf32>
    %127 = vector.shape_cast %126 : vector<2xf32> to vector<2x1xf32>
    %cst_43 = arith.constant 1.280000e+02 : f32
    %128 = vector.broadcast %cst_43 : f32 to vector<2x1xf32>
    %129 = arith.divf %127, %128 : vector<2x1xf32>
    %cst_44 = arith.constant 9.99999993E-9 : f32
    %130 = vector.broadcast %cst_44 : f32 to vector<2x1xf32>
    %131 = arith.addf %129, %130 : vector<2x1xf32>
    %132 = math.rsqrt %131 : vector<2x1xf32>
    %133 = vector.broadcast %132 : vector<2x1xf32> to vector<2x128xf32>
    %134 = arith.mulf %124, %133 : vector<2x128xf32>
    %135 = arith.truncf %134 : vector<2x128xf32> to vector<2x128xbf16>
    %c0_45 = arith.constant 0 : index
    %c1024 = arith.constant 1024 : index
    %136 = vector.load %arg4[%c0_45, %c1024] : memref<2x2048xbf16, #tpu.memory_space<vmem>>, vector<2x128xbf16>
    tpu.vector_store %arg4[%c0_45, %c1024], %135 {strides = array<i32>} : memref<2x2048xbf16, #tpu.memory_space<vmem>>, vector<2x128xbf16>,
    %137 = vector.extract_strided_slice %19 {offsets = [0, 1152], sizes = [2, 128], strides = [1, 1]} : vector<2x2048xf32> to vector<2x128xf32>
    %138 = arith.mulf %137, %137 : vector<2x128xf32>
    %cst_46 = arith.constant dense<0.000000e+00> : vector<2xf32>
    %139 = vector.multi_reduction <add>, %138, %cst_46 [1] : vector<2x128xf32> to vector<2xf32>
    %140 = vector.shape_cast %139 : vector<2xf32> to vector<2x1xf32>
    %cst_47 = arith.constant 1.280000e+02 : f32
    %141 = vector.broadcast %cst_47 : f32 to vector<2x1xf32>
    %142 = arith.divf %140, %141 : vector<2x1xf32>
    %cst_48 = arith.constant 9.99999993E-9 : f32
    %143 = vector.broadcast %cst_48 : f32 to vector<2x1xf32>
    %144 = arith.addf %142, %143 : vector<2x1xf32>
    %145 = math.rsqrt %144 : vector<2x1xf32>
    %146 = vector.broadcast %145 : vector<2x1xf32> to vector<2x128xf32>
    %147 = arith.mulf %137, %146 : vector<2x128xf32>
    %148 = arith.truncf %147 : vector<2x128xf32> to vector<2x128xbf16>
    %c0_49 = arith.constant 0 : index
    %c1152 = arith.constant 1152 : index
    %149 = vector.load %arg4[%c0_49, %c1152] : memref<2x2048xbf16, #tpu.memory_space<vmem>>, vector<2x128xbf16>
    tpu.vector_store %arg4[%c0_49, %c1152], %148 {strides = array<i32>} : memref<2x2048xbf16, #tpu.memory_space<vmem>>, vector<2x128xbf16>,
    %150 = vector.extract_strided_slice %19 {offsets = [0, 1280], sizes = [2, 128], strides = [1, 1]} : vector<2x2048xf32> to vector<2x128xf32>
    %151 = arith.mulf %150, %150 : vector<2x128xf32>
    %cst_50 = arith.constant dense<0.000000e+00> : vector<2xf32>
    %152 = vector.multi_reduction <add>, %151, %cst_50 [1] : vector<2x128xf32> to vector<2xf32>
    %153 = vector.shape_cast %152 : vector<2xf32> to vector<2x1xf32>
    %cst_51 = arith.constant 1.280000e+02 : f32
    %154 = vector.broadcast %cst_51 : f32 to vector<2x1xf32>
    %155 = arith.divf %153, %154 : vector<2x1xf32>
    %cst_52 = arith.constant 9.99999993E-9 : f32
    %156 = vector.broadcast %cst_52 : f32 to vector<2x1xf32>
    %157 = arith.addf %155, %156 : vector<2x1xf32>
    %158 = math.rsqrt %157 : vector<2x1xf32>
    %159 = vector.broadcast %158 : vector<2x1xf32> to vector<2x128xf32>
    %160 = arith.mulf %150, %159 : vector<2x128xf32>
    %161 = arith.truncf %160 : vector<2x128xf32> to vector<2x128xbf16>
    %c0_53 = arith.constant 0 : index
    %c1280 = arith.constant 1280 : index
    %162 = vector.load %arg4[%c0_53, %c1280] : memref<2x2048xbf16, #tpu.memory_space<vmem>>, vector<2x128xbf16>
    tpu.vector_store %arg4[%c0_53, %c1280], %161 {strides = array<i32>} : memref<2x2048xbf16, #tpu.memory_space<vmem>>, vector<2x128xbf16>,
    %163 = vector.extract_strided_slice %19 {offsets = [0, 1408], sizes = [2, 128], strides = [1, 1]} : vector<2x2048xf32> to vector<2x128xf32>
    %164 = arith.mulf %163, %163 : vector<2x128xf32>
    %cst_54 = arith.constant dense<0.000000e+00> : vector<2xf32>
    %165 = vector.multi_reduction <add>, %164, %cst_54 [1] : vector<2x128xf32> to vector<2xf32>
    %166 = vector.shape_cast %165 : vector<2xf32> to vector<2x1xf32>
    %cst_55 = arith.constant 1.280000e+02 : f32
    %167 = vector.broadcast %cst_55 : f32 to vector<2x1xf32>
    %168 = arith.divf %166, %167 : vector<2x1xf32>
    %cst_56 = arith.constant 9.99999993E-9 : f32
    %169 = vector.broadcast %cst_56 : f32 to vector<2x1xf32>
    %170 = arith.addf %168, %169 : vector<2x1xf32>
    %171 = math.rsqrt %170 : vector<2x1xf32>
    %172 = vector.broadcast %171 : vector<2x1xf32> to vector<2x128xf32>
    %173 = arith.mulf %163, %172 : vector<2x128xf32>
    %174 = arith.truncf %173 : vector<2x128xf32> to vector<2x128xbf16>
    %c0_57 = arith.constant 0 : index
    %c1408 = arith.constant 1408 : index
    %175 = vector.load %arg4[%c0_57, %c1408] : memref<2x2048xbf16, #tpu.memory_space<vmem>>, vector<2x128xbf16>
    tpu.vector_store %arg4[%c0_57, %c1408], %174 {strides = array<i32>} : memref<2x2048xbf16, #tpu.memory_space<vmem>>, vector<2x128xbf16>,
    %176 = vector.extract_strided_slice %19 {offsets = [0, 1536], sizes = [2, 128], strides = [1, 1]} : vector<2x2048xf32> to vector<2x128xf32>
    %177 = arith.mulf %176, %176 : vector<2x128xf32>
    %cst_58 = arith.constant dense<0.000000e+00> : vector<2xf32>
    %178 = vector.multi_reduction <add>, %177, %cst_58 [1] : vector<2x128xf32> to vector<2xf32>
    %179 = vector.shape_cast %178 : vector<2xf32> to vector<2x1xf32>
    %cst_59 = arith.constant 1.280000e+02 : f32
    %180 = vector.broadcast %cst_59 : f32 to vector<2x1xf32>
    %181 = arith.divf %179, %180 : vector<2x1xf32>
    %cst_60 = arith.constant 9.99999993E-9 : f32
    %182 = vector.broadcast %cst_60 : f32 to vector<2x1xf32>
    %183 = arith.addf %181, %182 : vector<2x1xf32>
    %184 = math.rsqrt %183 : vector<2x1xf32>
    %185 = vector.broadcast %184 : vector<2x1xf32> to vector<2x128xf32>
    %186 = arith.mulf %176, %185 : vector<2x128xf32>
    %187 = arith.truncf %186 : vector<2x128xf32> to vector<2x128xbf16>
    %c0_61 = arith.constant 0 : index
    %c1536 = arith.constant 1536 : index
    %188 = vector.load %arg4[%c0_61, %c1536] : memref<2x2048xbf16, #tpu.memory_space<vmem>>, vector<2x128xbf16>
    tpu.vector_store %arg4[%c0_61, %c1536], %187 {strides = array<i32>} : memref<2x2048xbf16, #tpu.memory_space<vmem>>, vector<2x128xbf16>,
    %189 = vector.extract_strided_slice %19 {offsets = [0, 1664], sizes = [2, 128], strides = [1, 1]} : vector<2x2048xf32> to vector<2x128xf32>
    %190 = arith.mulf %189, %189 : vector<2x128xf32>
    %cst_62 = arith.constant dense<0.000000e+00> : vector<2xf32>
    %191 = vector.multi_reduction <add>, %190, %cst_62 [1] : vector<2x128xf32> to vector<2xf32>
    %192 = vector.shape_cast %191 : vector<2xf32> to vector<2x1xf32>
    %cst_63 = arith.constant 1.280000e+02 : f32
    %193 = vector.broadcast %cst_63 : f32 to vector<2x1xf32>
    %194 = arith.divf %192, %193 : vector<2x1xf32>
    %cst_64 = arith.constant 9.99999993E-9 : f32
    %195 = vector.broadcast %cst_64 : f32 to vector<2x1xf32>
    %196 = arith.addf %194, %195 : vector<2x1xf32>
    %197 = math.rsqrt %196 : vector<2x1xf32>
    %198 = vector.broadcast %197 : vector<2x1xf32> to vector<2x128xf32>
    %199 = arith.mulf %189, %198 : vector<2x128xf32>
    %200 = arith.truncf %199 : vector<2x128xf32> to vector<2x128xbf16>
    %c0_65 = arith.constant 0 : index
    %c1664 = arith.constant 1664 : index
    %201 = vector.load %arg4[%c0_65, %c1664] : memref<2x2048xbf16, #tpu.memory_space<vmem>>, vector<2x128xbf16>
    tpu.vector_store %arg4[%c0_65, %c1664], %200 {strides = array<i32>} : memref<2x2048xbf16, #tpu.memory_space<vmem>>, vector<2x128xbf16>,
    %202 = vector.extract_strided_slice %19 {offsets = [0, 1792], sizes = [2, 128], strides = [1, 1]} : vector<2x2048xf32> to vector<2x128xf32>
    %203 = arith.mulf %202, %202 : vector<2x128xf32>
    %cst_66 = arith.constant dense<0.000000e+00> : vector<2xf32>
    %204 = vector.multi_reduction <add>, %203, %cst_66 [1] : vector<2x128xf32> to vector<2xf32>
    %205 = vector.shape_cast %204 : vector<2xf32> to vector<2x1xf32>
    %cst_67 = arith.constant 1.280000e+02 : f32
    %206 = vector.broadcast %cst_67 : f32 to vector<2x1xf32>
    %207 = arith.divf %205, %206 : vector<2x1xf32>
    %cst_68 = arith.constant 9.99999993E-9 : f32
    %208 = vector.broadcast %cst_68 : f32 to vector<2x1xf32>
    %209 = arith.addf %207, %208 : vector<2x1xf32>
    %210 = math.rsqrt %209 : vector<2x1xf32>
    %211 = vector.broadcast %210 : vector<2x1xf32> to vector<2x128xf32>
    %212 = arith.mulf %202, %211 : vector<2x128xf32>
    %213 = arith.truncf %212 : vector<2x128xf32> to vector<2x128xbf16>
    %c0_69 = arith.constant 0 : index
    %c1792 = arith.constant 1792 : index
    %214 = vector.load %arg4[%c0_69, %c1792] : memref<2x2048xbf16, #tpu.memory_space<vmem>>, vector<2x128xbf16>
    tpu.vector_store %arg4[%c0_69, %c1792], %213 {strides = array<i32>} : memref<2x2048xbf16, #tpu.memory_space<vmem>>, vector<2x128xbf16>,
    %215 = vector.extract_strided_slice %19 {offsets = [0, 1920], sizes = [2, 128], strides = [1, 1]} : vector<2x2048xf32> to vector<2x128xf32>
    %216 = arith.mulf %215, %215 : vector<2x128xf32>
    %cst_70 = arith.constant dense<0.000000e+00> : vector<2xf32>
    %217 = vector.multi_reduction <add>, %216, %cst_70 [1] : vector<2x128xf32> to vector<2xf32>
    %218 = vector.shape_cast %217 : vector<2xf32> to vector<2x1xf32>
    %cst_71 = arith.constant 1.280000e+02 : f32
    %219 = vector.broadcast %cst_71 : f32 to vector<2x1xf32>
    %220 = arith.divf %218, %219 : vector<2x1xf32>
    %cst_72 = arith.constant 9.99999993E-9 : f32
    %221 = vector.broadcast %cst_72 : f32 to vector<2x1xf32>
    %222 = arith.addf %220, %221 : vector<2x1xf32>
    %223 = math.rsqrt %222 : vector<2x1xf32>
    %224 = vector.broadcast %223 : vector<2x1xf32> to vector<2x128xf32>
    %225 = arith.mulf %215, %224 : vector<2x128xf32>
    %226 = arith.truncf %225 : vector<2x128xf32> to vector<2x128xbf16>
    %c0_73 = arith.constant 0 : index
    %c1920 = arith.constant 1920 : index
    %227 = vector.load %arg4[%c0_73, %c1920] : memref<2x2048xbf16, #tpu.memory_space<vmem>>, vector<2x128xbf16>
    tpu.vector_store %arg4[%c0_73, %c1920], %226 {strides = array<i32>} : memref<2x2048xbf16, #tpu.memory_space<vmem>>, vector<2x128xbf16>,
    return
  }
  func.func @transform_0(%arg0: i32) -> (i32, i32) {
    %c0_i32 = arith.constant 0 : i32
    %c0_i32_0 = arith.constant 0 : i32
    return %arg0, %c0_i32 : i32, i32
  }
  func.func @transform_1(%arg0: i32) -> (i32, i32) {
    %c0_i32 = arith.constant 0 : i32
    %c0_i32_0 = arith.constant 0 : i32
    %c0_i32_1 = arith.constant 0 : i32
    return %c0_i32, %c0_i32_0 : i32, i32
  }
  func.func @transform_2(%arg0: i32) -> (i32, i32) {
    %c0_i32 = arith.constant 0 : i32
    %c0_i32_0 = arith.constant 0 : i32
    %c0_i32_1 = arith.constant 0 : i32
    return %c0_i32, %c0_i32_0 : i32, i32
  }
  func.func @transform_3(%arg0: i32) -> (i32, i32) {
    %c0_i32 = arith.constant 0 : i32
    %c0_i32_0 = arith.constant 0 : i32
    return %arg0, %c0_i32 : i32, i32
  }
}

module attributes {stable_mosaic.version = 11 : i64} {
  func.func @kernel(%arg0: i32, %arg1: i32, %arg2: memref<1x4x4x128xbf16, #tpu.memory_space<vmem>>, %arg3: memref<3x384x128xbf16, #tpu.memory_space<vmem>>, %arg4: memref<1x128xf32, #tpu.memory_space<vmem>>, %arg5: memref<1x4x4x128xbf16, #tpu.memory_space<vmem>>, %arg6: memref<6x6x128xbf16, #tpu.memory_space<vmem>>) attributes {dimension_semantics = [#tpu.dimension_semantics<parallel>, #tpu.dimension_semantics<arbitrary>], iteration_bounds = array<i64: 2, 1>, scalar_prefetch = 0 : i64, scratch_operands = 1 : i64, tpu.core_type = #tpu.core_type<tc>, window_params = [{transform_indices = @transform_0, window_bounds = array<i64: 1, 4, 4, 128>}, {pipeline_mode = #tpu.pipeline_mode<synchronous>, transform_indices = @transform_1, window_bounds = array<i64: 3, 384, 128>}, {pipeline_mode = #tpu.pipeline_mode<synchronous>, transform_indices = @transform_2, window_bounds = array<i64: 1, 128>}, {transform_indices = @transform_3, window_bounds = array<i64: 1, 4, 4, 128>}]} {
    %c0_i32 = arith.constant 0 : i32
    %0 = arith.cmpi eq, %arg1, %c0_i32 : i32
    %1 = arith.extui %0 : i1 to i32
    %c0_i32_0 = arith.constant 0 : i32
    %2 = arith.cmpi ne, %1, %c0_i32_0 : i32
    scf.if %2 {
      %cst_26 = arith.constant 0.000000e+00 : bf16
      %60 = vector.broadcast %cst_26 : bf16 to vector<6x6x128xbf16>
      %c0_27 = arith.constant 0 : index
      %c0_28 = arith.constant 0 : index
      %c0_29 = arith.constant 0 : index
      %61 = vector.load %arg6[%c0_27, %c0_28, %c0_29] : memref<6x6x128xbf16, #tpu.memory_space<vmem>>, vector<6x6x128xbf16>
      tpu.vector_store %arg6[%c0_27, %c0_28, %c0_29], %60 {strides = array<i32>} : memref<6x6x128xbf16, #tpu.memory_space<vmem>>, vector<6x6x128xbf16>,
      %c0_30 = arith.constant 0 : index
      %c0_31 = arith.constant 0 : index
      %c0_32 = arith.constant 0 : index
      %c0_33 = arith.constant 0 : index
      %62 = vector.load %arg2[%c0_30, %c0_31, %c0_32, %c0_33] : memref<1x4x4x128xbf16, #tpu.memory_space<vmem>>, vector<1x4x4x128xbf16>
      %63 = vector.shape_cast %62 : vector<1x4x4x128xbf16> to vector<4x4x128xbf16>
      %c1_34 = arith.constant 1 : index
      %c1_35 = arith.constant 1 : index
      %c0_36 = arith.constant 0 : index
      %64 = vector.load %arg6[%c1_34, %c1_35, %c0_36] : memref<6x6x128xbf16, #tpu.memory_space<vmem>>, vector<4x4x128xbf16>
      tpu.vector_store %arg6[%c1_34, %c1_35, %c0_36], %63 {strides = array<i32>} : memref<6x6x128xbf16, #tpu.memory_space<vmem>>, vector<4x4x128xbf16>,
    } else {
    }
    %c4_i32 = arith.constant 4 : i32
    %3 = arith.muli %arg1, %c4_i32 : i32
    %c0_i32_1 = arith.constant 0 : i32
    %4 = arith.addi %3, %c0_i32_1 : i32
    %5 = arith.index_cast %4 : i32 to index
    %c0 = arith.constant 0 : index
    %c0_2 = arith.constant 0 : index
    %6 = vector.load %arg6[%5, %c0, %c0_2] : memref<6x6x128xbf16, #tpu.memory_space<vmem>>, vector<4x6x128xbf16>
    %7 = vector.extract_strided_slice %6 {offsets = [0, 0, 0], sizes = [4, 4, 128], strides = [1, 1, 1]} : vector<4x6x128xbf16> to vector<4x4x128xbf16>
    %8 = vector.extract_strided_slice %6 {offsets = [0, 1, 0], sizes = [4, 4, 128], strides = [1, 1, 1]} : vector<4x6x128xbf16> to vector<4x4x128xbf16>
    %9 = vector.extract_strided_slice %6 {offsets = [0, 2, 0], sizes = [4, 4, 128], strides = [1, 1, 1]} : vector<4x6x128xbf16> to vector<4x4x128xbf16>
    %10 = tpu.concatenate %7, %8, %9 in 2 : vector<4x4x128xbf16>, vector<4x4x128xbf16>, vector<4x4x128xbf16> -> vector<4x4x384xbf16>
    %11 = vector.shape_cast %10 : vector<4x4x384xbf16> to vector<16x384xbf16>
    %c0_3 = arith.constant 0 : index
    %c0_4 = arith.constant 0 : index
    %c0_5 = arith.constant 0 : index
    %12 = vector.load %arg3[%c0_3, %c0_4, %c0_5] : memref<3x384x128xbf16, #tpu.memory_space<vmem>>, vector<1x384x128xbf16>
    %13 = vector.shape_cast %12 : vector<1x384x128xbf16> to vector<384x128xbf16>
    %cst = arith.constant dense<0.000000e+00> : vector<16x128xf32>
    %14 = tpu.matmul %11, %13, %cst {dimension_numbers = #tpu.dot_dimension_numbers<[1], [0], [0], [1], [0, 0, 1, 1], [], []>} : vector<16x384xbf16>, vector<384x128xbf16>, vector<16x128xf32> -> vector<16x128xf32>
    %c1_i32 = arith.constant 1 : i32
    %15 = arith.addi %3, %c1_i32 : i32
    %16 = arith.index_cast %15 : i32 to index
    %c0_6 = arith.constant 0 : index
    %c0_7 = arith.constant 0 : index
    %17 = vector.load %arg6[%16, %c0_6, %c0_7] : memref<6x6x128xbf16, #tpu.memory_space<vmem>>, vector<4x6x128xbf16>
    %18 = vector.extract_strided_slice %17 {offsets = [0, 0, 0], sizes = [4, 4, 128], strides = [1, 1, 1]} : vector<4x6x128xbf16> to vector<4x4x128xbf16>
    %19 = vector.extract_strided_slice %17 {offsets = [0, 1, 0], sizes = [4, 4, 128], strides = [1, 1, 1]} : vector<4x6x128xbf16> to vector<4x4x128xbf16>
    %20 = vector.extract_strided_slice %17 {offsets = [0, 2, 0], sizes = [4, 4, 128], strides = [1, 1, 1]} : vector<4x6x128xbf16> to vector<4x4x128xbf16>
    %21 = tpu.concatenate %18, %19, %20 in 2 : vector<4x4x128xbf16>, vector<4x4x128xbf16>, vector<4x4x128xbf16> -> vector<4x4x384xbf16>
    %22 = vector.shape_cast %21 : vector<4x4x384xbf16> to vector<16x384xbf16>
    %c1 = arith.constant 1 : index
    %c0_8 = arith.constant 0 : index
    %c0_9 = arith.constant 0 : index
    %23 = vector.load %arg3[%c1, %c0_8, %c0_9] : memref<3x384x128xbf16, #tpu.memory_space<vmem>>, vector<1x384x128xbf16>
    %24 = vector.shape_cast %23 : vector<1x384x128xbf16> to vector<384x128xbf16>
    %cst_10 = arith.constant dense<0.000000e+00> : vector<16x128xf32>
    %25 = tpu.matmul %22, %24, %cst_10 {dimension_numbers = #tpu.dot_dimension_numbers<[1], [0], [0], [1], [0, 0, 1, 1], [], []>} : vector<16x384xbf16>, vector<384x128xbf16>, vector<16x128xf32> -> vector<16x128xf32>
    %26 = arith.addf %14, %25 : vector<16x128xf32>
    %c2_i32 = arith.constant 2 : i32
    %27 = arith.addi %3, %c2_i32 : i32
    %28 = arith.index_cast %27 : i32 to index
    %c0_11 = arith.constant 0 : index
    %c0_12 = arith.constant 0 : index
    %29 = vector.load %arg6[%28, %c0_11, %c0_12] : memref<6x6x128xbf16, #tpu.memory_space<vmem>>, vector<4x6x128xbf16>
    %30 = vector.extract_strided_slice %29 {offsets = [0, 0, 0], sizes = [4, 4, 128], strides = [1, 1, 1]} : vector<4x6x128xbf16> to vector<4x4x128xbf16>
    %31 = vector.extract_strided_slice %29 {offsets = [0, 1, 0], sizes = [4, 4, 128], strides = [1, 1, 1]} : vector<4x6x128xbf16> to vector<4x4x128xbf16>
    %32 = vector.extract_strided_slice %29 {offsets = [0, 2, 0], sizes = [4, 4, 128], strides = [1, 1, 1]} : vector<4x6x128xbf16> to vector<4x4x128xbf16>
    %33 = tpu.concatenate %30, %31, %32 in 2 : vector<4x4x128xbf16>, vector<4x4x128xbf16>, vector<4x4x128xbf16> -> vector<4x4x384xbf16>
    %34 = vector.shape_cast %33 : vector<4x4x384xbf16> to vector<16x384xbf16>
    %c2 = arith.constant 2 : index
    %c0_13 = arith.constant 0 : index
    %c0_14 = arith.constant 0 : index
    %35 = vector.load %arg3[%c2, %c0_13, %c0_14] : memref<3x384x128xbf16, #tpu.memory_space<vmem>>, vector<1x384x128xbf16>
    %36 = vector.shape_cast %35 : vector<1x384x128xbf16> to vector<384x128xbf16>
    %cst_15 = arith.constant dense<0.000000e+00> : vector<16x128xf32>
    %37 = tpu.matmul %34, %36, %cst_15 {dimension_numbers = #tpu.dot_dimension_numbers<[1], [0], [0], [1], [0, 0, 1, 1], [], []>} : vector<16x384xbf16>, vector<384x128xbf16>, vector<16x128xf32> -> vector<16x128xf32>
    %38 = arith.addf %26, %37 : vector<16x128xf32>
    %c0_16 = arith.constant 0 : index
    %c0_17 = arith.constant 0 : index
    %39 = vector.load %arg4[%c0_16, %c0_17] : memref<1x128xf32, #tpu.memory_space<vmem>>, vector<1x128xf32>
    %40 = vector.broadcast %39 : vector<1x128xf32> to vector<16x128xf32>
    %41 = arith.addf %38, %40 : vector<16x128xf32>
    %cst_18 = arith.constant 2.000000e-01 : f32
    %42 = vector.broadcast %cst_18 : f32 to vector<16x128xf32>
    %43 = arith.mulf %42, %41 : vector<16x128xf32>
    %44 = arith.maximumf %41, %43 : vector<16x128xf32>
    %45 = arith.mulf %44, %44 : vector<16x128xf32>
    %cst_19 = arith.constant dense<0.000000e+00> : vector<16xf32>
    %46 = vector.multi_reduction <add>, %45, %cst_19 [1] : vector<16x128xf32> to vector<16xf32>
    %47 = vector.shape_cast %46 : vector<16xf32> to vector<16x1xf32>
    %cst_20 = arith.constant 1.280000e+02 : f32
    %48 = vector.broadcast %cst_20 : f32 to vector<16x1xf32>
    %49 = arith.divf %47, %48 : vector<16x1xf32>
    %cst_21 = arith.constant 9.99999993E-9 : f32
    %50 = vector.broadcast %cst_21 : f32 to vector<16x1xf32>
    %51 = arith.addf %49, %50 : vector<16x1xf32>
    %52 = math.rsqrt %51 : vector<16x1xf32>
    %53 = vector.broadcast %52 : vector<16x1xf32> to vector<16x128xf32>
    %54 = arith.mulf %44, %53 : vector<16x128xf32>
    %55 = vector.shape_cast %54 : vector<16x128xf32> to vector<4x4x128xf32>
    %56 = arith.truncf %55 : vector<4x4x128xf32> to vector<4x4x128xbf16>
    %c0_22 = arith.constant 0 : index
    %c0_23 = arith.constant 0 : index
    %c0_24 = arith.constant 0 : index
    %c0_25 = arith.constant 0 : index
    %57 = vector.load %arg5[%c0_22, %c0_23, %c0_24, %c0_25] : memref<1x4x4x128xbf16, #tpu.memory_space<vmem>>, vector<1x4x4x128xbf16>
    %58 = vector.shape_cast %57 : vector<1x4x4x128xbf16> to vector<4x4x128xbf16>
    %59 = vector.shape_cast %56 : vector<4x4x128xbf16> to vector<1x4x4x128xbf16>
    tpu.vector_store %arg5[%c0_22, %c0_23, %c0_24, %c0_25], %59 {strides = array<i32>} : memref<1x4x4x128xbf16, #tpu.memory_space<vmem>>, vector<1x4x4x128xbf16>,
    return
  }
  func.func @transform_0(%arg0: i32, %arg1: i32) -> (i32, i32, i32, i32) {
    %c0_i32 = arith.constant 0 : i32
    %c0_i32_0 = arith.constant 0 : i32
    %c0_i32_1 = arith.constant 0 : i32
    %c0_i32_2 = arith.constant 0 : i32
    return %arg0, %c0_i32, %c0_i32_0, %c0_i32_1 : i32, i32, i32, i32
  }
  func.func @transform_1(%arg0: i32, %arg1: i32) -> (i32, i32, i32) {
    %c0_i32 = arith.constant 0 : i32
    %c0_i32_0 = arith.constant 0 : i32
    %c0_i32_1 = arith.constant 0 : i32
    %c0_i32_2 = arith.constant 0 : i32
    return %c0_i32, %c0_i32_0, %c0_i32_1 : i32, i32, i32
  }
  func.func @transform_2(%arg0: i32, %arg1: i32) -> (i32, i32) {
    %c0_i32 = arith.constant 0 : i32
    %c0_i32_0 = arith.constant 0 : i32
    %c0_i32_1 = arith.constant 0 : i32
    return %c0_i32, %c0_i32_0 : i32, i32
  }
  func.func @transform_3(%arg0: i32, %arg1: i32) -> (i32, i32, i32, i32) {
    %c0_i32 = arith.constant 0 : i32
    %c0_i32_0 = arith.constant 0 : i32
    %c0_i32_1 = arith.constant 0 : i32
    return %arg0, %arg1, %c0_i32, %c0_i32_0 : i32, i32, i32, i32
  }
}

module attributes {stable_mosaic.version = 11 : i64} {
  func.func @kernel(%arg0: i32, %arg1: i32, %arg2: memref<1x8x8x128xbf16, #tpu.memory_space<vmem>>, %arg3: memref<3x384x128xbf16, #tpu.memory_space<vmem>>, %arg4: memref<1x128xf32, #tpu.memory_space<vmem>>, %arg5: memref<1x8x8x128xbf16, #tpu.memory_space<vmem>>, %arg6: memref<10x10x128xbf16, #tpu.memory_space<vmem>>) attributes {dimension_semantics = [#tpu.dimension_semantics<parallel>, #tpu.dimension_semantics<arbitrary>], iteration_bounds = array<i64: 2, 1>, scalar_prefetch = 0 : i64, scratch_operands = 1 : i64, tpu.core_type = #tpu.core_type<tc>, window_params = [{transform_indices = @transform_0, window_bounds = array<i64: 1, 8, 8, 128>}, {pipeline_mode = #tpu.pipeline_mode<synchronous>, transform_indices = @transform_1, window_bounds = array<i64: 3, 384, 128>}, {pipeline_mode = #tpu.pipeline_mode<synchronous>, transform_indices = @transform_2, window_bounds = array<i64: 1, 128>}, {transform_indices = @transform_3, window_bounds = array<i64: 1, 8, 8, 128>}]} {
    %c0_i32 = arith.constant 0 : i32
    %0 = arith.cmpi eq, %arg1, %c0_i32 : i32
    %1 = arith.extui %0 : i1 to i32
    %c0_i32_0 = arith.constant 0 : i32
    %2 = arith.cmpi ne, %1, %c0_i32_0 : i32
    scf.if %2 {
      %cst_26 = arith.constant 0.000000e+00 : bf16
      %60 = vector.broadcast %cst_26 : bf16 to vector<10x10x128xbf16>
      %c0_27 = arith.constant 0 : index
      %c0_28 = arith.constant 0 : index
      %c0_29 = arith.constant 0 : index
      %61 = vector.load %arg6[%c0_27, %c0_28, %c0_29] : memref<10x10x128xbf16, #tpu.memory_space<vmem>>, vector<10x10x128xbf16>
      tpu.vector_store %arg6[%c0_27, %c0_28, %c0_29], %60 {strides = array<i32>} : memref<10x10x128xbf16, #tpu.memory_space<vmem>>, vector<10x10x128xbf16>,
      %c0_30 = arith.constant 0 : index
      %c0_31 = arith.constant 0 : index
      %c0_32 = arith.constant 0 : index
      %c0_33 = arith.constant 0 : index
      %62 = vector.load %arg2[%c0_30, %c0_31, %c0_32, %c0_33] : memref<1x8x8x128xbf16, #tpu.memory_space<vmem>>, vector<1x8x8x128xbf16>
      %63 = vector.shape_cast %62 : vector<1x8x8x128xbf16> to vector<8x8x128xbf16>
      %c1_34 = arith.constant 1 : index
      %c1_35 = arith.constant 1 : index
      %c0_36 = arith.constant 0 : index
      %64 = vector.load %arg6[%c1_34, %c1_35, %c0_36] : memref<10x10x128xbf16, #tpu.memory_space<vmem>>, vector<8x8x128xbf16>
      tpu.vector_store %arg6[%c1_34, %c1_35, %c0_36], %63 {strides = array<i32>} : memref<10x10x128xbf16, #tpu.memory_space<vmem>>, vector<8x8x128xbf16>,
    } else {
    }
    %c8_i32 = arith.constant 8 : i32
    %3 = arith.muli %arg1, %c8_i32 : i32
    %c0_i32_1 = arith.constant 0 : i32
    %4 = arith.addi %3, %c0_i32_1 : i32
    %5 = arith.index_cast %4 : i32 to index
    %c0 = arith.constant 0 : index
    %c0_2 = arith.constant 0 : index
    %6 = vector.load %arg6[%5, %c0, %c0_2] : memref<10x10x128xbf16, #tpu.memory_space<vmem>>, vector<8x10x128xbf16>
    %7 = vector.extract_strided_slice %6 {offsets = [0, 0, 0], sizes = [8, 8, 128], strides = [1, 1, 1]} : vector<8x10x128xbf16> to vector<8x8x128xbf16>
    %8 = vector.extract_strided_slice %6 {offsets = [0, 1, 0], sizes = [8, 8, 128], strides = [1, 1, 1]} : vector<8x10x128xbf16> to vector<8x8x128xbf16>
    %9 = vector.extract_strided_slice %6 {offsets = [0, 2, 0], sizes = [8, 8, 128], strides = [1, 1, 1]} : vector<8x10x128xbf16> to vector<8x8x128xbf16>
    %10 = tpu.concatenate %7, %8, %9 in 2 : vector<8x8x128xbf16>, vector<8x8x128xbf16>, vector<8x8x128xbf16> -> vector<8x8x384xbf16>
    %11 = vector.shape_cast %10 : vector<8x8x384xbf16> to vector<64x384xbf16>
    %c0_3 = arith.constant 0 : index
    %c0_4 = arith.constant 0 : index
    %c0_5 = arith.constant 0 : index
    %12 = vector.load %arg3[%c0_3, %c0_4, %c0_5] : memref<3x384x128xbf16, #tpu.memory_space<vmem>>, vector<1x384x128xbf16>
    %13 = vector.shape_cast %12 : vector<1x384x128xbf16> to vector<384x128xbf16>
    %cst = arith.constant dense<0.000000e+00> : vector<64x128xf32>
    %14 = tpu.matmul %11, %13, %cst {dimension_numbers = #tpu.dot_dimension_numbers<[1], [0], [0], [1], [0, 0, 1, 1], [], []>} : vector<64x384xbf16>, vector<384x128xbf16>, vector<64x128xf32> -> vector<64x128xf32>
    %c1_i32 = arith.constant 1 : i32
    %15 = arith.addi %3, %c1_i32 : i32
    %16 = arith.index_cast %15 : i32 to index
    %c0_6 = arith.constant 0 : index
    %c0_7 = arith.constant 0 : index
    %17 = vector.load %arg6[%16, %c0_6, %c0_7] : memref<10x10x128xbf16, #tpu.memory_space<vmem>>, vector<8x10x128xbf16>
    %18 = vector.extract_strided_slice %17 {offsets = [0, 0, 0], sizes = [8, 8, 128], strides = [1, 1, 1]} : vector<8x10x128xbf16> to vector<8x8x128xbf16>
    %19 = vector.extract_strided_slice %17 {offsets = [0, 1, 0], sizes = [8, 8, 128], strides = [1, 1, 1]} : vector<8x10x128xbf16> to vector<8x8x128xbf16>
    %20 = vector.extract_strided_slice %17 {offsets = [0, 2, 0], sizes = [8, 8, 128], strides = [1, 1, 1]} : vector<8x10x128xbf16> to vector<8x8x128xbf16>
    %21 = tpu.concatenate %18, %19, %20 in 2 : vector<8x8x128xbf16>, vector<8x8x128xbf16>, vector<8x8x128xbf16> -> vector<8x8x384xbf16>
    %22 = vector.shape_cast %21 : vector<8x8x384xbf16> to vector<64x384xbf16>
    %c1 = arith.constant 1 : index
    %c0_8 = arith.constant 0 : index
    %c0_9 = arith.constant 0 : index
    %23 = vector.load %arg3[%c1, %c0_8, %c0_9] : memref<3x384x128xbf16, #tpu.memory_space<vmem>>, vector<1x384x128xbf16>
    %24 = vector.shape_cast %23 : vector<1x384x128xbf16> to vector<384x128xbf16>
    %cst_10 = arith.constant dense<0.000000e+00> : vector<64x128xf32>
    %25 = tpu.matmul %22, %24, %cst_10 {dimension_numbers = #tpu.dot_dimension_numbers<[1], [0], [0], [1], [0, 0, 1, 1], [], []>} : vector<64x384xbf16>, vector<384x128xbf16>, vector<64x128xf32> -> vector<64x128xf32>
    %26 = arith.addf %14, %25 : vector<64x128xf32>
    %c2_i32 = arith.constant 2 : i32
    %27 = arith.addi %3, %c2_i32 : i32
    %28 = arith.index_cast %27 : i32 to index
    %c0_11 = arith.constant 0 : index
    %c0_12 = arith.constant 0 : index
    %29 = vector.load %arg6[%28, %c0_11, %c0_12] : memref<10x10x128xbf16, #tpu.memory_space<vmem>>, vector<8x10x128xbf16>
    %30 = vector.extract_strided_slice %29 {offsets = [0, 0, 0], sizes = [8, 8, 128], strides = [1, 1, 1]} : vector<8x10x128xbf16> to vector<8x8x128xbf16>
    %31 = vector.extract_strided_slice %29 {offsets = [0, 1, 0], sizes = [8, 8, 128], strides = [1, 1, 1]} : vector<8x10x128xbf16> to vector<8x8x128xbf16>
    %32 = vector.extract_strided_slice %29 {offsets = [0, 2, 0], sizes = [8, 8, 128], strides = [1, 1, 1]} : vector<8x10x128xbf16> to vector<8x8x128xbf16>
    %33 = tpu.concatenate %30, %31, %32 in 2 : vector<8x8x128xbf16>, vector<8x8x128xbf16>, vector<8x8x128xbf16> -> vector<8x8x384xbf16>
    %34 = vector.shape_cast %33 : vector<8x8x384xbf16> to vector<64x384xbf16>
    %c2 = arith.constant 2 : index
    %c0_13 = arith.constant 0 : index
    %c0_14 = arith.constant 0 : index
    %35 = vector.load %arg3[%c2, %c0_13, %c0_14] : memref<3x384x128xbf16, #tpu.memory_space<vmem>>, vector<1x384x128xbf16>
    %36 = vector.shape_cast %35 : vector<1x384x128xbf16> to vector<384x128xbf16>
    %cst_15 = arith.constant dense<0.000000e+00> : vector<64x128xf32>
    %37 = tpu.matmul %34, %36, %cst_15 {dimension_numbers = #tpu.dot_dimension_numbers<[1], [0], [0], [1], [0, 0, 1, 1], [], []>} : vector<64x384xbf16>, vector<384x128xbf16>, vector<64x128xf32> -> vector<64x128xf32>
    %38 = arith.addf %26, %37 : vector<64x128xf32>
    %c0_16 = arith.constant 0 : index
    %c0_17 = arith.constant 0 : index
    %39 = vector.load %arg4[%c0_16, %c0_17] : memref<1x128xf32, #tpu.memory_space<vmem>>, vector<1x128xf32>
    %40 = vector.broadcast %39 : vector<1x128xf32> to vector<64x128xf32>
    %41 = arith.addf %38, %40 : vector<64x128xf32>
    %cst_18 = arith.constant 2.000000e-01 : f32
    %42 = vector.broadcast %cst_18 : f32 to vector<64x128xf32>
    %43 = arith.mulf %42, %41 : vector<64x128xf32>
    %44 = arith.maximumf %41, %43 : vector<64x128xf32>
    %45 = arith.mulf %44, %44 : vector<64x128xf32>
    %cst_19 = arith.constant dense<0.000000e+00> : vector<64xf32>
    %46 = vector.multi_reduction <add>, %45, %cst_19 [1] : vector<64x128xf32> to vector<64xf32>
    %47 = vector.shape_cast %46 : vector<64xf32> to vector<64x1xf32>
    %cst_20 = arith.constant 1.280000e+02 : f32
    %48 = vector.broadcast %cst_20 : f32 to vector<64x1xf32>
    %49 = arith.divf %47, %48 : vector<64x1xf32>
    %cst_21 = arith.constant 9.99999993E-9 : f32
    %50 = vector.broadcast %cst_21 : f32 to vector<64x1xf32>
    %51 = arith.addf %49, %50 : vector<64x1xf32>
    %52 = math.rsqrt %51 : vector<64x1xf32>
    %53 = vector.broadcast %52 : vector<64x1xf32> to vector<64x128xf32>
    %54 = arith.mulf %44, %53 : vector<64x128xf32>
    %55 = vector.shape_cast %54 : vector<64x128xf32> to vector<8x8x128xf32>
    %56 = arith.truncf %55 : vector<8x8x128xf32> to vector<8x8x128xbf16>
    %c0_22 = arith.constant 0 : index
    %c0_23 = arith.constant 0 : index
    %c0_24 = arith.constant 0 : index
    %c0_25 = arith.constant 0 : index
    %57 = vector.load %arg5[%c0_22, %c0_23, %c0_24, %c0_25] : memref<1x8x8x128xbf16, #tpu.memory_space<vmem>>, vector<1x8x8x128xbf16>
    %58 = vector.shape_cast %57 : vector<1x8x8x128xbf16> to vector<8x8x128xbf16>
    %59 = vector.shape_cast %56 : vector<8x8x128xbf16> to vector<1x8x8x128xbf16>
    tpu.vector_store %arg5[%c0_22, %c0_23, %c0_24, %c0_25], %59 {strides = array<i32>} : memref<1x8x8x128xbf16, #tpu.memory_space<vmem>>, vector<1x8x8x128xbf16>,
    return
  }
  func.func @transform_0(%arg0: i32, %arg1: i32) -> (i32, i32, i32, i32) {
    %c0_i32 = arith.constant 0 : i32
    %c0_i32_0 = arith.constant 0 : i32
    %c0_i32_1 = arith.constant 0 : i32
    %c0_i32_2 = arith.constant 0 : i32
    return %arg0, %c0_i32, %c0_i32_0, %c0_i32_1 : i32, i32, i32, i32
  }
  func.func @transform_1(%arg0: i32, %arg1: i32) -> (i32, i32, i32) {
    %c0_i32 = arith.constant 0 : i32
    %c0_i32_0 = arith.constant 0 : i32
    %c0_i32_1 = arith.constant 0 : i32
    %c0_i32_2 = arith.constant 0 : i32
    return %c0_i32, %c0_i32_0, %c0_i32_1 : i32, i32, i32
  }
  func.func @transform_2(%arg0: i32, %arg1: i32) -> (i32, i32) {
    %c0_i32 = arith.constant 0 : i32
    %c0_i32_0 = arith.constant 0 : i32
    %c0_i32_1 = arith.constant 0 : i32
    return %c0_i32, %c0_i32_0 : i32, i32
  }
  func.func @transform_3(%arg0: i32, %arg1: i32) -> (i32, i32, i32, i32) {
    %c0_i32 = arith.constant 0 : i32
    %c0_i32_0 = arith.constant 0 : i32
    %c0_i32_1 = arith.constant 0 : i32
    return %arg0, %arg1, %c0_i32, %c0_i32_0 : i32, i32, i32, i32
  }
}

module attributes {stable_mosaic.version = 11 : i64} {
  func.func @kernel(%arg0: i32, %arg1: i32, %arg2: memref<1x16x16x128xbf16, #tpu.memory_space<vmem>>, %arg3: memref<3x384x128xbf16, #tpu.memory_space<vmem>>, %arg4: memref<1x128xf32, #tpu.memory_space<vmem>>, %arg5: memref<1x8x16x128xbf16, #tpu.memory_space<vmem>>, %arg6: memref<18x18x128xbf16, #tpu.memory_space<vmem>>) attributes {dimension_semantics = [#tpu.dimension_semantics<parallel>, #tpu.dimension_semantics<arbitrary>], iteration_bounds = array<i64: 2, 2>, scalar_prefetch = 0 : i64, scratch_operands = 1 : i64, tpu.core_type = #tpu.core_type<tc>, window_params = [{transform_indices = @transform_0, window_bounds = array<i64: 1, 16, 16, 128>}, {pipeline_mode = #tpu.pipeline_mode<synchronous>, transform_indices = @transform_1, window_bounds = array<i64: 3, 384, 128>}, {pipeline_mode = #tpu.pipeline_mode<synchronous>, transform_indices = @transform_2, window_bounds = array<i64: 1, 128>}, {transform_indices = @transform_3, window_bounds = array<i64: 1, 8, 16, 128>}]} {
    %c0_i32 = arith.constant 0 : i32
    %0 = arith.cmpi eq, %arg1, %c0_i32 : i32
    %1 = arith.extui %0 : i1 to i32
    %c0_i32_0 = arith.constant 0 : i32
    %2 = arith.cmpi ne, %1, %c0_i32_0 : i32
    scf.if %2 {
      %cst_26 = arith.constant 0.000000e+00 : bf16
      %60 = vector.broadcast %cst_26 : bf16 to vector<18x18x128xbf16>
      %c0_27 = arith.constant 0 : index
      %c0_28 = arith.constant 0 : index
      %c0_29 = arith.constant 0 : index
      %61 = vector.load %arg6[%c0_27, %c0_28, %c0_29] : memref<18x18x128xbf16, #tpu.memory_space<vmem>>, vector<18x18x128xbf16>
      tpu.vector_store %arg6[%c0_27, %c0_28, %c0_29], %60 {strides = array<i32>} : memref<18x18x128xbf16, #tpu.memory_space<vmem>>, vector<18x18x128xbf16>,
      %c0_30 = arith.constant 0 : index
      %c0_31 = arith.constant 0 : index
      %c0_32 = arith.constant 0 : index
      %c0_33 = arith.constant 0 : index
      %62 = vector.load %arg2[%c0_30, %c0_31, %c0_32, %c0_33] : memref<1x16x16x128xbf16, #tpu.memory_space<vmem>>, vector<1x16x16x128xbf16>
      %63 = vector.shape_cast %62 : vector<1x16x16x128xbf16> to vector<16x16x128xbf16>
      %c1_34 = arith.constant 1 : index
      %c1_35 = arith.constant 1 : index
      %c0_36 = arith.constant 0 : index
      %64 = vector.load %arg6[%c1_34, %c1_35, %c0_36] : memref<18x18x128xbf16, #tpu.memory_space<vmem>>, vector<16x16x128xbf16>
      tpu.vector_store %arg6[%c1_34, %c1_35, %c0_36], %63 {strides = array<i32>} : memref<18x18x128xbf16, #tpu.memory_space<vmem>>, vector<16x16x128xbf16>,
    } else {
    }
    %c8_i32 = arith.constant 8 : i32
    %3 = arith.muli %arg1, %c8_i32 : i32
    %c0_i32_1 = arith.constant 0 : i32
    %4 = arith.addi %3, %c0_i32_1 : i32
    %5 = arith.index_cast %4 : i32 to index
    %c0 = arith.constant 0 : index
    %c0_2 = arith.constant 0 : index
    %6 = vector.load %arg6[%5, %c0, %c0_2] : memref<18x18x128xbf16, #tpu.memory_space<vmem>>, vector<8x18x128xbf16>
    %7 = vector.extract_strided_slice %6 {offsets = [0, 0, 0], sizes = [8, 16, 128], strides = [1, 1, 1]} : vector<8x18x128xbf16> to vector<8x16x128xbf16>
    %8 = vector.extract_strided_slice %6 {offsets = [0, 1, 0], sizes = [8, 16, 128], strides = [1, 1, 1]} : vector<8x18x128xbf16> to vector<8x16x128xbf16>
    %9 = vector.extract_strided_slice %6 {offsets = [0, 2, 0], sizes = [8, 16, 128], strides = [1, 1, 1]} : vector<8x18x128xbf16> to vector<8x16x128xbf16>
    %10 = tpu.concatenate %7, %8, %9 in 2 : vector<8x16x128xbf16>, vector<8x16x128xbf16>, vector<8x16x128xbf16> -> vector<8x16x384xbf16>
    %11 = vector.shape_cast %10 : vector<8x16x384xbf16> to vector<128x384xbf16>
    %c0_3 = arith.constant 0 : index
    %c0_4 = arith.constant 0 : index
    %c0_5 = arith.constant 0 : index
    %12 = vector.load %arg3[%c0_3, %c0_4, %c0_5] : memref<3x384x128xbf16, #tpu.memory_space<vmem>>, vector<1x384x128xbf16>
    %13 = vector.shape_cast %12 : vector<1x384x128xbf16> to vector<384x128xbf16>
    %cst = arith.constant dense<0.000000e+00> : vector<128x128xf32>
    %14 = tpu.matmul %11, %13, %cst {dimension_numbers = #tpu.dot_dimension_numbers<[1], [0], [0], [1], [0, 0, 1, 1], [], []>} : vector<128x384xbf16>, vector<384x128xbf16>, vector<128x128xf32> -> vector<128x128xf32>
    %c1_i32 = arith.constant 1 : i32
    %15 = arith.addi %3, %c1_i32 : i32
    %16 = arith.index_cast %15 : i32 to index
    %c0_6 = arith.constant 0 : index
    %c0_7 = arith.constant 0 : index
    %17 = vector.load %arg6[%16, %c0_6, %c0_7] : memref<18x18x128xbf16, #tpu.memory_space<vmem>>, vector<8x18x128xbf16>
    %18 = vector.extract_strided_slice %17 {offsets = [0, 0, 0], sizes = [8, 16, 128], strides = [1, 1, 1]} : vector<8x18x128xbf16> to vector<8x16x128xbf16>
    %19 = vector.extract_strided_slice %17 {offsets = [0, 1, 0], sizes = [8, 16, 128], strides = [1, 1, 1]} : vector<8x18x128xbf16> to vector<8x16x128xbf16>
    %20 = vector.extract_strided_slice %17 {offsets = [0, 2, 0], sizes = [8, 16, 128], strides = [1, 1, 1]} : vector<8x18x128xbf16> to vector<8x16x128xbf16>
    %21 = tpu.concatenate %18, %19, %20 in 2 : vector<8x16x128xbf16>, vector<8x16x128xbf16>, vector<8x16x128xbf16> -> vector<8x16x384xbf16>
    %22 = vector.shape_cast %21 : vector<8x16x384xbf16> to vector<128x384xbf16>
    %c1 = arith.constant 1 : index
    %c0_8 = arith.constant 0 : index
    %c0_9 = arith.constant 0 : index
    %23 = vector.load %arg3[%c1, %c0_8, %c0_9] : memref<3x384x128xbf16, #tpu.memory_space<vmem>>, vector<1x384x128xbf16>
    %24 = vector.shape_cast %23 : vector<1x384x128xbf16> to vector<384x128xbf16>
    %cst_10 = arith.constant dense<0.000000e+00> : vector<128x128xf32>
    %25 = tpu.matmul %22, %24, %cst_10 {dimension_numbers = #tpu.dot_dimension_numbers<[1], [0], [0], [1], [0, 0, 1, 1], [], []>} : vector<128x384xbf16>, vector<384x128xbf16>, vector<128x128xf32> -> vector<128x128xf32>
    %26 = arith.addf %14, %25 : vector<128x128xf32>
    %c2_i32 = arith.constant 2 : i32
    %27 = arith.addi %3, %c2_i32 : i32
    %28 = arith.index_cast %27 : i32 to index
    %c0_11 = arith.constant 0 : index
    %c0_12 = arith.constant 0 : index
    %29 = vector.load %arg6[%28, %c0_11, %c0_12] : memref<18x18x128xbf16, #tpu.memory_space<vmem>>, vector<8x18x128xbf16>
    %30 = vector.extract_strided_slice %29 {offsets = [0, 0, 0], sizes = [8, 16, 128], strides = [1, 1, 1]} : vector<8x18x128xbf16> to vector<8x16x128xbf16>
    %31 = vector.extract_strided_slice %29 {offsets = [0, 1, 0], sizes = [8, 16, 128], strides = [1, 1, 1]} : vector<8x18x128xbf16> to vector<8x16x128xbf16>
    %32 = vector.extract_strided_slice %29 {offsets = [0, 2, 0], sizes = [8, 16, 128], strides = [1, 1, 1]} : vector<8x18x128xbf16> to vector<8x16x128xbf16>
    %33 = tpu.concatenate %30, %31, %32 in 2 : vector<8x16x128xbf16>, vector<8x16x128xbf16>, vector<8x16x128xbf16> -> vector<8x16x384xbf16>
    %34 = vector.shape_cast %33 : vector<8x16x384xbf16> to vector<128x384xbf16>
    %c2 = arith.constant 2 : index
    %c0_13 = arith.constant 0 : index
    %c0_14 = arith.constant 0 : index
    %35 = vector.load %arg3[%c2, %c0_13, %c0_14] : memref<3x384x128xbf16, #tpu.memory_space<vmem>>, vector<1x384x128xbf16>
    %36 = vector.shape_cast %35 : vector<1x384x128xbf16> to vector<384x128xbf16>
    %cst_15 = arith.constant dense<0.000000e+00> : vector<128x128xf32>
    %37 = tpu.matmul %34, %36, %cst_15 {dimension_numbers = #tpu.dot_dimension_numbers<[1], [0], [0], [1], [0, 0, 1, 1], [], []>} : vector<128x384xbf16>, vector<384x128xbf16>, vector<128x128xf32> -> vector<128x128xf32>
    %38 = arith.addf %26, %37 : vector<128x128xf32>
    %c0_16 = arith.constant 0 : index
    %c0_17 = arith.constant 0 : index
    %39 = vector.load %arg4[%c0_16, %c0_17] : memref<1x128xf32, #tpu.memory_space<vmem>>, vector<1x128xf32>
    %40 = vector.broadcast %39 : vector<1x128xf32> to vector<128x128xf32>
    %41 = arith.addf %38, %40 : vector<128x128xf32>
    %cst_18 = arith.constant 2.000000e-01 : f32
    %42 = vector.broadcast %cst_18 : f32 to vector<128x128xf32>
    %43 = arith.mulf %42, %41 : vector<128x128xf32>
    %44 = arith.maximumf %41, %43 : vector<128x128xf32>
    %45 = arith.mulf %44, %44 : vector<128x128xf32>
    %cst_19 = arith.constant dense<0.000000e+00> : vector<128xf32>
    %46 = vector.multi_reduction <add>, %45, %cst_19 [1] : vector<128x128xf32> to vector<128xf32>
    %47 = vector.shape_cast %46 : vector<128xf32> to vector<128x1xf32>
    %cst_20 = arith.constant 1.280000e+02 : f32
    %48 = vector.broadcast %cst_20 : f32 to vector<128x1xf32>
    %49 = arith.divf %47, %48 : vector<128x1xf32>
    %cst_21 = arith.constant 9.99999993E-9 : f32
    %50 = vector.broadcast %cst_21 : f32 to vector<128x1xf32>
    %51 = arith.addf %49, %50 : vector<128x1xf32>
    %52 = math.rsqrt %51 : vector<128x1xf32>
    %53 = vector.broadcast %52 : vector<128x1xf32> to vector<128x128xf32>
    %54 = arith.mulf %44, %53 : vector<128x128xf32>
    %55 = vector.shape_cast %54 : vector<128x128xf32> to vector<8x16x128xf32>
    %56 = arith.truncf %55 : vector<8x16x128xf32> to vector<8x16x128xbf16>
    %c0_22 = arith.constant 0 : index
    %c0_23 = arith.constant 0 : index
    %c0_24 = arith.constant 0 : index
    %c0_25 = arith.constant 0 : index
    %57 = vector.load %arg5[%c0_22, %c0_23, %c0_24, %c0_25] : memref<1x8x16x128xbf16, #tpu.memory_space<vmem>>, vector<1x8x16x128xbf16>
    %58 = vector.shape_cast %57 : vector<1x8x16x128xbf16> to vector<8x16x128xbf16>
    %59 = vector.shape_cast %56 : vector<8x16x128xbf16> to vector<1x8x16x128xbf16>
    tpu.vector_store %arg5[%c0_22, %c0_23, %c0_24, %c0_25], %59 {strides = array<i32>} : memref<1x8x16x128xbf16, #tpu.memory_space<vmem>>, vector<1x8x16x128xbf16>,
    return
  }
  func.func @transform_0(%arg0: i32, %arg1: i32) -> (i32, i32, i32, i32) {
    %c0_i32 = arith.constant 0 : i32
    %c0_i32_0 = arith.constant 0 : i32
    %c0_i32_1 = arith.constant 0 : i32
    %c0_i32_2 = arith.constant 0 : i32
    return %arg0, %c0_i32, %c0_i32_0, %c0_i32_1 : i32, i32, i32, i32
  }
  func.func @transform_1(%arg0: i32, %arg1: i32) -> (i32, i32, i32) {
    %c0_i32 = arith.constant 0 : i32
    %c0_i32_0 = arith.constant 0 : i32
    %c0_i32_1 = arith.constant 0 : i32
    %c0_i32_2 = arith.constant 0 : i32
    return %c0_i32, %c0_i32_0, %c0_i32_1 : i32, i32, i32
  }
  func.func @transform_2(%arg0: i32, %arg1: i32) -> (i32, i32) {
    %c0_i32 = arith.constant 0 : i32
    %c0_i32_0 = arith.constant 0 : i32
    %c0_i32_1 = arith.constant 0 : i32
    return %c0_i32, %c0_i32_0 : i32, i32
  }
  func.func @transform_3(%arg0: i32, %arg1: i32) -> (i32, i32, i32, i32) {
    %c0_i32 = arith.constant 0 : i32
    %c0_i32_0 = arith.constant 0 : i32
    %c0_i32_1 = arith.constant 0 : i32
    return %arg0, %arg1, %c0_i32, %c0_i32_0 : i32, i32, i32, i32
  }
}

module attributes {stable_mosaic.version = 11 : i64} {
  func.func @kernel(%arg0: i32, %arg1: i32, %arg2: memref<1x16x16x128xbf16, #tpu.memory_space<vmem>>, %arg3: memref<3x384x128xbf16, #tpu.memory_space<vmem>>, %arg4: memref<1x128xf32, #tpu.memory_space<vmem>>, %arg5: memref<1x8x16x128xbf16, #tpu.memory_space<vmem>>, %arg6: memref<18x18x128xbf16, #tpu.memory_space<vmem>>) attributes {dimension_semantics = [#tpu.dimension_semantics<parallel>, #tpu.dimension_semantics<arbitrary>], iteration_bounds = array<i64: 2, 2>, scalar_prefetch = 0 : i64, scratch_operands = 1 : i64, tpu.core_type = #tpu.core_type<tc>, window_params = [{transform_indices = @transform_0, window_bounds = array<i64: 1, 16, 16, 128>}, {pipeline_mode = #tpu.pipeline_mode<synchronous>, transform_indices = @transform_1, window_bounds = array<i64: 3, 384, 128>}, {pipeline_mode = #tpu.pipeline_mode<synchronous>, transform_indices = @transform_2, window_bounds = array<i64: 1, 128>}, {transform_indices = @transform_3, window_bounds = array<i64: 1, 8, 16, 128>}]} {
    %c0_i32 = arith.constant 0 : i32
    %0 = arith.cmpi eq, %arg1, %c0_i32 : i32
    %1 = arith.extui %0 : i1 to i32
    %c0_i32_0 = arith.constant 0 : i32
    %2 = arith.cmpi ne, %1, %c0_i32_0 : i32
    scf.if %2 {
      %cst_26 = arith.constant 0.000000e+00 : bf16
      %60 = vector.broadcast %cst_26 : bf16 to vector<18x18x128xbf16>
      %c0_27 = arith.constant 0 : index
      %c0_28 = arith.constant 0 : index
      %c0_29 = arith.constant 0 : index
      %61 = vector.load %arg6[%c0_27, %c0_28, %c0_29] : memref<18x18x128xbf16, #tpu.memory_space<vmem>>, vector<18x18x128xbf16>
      tpu.vector_store %arg6[%c0_27, %c0_28, %c0_29], %60 {strides = array<i32>} : memref<18x18x128xbf16, #tpu.memory_space<vmem>>, vector<18x18x128xbf16>,
      %c0_30 = arith.constant 0 : index
      %c0_31 = arith.constant 0 : index
      %c0_32 = arith.constant 0 : index
      %c0_33 = arith.constant 0 : index
      %62 = vector.load %arg2[%c0_30, %c0_31, %c0_32, %c0_33] : memref<1x16x16x128xbf16, #tpu.memory_space<vmem>>, vector<1x16x16x128xbf16>
      %63 = vector.shape_cast %62 : vector<1x16x16x128xbf16> to vector<16x16x128xbf16>
      %c1_34 = arith.constant 1 : index
      %c1_35 = arith.constant 1 : index
      %c0_36 = arith.constant 0 : index
      %64 = vector.load %arg6[%c1_34, %c1_35, %c0_36] : memref<18x18x128xbf16, #tpu.memory_space<vmem>>, vector<16x16x128xbf16>
      tpu.vector_store %arg6[%c1_34, %c1_35, %c0_36], %63 {strides = array<i32>} : memref<18x18x128xbf16, #tpu.memory_space<vmem>>, vector<16x16x128xbf16>,
    } else {
    }
    %c8_i32 = arith.constant 8 : i32
    %3 = arith.muli %arg1, %c8_i32 : i32
    %c0_i32_1 = arith.constant 0 : i32
    %4 = arith.addi %3, %c0_i32_1 : i32
    %5 = arith.index_cast %4 : i32 to index
    %c0 = arith.constant 0 : index
    %c0_2 = arith.constant 0 : index
    %6 = vector.load %arg6[%5, %c0, %c0_2] : memref<18x18x128xbf16, #tpu.memory_space<vmem>>, vector<8x18x128xbf16>
    %7 = vector.extract_strided_slice %6 {offsets = [0, 0, 0], sizes = [8, 16, 128], strides = [1, 1, 1]} : vector<8x18x128xbf16> to vector<8x16x128xbf16>
    %8 = vector.extract_strided_slice %6 {offsets = [0, 1, 0], sizes = [8, 16, 128], strides = [1, 1, 1]} : vector<8x18x128xbf16> to vector<8x16x128xbf16>
    %9 = vector.extract_strided_slice %6 {offsets = [0, 2, 0], sizes = [8, 16, 128], strides = [1, 1, 1]} : vector<8x18x128xbf16> to vector<8x16x128xbf16>
    %10 = tpu.concatenate %7, %8, %9 in 2 : vector<8x16x128xbf16>, vector<8x16x128xbf16>, vector<8x16x128xbf16> -> vector<8x16x384xbf16>
    %11 = vector.shape_cast %10 : vector<8x16x384xbf16> to vector<128x384xbf16>
    %c0_3 = arith.constant 0 : index
    %c0_4 = arith.constant 0 : index
    %c0_5 = arith.constant 0 : index
    %12 = vector.load %arg3[%c0_3, %c0_4, %c0_5] : memref<3x384x128xbf16, #tpu.memory_space<vmem>>, vector<1x384x128xbf16>
    %13 = vector.shape_cast %12 : vector<1x384x128xbf16> to vector<384x128xbf16>
    %cst = arith.constant dense<0.000000e+00> : vector<128x128xf32>
    %14 = tpu.matmul %11, %13, %cst {dimension_numbers = #tpu.dot_dimension_numbers<[1], [0], [0], [1], [0, 0, 1, 1], [], []>} : vector<128x384xbf16>, vector<384x128xbf16>, vector<128x128xf32> -> vector<128x128xf32>
    %c1_i32 = arith.constant 1 : i32
    %15 = arith.addi %3, %c1_i32 : i32
    %16 = arith.index_cast %15 : i32 to index
    %c0_6 = arith.constant 0 : index
    %c0_7 = arith.constant 0 : index
    %17 = vector.load %arg6[%16, %c0_6, %c0_7] : memref<18x18x128xbf16, #tpu.memory_space<vmem>>, vector<8x18x128xbf16>
    %18 = vector.extract_strided_slice %17 {offsets = [0, 0, 0], sizes = [8, 16, 128], strides = [1, 1, 1]} : vector<8x18x128xbf16> to vector<8x16x128xbf16>
    %19 = vector.extract_strided_slice %17 {offsets = [0, 1, 0], sizes = [8, 16, 128], strides = [1, 1, 1]} : vector<8x18x128xbf16> to vector<8x16x128xbf16>
    %20 = vector.extract_strided_slice %17 {offsets = [0, 2, 0], sizes = [8, 16, 128], strides = [1, 1, 1]} : vector<8x18x128xbf16> to vector<8x16x128xbf16>
    %21 = tpu.concatenate %18, %19, %20 in 2 : vector<8x16x128xbf16>, vector<8x16x128xbf16>, vector<8x16x128xbf16> -> vector<8x16x384xbf16>
    %22 = vector.shape_cast %21 : vector<8x16x384xbf16> to vector<128x384xbf16>
    %c1 = arith.constant 1 : index
    %c0_8 = arith.constant 0 : index
    %c0_9 = arith.constant 0 : index
    %23 = vector.load %arg3[%c1, %c0_8, %c0_9] : memref<3x384x128xbf16, #tpu.memory_space<vmem>>, vector<1x384x128xbf16>
    %24 = vector.shape_cast %23 : vector<1x384x128xbf16> to vector<384x128xbf16>
    %cst_10 = arith.constant dense<0.000000e+00> : vector<128x128xf32>
    %25 = tpu.matmul %22, %24, %cst_10 {dimension_numbers = #tpu.dot_dimension_numbers<[1], [0], [0], [1], [0, 0, 1, 1], [], []>} : vector<128x384xbf16>, vector<384x128xbf16>, vector<128x128xf32> -> vector<128x128xf32>
    %26 = arith.addf %14, %25 : vector<128x128xf32>
    %c2_i32 = arith.constant 2 : i32
    %27 = arith.addi %3, %c2_i32 : i32
    %28 = arith.index_cast %27 : i32 to index
    %c0_11 = arith.constant 0 : index
    %c0_12 = arith.constant 0 : index
    %29 = vector.load %arg6[%28, %c0_11, %c0_12] : memref<18x18x128xbf16, #tpu.memory_space<vmem>>, vector<8x18x128xbf16>
    %30 = vector.extract_strided_slice %29 {offsets = [0, 0, 0], sizes = [8, 16, 128], strides = [1, 1, 1]} : vector<8x18x128xbf16> to vector<8x16x128xbf16>
    %31 = vector.extract_strided_slice %29 {offsets = [0, 1, 0], sizes = [8, 16, 128], strides = [1, 1, 1]} : vector<8x18x128xbf16> to vector<8x16x128xbf16>
    %32 = vector.extract_strided_slice %29 {offsets = [0, 2, 0], sizes = [8, 16, 128], strides = [1, 1, 1]} : vector<8x18x128xbf16> to vector<8x16x128xbf16>
    %33 = tpu.concatenate %30, %31, %32 in 2 : vector<8x16x128xbf16>, vector<8x16x128xbf16>, vector<8x16x128xbf16> -> vector<8x16x384xbf16>
    %34 = vector.shape_cast %33 : vector<8x16x384xbf16> to vector<128x384xbf16>
    %c2 = arith.constant 2 : index
    %c0_13 = arith.constant 0 : index
    %c0_14 = arith.constant 0 : index
    %35 = vector.load %arg3[%c2, %c0_13, %c0_14] : memref<3x384x128xbf16, #tpu.memory_space<vmem>>, vector<1x384x128xbf16>
    %36 = vector.shape_cast %35 : vector<1x384x128xbf16> to vector<384x128xbf16>
    %cst_15 = arith.constant dense<0.000000e+00> : vector<128x128xf32>
    %37 = tpu.matmul %34, %36, %cst_15 {dimension_numbers = #tpu.dot_dimension_numbers<[1], [0], [0], [1], [0, 0, 1, 1], [], []>} : vector<128x384xbf16>, vector<384x128xbf16>, vector<128x128xf32> -> vector<128x128xf32>
    %38 = arith.addf %26, %37 : vector<128x128xf32>
    %c0_16 = arith.constant 0 : index
    %c0_17 = arith.constant 0 : index
    %39 = vector.load %arg4[%c0_16, %c0_17] : memref<1x128xf32, #tpu.memory_space<vmem>>, vector<1x128xf32>
    %40 = vector.broadcast %39 : vector<1x128xf32> to vector<128x128xf32>
    %41 = arith.addf %38, %40 : vector<128x128xf32>
    %cst_18 = arith.constant 2.000000e-01 : f32
    %42 = vector.broadcast %cst_18 : f32 to vector<128x128xf32>
    %43 = arith.mulf %42, %41 : vector<128x128xf32>
    %44 = arith.maximumf %41, %43 : vector<128x128xf32>
    %45 = arith.mulf %44, %44 : vector<128x128xf32>
    %cst_19 = arith.constant dense<0.000000e+00> : vector<128xf32>
    %46 = vector.multi_reduction <add>, %45, %cst_19 [1] : vector<128x128xf32> to vector<128xf32>
    %47 = vector.shape_cast %46 : vector<128xf32> to vector<128x1xf32>
    %cst_20 = arith.constant 1.280000e+02 : f32
    %48 = vector.broadcast %cst_20 : f32 to vector<128x1xf32>
    %49 = arith.divf %47, %48 : vector<128x1xf32>
    %cst_21 = arith.constant 9.99999993E-9 : f32
    %50 = vector.broadcast %cst_21 : f32 to vector<128x1xf32>
    %51 = arith.addf %49, %50 : vector<128x1xf32>
    %52 = math.rsqrt %51 : vector<128x1xf32>
    %53 = vector.broadcast %52 : vector<128x1xf32> to vector<128x128xf32>
    %54 = arith.mulf %44, %53 : vector<128x128xf32>
    %55 = vector.shape_cast %54 : vector<128x128xf32> to vector<8x16x128xf32>
    %56 = arith.truncf %55 : vector<8x16x128xf32> to vector<8x16x128xbf16>
    %c0_22 = arith.constant 0 : index
    %c0_23 = arith.constant 0 : index
    %c0_24 = arith.constant 0 : index
    %c0_25 = arith.constant 0 : index
    %57 = vector.load %arg5[%c0_22, %c0_23, %c0_24, %c0_25] : memref<1x8x16x128xbf16, #tpu.memory_space<vmem>>, vector<1x8x16x128xbf16>
    %58 = vector.shape_cast %57 : vector<1x8x16x128xbf16> to vector<8x16x128xbf16>
    %59 = vector.shape_cast %56 : vector<8x16x128xbf16> to vector<1x8x16x128xbf16>
    tpu.vector_store %arg5[%c0_22, %c0_23, %c0_24, %c0_25], %59 {strides = array<i32>} : memref<1x8x16x128xbf16, #tpu.memory_space<vmem>>, vector<1x8x16x128xbf16>,
    return
  }
  func.func @transform_0(%arg0: i32, %arg1: i32) -> (i32, i32, i32, i32) {
    %c0_i32 = arith.constant 0 : i32
    %c0_i32_0 = arith.constant 0 : i32
    %c0_i32_1 = arith.constant 0 : i32
    %c0_i32_2 = arith.constant 0 : i32
    return %arg0, %c0_i32, %c0_i32_0, %c0_i32_1 : i32, i32, i32, i32
  }
  func.func @transform_1(%arg0: i32, %arg1: i32) -> (i32, i32, i32) {
    %c0_i32 = arith.constant 0 : i32
    %c0_i32_0 = arith.constant 0 : i32
    %c0_i32_1 = arith.constant 0 : i32
    %c0_i32_2 = arith.constant 0 : i32
    return %c0_i32, %c0_i32_0, %c0_i32_1 : i32, i32, i32
  }
  func.func @transform_2(%arg0: i32, %arg1: i32) -> (i32, i32) {
    %c0_i32 = arith.constant 0 : i32
    %c0_i32_0 = arith.constant 0 : i32
    %c0_i32_1 = arith.constant 0 : i32
    return %c0_i32, %c0_i32_0 : i32, i32
  }
  func.func @transform_3(%arg0: i32, %arg1: i32) -> (i32, i32, i32, i32) {
    %c0_i32 = arith.constant 0 : i32
    %c0_i32_0 = arith.constant 0 : i32
    %c0_i32_1 = arith.constant 0 : i32
    return %arg0, %arg1, %c0_i32, %c0_i32_0 : i32, i32, i32, i32
  }
}

module attributes {stable_mosaic.version = 11 : i64} {
  func.func @kernel(%arg0: i32, %arg1: memref<512x128xbf16, #tpu.memory_space<vmem>>, %arg2: memref<128x3xbf16, #tpu.memory_space<vmem>>, %arg3: memref<1x3xf32, #tpu.memory_space<vmem>>, %arg4: memref<512x3xf32, #tpu.memory_space<vmem>>) attributes {dimension_semantics = [#tpu.dimension_semantics<parallel>], iteration_bounds = array<i64: 1>, scalar_prefetch = 0 : i64, scratch_operands = 0 : i64, tpu.core_type = #tpu.core_type<tc>, window_params = [{transform_indices = @transform_0, window_bounds = array<i64: 512, 128>}, {pipeline_mode = #tpu.pipeline_mode<synchronous>, transform_indices = @transform_1, window_bounds = array<i64: 128, 3>}, {pipeline_mode = #tpu.pipeline_mode<synchronous>, transform_indices = @transform_2, window_bounds = array<i64: 1, 3>}, {transform_indices = @transform_3, window_bounds = array<i64: 512, 3>}]} {
    %c0 = arith.constant 0 : index
    %c0_0 = arith.constant 0 : index
    %0 = vector.load %arg1[%c0, %c0_0] : memref<512x128xbf16, #tpu.memory_space<vmem>>, vector<512x128xbf16>
    %c0_1 = arith.constant 0 : index
    %c0_2 = arith.constant 0 : index
    %1 = vector.load %arg2[%c0_1, %c0_2] : memref<128x3xbf16, #tpu.memory_space<vmem>>, vector<128x3xbf16>
    %cst = arith.constant dense<0.000000e+00> : vector<512x3xf32>
    %2 = tpu.matmul %0, %1, %cst {dimension_numbers = #tpu.dot_dimension_numbers<[1], [0], [0], [1], [0, 0, 1, 1], [], []>} : vector<512x128xbf16>, vector<128x3xbf16>, vector<512x3xf32> -> vector<512x3xf32>
    %c0_3 = arith.constant 0 : index
    %c0_4 = arith.constant 0 : index
    %3 = vector.load %arg3[%c0_3, %c0_4] : memref<1x3xf32, #tpu.memory_space<vmem>>, vector<1x3xf32>
    %4 = vector.broadcast %3 : vector<1x3xf32> to vector<512x3xf32>
    %5 = arith.addf %2, %4 : vector<512x3xf32>
    %c0_5 = arith.constant 0 : index
    %c0_6 = arith.constant 0 : index
    %6 = vector.load %arg4[%c0_5, %c0_6] : memref<512x3xf32, #tpu.memory_space<vmem>>, vector<512x3xf32>
    tpu.vector_store %arg4[%c0_5, %c0_6], %5 {strides = array<i32>} : memref<512x3xf32, #tpu.memory_space<vmem>>, vector<512x3xf32>,
    return
  }
  func.func @transform_0(%arg0: i32) -> (i32, i32) {
    %c0_i32 = arith.constant 0 : i32
    %c0_i32_0 = arith.constant 0 : i32
    return %arg0, %c0_i32 : i32, i32
  }
  func.func @transform_1(%arg0: i32) -> (i32, i32) {
    %c0_i32 = arith.constant 0 : i32
    %c0_i32_0 = arith.constant 0 : i32
    %c0_i32_1 = arith.constant 0 : i32
    return %c0_i32, %c0_i32_0 : i32, i32
  }
  func.func @transform_2(%arg0: i32) -> (i32, i32) {
    %c0_i32 = arith.constant 0 : i32
    %c0_i32_0 = arith.constant 0 : i32
    %c0_i32_1 = arith.constant 0 : i32
    return %c0_i32, %c0_i32_0 : i32, i32
  }
  func.func @transform_3(%arg0: i32) -> (i32, i32) {
    %c0_i32 = arith.constant 0 : i32
    %c0_i32_0 = arith.constant 0 : i32
    return %arg0, %c0_i32 : i32, i32
  }
}

</mosaic_0001>

<llo_original>
// kernel: progan_gen_forward.7
$region0: #{progan_gen_forward.7}
  #allocation0 [shape = 'u32[]', space=smem, size = 0x4, offset = 0x4, fixed_abs, tag = 'smem constant byte address 0x4 - core index']
  #allocation1 [shape = 'u32[72,128]{1,0:T(1,128)}', space=vmem, size = 0x9000, scoped, tag = 'internal scratch']
  %s0 = inlined_call_operand.hbm [shape: f32[2,128], index: 0, kind: input, shape index: {}]
  %s1 = inlined_call_operand.hbm [shape: bf16[128,2048], index: 1, kind: input, shape index: {}]
  %s2 = inlined_call_operand.hbm [shape: f32[1,2048], index: 2, kind: input, shape index: {}]
  %s3 = inlined_call_operand.vmem [shape: bf16[2,2048], index: 3, kind: output, shape index: {}]
  %s4 = sld [smem:[#allocation0]]
  $region34: #{progan_gen_forward.7} parent=0
    _
  %s6 = ssub.s32 1, %s4
  %s7 = scalar_select 0, %s6, %s4
  $region1: #{progan_gen_forward.7} parent=0
    #allocation2 [shape = 'u8[1024]{0}', space=vmem, size = 0x400, scoped, tag = 'input window, operand 0, single buffered']
    #allocation3 [shape = 's32[1]{0}', space=sflag, size = 0x4, scoped, tag = 'scoped memory for progan_gen_forward.7']
    #allocation4 [shape = 'u8[524288]{0}', space=vmem, size = 0x80000, scoped, tag = 'input window, operand 1, single buffered']
    #allocation5 [shape = 's32[1]{0}', space=sflag, size = 0x4, scoped, tag = 'scoped memory for progan_gen_forward.7']
    #allocation6 [shape = 'u8[8192]{0}', space=vmem, size = 0x2000, scoped, tag = 'input window, operand 2, single buffered']
    %8 = vsyncpa [#allocation3], 0
    %9 = vsyncpa [#allocation5], 0
    // Predicated region
    $region2: #{progan_gen_forward.7} parent=1 // pred_check
      _
    $region3: #{progan_gen_forward.7} parent=1 // pred_check_branch
      %11 = sbr.rel (0) target = $region5
    $region4: #{progan_gen_forward.7} parent=1 // pred_region
      %13 = vsyncadd [#allocation3], 0
      %s15 = sshll.u32 %s0, 4
      %s16 = int_to_ptr.hbm [resolvable:$true] %s15
      %s17 = sshll.u32 [#allocation2], 4
      %s18 = int_to_ptr.vmem [resolvable:$true] %s17
      %20 = dma.hbm_to_vmem [thread:$0]  %s16, 32, %s18, [#allocation3]
    $region5: #{progan_gen_forward.7} parent=1 // pred_fallthru
      _
    // Predicated region
    $region6: #{progan_gen_forward.7} parent=1 // pred_check
      _
    $region7: #{progan_gen_forward.7} parent=1 // pred_check_branch
      %22 = sbr.rel (0) target = $region9
    $region8: #{progan_gen_forward.7} parent=1 // pred_region
      %24 = vsyncadd [#allocation5], 0
      %s25 = sshll.u32 %s1, 4
      %s26 = int_to_ptr.hbm [resolvable:$true] %s25
      %s27 = sshll.u32 [#allocation4], 4
      %s28 = int_to_ptr.vmem [resolvable:$true] %s27
      %33 = dma.hbm_to_vmem [thread:$0]  %s26, 16384, %s28, [#allocation5], 1024, 1024, 64
    $region9: #{progan_gen_forward.7} parent=1 // pred_fallthru
      _
    // Predicated region
    $region10: #{progan_gen_forward.7} parent=1 // pred_check
      _
    $region11: #{progan_gen_forward.7} parent=1 // pred_check_branch
      %35 = sbr.rel (0) target = $region13
    $region12: #{progan_gen_forward.7} parent=1 // pred_region
      %37 = vsyncadd [#allocation5], 0
      %s39 = sshll.u32 %s2, 4
      %s40 = int_to_ptr.hbm [resolvable:$true] %s39
      %s41 = sshll.u32 [#allocation6], 4
      %s42 = int_to_ptr.vmem [resolvable:$true] %s41
      %44 = dma.hbm_to_vmem [thread:$0]  %s40, 256, %s42, [#allocation5]
    $region13: #{progan_gen_forward.7} parent=1 // pred_fallthru
      _
    // Predicated region
    $region14: #{progan_gen_forward.7} parent=1 // pred_check
      _
    $region15: #{progan_gen_forward.7} parent=1 // pred_check_branch
      %46 = sbr.rel (0) target = $region17
    $region16: #{progan_gen_forward.7} parent=1 // pred_region
      %48 = dma.done [#allocation3], 32
    $region17: #{progan_gen_forward.7} parent=1 // pred_fallthru
      _
    // Predicated region
    $region18: #{progan_gen_forward.7} parent=1 // pred_check
      _
    $region19: #{progan_gen_forward.7} parent=1 // pred_check_branch
      %50 = sbr.rel (0) target = $region21
    $region20: #{progan_gen_forward.7} parent=1 // pred_region
      %52 = dma.done [#allocation5], 16384
    $region21: #{progan_gen_forward.7} parent=1 // pred_fallthru
      _
    // Predicated region
    $region22: #{progan_gen_forward.7} parent=1 // pred_check
      _
    $region23: #{progan_gen_forward.7} parent=1 // pred_check_branch
      %54 = sbr.rel (0) target = $region25
    $region24: #{progan_gen_forward.7} parent=1 // pred_region
      %56 = dma.done [#allocation5], 256
    $region25: #{progan_gen_forward.7} parent=1 // pred_fallthru
      _
    %v57 = vld [vmem:[#allocation2] sm:$0x3]
    %v58 = vmul.f32 %v57, %v57
    %vm59 = vcmask 1041408
    %v60 = vsel %vm59, %v58, 0.0
    %61 = vadd.xlane.f32.xlu0 %v60
    %v62 = vpop.xlane.xlu0 %61
    %v63 = vrcp.pop 128.0
    %v64 = vmul.f32 128.0, %v63
    %v65 = vsub.f32 1.0, %v64
    %v66 = vmul.f32 %v63, %v65
    %v67 = vadd.f32 %v63, %v66
    %vm68 = vweird.f32 %v63
    %v69 = vsel %vm68, %v63, %v67
    %v70 = vmul.f32 %v62, %v69
    %v71 = vadd.f32 %v70, 1e-08
    %v72 = vrsqrt.pop %v71
    %v73 = vmul.f32 %v72, %v71
    %v74 = vmul.f32 %v73, %v72
    %v75 = vmul.f32 0.5, %v74
    %v76 = vsub.f32 1.5, %v75
    %v77 = vmul.f32 %v72, %v76
    %vm78 = vweird.f32 %v71
    %vm79 = vweird.f32 %v72
    %vm80 = vmor %vm78, %vm79
    %v81 = vsel %vm80, %v72, %v77
    %v82 = vmul.f32 %v57, %v81
    %v83 = vpack.c.bf16 %v82, %v82
    %v84 = vld [vmem:[#allocation4] sm:$0xff]
    %v85 = vld [vmem:[#allocation4 + $0x8] sm:$0xff]
    %v86 = vld [vmem:[#allocation4 + $0x10] sm:$0xff]
    %v87 = vld [vmem:[#allocation4 + $0x18] sm:$0xff]
    %v88 = vld [vmem:[#allocation4 + $0x20] sm:$0xff]
    %v89 = vld [vmem:[#allocation4 + $0x28] sm:$0xff]
    %v90 = vld [vmem:[#allocation4 + $0x30] sm:$0xff]
    %v91 = vld [vmem:[#allocation4 + $0x38] sm:$0xff]
    %v92 = vld [vmem:[#allocation4 + $0x40] sm:$0xff]
    %v93 = vld [vmem:[#allocation4 + $0x48] sm:$0xff]
    %v94 = vld [vmem:[#allocation4 + $0x50] sm:$0xff]
    %v95 = vld [vmem:[#allocation4 + $0x58] sm:$0xff]
    %v96 = vld [vmem:[#allocation4 + $0x60] sm:$0xff]
    %v97 = vld [vmem:[#allocation4 + $0x68] sm:$0xff]
    %v98 = vld [vmem:[#allocation4 + $0x70] sm:$0xff]
    %v99 = vld [vmem:[#allocation4 + $0x78] sm:$0xff]
    %v100 = vld [vmem:[#allocation4 + $0x80] sm:$0xff]
    %v101 = vld [vmem:[#allocation4 + $0x88] sm:$0xff]
    %v102 = vld [vmem:[#allocation4 + $0x90] sm:$0xff]
    %v103 = vld [vmem:[#allocation4 + $0x98] sm:$0xff]
    %v104 = vld [vmem:[#allocation4 + $0xa0] sm:$0xff]
    %v105 = vld [vmem:[#allocation4 + $0xa8] sm:$0xff]
    %v106 = vld [vmem:[#allocation4 + $0xb0] sm:$0xff]
    %v107 = vld [vmem:[#allocation4 + $0xb8] sm:$0xff]
    %v108 = vld [vmem:[#allocation4 + $0xc0] sm:$0xff]
    %v109 = vld [vmem:[#allocation4 + $0xc8] sm:$0xff]
    %v110 = vld [vmem:[#allocation4 + $0xd0] sm:$0xff]
    %v111 = vld [vmem:[#allocation4 + $0xd8] sm:$0xff]
    %v112 = vld [vmem:[#allocation4 + $0xe0] sm:$0xff]
    %v113 = vld [vmem:[#allocation4 + $0xe8] sm:$0xff]
    %v114 = vld [vmem:[#allocation4 + $0xf0] sm:$0xff]
    %v115 = vld [vmem:[#allocation4 + $0xf8] sm:$0xff]
    %v116 = vld [vmem:[#allocation4 + $0x100] sm:$0xff]
    %v117 = vld [vmem:[#allocation4 + $0x108] sm:$0xff]
    %v118 = vld [vmem:[#allocation4 + $0x110] sm:$0xff]
    %v119 = vld [vmem:[#allocation4 + $0x118] sm:$0xff]
    %v120 = vld [vmem:[#allocation4 + $0x120] sm:$0xff]
    %v121 = vld [vmem:[#allocation4 + $0x128] sm:$0xff]
    %v122 = vld [vmem:[#allocation4 + $0x130] sm:$0xff]
    %v123 = vld [vmem:[#allocation4 + $0x138] sm:$0xff]
    %v124 = vld [vmem:[#allocation4 + $0x140] sm:$0xff]
    %v125 = vld [vmem:[#allocation4 + $0x148] sm:$0xff]
    %v126 = vld [vmem:[#allocation4 + $0x150] sm:$0xff]
    %v127 = vld [vmem:[#allocation4 + $0x158] sm:$0xff]
    %v128 = vld [vmem:[#allocation4 + $0x160] sm:$0xff]
    %v129 = vld [vmem:[#allocation4 + $0x168] sm:$0xff]
    %v130 = vld [vmem:[#allocation4 + $0x170] sm:$0xff]
    %v131 = vld [vmem:[#allocation4 + $0x178] sm:$0xff]
    %v132 = vld [vmem:[#allocation4 + $0x180] sm:$0xff]
    %v133 = vld [vmem:[#allocation4 + $0x188] sm:$0xff]
    %v134 = vld [vmem:[#allocation4 + $0x190] sm:$0xff]
    %v135 = vld [vmem:[#allocation4 + $0x198] sm:$0xff]
    %v136 = vld [vmem:[#allocation4 + $0x1a0] sm:$0xff]
    %v137 = vld [vmem:[#allocation4 + $0x1a8] sm:$0xff]
    %v138 = vld [vmem:[#allocation4 + $0x1b0] sm:$0xff]
    %v139 = vld [vmem:[#allocation4 + $0x1b8] sm:$0xff]
    %v140 = vld [vmem:[#allocation4 + $0x1c0] sm:$0xff]
    %v141 = vld [vmem:[#allocation4 + $0x1c8] sm:$0xff]
    %v142 = vld [vmem:[#allocation4 + $0x1d0] sm:$0xff]
    %v143 = vld [vmem:[#allocation4 + $0x1d8] sm:$0xff]
    %v144 = vld [vmem:[#allocation4 + $0x1e0] sm:$0xff]
    %v145 = vld [vmem:[#allocation4 + $0x1e8] sm:$0xff]
    %v146 = vld [vmem:[#allocation4 + $0x1f0] sm:$0xff]
    %v147 = vld [vmem:[#allocation4 + $0x1f8] sm:$0xff]
    %v148 = vld [vmem:[#allocation4 + $0x200] sm:$0xff]
    %v149 = vld [vmem:[#allocation4 + $0x208] sm:$0xff]
    %v150 = vld [vmem:[#allocation4 + $0x210] sm:$0xff]
    %v151 = vld [vmem:[#allocation4 + $0x218] sm:$0xff]
    %v152 = vld [vmem:[#allocation4 + $0x220] sm:$0xff]
    %v153 = vld [vmem:[#allocation4 + $0x228] sm:$0xff]
    %v154 = vld [vmem:[#allocation4 + $0x230] sm:$0xff]
    %v155 = vld [vmem:[#allocation4 + $0x238] sm:$0xff]
    %v156 = vld [vmem:[#allocation4 + $0x240] sm:$0xff]
    %v157 = vld [vmem:[#allocation4 + $0x248] sm:$0xff]
    %v158 = vld [vmem:[#allocation4 + $0x250] sm:$0xff]
    %v159 = vld [vmem:[#allocation4 + $0x258] sm:$0xff]
    %v160 = vld [vmem:[#allocation4 + $0x260] sm:$0xff]
    %v161 = vld [vmem:[#allocation4 + $0x268] sm:$0xff]
    %v162 = vld [vmem:[#allocation4 + $0x270] sm:$0xff]
    %v163 = vld [vmem:[#allocation4 + $0x278] sm:$0xff]
    %v164 = vld [vmem:[#allocation4 + $0x280] sm:$0xff]
    %v165 = vld [vmem:[#allocation4 + $0x288] sm:$0xff]
    %v166 = vld [vmem:[#allocation4 + $0x290] sm:$0xff]
    %v167 = vld [vmem:[#allocation4 + $0x298] sm:$0xff]
    %v168 = vld [vmem:[#allocation4 + $0x2a0] sm:$0xff]
    %v169 = vld [vmem:[#allocation4 + $0x2a8] sm:$0xff]
    %v170 = vld [vmem:[#allocation4 + $0x2b0] sm:$0xff]
    %v171 = vld [vmem:[#allocation4 + $0x2b8] sm:$0xff]
    %v172 = vld [vmem:[#allocation4 + $0x2c0] sm:$0xff]
    %v173 = vld [vmem:[#allocation4 + $0x2c8] sm:$0xff]
    %v174 = vld [vmem:[#allocation4 + $0x2d0] sm:$0xff]
    %v175 = vld [vmem:[#allocation4 + $0x2d8] sm:$0xff]
    %v176 = vld [vmem:[#allocation4 + $0x2e0] sm:$0xff]
    %v177 = vld [vmem:[#allocation4 + $0x2e8] sm:$0xff]
    %v178 = vld [vmem:[#allocation4 + $0x2f0] sm:$0xff]
    %v179 = vld [vmem:[#allocation4 + $0x2f8] sm:$0xff]
    %v180 = vld [vmem:[#allocation4 + $0x300] sm:$0xff]
    %v181 = vld [vmem:[#allocation4 + $0x308] sm:$0xff]
    %v182 = vld [vmem:[#allocation4 + $0x310] sm:$0xff]
    %v183 = vld [vmem:[#allocation4 + $0x318] sm:$0xff]
    %v184 = vld [vmem:[#allocation4 + $0x320] sm:$0xff]
    %v185 = vld [vmem:[#allocation4 + $0x328] sm:$0xff]
    %v186 = vld [vmem:[#allocation4 + $0x330] sm:$0xff]
    %v187 = vld [vmem:[#allocation4 + $0x338] sm:$0xff]
    %v188 = vld [vmem:[#allocation4 + $0x340] sm:$0xff]
    %v189 = vld [vmem:[#allocation4 + $0x348] sm:$0xff]
    %v190 = vld [vmem:[#allocation4 + $0x350] sm:$0xff]
    %v191 = vld [vmem:[#allocation4 + $0x358] sm:$0xff]
    %v192 = vld [vmem:[#allocation4 + $0x360] sm:$0xff]
    %v193 = vld [vmem:[#allocation4 + $0x368] sm:$0xff]
    %v194 = vld [vmem:[#allocation4 + $0x370] sm:$0xff]
    %v195 = vld [vmem:[#allocation4 + $0x378] sm:$0xff]
    %v196 = vld [vmem:[#allocation4 + $0x380] sm:$0xff]
    %v197 = vld [vmem:[#allocation4 + $0x388] sm:$0xff]
    %v198 = vld [vmem:[#allocation4 + $0x390] sm:$0xff]
    %v199 = vld [vmem:[#allocation4 + $0x398] sm:$0xff]
    %v200 = vld [vmem:[#allocation4 + $0x3a0] sm:$0xff]
    %v201 = vld [vmem:[#allocation4 + $0x3a8] sm:$0xff]
    %v202 = vld [vmem:[#allocation4 + $0x3b0] sm:$0xff]
    %v203 = vld [vmem:[#allocation4 + $0x3b8] sm:$0xff]
    %v204 = vld [vmem:[#allocation4 + $0x3c0] sm:$0xff]
    %v205 = vld [vmem:[#allocation4 + $0x3c8] sm:$0xff]
    %v206 = vld [vmem:[#allocation4 + $0x3d0] sm:$0xff]
    %v207 = vld [vmem:[#allocation4 + $0x3d8] sm:$0xff]
    %v208 = vld [vmem:[#allocation4 + $0x3e0] sm:$0xff]
    %v209 = vld [vmem:[#allocation4 + $0x3e8] sm:$0xff]
    %v210 = vld [vmem:[#allocation4 + $0x3f0] sm:$0xff]
    %v211 = vld [vmem:[#allocation4 + $0x3f8] sm:$0xff]
    %v212 = vld [vmem:[#allocation6] sm:$0xff]
    %v213 = vld [vmem:[#allocation6 + $0x8] sm:$0xff]
    %v216 = vperm.slane %v212, 0
    %v217 = vperm.slane %v212, 1
    %v218 = vperm.slane %v212, 2
    %v219 = vperm.slane %v212, 3
    %v220 = vperm.slane %v212, 4
    %v221 = vperm.slane %v212, 5
    %v222 = vperm.slane %v212, 6
    %v223 = vperm.slane %v212, 7
    %v224 = vperm.slane %v213, 0
    %v225 = vperm.slane %v213, 1
    %v226 = vperm.slane %v213, 2
    %v227 = vperm.slane %v213, 3
    %v228 = vperm.slane %v213, 4
    %v229 = vperm.slane %v213, 5
    %v230 = vperm.slane %v213, 6
    %v231 = vperm.slane %v213, 7
    %v376 = vunpack.c.l.b16 %v84
    %v377 = vunpack.c.h.b16 %v84
    %v378 = vunpack.c.l.b16 %v85
    %v379 = vunpack.c.h.b16 %v85
    %v380 = vunpack.c.l.b16 %v86
    %v381 = vunpack.c.h.b16 %v86
    %v382 = vunpack.c.l.b16 %v87
    %v383 = vunpack.c.h.b16 %v87
    %v384 = vunpack.c.l.b16 %v88
    %v385 = vunpack.c.h.b16 %v88
    %v386 = vunpack.c.l.b16 %v89
    %v387 = vunpack.c.h.b16 %v89
    %v388 = vunpack.c.l.b16 %v90
    %v389 = vunpack.c.h.b16 %v90
    %v390 = vunpack.c.l.b16 %v91
    %v391 = vunpack.c.h.b16 %v91
    %v392 = vunpack.c.l.b16 %v92
    %v393 = vunpack.c.h.b16 %v92
    %v394 = vunpack.c.l.b16 %v93
    %v395 = vunpack.c.h.b16 %v93
    %v396 = vunpack.c.l.b16 %v94
    %v397 = vunpack.c.h.b16 %v94
    %v398 = vunpack.c.l.b16 %v95
    %v399 = vunpack.c.h.b16 %v95
    %v400 = vunpack.c.l.b16 %v96
    %v401 = vunpack.c.h.b16 %v96
    %v402 = vunpack.c.l.b16 %v97
    %v403 = vunpack.c.h.b16 %v97
    %v404 = vunpack.c.l.b16 %v98
    %v405 = vunpack.c.h.b16 %v98
    %v406 = vunpack.c.l.b16 %v99
    %v407 = vunpack.c.h.b16 %v99
    %v408 = vunpack.c.l.b16 %v100
    %v409 = vunpack.c.h.b16 %v100
    %v410 = vunpack.c.l.b16 %v101
    %v411 = vunpack.c.h.b16 %v101
    %v412 = vunpack.c.l.b16 %v102
    %v413 = vunpack.c.h.b16 %v102
    %v414 = vunpack.c.l.b16 %v103
    %v415 = vunpack.c.h.b16 %v103
    %v416 = vunpack.c.l.b16 %v104
    %v417 = vunpack.c.h.b16 %v104
    %v418 = vunpack.c.l.b16 %v105
    %v419 = vunpack.c.h.b16 %v105
    %v420 = vunpack.c.l.b16 %v106
    %v421 = vunpack.c.h.b16 %v106
    %v422 = vunpack.c.l.b16 %v107
    %v423 = vunpack.c.h.b16 %v107
    %v424 = vunpack.c.l.b16 %v108
    %v425 = vunpack.c.h.b16 %v108
    %v426 = vunpack.c.l.b16 %v109
    %v427 = vunpack.c.h.b16 %v109
    %v428 = vunpack.c.l.b16 %v110
    %v429 = vunpack.c.h.b16 %v110
    %v430 = vunpack.c.l.b16 %v111
    %v431 = vunpack.c.h.b16 %v111
    %v432 = vunpack.c.l.b16 %v112
    %v433 = vunpack.c.h.b16 %v112
    %v434 = vunpack.c.l.b16 %v113
    %v435 = vunpack.c.h.b16 %v113
    %v436 = vunpack.c.l.b16 %v114
    %v437 = vunpack.c.h.b16 %v114
    %v438 = vunpack.c.l.b16 %v115
    %v439 = vunpack.c.h.b16 %v115
    %v440 = vunpack.c.l.b16 %v116
    %v441 = vunpack.c.h.b16 %v116
    %v442 = vunpack.c.l.b16 %v117
    %v443 = vunpack.c.h.b16 %v117
    %v444 = vunpack.c.l.b16 %v118
    %v445 = vunpack.c.h.b16 %v118
    %v446 = vunpack.c.l.b16 %v119
    %v447 = vunpack.c.h.b16 %v119
    %v448 = vunpack.c.l.b16 %v120
    %v449 = vunpack.c.h.b16 %v120
    %v450 = vunpack.c.l.b16 %v121
    %v451 = vunpack.c.h.b16 %v121
    %v452 = vunpack.c.l.b16 %v122
    %v453 = vunpack.c.h.b16 %v122
    %v454 = vunpack.c.l.b16 %v123
    %v455 = vunpack.c.h.b16 %v123
    %v456 = vunpack.c.l.b16 %v124
    %v457 = vunpack.c.h.b16 %v124
    %v458 = vunpack.c.l.b16 %v125
    %v459 = vunpack.c.h.b16 %v125
    %v460 = vunpack.c.l.b16 %v126
    %v461 = vunpack.c.h.b16 %v126
    %v462 = vunpack.c.l.b16 %v127
    %v463 = vunpack.c.h.b16 %v127
    %v464 = vunpack.c.l.b16 %v128
    %v465 = vunpack.c.h.b16 %v128
    %v466 = vunpack.c.l.b16 %v129
    %v467 = vunpack.c.h.b16 %v129
    %v468 = vunpack.c.l.b16 %v130
    %v469 = vunpack.c.h.b16 %v130
    %v470 = vunpack.c.l.b16 %v131
    %v471 = vunpack.c.h.b16 %v131
    %v472 = vunpack.c.l.b16 %v132
    %v473 = vunpack.c.h.b16 %v132
    %v474 = vunpack.c.l.b16 %v133
    %v475 = vunpack.c.h.b16 %v133
    %v476 = vunpack.c.l.b16 %v134
    %v477 = vunpack.c.h.b16 %v134
    %v478 = vunpack.c.l.b16 %v135
    %v479 = vunpack.c.h.b16 %v135
    %v480 = vunpack.c.l.b16 %v136
    %v481 = vunpack.c.h.b16 %v136
    %v482 = vunpack.c.l.b16 %v137
    %v483 = vunpack.c.h.b16 %v137
    %v484 = vunpack.c.l.b16 %v138
    %v485 = vunpack.c.h.b16 %v138
    %v486 = vunpack.c.l.b16 %v139
    %v487 = vunpack.c.h.b16 %v139
    %v488 = vunpack.c.l.b16 %v140
    %v489 = vunpack.c.h.b16 %v140
    %v490 = vunpack.c.l.b16 %v141
    %v491 = vunpack.c.h.b16 %v141
    %v492 = vunpack.c.l.b16 %v142
    %v493 = vunpack.c.h.b16 %v142
    %v494 = vunpack.c.l.b16 %v143
    %v495 = vunpack.c.h.b16 %v143
    %v496 = vunpack.c.l.b16 %v144
    %v497 = vunpack.c.h.b16 %v144
    %v498 = vunpack.c.l.b16 %v145
    %v499 = vunpack.c.h.b16 %v145
    %v500 = vunpack.c.l.b16 %v146
    %v501 = vunpack.c.h.b16 %v146
    %v502 = vunpack.c.l.b16 %v147
    %v503 = vunpack.c.h.b16 %v147
    %v504 = vunpack.c.l.b16 %v148
    %v505 = vunpack.c.h.b16 %v148
    %v506 = vunpack.c.l.b16 %v149
    %v507 = vunpack.c.h.b16 %v149
    %v508 = vunpack.c.l.b16 %v150
    %v509 = vunpack.c.h.b16 %v150
    %v510 = vunpack.c.l.b16 %v151
    %v511 = vunpack.c.h.b16 %v151
    %v512 = vunpack.c.l.b16 %v152
    %v513 = vunpack.c.h.b16 %v152
    %v514 = vunpack.c.l.b16 %v153
    %v515 = vunpack.c.h.b16 %v153
    %v516 = vunpack.c.l.b16 %v154
    %v517 = vunpack.c.h.b16 %v154
    %v518 = vunpack.c.l.b16 %v155
    %v519 = vunpack.c.h.b16 %v155
    %v520 = vunpack.c.l.b16 %v156
    %v521 = vunpack.c.h.b16 %v156
    %v522 = vunpack.c.l.b16 %v157
    %v523 = vunpack.c.h.b16 %v157
    %v524 = vunpack.c.l.b16 %v158
    %v525 = vunpack.c.h.b16 %v158
    %v526 = vunpack.c.l.b16 %v159
    %v527 = vunpack.c.h.b16 %v159
    %v528 = vunpack.c.l.b16 %v160
    %v529 = vunpack.c.h.b16 %v160
    %v530 = vunpack.c.l.b16 %v161
    %v531 = vunpack.c.h.b16 %v161
    %v532 = vunpack.c.l.b16 %v162
    %v533 = vunpack.c.h.b16 %v162
    %v534 = vunpack.c.l.b16 %v163
    %v535 = vunpack.c.h.b16 %v163
    %v536 = vunpack.c.l.b16 %v164
    %v537 = vunpack.c.h.b16 %v164
    %v538 = vunpack.c.l.b16 %v165
    %v539 = vunpack.c.h.b16 %v165
    %v540 = vunpack.c.l.b16 %v166
    %v541 = vunpack.c.h.b16 %v166
    %v542 = vunpack.c.l.b16 %v167
    %v543 = vunpack.c.h.b16 %v167
    %v544 = vunpack.c.l.b16 %v168
    %v545 = vunpack.c.h.b16 %v168
    %v546 = vunpack.c.l.b16 %v169
    %v547 = vunpack.c.h.b16 %v169
    %v548 = vunpack.c.l.b16 %v170
    %v549 = vunpack.c.h.b16 %v170
    %v550 = vunpack.c.l.b16 %v171
    %v551 = vunpack.c.h.b16 %v171
    %v552 = vunpack.c.l.b16 %v172
    %v553 = vunpack.c.h.b16 %v172
    %v554 = vunpack.c.l.b16 %v173
    %v555 = vunpack.c.h.b16 %v173
    %v556 = vunpack.c.l.b16 %v174
    %v557 = vunpack.c.h.b16 %v174
    %v558 = vunpack.c.l.b16 %v175
    %v559 = vunpack.c.h.b16 %v175
    %v560 = vunpack.c.l.b16 %v176
    %v561 = vunpack.c.h.b16 %v176
    %v562 = vunpack.c.l.b16 %v177
    %v563 = vunpack.c.h.b16 %v177
    %v564 = vunpack.c.l.b16 %v178
    %v565 = vunpack.c.h.b16 %v178
    %v566 = vunpack.c.l.b16 %v179
    %v567 = vunpack.c.h.b16 %v179
    %v568 = vunpack.c.l.b16 %v180
    %v569 = vunpack.c.h.b16 %v180
    %v570 = vunpack.c.l.b16 %v181
    %v571 = vunpack.c.h.b16 %v181
    %v572 = vunpack.c.l.b16 %v182
    %v573 = vunpack.c.h.b16 %v182
    %v574 = vunpack.c.l.b16 %v183
    %v575 = vunpack.c.h.b16 %v183
    %v576 = vunpack.c.l.b16 %v184
    %v577 = vunpack.c.h.b16 %v184
    %v578 = vunpack.c.l.b16 %v185
    %v579 = vunpack.c.h.b16 %v185
    %v580 = vunpack.c.l.b16 %v186
    %v581 = vunpack.c.h.b16 %v186
    %v582 = vunpack.c.l.b16 %v187
    %v583 = vunpack.c.h.b16 %v187
    %v584 = vunpack.c.l.b16 %v188
    %v585 = vunpack.c.h.b16 %v188
    %v586 = vunpack.c.l.b16 %v189
    %v587 = vunpack.c.h.b16 %v189
    %v588 = vunpack.c.l.b16 %v190
    %v589 = vunpack.c.h.b16 %v190
    %v590 = vunpack.c.l.b16 %v191
    %v591 = vunpack.c.h.b16 %v191
    %v592 = vunpack.c.l.b16 %v192
    %v593 = vunpack.c.h.b16 %v192
    %v594 = vunpack.c.l.b16 %v193
    %v595 = vunpack.c.h.b16 %v193
    %v596 = vunpack.c.l.b16 %v194
    %v597 = vunpack.c.h.b16 %v194
    %v598 = vunpack.c.l.b16 %v195
    %v599 = vunpack.c.h.b16 %v195
    %v600 = vunpack.c.l.b16 %v196
    %v601 = vunpack.c.h.b16 %v196
    %v602 = vunpack.c.l.b16 %v197
    %v603 = vunpack.c.h.b16 %v197
    %v604 = vunpack.c.l.b16 %v198
    %v605 = vunpack.c.h.b16 %v198
    %v606 = vunpack.c.l.b16 %v199
    %v607 = vunpack.c.h.b16 %v199
    %v608 = vunpack.c.l.b16 %v200
    %v609 = vunpack.c.h.b16 %v200
    %v610 = vunpack.c.l.b16 %v201
    %v611 = vunpack.c.h.b16 %v201
    %v612 = vunpack.c.l.b16 %v202
    %v613 = vunpack.c.h.b16 %v202
    %v614 = vunpack.c.l.b16 %v203
    %v615 = vunpack.c.h.b16 %v203
    %v616 = vunpack.c.l.b16 %v204
    %v617 = vunpack.c.h.b16 %v204
    %v618 = vunpack.c.l.b16 %v205
    %v619 = vunpack.c.h.b16 %v205
    %v620 = vunpack.c.l.b16 %v206
    %v621 = vunpack.c.h.b16 %v206
    %v622 = vunpack.c.l.b16 %v207
    %v623 = vunpack.c.h.b16 %v207
    %v624 = vunpack.c.l.b16 %v208
    %v625 = vunpack.c.h.b16 %v208
    %v626 = vunpack.c.l.b16 %v209
    %v627 = vunpack.c.h.b16 %v209
    %v628 = vunpack.c.l.b16 %v210
    %v629 = vunpack.c.h.b16 %v210
    %v630 = vunpack.c.l.b16 %v211
    %v631 = vunpack.c.h.b16 %v211
    %v632 = vpack.c.b16 %v392, %v376
    %v633 = vpack.c.b16 %v393, %v377
    %v634 = vpack.c.b16 %v394, %v378
    %v635 = vpack.c.b16 %v395, %v379
    %v636 = vpack.c.b16 %v396, %v380
    %v637 = vpack.c.b16 %v397, %v381
    %v638 = vpack.c.b16 %v398, %v382
    %v639 = vpack.c.b16 %v399, %v383
    %v640 = vpack.c.b16 %v400, %v384
    %v641 = vpack.c.b16 %v401, %v385
    %v642 = vpack.c.b16 %v402, %v386
    %v643 = vpack.c.b16 %v403, %v387
    %v644 = vpack.c.b16 %v404, %v388
    %v645 = vpack.c.b16 %v405, %v389
    %v646 = vpack.c.b16 %v406, %v390
    %v647 = vpack.c.b16 %v407, %v391
    %v648 = vpack.c.b16 %v424, %v408
    %v649 = vpack.c.b16 %v425, %v409
    %v650 = vpack.c.b16 %v426, %v410
    %v651 = vpack.c.b16 %v427, %v411
    %v652 = vpack.c.b16 %v428, %v412
    %v653 = vpack.c.b16 %v429, %v413
    %v654 = vpack.c.b16 %v430, %v414
    %v655 = vpack.c.b16 %v431, %v415
    %v656 = vpack.c.b16 %v432, %v416
    %v657 = vpack.c.b16 %v433, %v417
    %v658 = vpack.c.b16 %v434, %v418
    %v659 = vpack.c.b16 %v435, %v419
    %v660 = vpack.c.b16 %v436, %v420
    %v661 = vpack.c.b16 %v437, %v421
    %v662 = vpack.c.b16 %v438, %v422
    %v663 = vpack.c.b16 %v439, %v423
    %v664 = vpack.c.b16 %v456, %v440
    %v665 = vpack.c.b16 %v457, %v441
    %v666 = vpack.c.b16 %v458, %v442
    %v667 = vpack.c.b16 %v459, %v443
    %v668 = vpack.c.b16 %v460, %v444
    %v669 = vpack.c.b16 %v461, %v445
    %v670 = vpack.c.b16 %v462, %v446
    %v671 = vpack.c.b16 %v463, %v447
    %v672 = vpack.c.b16 %v464, %v448
    %v673 = vpack.c.b16 %v465, %v449
    %v674 = vpack.c.b16 %v466, %v450
    %v675 = vpack.c.b16 %v467, %v451
    %v676 = vpack.c.b16 %v468, %v452
    %v677 = vpack.c.b16 %v469, %v453
    %v678 = vpack.c.b16 %v470, %v454
    %v679 = vpack.c.b16 %v471, %v455
    %v680 = vpack.c.b16 %v488, %v472
    %v681 = vpack.c.b16 %v489, %v473
    %v682 = vpack.c.b16 %v490, %v474
    %v683 = vpack.c.b16 %v491, %v475
    %v684 = vpack.c.b16 %v492, %v476
    %v685 = vpack.c.b16 %v493, %v477
    %v686 = vpack.c.b16 %v494, %v478
    %v687 = vpack.c.b16 %v495, %v479
    %v688 = vpack.c.b16 %v496, %v480
    %v689 = vpack.c.b16 %v497, %v481
    %v690 = vpack.c.b16 %v498, %v482
    %v691 = vpack.c.b16 %v499, %v483
    %v692 = vpack.c.b16 %v500, %v484
    %v693 = vpack.c.b16 %v501, %v485
    %v694 = vpack.c.b16 %v502, %v486
    %v695 = vpack.c.b16 %v503, %v487
    %v696 = vpack.c.b16 %v520, %v504
    %v697 = vpack.c.b16 %v521, %v505
    %v698 = vpack.c.b16 %v522, %v506
    %v699 = vpack.c.b16 %v523, %v507
    %v700 = vpack.c.b16 %v524, %v508
    %v701 = vpack.c.b16 %v525, %v509
    %v702 = vpack.c.b16 %v526, %v510
    %v703 = vpack.c.b16 %v527, %v511
    %v704 = vpack.c.b16 %v528, %v512
    %v705 = vpack.c.b16 %v529, %v513
    %v706 = vpack.c.b16 %v530, %v514
    %v707 = vpack.c.b16 %v531, %v515
    %v708 = vpack.c.b16 %v532, %v516
    %v709 = vpack.c.b16 %v533, %v517
    %v710 = vpack.c.b16 %v534, %v518
    %v711 = vpack.c.b16 %v535, %v519
    %v712 = vpack.c.b16 %v552, %v536
    %v713 = vpack.c.b16 %v553, %v537
    %v714 = vpack.c.b16 %v554, %v538
    %v715 = vpack.c.b16 %v555, %v539
    %v716 = vpack.c.b16 %v556, %v540
    %v717 = vpack.c.b16 %v557, %v541
    %v718 = vpack.c.b16 %v558, %v542
    %v719 = vpack.c.b16 %v559, %v543
    %v720 = vpack.c.b16 %v560, %v544
    %v721 = vpack.c.b16 %v561, %v545
    %v722 = vpack.c.b16 %v562, %v546
    %v723 = vpack.c.b16 %v563, %v547
    %v724 = vpack.c.b16 %v564, %v548
    %v725 = vpack.c.b16 %v565, %v549
    %v726 = vpack.c.b16 %v566, %v550
    %v727 = vpack.c.b16 %v567, %v551
    %v728 = vpack.c.b16 %v584, %v568
    %v729 = vpack.c.b16 %v585, %v569
    %v730 = vpack.c.b16 %v586, %v570
    %v731 = vpack.c.b16 %v587, %v571
    %v732 = vpack.c.b16 %v588, %v572
    %v733 = vpack.c.b16 %v589, %v573
    %v734 = vpack.c.b16 %v590, %v574
    %v735 = vpack.c.b16 %v591, %v575
    %v736 = vpack.c.b16 %v592, %v576
    %v737 = vpack.c.b16 %v593, %v577
    %v738 = vpack.c.b16 %v594, %v578
    %v739 = vpack.c.b16 %v595, %v579
    %v740 = vpack.c.b16 %v596, %v580
    %v741 = vpack.c.b16 %v597, %v581
    %v742 = vpack.c.b16 %v598, %v582
    %v743 = vpack.c.b16 %v599, %v583
    %v744 = vpack.c.b16 %v616, %v600
    %v745 = vpack.c.b16 %v617, %v601
    %v746 = vpack.c.b16 %v618, %v602
    %v747 = vpack.c.b16 %v619, %v603
    %v748 = vpack.c.b16 %v620, %v604
    %v749 = vpack.c.b16 %v621, %v605
    %v750 = vpack.c.b16 %v622, %v606
    %v751 = vpack.c.b16 %v623, %v607
    %v752 = vpack.c.b16 %v624, %v608
    %v753 = vpack.c.b16 %v625, %v609
    %v754 = vpack.c.b16 %v626, %v610
    %v755 = vpack.c.b16 %v627, %v611
    %v756 = vpack.c.b16 %v628, %v612
    %v757 = vpack.c.b16 %v629, %v613
    %v758 = vpack.c.b16 %v630, %v614
    %v759 = vpack.c.b16 %v631, %v615
    %888 = vmatpush.bf16.msra.mxu0 %v744
    %889 = vmatpush.bf16.msra.mxu0 %v728
    %890 = vmatpush.bf16.msra.mxu0 %v712
    %891 = vmatpush.bf16.msra.mxu0 %v696
    %892 = vmatpush.bf16.msra.mxu0 %v680
    %893 = vmatpush.bf16.msra.mxu0 %v664
    %894 = vmatpush.bf16.msra.mxu0 %v648
    %895 = vmatpush.bf16.msra.mxu0 %v632
    %896 = vmatmul.bf16.gmra.mxu0 %v83
    %v897 = vpop.f32.mrf.mxu0
    %v898 = vadd.f32 %v216, %v897
    %v899 = vpop.f32.mrf.mxu0
    %900 = vdwg.mxu0
    %901 = vmatpush.bf16.msra.mxu0 %v745
    %902 = vmatpush.bf16.msra.mxu0 %v729
    %903 = vmatpush.bf16.msra.mxu0 %v713
    %904 = vmatpush.bf16.msra.mxu0 %v697
    %905 = vmatpush.bf16.msra.mxu0 %v681
    %906 = vmatpush.bf16.msra.mxu0 %v665
    %907 = vmatpush.bf16.msra.mxu0 %v649
    %908 = vmatpush.bf16.msra.mxu0 %v633
    %909 = vmatmul.bf16.gmra.mxu0 %v83
    %v910 = vpop.f32.mrf.mxu0
    %v911 = vadd.f32 %v217, %v910
    %v912 = vpop.f32.mrf.mxu0
    %913 = vdwg.mxu0
    %914 = vmatpush.bf16.msra.mxu0 %v746
    %915 = vmatpush.bf16.msra.mxu0 %v730
    %916 = vmatpush.bf16.msra.mxu0 %v714
    %917 = vmatpush.bf16.msra.mxu0 %v698
    %918 = vmatpush.bf16.msra.mxu0 %v682
    %919 = vmatpush.bf16.msra.mxu0 %v666
    %920 = vmatpush.bf16.msra.mxu0 %v650
    %921 = vmatpush.bf16.msra.mxu0 %v634
    %922 = vmatmul.bf16.gmra.mxu0 %v83
    %v923 = vpop.f32.mrf.mxu0
    %v924 = vadd.f32 %v218, %v923
    %v925 = vpop.f32.mrf.mxu0
    %926 = vdwg.mxu0
    %927 = vmatpush.bf16.msra.mxu0 %v747
    %928 = vmatpush.bf16.msra.mxu0 %v731
    %929 = vmatpush.bf16.msra.mxu0 %v715
    %930 = vmatpush.bf16.msra.mxu0 %v699
    %931 = vmatpush.bf16.msra.mxu0 %v683
    %932 = vmatpush.bf16.msra.mxu0 %v667
    %933 = vmatpush.bf16.msra.mxu0 %v651
    %934 = vmatpush.bf16.msra.mxu0 %v635
    %935 = vmatmul.bf16.gmra.mxu0 %v83
    %v936 = vpop.f32.mrf.mxu0
    %v937 = vadd.f32 %v219, %v936
    %v938 = vpop.f32.mrf.mxu0
    %939 = vdwg.mxu0
    %940 = vmatpush.bf16.msra.mxu0 %v748
    %941 = vmatpush.bf16.msra.mxu0 %v732
    %942 = vmatpush.bf16.msra.mxu0 %v716
    %943 = vmatpush.bf16.msra.mxu0 %v700
    %944 = vmatpush.bf16.msra.mxu0 %v684
    %945 = vmatpush.bf16.msra.mxu0 %v668
    %946 = vmatpush.bf16.msra.mxu0 %v652
    %947 = vmatpush.bf16.msra.mxu0 %v636
    %948 = vmatmul.bf16.gmra.mxu0 %v83
    %v949 = vpop.f32.mrf.mxu0
    %v950 = vadd.f32 %v220, %v949
    %v951 = vpop.f32.mrf.mxu0
    %952 = vdwg.mxu0
    %953 = vmatpush.bf16.msra.mxu0 %v749
    %954 = vmatpush.bf16.msra.mxu0 %v733
    %955 = vmatpush.bf16.msra.mxu0 %v717
    %956 = vmatpush.bf16.msra.mxu0 %v701
    %957 = vmatpush.bf16.msra.mxu0 %v685
    %958 = vmatpush.bf16.msra.mxu0 %v669
    %959 = vmatpush.bf16.msra.mxu0 %v653
    %960 = vmatpush.bf16.msra.mxu0 %v637
    %961 = vmatmul.bf16.gmra.mxu0 %v83
    %v962 = vpop.f32.mrf.mxu0
    %v963 = vadd.f32 %v221, %v962
    %v964 = vpop.f32.mrf.mxu0
    %965 = vdwg.mxu0
    %966 = vmatpush.bf16.msra.mxu0 %v750
    %967 = vmatpush.bf16.msra.mxu0 %v734
    %968 = vmatpush.bf16.msra.mxu0 %v718
    %969 = vmatpush.bf16.msra.mxu0 %v702
    %970 = vmatpush.bf16.msra.mxu0 %v686
    %971 = vmatpush.bf16.msra.mxu0 %v670
    %972 = vmatpush.bf16.msra.mxu0 %v654
    %973 = vmatpush.bf16.msra.mxu0 %v638
    %974 = vmatmul.bf16.gmra.mxu0 %v83
    %v975 = vpop.f32.mrf.mxu0
    %v976 = vadd.f32 %v222, %v975
    %v977 = vpop.f32.mrf.mxu0
    %978 = vdwg.mxu0
    %979 = vmatpush.bf16.msra.mxu0 %v751
    %980 = vmatpush.bf16.msra.mxu0 %v735
    %981 = vmatpush.bf16.msra.mxu0 %v719
    %982 = vmatpush.bf16.msra.mxu0 %v703
    %983 = vmatpush.bf16.msra.mxu0 %v687
    %984 = vmatpush.bf16.msra.mxu0 %v671
    %985 = vmatpush.bf16.msra.mxu0 %v655
    %986 = vmatpush.bf16.msra.mxu0 %v639
    %987 = vmatmul.bf16.gmra.mxu0 %v83
    %v988 = vpop.f32.mrf.mxu0
    %v989 = vadd.f32 %v223, %v988
    %v990 = vpop.f32.mrf.mxu0
    %991 = vdwg.mxu0
    %992 = vmatpush.bf16.msra.mxu0 %v752
    %993 = vmatpush.bf16.msra.mxu0 %v736
    %994 = vmatpush.bf16.msra.mxu0 %v720
    %995 = vmatpush.bf16.msra.mxu0 %v704
    %996 = vmatpush.bf16.msra.mxu0 %v688
    %997 = vmatpush.bf16.msra.mxu0 %v672
    %998 = vmatpush.bf16.msra.mxu0 %v656
    %999 = vmatpush.bf16.msra.mxu0 %v640
    %1000 = vmatmul.bf16.gmra.mxu0 %v83
    %v1001 = vpop.f32.mrf.mxu0
    %v1002 = vadd.f32 %v224, %v1001
    %v1003 = vpop.f32.mrf.mxu0
    %1004 = vdwg.mxu0
    %1005 = vmatpush.bf16.msra.mxu0 %v753
    %1006 = vmatpush.bf16.msra.mxu0 %v737
    %1007 = vmatpush.bf16.msra.mxu0 %v721
    %1008 = vmatpush.bf16.msra.mxu0 %v705
    %1009 = vmatpush.bf16.msra.mxu0 %v689
    %1010 = vmatpush.bf16.msra.mxu0 %v673
    %1011 = vmatpush.bf16.msra.mxu0 %v657
    %1012 = vmatpush.bf16.msra.mxu0 %v641
    %1013 = vmatmul.bf16.gmra.mxu0 %v83
    %v1014 = vpop.f32.mrf.mxu0
    %v1015 = vadd.f32 %v225, %v1014
    %v1016 = vpop.f32.mrf.mxu0
    %1017 = vdwg.mxu0
    %1018 = vmatpush.bf16.msra.mxu0 %v754
    %1019 = vmatpush.bf16.msra.mxu0 %v738
    %1020 = vmatpush.bf16.msra.mxu0 %v722
    %1021 = vmatpush.bf16.msra.mxu0 %v706
    %1022 = vmatpush.bf16.msra.mxu0 %v690
    %1023 = vmatpush.bf16.msra.mxu0 %v674
    %1024 = vmatpush.bf16.msra.mxu0 %v658
    %1025 = vmatpush.bf16.msra.mxu0 %v642
    %1026 = vmatmul.bf16.gmra.mxu0 %v83
    %v1027 = vpop.f32.mrf.mxu0
    %v1028 = vadd.f32 %v226, %v1027
    %v1029 = vpop.f32.mrf.mxu0
    %1030 = vdwg.mxu0
    %1031 = vmatpush.bf16.msra.mxu0 %v755
    %1032 = vmatpush.bf16.msra.mxu0 %v739
    %1033 = vmatpush.bf16.msra.mxu0 %v723
    %1034 = vmatpush.bf16.msra.mxu0 %v707
    %1035 = vmatpush.bf16.msra.mxu0 %v691
    %1036 = vmatpush.bf16.msra.mxu0 %v675
    %1037 = vmatpush.bf16.msra.mxu0 %v659
    %1038 = vmatpush.bf16.msra.mxu0 %v643
    %1039 = vmatmul.bf16.gmra.mxu0 %v83
    %v1040 = vpop.f32.mrf.mxu0
    %v1041 = vadd.f32 %v227, %v1040
    %v1042 = vpop.f32.mrf.mxu0
    %1043 = vdwg.mxu0
    %1044 = vmatpush.bf16.msra.mxu0 %v756
    %1045 = vmatpush.bf16.msra.mxu0 %v740
    %1046 = vmatpush.bf16.msra.mxu0 %v724
    %1047 = vmatpush.bf16.msra.mxu0 %v708
    %1048 = vmatpush.bf16.msra.mxu0 %v692
    %1049 = vmatpush.bf16.msra.mxu0 %v676
    %1050 = vmatpush.bf16.msra.mxu0 %v660
    %1051 = vmatpush.bf16.msra.mxu0 %v644
    %1052 = vmatmul.bf16.gmra.mxu0 %v83
    %v1053 = vpop.f32.mrf.mxu0
    %v1054 = vadd.f32 %v228, %v1053
    %v1055 = vpop.f32.mrf.mxu0
    %1056 = vdwg.mxu0
    %1057 = vmatpush.bf16.msra.mxu0 %v757
    %1058 = vmatpush.bf16.msra.mxu0 %v741
    %1059 = vmatpush.bf16.msra.mxu0 %v725
    %1060 = vmatpush.bf16.msra.mxu0 %v709
    %1061 = vmatpush.bf16.msra.mxu0 %v693
    %1062 = vmatpush.bf16.msra.mxu0 %v677
    %1063 = vmatpush.bf16.msra.mxu0 %v661
    %1064 = vmatpush.bf16.msra.mxu0 %v645
    %1065 = vmatmul.bf16.gmra.mxu0 %v83
    %v1066 = vpop.f32.mrf.mxu0
    %v1067 = vadd.f32 %v229, %v1066
    %v1068 = vpop.f32.mrf.mxu0
    %1069 = vdwg.mxu0
    %1070 = vmatpush.bf16.msra.mxu0 %v758
    %1071 = vmatpush.bf16.msra.mxu0 %v742
    %1072 = vmatpush.bf16.msra.mxu0 %v726
    %1073 = vmatpush.bf16.msra.mxu0 %v710
    %1074 = vmatpush.bf16.msra.mxu0 %v694
    %1075 = vmatpush.bf16.msra.mxu0 %v678
    %1076 = vmatpush.bf16.msra.mxu0 %v662
    %1077 = vmatpush.bf16.msra.mxu0 %v646
    %1078 = vmatmul.bf16.gmra.mxu0 %v83
    %v1079 = vpop.f32.mrf.mxu0
    %v1080 = vadd.f32 %v230, %v1079
    %v1081 = vpop.f32.mrf.mxu0
    %1082 = vdwg.mxu0
    %1083 = vmatpush.bf16.msra.mxu0 %v759
    %1084 = vmatpush.bf16.msra.mxu0 %v743
    %1085 = vmatpush.bf16.msra.mxu0 %v727
    %1086 = vmatpush.bf16.msra.mxu0 %v711
    %1087 = vmatpush.bf16.msra.mxu0 %v695
    %1088 = vmatpush.bf16.msra.mxu0 %v679
    %1089 = vmatpush.bf16.msra.mxu0 %v663
    %1090 = vmatpush.bf16.msra.mxu0 %v647
    %1091 = vmatmul.bf16.gmra.mxu0 %v83
    %v1092 = vpop.f32.mrf.mxu0
    %v1093 = vadd.f32 %v231, %v1092
    %v1094 = vpop.f32.mrf.mxu0
    %1095 = vdwg.mxu0
    %v1096 = vmul.f32 %v898, 0.2
    %v1097 = vmul.f32 %v911, 0.2
    %v1098 = vmul.f32 %v924, 0.2
    %v1099 = vmul.f32 %v937, 0.2
    %v1100 = vmul.f32 %v950, 0.2
    %v1101 = vmul.f32 %v963, 0.2
    %v1102 = vmul.f32 %v976, 0.2
    %v1103 = vmul.f32 %v989, 0.2
    %v1104 = vmul.f32 %v1002, 0.2
    %v1105 = vmul.f32 %v1015, 0.2
    %v1106 = vmul.f32 %v1028, 0.2
    %v1107 = vmul.f32 %v1041, 0.2
    %v1108 = vmul.f32 %v1054, 0.2
    %v1109 = vmul.f32 %v1067, 0.2
    %v1110 = vmul.f32 %v1080, 0.2
    %v1111 = vmul.f32 %v1093, 0.2
    %v1112 = vmax.f32 %v898, %v1096
    %v1113 = vmax.f32 %v911, %v1097
    %v1114 = vmax.f32 %v924, %v1098
    %v1115 = vmax.f32 %v937, %v1099
    %v1116 = vmax.f32 %v950, %v1100
    %v1117 = vmax.f32 %v963, %v1101
    %v1118 = vmax.f32 %v976, %v1102
    %v1119 = vmax.f32 %v989, %v1103
    %v1120 = vmax.f32 %v1002, %v1104
    %v1121 = vmax.f32 %v1015, %v1105
    %v1122 = vmax.f32 %v1028, %v1106
    %v1123 = vmax.f32 %v1041, %v1107
    %v1124 = vmax.f32 %v1054, %v1108
    %v1125 = vmax.f32 %v1067, %v1109
    %v1126 = vmax.f32 %v1080, %v1110
    %v1127 = vmax.f32 %v1093, %v1111
    %v1128 = vmul.f32 %v1112, %v1112
    %v1129 = vsel %vm59, %v1128, 0.0
    %1130 = vadd.xlane.f32.xlu0 %v1129
    %v1131 = vpop.xlane.xlu0 %1130
    %v1132 = vmul.f32 %v1131, %v69
    %v1133 = vadd.f32 %v1132, 1e-08
    %v1134 = vrsqrt.pop %v1133
    %v1135 = vmul.f32 %v1134, %v1133
    %v1136 = vmul.f32 %v1135, %v1134
    %v1137 = vmul.f32 0.5, %v1136
    %v1138 = vsub.f32 1.5, %v1137
    %v1139 = vmul.f32 %v1134, %v1138
    %vm1140 = vweird.f32 %v1133
    %vm1141 = vweird.f32 %v1134
    %vm1142 = vmor %vm1140, %vm1141
    %v1143 = vsel %vm1142, %v1134, %v1139
    %v1144 = vmul.f32 %v1112, %v1143
    %v1145 = vpack.c.bf16 %v1144, %v1144
    %1146 = vst [vmem:[%s3] sm:$0x1] %v1145
    %v1147 = vmul.f32 %v1113, %v1113
    %v1148 = vsel %vm59, %v1147, 0.0
    %1149 = vadd.xlane.f32.xlu0 %v1148
    %v1150 = vpop.xlane.xlu0 %1149
    %v1151 = vmul.f32 %v1150, %v69
    %v1152 = vadd.f32 %v1151, 1e-08
    %v1153 = vrsqrt.pop %v1152
    %v1154 = vmul.f32 %v1153, %v1152
    %v1155 = vmul.f32 %v1154, %v1153
    %v1156 = vmul.f32 0.5, %v1155
    %v1157 = vsub.f32 1.5, %v1156
    %v1158 = vmul.f32 %v1153, %v1157
    %vm1159 = vweird.f32 %v1152
    %vm1160 = vweird.f32 %v1153
    %vm1161 = vmor %vm1159, %vm1160
    %v1162 = vsel %vm1161, %v1153, %v1158
    %v1163 = vmul.f32 %v1113, %v1162
    %v1164 = vpack.c.bf16 %v1163, %v1163
    %1165 = vst [vmem:[%s3 + $0x1] sm:$0x1] %v1164
    %v1166 = vmul.f32 %v1114, %v1114
    %v1167 = vsel %vm59, %v1166, 0.0
    %1168 = vadd.xlane.f32.xlu0 %v1167
    %v1169 = vpop.xlane.xlu0 %1168
    %v1170 = vmul.f32 %v1169, %v69
    %v1171 = vadd.f32 %v1170, 1e-08
    %v1172 = vrsqrt.pop %v1171
    %v1173 = vmul.f32 %v1172, %v1171
    %v1174 = vmul.f32 %v1173, %v1172
    %v1175 = vmul.f32 0.5, %v1174
    %v1176 = vsub.f32 1.5, %v1175
    %v1177 = vmul.f32 %v1172, %v1176
    %vm1178 = vweird.f32 %v1171
    %vm1179 = vweird.f32 %v1172
    %vm1180 = vmor %vm1178, %vm1179
    %v1181 = vsel %vm1180, %v1172, %v1177
    %v1182 = vmul.f32 %v1114, %v1181
    %v1183 = vpack.c.bf16 %v1182, %v1182
    %1184 = vst [vmem:[%s3 + $0x2] sm:$0x1] %v1183
    %v1185 = vmul.f32 %v1115, %v1115
    %v1186 = vsel %vm59, %v1185, 0.0
    %1187 = vadd.xlane.f32.xlu0 %v1186
    %v1188 = vpop.xlane.xlu0 %1187
    %v1189 = vmul.f32 %v1188, %v69
    %v1190 = vadd.f32 %v1189, 1e-08
    %v1191 = vrsqrt.pop %v1190
    %v1192 = vmul.f32 %v1191, %v1190
    %v1193 = vmul.f32 %v1192, %v1191
    %v1194 = vmul.f32 0.5, %v1193
    %v1195 = vsub.f32 1.5, %v1194
    %v1196 = vmul.f32 %v1191, %v1195
    %vm1197 = vweird.f32 %v1190
    %vm1198 = vweird.f32 %v1191
    %vm1199 = vmor %vm1197, %vm1198
    %v1200 = vsel %vm1199, %v1191, %v1196
    %v1201 = vmul.f32 %v1115, %v1200
    %v1202 = vpack.c.bf16 %v1201, %v1201
    %1203 = vst [vmem:[%s3 + $0x3] sm:$0x1] %v1202
    %v1204 = vmul.f32 %v1116, %v1116
    %v1205 = vsel %vm59, %v1204, 0.0
    %1206 = vadd.xlane.f32.xlu0 %v1205
    %v1207 = vpop.xlane.xlu0 %1206
    %v1208 = vmul.f32 %v1207, %v69
    %v1209 = vadd.f32 %v1208, 1e-08
    %v1210 = vrsqrt.pop %v1209
    %v1211 = vmul.f32 %v1210, %v1209
    %v1212 = vmul.f32 %v1211, %v1210
    %v1213 = vmul.f32 0.5, %v1212
    %v1214 = vsub.f32 1.5, %v1213
    %v1215 = vmul.f32 %v1210, %v1214
    %vm1216 = vweird.f32 %v1209
    %vm1217 = vweird.f32 %v1210
    %vm1218 = vmor %vm1216, %vm1217
    %v1219 = vsel %vm1218, %v1210, %v1215
    %v1220 = vmul.f32 %v1116, %v1219
    %v1221 = vpack.c.bf16 %v1220, %v1220
    %1222 = vst [vmem:[%s3 + $0x4] sm:$0x1] %v1221
    %v1223 = vmul.f32 %v1117, %v1117
    %v1224 = vsel %vm59, %v1223, 0.0
    %1225 = vadd.xlane.f32.xlu0 %v1224
    %v1226 = vpop.xlane.xlu0 %1225
    %v1227 = vmul.f32 %v1226, %v69
    %v1228 = vadd.f32 %v1227, 1e-08
    %v1229 = vrsqrt.pop %v1228
    %v1230 = vmul.f32 %v1229, %v1228
    %v1231 = vmul.f32 %v1230, %v1229
    %v1232 = vmul.f32 0.5, %v1231
    %v1233 = vsub.f32 1.5, %v1232
    %v1234 = vmul.f32 %v1229, %v1233
    %vm1235 = vweird.f32 %v1228
    %vm1236 = vweird.f32 %v1229
    %vm1237 = vmor %vm1235, %vm1236
    %v1238 = vsel %vm1237, %v1229, %v1234
    %v1239 = vmul.f32 %v1117, %v1238
    %v1240 = vpack.c.bf16 %v1239, %v1239
    %1241 = vst [vmem:[%s3 + $0x5] sm:$0x1] %v1240
    %v1242 = vmul.f32 %v1118, %v1118
    %v1243 = vsel %vm59, %v1242, 0.0
    %1244 = vadd.xlane.f32.xlu0 %v1243
    %v1245 = vpop.xlane.xlu0 %1244
    %v1246 = vmul.f32 %v1245, %v69
    %v1247 = vadd.f32 %v1246, 1e-08
    %v1248 = vrsqrt.pop %v1247
    %v1249 = vmul.f32 %v1248, %v1247
    %v1250 = vmul.f32 %v1249, %v1248
    %v1251 = vmul.f32 0.5, %v1250
    %v1252 = vsub.f32 1.5, %v1251
    %v1253 = vmul.f32 %v1248, %v1252
    %vm1254 = vweird.f32 %v1247
    %vm1255 = vweird.f32 %v1248
    %vm1256 = vmor %vm1254, %vm1255
    %v1257 = vsel %vm1256, %v1248, %v1253
    %v1258 = vmul.f32 %v1118, %v1257
    %v1259 = vpack.c.bf16 %v1258, %v1258
    %1260 = vst [vmem:[%s3 + $0x6] sm:$0x1] %v1259
    %v1261 = vmul.f32 %v1119, %v1119
    %v1262 = vsel %vm59, %v1261, 0.0
    %1263 = vadd.xlane.f32.xlu0 %v1262
    %v1264 = vpop.xlane.xlu0 %1263
    %v1265 = vmul.f32 %v1264, %v69
    %v1266 = vadd.f32 %v1265, 1e-08
    %v1267 = vrsqrt.pop %v1266
    %v1268 = vmul.f32 %v1267, %v1266
    %v1269 = vmul.f32 %v1268, %v1267
    %v1270 = vmul.f32 0.5, %v1269
    %v1271 = vsub.f32 1.5, %v1270
    %v1272 = vmul.f32 %v1267, %v1271
    %vm1273 = vweird.f32 %v1266
    %vm1274 = vweird.f32 %v1267
    %vm1275 = vmor %vm1273, %vm1274
    %v1276 = vsel %vm1275, %v1267, %v1272
    %v1277 = vmul.f32 %v1119, %v1276
    %v1278 = vpack.c.bf16 %v1277, %v1277
    %1279 = vst [vmem:[%s3 + $0x7] sm:$0x1] %v1278
    %v1280 = vmul.f32 %v1120, %v1120
    %v1281 = vsel %vm59, %v1280, 0.0
    %1282 = vadd.xlane.f32.xlu0 %v1281
    %v1283 = vpop.xlane.xlu0 %1282
    %v1284 = vmul.f32 %v1283, %v69
    %v1285 = vadd.f32 %v1284, 1e-08
    %v1286 = vrsqrt.pop %v1285
    %v1287 = vmul.f32 %v1286, %v1285
    %v1288 = vmul.f32 %v1287, %v1286
    %v1289 = vmul.f32 0.5, %v1288
    %v1290 = vsub.f32 1.5, %v1289
    %v1291 = vmul.f32 %v1286, %v1290
    %vm1292 = vweird.f32 %v1285
    %vm1293 = vweird.f32 %v1286
    %vm1294 = vmor %vm1292, %vm1293
    %v1295 = vsel %vm1294, %v1286, %v1291
    %v1296 = vmul.f32 %v1120, %v1295
    %v1297 = vpack.c.bf16 %v1296, %v1296
    %1298 = vst [vmem:[%s3 + $0x8] sm:$0x1] %v1297
    %v1299 = vmul.f32 %v1121, %v1121
    %v1300 = vsel %vm59, %v1299, 0.0
    %1301 = vadd.xlane.f32.xlu0 %v1300
    %v1302 = vpop.xlane.xlu0 %1301
    %v1303 = vmul.f32 %v1302, %v69
    %v1304 = vadd.f32 %v1303, 1e-08
    %v1305 = vrsqrt.pop %v1304
    %v1306 = vmul.f32 %v1305, %v1304
    %v1307 = vmul.f32 %v1306, %v1305
    %v1308 = vmul.f32 0.5, %v1307
    %v1309 = vsub.f32 1.5, %v1308
    %v1310 = vmul.f32 %v1305, %v1309
    %vm1311 = vweird.f32 %v1304
    %vm1312 = vweird.f32 %v1305
    %vm1313 = vmor %vm1311, %vm1312
    %v1314 = vsel %vm1313, %v1305, %v1310
    %v1315 = vmul.f32 %v1121, %v1314
    %v1316 = vpack.c.bf16 %v1315, %v1315
    %1317 = vst [vmem:[%s3 + $0x9] sm:$0x1] %v1316
    %v1318 = vmul.f32 %v1122, %v1122
    %v1319 = vsel %vm59, %v1318, 0.0
    %1320 = vadd.xlane.f32.xlu0 %v1319
    %v1321 = vpop.xlane.xlu0 %1320
    %v1322 = vmul.f32 %v1321, %v69
    %v1323 = vadd.f32 %v1322, 1e-08
    %v1324 = vrsqrt.pop %v1323
    %v1325 = vmul.f32 %v1324, %v1323
    %v1326 = vmul.f32 %v1325, %v1324
    %v1327 = vmul.f32 0.5, %v1326
    %v1328 = vsub.f32 1.5, %v1327
    %v1329 = vmul.f32 %v1324, %v1328
    %vm1330 = vweird.f32 %v1323
    %vm1331 = vweird.f32 %v1324
    %vm1332 = vmor %vm1330, %vm1331
    %v1333 = vsel %vm1332, %v1324, %v1329
    %v1334 = vmul.f32 %v1122, %v1333
    %v1335 = vpack.c.bf16 %v1334, %v1334
    %1336 = vst [vmem:[%s3 + $0xa] sm:$0x1] %v1335
    %v1337 = vmul.f32 %v1123, %v1123
    %v1338 = vsel %vm59, %v1337, 0.0
    %1339 = vadd.xlane.f32.xlu0 %v1338
    %v1340 = vpop.xlane.xlu0 %1339
    %v1341 = vmul.f32 %v1340, %v69
    %v1342 = vadd.f32 %v1341, 1e-08
    %v1343 = vrsqrt.pop %v1342
    %v1344 = vmul.f32 %v1343, %v1342
    %v1345 = vmul.f32 %v1344, %v1343
    %v1346 = vmul.f32 0.5, %v1345
    %v1347 = vsub.f32 1.5, %v1346
    %v1348 = vmul.f32 %v1343, %v1347
    %vm1349 = vweird.f32 %v1342
    %vm1350 = vweird.f32 %v1343
    %vm1351 = vmor %vm1349, %vm1350
    %v1352 = vsel %vm1351, %v1343, %v1348
    %v1353 = vmul.f32 %v1123, %v1352
    %v1354 = vpack.c.bf16 %v1353, %v1353
    %1355 = vst [vmem:[%s3 + $0xb] sm:$0x1] %v1354
    %v1356 = vmul.f32 %v1124, %v1124
    %v1357 = vsel %vm59, %v1356, 0.0
    %1358 = vadd.xlane.f32.xlu0 %v1357
    %v1359 = vpop.xlane.xlu0 %1358
    %v1360 = vmul.f32 %v1359, %v69
    %v1361 = vadd.f32 %v1360, 1e-08
    %v1362 = vrsqrt.pop %v1361
    %v1363 = vmul.f32 %v1362, %v1361
    %v1364 = vmul.f32 %v1363, %v1362
    %v1365 = vmul.f32 0.5, %v1364
    %v1366 = vsub.f32 1.5, %v1365
    %v1367 = vmul.f32 %v1362, %v1366
    %vm1368 = vweird.f32 %v1361
    %vm1369 = vweird.f32 %v1362
    %vm1370 = vmor %vm1368, %vm1369
    %v1371 = vsel %vm1370, %v1362, %v1367
    %v1372 = vmul.f32 %v1124, %v1371
    %v1373 = vpack.c.bf16 %v1372, %v1372
    %1374 = vst [vmem:[%s3 + $0xc] sm:$0x1] %v1373
    %v1375 = vmul.f32 %v1125, %v1125
    %v1376 = vsel %vm59, %v1375, 0.0
    %1377 = vadd.xlane.f32.xlu0 %v1376
    %v1378 = vpop.xlane.xlu0 %1377
    %v1379 = vmul.f32 %v1378, %v69
    %v1380 = vadd.f32 %v1379, 1e-08
    %v1381 = vrsqrt.pop %v1380
    %v1382 = vmul.f32 %v1381, %v1380
    %v1383 = vmul.f32 %v1382, %v1381
    %v1384 = vmul.f32 0.5, %v1383
    %v1385 = vsub.f32 1.5, %v1384
    %v1386 = vmul.f32 %v1381, %v1385
    %vm1387 = vweird.f32 %v1380
    %vm1388 = vweird.f32 %v1381
    %vm1389 = vmor %vm1387, %vm1388
    %v1390 = vsel %vm1389, %v1381, %v1386
    %v1391 = vmul.f32 %v1125, %v1390
    %v1392 = vpack.c.bf16 %v1391, %v1391
    %1393 = vst [vmem:[%s3 + $0xd] sm:$0x1] %v1392
    %v1394 = vmul.f32 %v1126, %v1126
    %v1395 = vsel %vm59, %v1394, 0.0
    %1396 = vadd.xlane.f32.xlu0 %v1395
    %v1397 = vpop.xlane.xlu0 %1396
    %v1398 = vmul.f32 %v1397, %v69
    %v1399 = vadd.f32 %v1398, 1e-08
    %v1400 = vrsqrt.pop %v1399
    %v1401 = vmul.f32 %v1400, %v1399
    %v1402 = vmul.f32 %v1401, %v1400
    %v1403 = vmul.f32 0.5, %v1402
    %v1404 = vsub.f32 1.5, %v1403
    %v1405 = vmul.f32 %v1400, %v1404
    %vm1406 = vweird.f32 %v1399
    %vm1407 = vweird.f32 %v1400
    %vm1408 = vmor %vm1406, %vm1407
    %v1409 = vsel %vm1408, %v1400, %v1405
    %v1410 = vmul.f32 %v1126, %v1409
    %v1411 = vpack.c.bf16 %v1410, %v1410
    %1412 = vst [vmem:[%s3 + $0xe] sm:$0x1] %v1411
    %v1413 = vmul.f32 %v1127, %v1127
    %v1414 = vsel %vm59, %v1413, 0.0
    %1415 = vadd.xlane.f32.xlu0 %v1414
    %v1416 = vpop.xlane.xlu0 %1415
    %v1417 = vmul.f32 %v1416, %v69
    %v1418 = vadd.f32 %v1417, 1e-08
    %v1419 = vrsqrt.pop %v1418
    %v1420 = vmul.f32 %v1419, %v1418
    %v1421 = vmul.f32 %v1420, %v1419
    %v1422 = vmul.f32 0.5, %v1421
    %v1423 = vsub.f32 1.5, %v1422
    %v1424 = vmul.f32 %v1419, %v1423
    %vm1425 = vweird.f32 %v1418
    %vm1426 = vweird.f32 %v1419
    %vm1427 = vmor %vm1425, %vm1426
    %v1428 = vsel %vm1427, %v1419, %v1424
    %v1429 = vmul.f32 %v1127, %v1428
    %v1430 = vpack.c.bf16 %v1429, %v1429
    %1431 = vst [vmem:[%s3 + $0xf] sm:$0x1] %v1430
    // Predicated region
    $region26: #{progan_gen_forward.7} parent=1 // pred_check
      _
    $region27: #{progan_gen_forward.7} parent=1 // pred_check_branch
      %1433 = sbr.rel (0) target = $region29
    $region28: #{progan_gen_forward.7} parent=1 // pred_region
      _
    $region29: #{progan_gen_forward.7} parent=1 // pred_fallthru
      _
    // Predicated region
    $region30: #{progan_gen_forward.7} parent=1 // pred_check
      _
    $region31: #{progan_gen_forward.7} parent=1 // pred_check_branch
      %1435 = sbr.rel (0) target = $region33
    $region32: #{progan_gen_forward.7} parent=1 // pred_region
      _
    $region33: #{progan_gen_forward.7} parent=1 // pred_fallthru
      _
    %1436 = vsyncpa [#allocation3], 1
    %1437 = vsyncpa [#allocation5], 1

// kernel: progan_gen_forward.8
$region0: #{progan_gen_forward.8}
  #allocation0 [shape = 'u32[]', space=smem, size = 0x4, offset = 0x4, fixed_abs, tag = 'smem constant byte address 0x4 - core index']
  #allocation1 [shape = 'u32[72,128]{1,0:T(1,128)}', space=vmem, size = 0x9000, scoped, tag = 'internal scratch']
  #allocation2 [shape = 'bf16[6,6,128]{2,1,0:T(8,128)(2,1)}', space=vmem, size = 0x3000, scoped, tag = 'scratch operand']
  %s0 = inlined_call_operand.vmem [shape: bf16[2,4,4,128], index: 0, kind: input, shape index: {}]
  %s1 = inlined_call_operand.hbm [shape: bf16[3,384,128], index: 1, kind: input, shape index: {}]
  %s2 = inlined_call_operand.vmem [shape: f32[1,128], index: 2, kind: input, shape index: {}]
  %s3 = inlined_call_operand.vmem [shape: bf16[2,4,4,128], index: 3, kind: output, shape index: {}]
  %s4 = sld [smem:[#allocation0]]
  $region53: #{progan_gen_forward.8} parent=0
    _
  %s6 = ssub.s32 1, %s4
  %s7 = scalar_select 0, %s6, %s4
  $region1: #{progan_gen_forward.8} parent=0
    #allocation3 [shape = 'u8[294912]{0}', space=vmem, size = 0x48000, scoped, tag = 'input window, operand 1, single buffered']
    #allocation4 [shape = 's32[2]{0}', space=sflag, size = 0x8, scoped, tag = 'scoped memory for progan_gen_forward.8']
    %8 = vsyncpa [#allocation4], 0
    loop: start=0, step=1, limit=4
    $region2: #{progan_gen_forward.8} parent=1 // loop_pre_header
      _
    $region3: #{progan_gen_forward.8} parent=1 // loop_header
      %s10 = sphi 0, %s14
      %p11 = scmp.ge.s32.totalorder %s10, 4
      %s17 = sphi 0, %s29
      %s18 = sphi 0, %s25
      %s19 = sphi 0, %s17
      %s20 = sphi 0, %s18
      %s21 = sphi 0, %s19
      %s22 = sphi 0, %s20
      %s32 = sphi 0, %s34
      %s35 = sphi 0, %s32
      %s36 = sphi 0, %s35
      %s52 = sphi 0, %s36
      %s56 = sphi 0, %s56
      %s58 = sphi 0, %s56
      %s59 = sphi 0, %s58
      %s73 = sphi 0, %s59
      %s77 = sphi 0, %s77
      %s79 = sphi 0, %s77
      %s80 = sphi 0, %s79
      %s94 = sphi 0, %s80
      %s102 = sphi 0, %s104
      %s105 = sphi 0, %s102
      %s106 = sphi 0, %s105
      %s122 = sphi 0, %s106
    $region4: #{progan_gen_forward.8} parent=1 // loop_header_branch
      %13 = sbr.rel (%p11) target = $region8
    $region5: #{progan_gen_forward.8} parent=1 // loop_body
      %s15 = ssub.s32 %s10, 1
      %s16 = ssub.s32 %s10, 2
      %s23 = sadd.s32 1, %s18
      %p24 = scmp.ge.s32.totalorder %s23, 1
      %s25 = scalar_select %p24, 0, %s23
      %s26 = sadd.s32 1, %s17
      %s27 = scalar_select %p24, %s26, %s17
      %p28 = scmp.ge.s32.totalorder %s27, 2
      %s29 = scalar_select %p28, 0, %s27
      %s30 = ssub.s32 %s17, %s29
      %p31 = scmp.eq.s32.totalorder %s30, 0
      %s33 = sadd.s32 %s32, 1
      %s34 = scalar_select %p31, %s32, %s33
      %p37 = pneg %p31
      %p38 = scmp.eq.s32.totalorder %s10, 1
      %p39 = por %p37, %p38
      %p40 = scmp.ne.s32.totalorder %s32, %s35
      %p41 = scmp.eq.s32.totalorder %s10, 0
      %p42 = por %p40, %p41
      %p43 = scmp.ne.s32.totalorder %s32, %s35
      %p44 = scmp.eq.s32.totalorder %s15, 1
      %p45 = por %p43, %p44
      %p46 = scmp.ne.s32.totalorder %s35, %s36
      %p47 = scmp.eq.s32.totalorder %s15, 0
      %p48 = por %p46, %p47
      %p49 = scmp.ne.s32.totalorder %s35, %s36
      %p50 = scmp.eq.s32.totalorder %s16, 1
      %p51 = por %p49, %p50
      %p53 = scmp.ne.s32.totalorder %s36, %s52
      %p54 = scmp.eq.s32.totalorder %s16, 0
      %p55 = por %p53, %p54
      %s57 = sadd.s32 %s56, 1
      %p60 = scmp.eq.s32.totalorder %s10, 1
      %p61 = scmp.ne.s32.totalorder %s56, %s58
      %p62 = scmp.eq.s32.totalorder %s10, 0
      %p63 = por %p61, %p62
      %p64 = scmp.ne.s32.totalorder %s56, %s58
      %p65 = scmp.eq.s32.totalorder %s15, 1
      %p66 = por %p64, %p65
      %p67 = scmp.ne.s32.totalorder %s58, %s59
      %p68 = scmp.eq.s32.totalorder %s15, 0
      %p69 = por %p67, %p68
      %p70 = scmp.ne.s32.totalorder %s58, %s59
      %p71 = scmp.eq.s32.totalorder %s16, 1
      %p72 = por %p70, %p71
      %p74 = scmp.ne.s32.totalorder %s59, %s73
      %p75 = scmp.eq.s32.totalorder %s16, 0
      %p76 = por %p74, %p75
      %s78 = sadd.s32 %s77, 1
      %p81 = scmp.eq.s32.totalorder %s10, 1
      %p82 = scmp.ne.s32.totalorder %s77, %s79
      %p83 = scmp.eq.s32.totalorder %s10, 0
      %p84 = por %p82, %p83
      %p85 = scmp.ne.s32.totalorder %s77, %s79
      %p86 = scmp.eq.s32.totalorder %s15, 1
      %p87 = por %p85, %p86
      %p88 = scmp.ne.s32.totalorder %s79, %s80
      %p89 = scmp.eq.s32.totalorder %s15, 0
      %p90 = por %p88, %p89
      %p91 = scmp.ne.s32.totalorder %s79, %s80
      %p92 = scmp.eq.s32.totalorder %s16, 1
      %p93 = por %p91, %p92
      %p95 = scmp.ne.s32.totalorder %s80, %s94
      %p96 = scmp.eq.s32.totalorder %s16, 0
      %p97 = por %p95, %p96
      %s98 = ssub.s32 %s17, %s29
      %s99 = ssub.s32 %s18, %s25
      %s100 = sor.u32 %s98, %s99
      %p101 = scmp.eq.s32.totalorder %s100, 0
      %s103 = sadd.s32 %s102, 1
      %s104 = scalar_select %p101, %s102, %s103
      %p107 = pneg %p101
      %p108 = scmp.eq.s32.totalorder %s10, 1
      %p109 = por %p107, %p108
      %p110 = scmp.ne.s32.totalorder %s102, %s105
      %p111 = scmp.eq.s32.totalorder %s10, 0
      %p112 = por %p110, %p111
      %p113 = scmp.ne.s32.totalorder %s102, %s105
      %p114 = scmp.eq.s32.totalorder %s15, 1
      %p115 = por %p113, %p114
      %p116 = scmp.ne.s32.totalorder %s105, %s106
      %p117 = scmp.eq.s32.totalorder %s15, 0
      %p118 = por %p116, %p117
      %p119 = scmp.ne.s32.totalorder %s105, %s106
      %p120 = scmp.eq.s32.totalorder %s16, 1
      %p121 = por %p119, %p120
      %p123 = scmp.ne.s32.totalorder %s106, %s122
      %p124 = scmp.eq.s32.totalorder %s16, 0
      %p125 = por %p123, %p124
      %p126 = scmp.le.s32.totalorder 1, %s10
      %p127 = scmp.lt.s32.totalorder %s10, 3
      %p128 = pnand %p126, %p127
      %p129 = pneg %p128
      // Predicated region
      $region9: #{progan_gen_forward.8} parent=5 // pred_check
        _
      $region10: #{progan_gen_forward.8} parent=5 // pred_check_branch
        %131 = sbr.rel (%p128) target = $region12
      $region11: #{progan_gen_forward.8} parent=5 // pred_region
        %s132 = ssub.s32 %s10, 1
        // Predicated region
        $region13: #{progan_gen_forward.8} parent=11 // pred_check
          %p133 = pneg %p69
        $region14: #{progan_gen_forward.8} parent=11 // pred_check_branch
          %135 = sbr.rel (%p133) target = $region16
        $region15: #{progan_gen_forward.8} parent=11 // pred_region
          %137 = vsyncadd [#allocation4], 0
          %s138 = sshll.u32 %s1, 4
          %s139 = int_to_ptr.hbm [resolvable:$true] %s138
          %s140 = sshll.u32 [#allocation3], 4
          %s141 = int_to_ptr.vmem [resolvable:$true] %s140
          %146 = dma.hbm_to_vmem [thread:$0]  %s139, 9216, %s141, [#allocation4], 64, 64, 4
        $region16: #{progan_gen_forward.8} parent=11 // pred_fallthru
          _
        // Predicated region
        $region17: #{progan_gen_forward.8} parent=11 // pred_check
          %p147 = pneg %p90
        $region18: #{progan_gen_forward.8} parent=11 // pred_check_branch
          %149 = sbr.rel (%p147) target = $region20
        $region19: #{progan_gen_forward.8} parent=11 // pred_region
          _
        $region20: #{progan_gen_forward.8} parent=11 // pred_fallthru
          _
      $region12: #{progan_gen_forward.8} parent=5 // pred_fallthru
        _
      %p150 = scmp.lt.s32.totalorder %s10, 2
      // Predicated region
      $region21: #{progan_gen_forward.8} parent=5 // pred_check
        %p151 = pneg %p150
      $region22: #{progan_gen_forward.8} parent=5 // pred_check_branch
        %153 = sbr.rel (%p151) target = $region24
      $region23: #{progan_gen_forward.8} parent=5 // pred_region
        // Predicated region
        $region25: #{progan_gen_forward.8} parent=23 // pred_check
          %p154 = pneg %p42
        $region26: #{progan_gen_forward.8} parent=23 // pred_check_branch
          %156 = sbr.rel (%p154) target = $region28
        $region27: #{progan_gen_forward.8} parent=23 // pred_region
          %p157 = scmp.lt.s32.totalorder %s17, 1
          %s158 = scalar_select %p157, %s17, 1
          %s159 = smul.addr %s158, 4
          %s160 = smul.addr %s159, 2
          %s161 = scalar_lea.vmem %s0, %s160
        $region28: #{progan_gen_forward.8} parent=23 // pred_fallthru
          _
      $region24: #{progan_gen_forward.8} parent=5 // pred_fallthru
        _
      %p162 = scmp.le.s32.totalorder 1, %s10
      %p163 = scmp.lt.s32.totalorder %s10, 3
      %p164 = pnand %p162, %p163
      %p165 = pneg %p164
      // Predicated region
      $region29: #{progan_gen_forward.8} parent=5 // pred_check
        _
      $region30: #{progan_gen_forward.8} parent=5 // pred_check_branch
        %167 = sbr.rel (%p164) target = $region32
      $region31: #{progan_gen_forward.8} parent=5 // pred_region
        %s168 = ssub.s32 %s10, 1
        // Predicated region
        $region33: #{progan_gen_forward.8} parent=31 // pred_check
          %p169 = pneg %p69
        $region34: #{progan_gen_forward.8} parent=31 // pred_check_branch
          %171 = sbr.rel (%p169) target = $region36
        $region35: #{progan_gen_forward.8} parent=31 // pred_region
          %173 = dma.done [#allocation4], 9216
        $region36: #{progan_gen_forward.8} parent=31 // pred_fallthru
          _
        %p174 = scmp.lt.s32.totalorder %s19, 1
        %s175 = scalar_select %p174, %s19, 1
        %s176 = smul.addr %s175, 4
        %s177 = smul.addr %s176, 2
        %s178 = scalar_lea.vmem %s0, %s177
        %p179 = pneg %p48
        %p180 = pneg %p45
        %p181 = pneg %p69
        %p182 = pneg %p66
        %p183 = pneg %p90
        %p184 = pneg %p87
        %p185 = pneg %p118
        %p186 = pneg %p115
        %s187 = smul.u32 4, %s20
        %p188 = scmp.lt.s32.totalorder %s19, 1
        %s189 = scalar_select %p188, %s19, 1
        %p190 = scmp.lt.s32.totalorder %s187, 3
        %s191 = scalar_select %p190, %s187, 3
        %s192 = smul.addr %s189, 4
        %s193 = sadd.s32 %s191, %s192
        %s194 = smul.addr %s193, 2
        %s195 = scalar_lea.vmem %s3, %s194
        %p196 = scmp.lt.s32.totalorder %s19, 1
        %s197 = scalar_select %p196, %s19, 1
        %s198 = smul.addr %s197, 4
        %s199 = smul.addr %s198, 2
        %s200 = scalar_lea.vmem %s0, %s199
        %s201 = smul.u32 4, %s20
        %p202 = scmp.lt.s32.totalorder %s19, 1
        %s203 = scalar_select %p202, %s19, 1
        %p204 = scmp.lt.s32.totalorder %s201, 3
        %s205 = scalar_select %p204, %s201, 3
        %s206 = smul.addr %s203, 4
        %s207 = sadd.s32 %s205, %s206
        %s208 = smul.addr %s207, 2
        %s209 = scalar_lea.vmem %s3, %s208
        %s210 = smul.u32 4, %s20
        %p212 = scmp.eq.s32.totalorder %s20, 0
        // Predicated region
        $region37: #{progan_gen_forward.8} parent=31 // pred_check
          %p213 = pneg %p212
        $region38: #{progan_gen_forward.8} parent=31 // pred_check_branch
          %215 = sbr.rel (%p213) target = $region40
        $region39: #{progan_gen_forward.8} parent=31 // pred_region
          %216 = vst [vmem:[#allocation2] sm:$0x7] 0
          %217 = vst [vmem:[#allocation2 + $0x4] sm:$0x7] 0
          %218 = vst [vmem:[#allocation2 + $0x8] sm:$0x7] 0
          %219 = vst [vmem:[#allocation2 + $0xc] sm:$0x7] 0
          %220 = vst [vmem:[#allocation2 + $0x10] sm:$0x7] 0
          %221 = vst [vmem:[#allocation2 + $0x14] sm:$0x7] 0
          %v222 = vld [vmem:[%s200] sm:$0x3]
          %v223 = vld [vmem:[%s200 + $0x2] sm:$0x3]
          %v224 = vld [vmem:[%s200 + $0x4] sm:$0x3]
          %v225 = vld [vmem:[%s200 + $0x6] sm:$0x3]
          %227 = vst [vmem:[#allocation1] ss:$2 sm:$0xff] %v222
          %v228 = vld.sshfl [vmem:[#allocation1] sm:$0xff pattern:$0x75643120]
          %s230 = scalar_lea.vmem [#allocation1], 16
          %231 = vst [vmem:[%s230] ss:$2 sm:$0xff] %v223
          %v232 = vld.sshfl [vmem:[#allocation1 + $0x10] sm:$0xff pattern:$0x75643120]
          %s234 = scalar_lea.vmem [#allocation1], 32
          %235 = vst [vmem:[%s234] ss:$2 sm:$0xff] %v224
          %v236 = vld.sshfl [vmem:[#allocation1 + $0x20] sm:$0xff pattern:$0x75643120]
          %s238 = scalar_lea.vmem [#allocation1], 48
          %239 = vst [vmem:[%s238] ss:$2 sm:$0xff] %v225
          %v240 = vld.sshfl [vmem:[#allocation1 + $0x30] sm:$0xff pattern:$0x75643120]
          %v241 = vshrl.u32 %v228, 16
          %v243 = vrot.slane %v241, 7
          %v244 = vshll.u32 %v228, 16
          %v246 = vor.u32 %v243, %v244
          %v247 = vshrl.u32 %v232, 16
          %v249 = vrot.slane %v247, 7
          %v250 = vshll.u32 %v232, 16
          %v252 = vor.u32 %v249, %v250
          %v253 = vshrl.u32 %v236, 16
          %v255 = vrot.slane %v253, 7
          %v256 = vshll.u32 %v236, 16
          %v258 = vor.u32 %v255, %v256
          %v259 = vshrl.u32 %v240, 16
          %v261 = vrot.slane %v259, 7
          %v262 = vshll.u32 %v240, 16
          %v264 = vor.u32 %v261, %v262
          %s269 = scalar_lea.vmem [#allocation2], 4
          %vm270 = vcmask 1042432
          %vm271 = vsmask.f32 2306
          %vm272 = vmand %vm270, %vm271
          %v273 = vld [vmem:[%s269] sm:$0x7]
          %v274 = vsel %vm272, %v246, %v273
          %275 = vst [vmem:[%s269] sm:$0x7] %v274
          %v276 = vld [vmem:[%s269 + $0x4] sm:$0x7]
          %v277 = vsel %vm272, %v252, %v276
          %278 = vst [vmem:[%s269 + $0x4] sm:$0x7] %v277
          %v279 = vld [vmem:[%s269 + $0x8] sm:$0x7]
          %v280 = vsel %vm272, %v258, %v279
          %281 = vst [vmem:[%s269 + $0x8] sm:$0x7] %v280
          %v282 = vld [vmem:[%s269 + $0xc] sm:$0x7]
          %v283 = vsel %vm272, %v264, %v282
          %284 = vst [vmem:[%s269 + $0xc] sm:$0x7] %v283
        $region40: #{progan_gen_forward.8} parent=31 // pred_fallthru
          _
        %s285 = smul.u32 %s20, 4
        %s286 = smul.addr %s285, 4
        %s287 = scalar_lea.vmem [#allocation2], %s286
        %v288 = vld [vmem:[%s287] sm:$0x7]
        %v289 = vld [vmem:[%s287 + $0x4] sm:$0x7]
        %v290 = vld [vmem:[%s287 + $0x8] sm:$0x7]
        %v291 = vld [vmem:[%s287 + $0xc] sm:$0x7]
        %v296 = vunpack.c.l.b16 %v288
        %v297 = vunpack.c.l.b16 %v289
        %v298 = vunpack.c.l.b16 %v290
        %v299 = vunpack.c.l.b16 %v291
        %v300 = vpack.c.b16 %v296, %v296
        %v301 = vpack.c.b16 %v297, %v297
        %v302 = vpack.c.b16 %v298, %v298
        %v303 = vpack.c.b16 %v299, %v299
        %v305 = vshrl.u32 %v300, 16
        %v307 = vshll.u32 %v300, 16
        %v309 = vrot.slane %v307, 1
        %v310 = vor.u32 %v305, %v309
        %v312 = vshrl.u32 %v301, 16
        %v314 = vshll.u32 %v301, 16
        %v316 = vrot.slane %v314, 1
        %v317 = vor.u32 %v312, %v316
        %v319 = vshrl.u32 %v302, 16
        %v321 = vshll.u32 %v302, 16
        %v323 = vrot.slane %v321, 1
        %v324 = vor.u32 %v319, %v323
        %v326 = vshrl.u32 %v303, 16
        %v328 = vshll.u32 %v303, 16
        %v330 = vrot.slane %v328, 1
        %v331 = vor.u32 %v326, %v330
        %v332 = vrot.slane %v300, 1
        %v333 = vrot.slane %v301, 1
        %v334 = vrot.slane %v302, 1
        %v335 = vrot.slane %v303, 1
        %v336 = vrot.slane %v310, 6
        %v337 = vrot.slane %v332, 4
        %v338 = vrot.slane %v317, 6
        %v339 = vrot.slane %v333, 4
        %v340 = vrot.slane %v324, 6
        %v341 = vrot.slane %v334, 4
        %v342 = vrot.slane %v331, 6
        %v343 = vrot.slane %v335, 4
        %vm344 = vcmask 1041408
        %v347 = vsel %vm344, %v288, %v336
        %vm348 = vcmask 1043456
        %v350 = vsel %vm348, %v347, %v337
        %v353 = vsel %vm344, %v289, %v338
        %v355 = vsel %vm348, %v353, %v339
        %v358 = vsel %vm344, %v290, %v340
        %v360 = vsel %vm348, %v358, %v341
        %v363 = vsel %vm344, %v291, %v342
        %v365 = vsel %vm348, %v363, %v343
        %v366 = vld [vmem:[#allocation3] sm:$0xf]
        %v367 = vld [vmem:[#allocation3 + $0x4] sm:$0xf]
        %v368 = vld [vmem:[#allocation3 + $0x8] sm:$0xf]
        %v369 = vld [vmem:[#allocation3 + $0xc] sm:$0xf]
        %v370 = vld [vmem:[#allocation3 + $0x10] sm:$0xf]
        %v371 = vld [vmem:[#allocation3 + $0x14] sm:$0xf]
        %v372 = vld [vmem:[#allocation3 + $0x18] sm:$0xf]
        %v373 = vld [vmem:[#allocation3 + $0x1c] sm:$0xf]
        %v374 = vld [vmem:[#allocation3 + $0x20] sm:$0xf]
        %v375 = vld [vmem:[#allocation3 + $0x24] sm:$0xf]
        %v376 = vld [vmem:[#allocation3 + $0x28] sm:$0xf]
        %v377 = vld [vmem:[#allocation3 + $0x2c] sm:$0xf]
        %v378 = vld [vmem:[#allocation3 + $0x30] sm:$0xf]
        %v379 = vld [vmem:[#allocation3 + $0x34] sm:$0xf]
        %v380 = vld [vmem:[#allocation3 + $0x38] sm:$0xf]
        %v381 = vld [vmem:[#allocation3 + $0x3c] sm:$0xf]
        %v382 = vld [vmem:[#allocation3 + $0x40] sm:$0xf]
        %v383 = vld [vmem:[#allocation3 + $0x44] sm:$0xf]
        %v384 = vld [vmem:[#allocation3 + $0x48] sm:$0xf]
        %v385 = vld [vmem:[#allocation3 + $0x4c] sm:$0xf]
        %v386 = vld [vmem:[#allocation3 + $0x50] sm:$0xf]
        %v387 = vld [vmem:[#allocation3 + $0x54] sm:$0xf]
        %v388 = vld [vmem:[#allocation3 + $0x58] sm:$0xf]
        %v389 = vld [vmem:[#allocation3 + $0x5c] sm:$0xf]
        %v390 = vld [vmem:[#allocation3 + $0x60] sm:$0xf]
        %v391 = vld [vmem:[#allocation3 + $0x64] sm:$0xf]
        %v392 = vld [vmem:[#allocation3 + $0x68] sm:$0xf]
        %v393 = vld [vmem:[#allocation3 + $0x6c] sm:$0xf]
        %v394 = vld [vmem:[#allocation3 + $0x70] sm:$0xf]
        %v395 = vld [vmem:[#allocation3 + $0x74] sm:$0xf]
        %v396 = vld [vmem:[#allocation3 + $0x78] sm:$0xf]
        %v397 = vld [vmem:[#allocation3 + $0x7c] sm:$0xf]
        %v398 = vld [vmem:[#allocation3 + $0x80] sm:$0xf]
        %v399 = vld [vmem:[#allocation3 + $0x84] sm:$0xf]
        %v400 = vld [vmem:[#allocation3 + $0x88] sm:$0xf]
        %v401 = vld [vmem:[#allocation3 + $0x8c] sm:$0xf]
        %v402 = vld [vmem:[#allocation3 + $0x90] sm:$0xf]
        %v403 = vld [vmem:[#allocation3 + $0x94] sm:$0xf]
        %v404 = vld [vmem:[#allocation3 + $0x98] sm:$0xf]
        %v405 = vld [vmem:[#allocation3 + $0x9c] sm:$0xf]
        %v406 = vld [vmem:[#allocation3 + $0xa0] sm:$0xf]
        %v407 = vld [vmem:[#allocation3 + $0xa4] sm:$0xf]
        %v408 = vld [vmem:[#allocation3 + $0xa8] sm:$0xf]
        %v409 = vld [vmem:[#allocation3 + $0xac] sm:$0xf]
        %v410 = vld [vmem:[#allocation3 + $0xb0] sm:$0xf]
        %v411 = vld [vmem:[#allocation3 + $0xb4] sm:$0xf]
        %v412 = vld [vmem:[#allocation3 + $0xb8] sm:$0xf]
        %v413 = vld [vmem:[#allocation3 + $0xbc] sm:$0xf]
        %s414 = sadd.s32 %s285, 1
        %s415 = smul.addr %s414, 4
        %s416 = scalar_lea.vmem [#allocation2], %s415
        %v417 = vld [vmem:[%s416] sm:$0x7]
        %v418 = vld [vmem:[%s416 + $0x4] sm:$0x7]
        %v419 = vld [vmem:[%s416 + $0x8] sm:$0x7]
        %v420 = vld [vmem:[%s416 + $0xc] sm:$0x7]
        %v425 = vunpack.c.l.b16 %v417
        %v426 = vunpack.c.l.b16 %v418
        %v427 = vunpack.c.l.b16 %v419
        %v428 = vunpack.c.l.b16 %v420
        %v429 = vpack.c.b16 %v425, %v425
        %v430 = vpack.c.b16 %v426, %v426
        %v431 = vpack.c.b16 %v427, %v427
        %v432 = vpack.c.b16 %v428, %v428
        %v434 = vshrl.u32 %v429, 16
        %v436 = vshll.u32 %v429, 16
        %v438 = vrot.slane %v436, 1
        %v439 = vor.u32 %v434, %v438
        %v441 = vshrl.u32 %v430, 16
        %v443 = vshll.u32 %v430, 16
        %v445 = vrot.slane %v443, 1
        %v446 = vor.u32 %v441, %v445
        %v448 = vshrl.u32 %v431, 16
        %v450 = vshll.u32 %v431, 16
        %v452 = vrot.slane %v450, 1
        %v453 = vor.u32 %v448, %v452
        %v455 = vshrl.u32 %v432, 16
        %v457 = vshll.u32 %v432, 16
        %v459 = vrot.slane %v457, 1
        %v460 = vor.u32 %v455, %v459
        %v461 = vrot.slane %v429, 1
        %v462 = vrot.slane %v430, 1
        %v463 = vrot.slane %v431, 1
        %v464 = vrot.slane %v432, 1
        %v465 = vrot.slane %v439, 6
        %v466 = vrot.slane %v461, 4
        %v467 = vrot.slane %v446, 6
        %v468 = vrot.slane %v462, 4
        %v469 = vrot.slane %v453, 6
        %v470 = vrot.slane %v463, 4
        %v471 = vrot.slane %v460, 6
        %v472 = vrot.slane %v464, 4
        %v475 = vsel %vm344, %v417, %v465
        %v477 = vsel %vm348, %v475, %v466
        %v480 = vsel %vm344, %v418, %v467
        %v482 = vsel %vm348, %v480, %v468
        %v485 = vsel %vm344, %v419, %v469
        %v487 = vsel %vm348, %v485, %v470
        %v490 = vsel %vm344, %v420, %v471
        %v492 = vsel %vm348, %v490, %v472
        %s493 = scalar_lea.vmem [#allocation3], 192
        %v494 = vld [vmem:[%s493] sm:$0xf]
        %v495 = vld [vmem:[%s493 + $0x4] sm:$0xf]
        %v496 = vld [vmem:[%s493 + $0x8] sm:$0xf]
        %v497 = vld [vmem:[%s493 + $0xc] sm:$0xf]
        %v498 = vld [vmem:[%s493 + $0x10] sm:$0xf]
        %v499 = vld [vmem:[%s493 + $0x14] sm:$0xf]
        %v500 = vld [vmem:[%s493 + $0x18] sm:$0xf]
        %v501 = vld [vmem:[%s493 + $0x1c] sm:$0xf]
        %v502 = vld [vmem:[%s493 + $0x20] sm:$0xf]
        %v503 = vld [vmem:[%s493 + $0x24] sm:$0xf]
        %v504 = vld [vmem:[%s493 + $0x28] sm:$0xf]
        %v505 = vld [vmem:[%s493 + $0x2c] sm:$0xf]
        %v506 = vld [vmem:[%s493 + $0x30] sm:$0xf]
        %v507 = vld [vmem:[%s493 + $0x34] sm:$0xf]
        %v508 = vld [vmem:[%s493 + $0x38] sm:$0xf]
        %v509 = vld [vmem:[%s493 + $0x3c] sm:$0xf]
        %v510 = vld [vmem:[%s493 + $0x40] sm:$0xf]
        %v511 = vld [vmem:[%s493 + $0x44] sm:$0xf]
        %v512 = vld [vmem:[%s493 + $0x48] sm:$0xf]
        %v513 = vld [vmem:[%s493 + $0x4c] sm:$0xf]
        %v514 = vld [vmem:[%s493 + $0x50] sm:$0xf]
        %v515 = vld [vmem:[%s493 + $0x54] sm:$0xf]
        %v516 = vld [vmem:[%s493 + $0x58] sm:$0xf]
        %v517 = vld [vmem:[%s493 + $0x5c] sm:$0xf]
        %v518 = vld [vmem:[%s493 + $0x60] sm:$0xf]
        %v519 = vld [vmem:[%s493 + $0x64] sm:$0xf]
        %v520 = vld [vmem:[%s493 + $0x68] sm:$0xf]
        %v521 = vld [vmem:[%s493 + $0x6c] sm:$0xf]
        %v522 = vld [vmem:[%s493 + $0x70] sm:$0xf]
        %v523 = vld [vmem:[%s493 + $0x74] sm:$0xf]
        %v524 = vld [vmem:[%s493 + $0x78] sm:$0xf]
        %v525 = vld [vmem:[%s493 + $0x7c] sm:$0xf]
        %v526 = vld [vmem:[%s493 + $0x80] sm:$0xf]
        %v527 = vld [vmem:[%s493 + $0x84] sm:$0xf]
        %v528 = vld [vmem:[%s493 + $0x88] sm:$0xf]
        %v529 = vld [vmem:[%s493 + $0x8c] sm:$0xf]
        %v530 = vld [vmem:[%s493 + $0x90] sm:$0xf]
        %v531 = vld [vmem:[%s493 + $0x94] sm:$0xf]
        %v532 = vld [vmem:[%s493 + $0x98] sm:$0xf]
        %v533 = vld [vmem:[%s493 + $0x9c] sm:$0xf]
        %v534 = vld [vmem:[%s493 + $0xa0] sm:$0xf]
        %v535 = vld [vmem:[%s493 + $0xa4] sm:$0xf]
        %v536 = vld [vmem:[%s493 + $0xa8] sm:$0xf]
        %v537 = vld [vmem:[%s493 + $0xac] sm:$0xf]
        %v538 = vld [vmem:[%s493 + $0xb0] sm:$0xf]
        %v539 = vld [vmem:[%s493 + $0xb4] sm:$0xf]
        %v540 = vld [vmem:[%s493 + $0xb8] sm:$0xf]
        %v541 = vld [vmem:[%s493 + $0xbc] sm:$0xf]
        %542 = vst [vmem:[#allocation1] ss:$4 sm:$0xff] %v477
        %s543 = scalar_lea.vmem [#allocation1], 1
        %544 = vst [vmem:[%s543] ss:$4 sm:$0xff] %v482
        %s545 = scalar_lea.vmem [#allocation1], 2
        %546 = vst [vmem:[%s545] ss:$4 sm:$0xff] %v487
        %s547 = scalar_lea.vmem [#allocation1], 3
        %548 = vst [vmem:[%s547] ss:$4 sm:$0xff] %v492
        %v549 = vld.sshfl [vmem:[#allocation1] sm:$0xff pattern:$0x73625140]
        %v550 = vld.sshfl [vmem:[#allocation1 + $0x8] sm:$0xff pattern:$0x73625140]
        %v551 = vld.sshfl [vmem:[#allocation1 + $0x10] sm:$0xff pattern:$0x73625140]
        %v603 = vunpack.c.l.b16 %v494
        %v604 = vunpack.c.l.b16 %v495
        %v605 = vunpack.c.l.b16 %v496
        %v606 = vunpack.c.l.b16 %v497
        %v607 = vunpack.c.l.b16 %v498
        %v608 = vunpack.c.l.b16 %v499
        %v609 = vunpack.c.l.b16 %v500
        %v610 = vunpack.c.l.b16 %v501
        %v611 = vunpack.c.l.b16 %v502
        %v612 = vunpack.c.l.b16 %v503
        %v613 = vunpack.c.l.b16 %v504
        %v614 = vunpack.c.l.b16 %v505
        %v615 = vunpack.c.l.b16 %v506
        %v616 = vunpack.c.l.b16 %v507
        %v617 = vunpack.c.l.b16 %v508
        %v618 = vunpack.c.l.b16 %v509
        %v619 = vunpack.c.l.b16 %v510
        %v620 = vunpack.c.l.b16 %v511
        %v621 = vunpack.c.l.b16 %v512
        %v622 = vunpack.c.l.b16 %v513
        %v623 = vunpack.c.l.b16 %v514
        %v624 = vunpack.c.l.b16 %v515
        %v625 = vunpack.c.l.b16 %v516
        %v626 = vunpack.c.l.b16 %v517
        %v627 = vunpack.c.l.b16 %v518
        %v628 = vunpack.c.l.b16 %v519
        %v629 = vunpack.c.l.b16 %v520
        %v630 = vunpack.c.l.b16 %v521
        %v631 = vunpack.c.l.b16 %v522
        %v632 = vunpack.c.l.b16 %v523
        %v633 = vunpack.c.l.b16 %v524
        %v634 = vunpack.c.l.b16 %v525
        %v635 = vunpack.c.l.b16 %v526
        %v636 = vunpack.c.l.b16 %v527
        %v637 = vunpack.c.l.b16 %v528
        %v638 = vunpack.c.l.b16 %v529
        %v639 = vunpack.c.l.b16 %v530
        %v640 = vunpack.c.l.b16 %v531
        %v641 = vunpack.c.l.b16 %v532
        %v642 = vunpack.c.l.b16 %v533
        %v643 = vunpack.c.l.b16 %v534
        %v644 = vunpack.c.l.b16 %v535
        %v645 = vunpack.c.l.b16 %v536
        %v646 = vunpack.c.l.b16 %v537
        %v647 = vunpack.c.l.b16 %v538
        %v648 = vunpack.c.l.b16 %v539
        %v649 = vunpack.c.l.b16 %v540
        %v650 = vunpack.c.l.b16 %v541
        %v651 = vpack.c.b16 %v604, %v603
        %v652 = vpack.c.b16 %v606, %v605
        %v653 = vpack.c.b16 %v608, %v607
        %v654 = vpack.c.b16 %v610, %v609
        %v655 = vpack.c.b16 %v612, %v611
        %v656 = vpack.c.b16 %v614, %v613
        %v657 = vpack.c.b16 %v616, %v615
        %v658 = vpack.c.b16 %v618, %v617
        %v659 = vpack.c.b16 %v620, %v619
        %v660 = vpack.c.b16 %v622, %v621
        %v661 = vpack.c.b16 %v624, %v623
        %v662 = vpack.c.b16 %v626, %v625
        %v663 = vpack.c.b16 %v628, %v627
        %v664 = vpack.c.b16 %v630, %v629
        %v665 = vpack.c.b16 %v632, %v631
        %v666 = vpack.c.b16 %v634, %v633
        %v667 = vpack.c.b16 %v636, %v635
        %v668 = vpack.c.b16 %v638, %v637
        %v669 = vpack.c.b16 %v640, %v639
        %v670 = vpack.c.b16 %v642, %v641
        %v671 = vpack.c.b16 %v644, %v643
        %v672 = vpack.c.b16 %v646, %v645
        %v673 = vpack.c.b16 %v648, %v647
        %v674 = vpack.c.b16 %v650, %v649
        %699 = vmatpush.bf16.msra.mxu0 %v658
        %700 = vmatpush.bf16.msra.mxu0 %v657
        %701 = vmatpush.bf16.msra.mxu0 %v656
        %702 = vmatpush.bf16.msra.mxu0 %v655
        %703 = vmatpush.bf16.msra.mxu0 %v654
        %704 = vmatpush.bf16.msra.mxu0 %v653
        %705 = vmatpush.bf16.msra.mxu0 %v652
        %706 = vmatpush.bf16.msra.mxu0 %v651
        %707 = vmatmul.bf16.gmra.mxu0 %v549
        %v708 = vpop.f32.mrf.mxu0
        %v709 = vadd.f32 0.0, %v708
        %v710 = vpop.f32.mrf.mxu0
        %v711 = vadd.f32 0.0, %v710
        %712 = vdwg.mxu0
        %713 = vmatpush.bf16.msra.mxu0 %v666
        %714 = vmatpush.bf16.msra.mxu0 %v665
        %715 = vmatpush.bf16.msra.mxu0 %v664
        %716 = vmatpush.bf16.msra.mxu0 %v663
        %717 = vmatpush.bf16.msra.mxu0 %v662
        %718 = vmatpush.bf16.msra.mxu0 %v661
        %719 = vmatpush.bf16.msra.mxu0 %v660
        %720 = vmatpush.bf16.msra.mxu0 %v659
        %721 = vmatmul.bf16.gmra.mxu0 %v550
        %v722 = vpop.f32.mrf.mxu0
        %v723 = vadd.f32 %v709, %v722
        %v724 = vpop.f32.mrf.mxu0
        %v725 = vadd.f32 %v711, %v724
        %726 = vdwg.mxu0
        %727 = vmatpush.bf16.msra.mxu0 %v674
        %728 = vmatpush.bf16.msra.mxu0 %v673
        %729 = vmatpush.bf16.msra.mxu0 %v672
        %730 = vmatpush.bf16.msra.mxu0 %v671
        %731 = vmatpush.bf16.msra.mxu0 %v670
        %732 = vmatpush.bf16.msra.mxu0 %v669
        %733 = vmatpush.bf16.msra.mxu0 %v668
        %734 = vmatpush.bf16.msra.mxu0 %v667
        %735 = vmatmul.bf16.gmra.mxu0 %v551
        %v736 = vpop.f32.mrf.mxu0
        %v737 = vadd.f32 %v723, %v736
        %v738 = vpop.f32.mrf.mxu0
        %v739 = vadd.f32 %v725, %v738
        %740 = vdwg.mxu0
        %741 = vst [vmem:[#allocation1] ss:$4 sm:$0xff] %v350
        %s742 = scalar_lea.vmem [#allocation1], 1
        %743 = vst [vmem:[%s742] ss:$4 sm:$0xff] %v355
        %s744 = scalar_lea.vmem [#allocation1], 2
        %745 = vst [vmem:[%s744] ss:$4 sm:$0xff] %v360
        %s746 = scalar_lea.vmem [#allocation1], 3
        %747 = vst [vmem:[%s746] ss:$4 sm:$0xff] %v365
        %v748 = vld.sshfl [vmem:[#allocation1] sm:$0xff pattern:$0x73625140]
        %v749 = vld.sshfl [vmem:[#allocation1 + $0x8] sm:$0xff pattern:$0x73625140]
        %v750 = vld.sshfl [vmem:[#allocation1 + $0x10] sm:$0xff pattern:$0x73625140]
        %v802 = vunpack.c.l.b16 %v366
        %v803 = vunpack.c.l.b16 %v367
        %v804 = vunpack.c.l.b16 %v368
        %v805 = vunpack.c.l.b16 %v369
        %v806 = vunpack.c.l.b16 %v370
        %v807 = vunpack.c.l.b16 %v371
        %v808 = vunpack.c.l.b16 %v372
        %v809 = vunpack.c.l.b16 %v373
        %v810 = vunpack.c.l.b16 %v374
        %v811 = vunpack.c.l.b16 %v375
        %v812 = vunpack.c.l.b16 %v376
        %v813 = vunpack.c.l.b16 %v377
        %v814 = vunpack.c.l.b16 %v378
        %v815 = vunpack.c.l.b16 %v379
        %v816 = vunpack.c.l.b16 %v380
        %v817 = vunpack.c.l.b16 %v381
        %v818 = vunpack.c.l.b16 %v382
        %v819 = vunpack.c.l.b16 %v383
        %v820 = vunpack.c.l.b16 %v384
        %v821 = vunpack.c.l.b16 %v385
        %v822 = vunpack.c.l.b16 %v386
        %v823 = vunpack.c.l.b16 %v387
        %v824 = vunpack.c.l.b16 %v388
        %v825 = vunpack.c.l.b16 %v389
        %v826 = vunpack.c.l.b16 %v390
        %v827 = vunpack.c.l.b16 %v391
        %v828 = vunpack.c.l.b16 %v392
        %v829 = vunpack.c.l.b16 %v393
        %v830 = vunpack.c.l.b16 %v394
        %v831 = vunpack.c.l.b16 %v395
        %v832 = vunpack.c.l.b16 %v396
        %v833 = vunpack.c.l.b16 %v397
        %v834 = vunpack.c.l.b16 %v398
        %v835 = vunpack.c.l.b16 %v399
        %v836 = vunpack.c.l.b16 %v400
        %v837 = vunpack.c.l.b16 %v401
        %v838 = vunpack.c.l.b16 %v402
        %v839 = vunpack.c.l.b16 %v403
        %v840 = vunpack.c.l.b16 %v404
        %v841 = vunpack.c.l.b16 %v405
        %v842 = vunpack.c.l.b16 %v406
        %v843 = vunpack.c.l.b16 %v407
        %v844 = vunpack.c.l.b16 %v408
        %v845 = vunpack.c.l.b16 %v409
        %v846 = vunpack.c.l.b16 %v410
        %v847 = vunpack.c.l.b16 %v411
        %v848 = vunpack.c.l.b16 %v412
        %v849 = vunpack.c.l.b16 %v413
        %v850 = vpack.c.b16 %v803, %v802
        %v851 = vpack.c.b16 %v805, %v804
        %v852 = vpack.c.b16 %v807, %v806
        %v853 = vpack.c.b16 %v809, %v808
        %v854 = vpack.c.b16 %v811, %v810
        %v855 = vpack.c.b16 %v813, %v812
        %v856 = vpack.c.b16 %v815, %v814
        %v857 = vpack.c.b16 %v817, %v816
        %v858 = vpack.c.b16 %v819, %v818
        %v859 = vpack.c.b16 %v821, %v820
        %v860 = vpack.c.b16 %v823, %v822
        %v861 = vpack.c.b16 %v825, %v824
        %v862 = vpack.c.b16 %v827, %v826
        %v863 = vpack.c.b16 %v829, %v828
        %v864 = vpack.c.b16 %v831, %v830
        %v865 = vpack.c.b16 %v833, %v832
        %v866 = vpack.c.b16 %v835, %v834
        %v867 = vpack.c.b16 %v837, %v836
        %v868 = vpack.c.b16 %v839, %v838
        %v869 = vpack.c.b16 %v841, %v840
        %v870 = vpack.c.b16 %v843, %v842
        %v871 = vpack.c.b16 %v845, %v844
        %v872 = vpack.c.b16 %v847, %v846
        %v873 = vpack.c.b16 %v849, %v848
        %898 = vmatpush.bf16.msra.mxu0 %v857
        %899 = vmatpush.bf16.msra.mxu0 %v856
        %900 = vmatpush.bf16.msra.mxu0 %v855
        %901 = vmatpush.bf16.msra.mxu0 %v854
        %902 = vmatpush.bf16.msra.mxu0 %v853
        %903 = vmatpush.bf16.msra.mxu0 %v852
        %904 = vmatpush.bf16.msra.mxu0 %v851
        %905 = vmatpush.bf16.msra.mxu0 %v850
        %906 = vmatmul.bf16.gmra.mxu0 %v748
        %v907 = vpop.f32.mrf.mxu0
        %v908 = vadd.f32 %v737, %v907
        %v909 = vpop.f32.mrf.mxu0
        %v910 = vadd.f32 %v739, %v909
        %911 = vdwg.mxu0
        %912 = vmatpush.bf16.msra.mxu0 %v865
        %913 = vmatpush.bf16.msra.mxu0 %v864
        %914 = vmatpush.bf16.msra.mxu0 %v863
        %915 = vmatpush.bf16.msra.mxu0 %v862
        %916 = vmatpush.bf16.msra.mxu0 %v861
        %917 = vmatpush.bf16.msra.mxu0 %v860
        %918 = vmatpush.bf16.msra.mxu0 %v859
        %919 = vmatpush.bf16.msra.mxu0 %v858
        %920 = vmatmul.bf16.gmra.mxu0 %v749
        %v921 = vpop.f32.mrf.mxu0
        %v922 = vadd.f32 %v908, %v921
        %v923 = vpop.f32.mrf.mxu0
        %v924 = vadd.f32 %v910, %v923
        %925 = vdwg.mxu0
        %926 = vmatpush.bf16.msra.mxu0 %v873
        %927 = vmatpush.bf16.msra.mxu0 %v872
        %928 = vmatpush.bf16.msra.mxu0 %v871
        %929 = vmatpush.bf16.msra.mxu0 %v870
        %930 = vmatpush.bf16.msra.mxu0 %v869
        %931 = vmatpush.bf16.msra.mxu0 %v868
        %932 = vmatpush.bf16.msra.mxu0 %v867
        %933 = vmatpush.bf16.msra.mxu0 %v866
        %934 = vmatmul.bf16.gmra.mxu0 %v750
        %v935 = vpop.f32.mrf.mxu0
        %v936 = vadd.f32 %v922, %v935
        %v937 = vpop.f32.mrf.mxu0
        %v938 = vadd.f32 %v924, %v937
        %939 = vdwg.mxu0
        %s940 = sadd.s32 %s285, 2
        %s941 = smul.addr %s940, 4
        %s942 = scalar_lea.vmem [#allocation2], %s941
        %v943 = vld [vmem:[%s942] sm:$0x7]
        %v944 = vld [vmem:[%s942 + $0x4] sm:$0x7]
        %v945 = vld [vmem:[%s942 + $0x8] sm:$0x7]
        %v946 = vld [vmem:[%s942 + $0xc] sm:$0x7]
        %v951 = vunpack.c.l.b16 %v943
        %v952 = vunpack.c.l.b16 %v944
        %v953 = vunpack.c.l.b16 %v945
        %v954 = vunpack.c.l.b16 %v946
        %v955 = vpack.c.b16 %v951, %v951
        %v956 = vpack.c.b16 %v952, %v952
        %v957 = vpack.c.b16 %v953, %v953
        %v958 = vpack.c.b16 %v954, %v954
        %v960 = vshrl.u32 %v955, 16
        %v962 = vshll.u32 %v955, 16
        %v964 = vrot.slane %v962, 1
        %v965 = vor.u32 %v960, %v964
        %v967 = vshrl.u32 %v956, 16
        %v969 = vshll.u32 %v956, 16
        %v971 = vrot.slane %v969, 1
        %v972 = vor.u32 %v967, %v971
        %v974 = vshrl.u32 %v957, 16
        %v976 = vshll.u32 %v957, 16
        %v978 = vrot.slane %v976, 1
        %v979 = vor.u32 %v974, %v978
        %v981 = vshrl.u32 %v958, 16
        %v983 = vshll.u32 %v958, 16
        %v985 = vrot.slane %v983, 1
        %v986 = vor.u32 %v981, %v985
        %v987 = vrot.slane %v955, 1
        %v988 = vrot.slane %v956, 1
        %v989 = vrot.slane %v957, 1
        %v990 = vrot.slane %v958, 1
        %v991 = vrot.slane %v965, 6
        %v992 = vrot.slane %v987, 4
        %v993 = vrot.slane %v972, 6
        %v994 = vrot.slane %v988, 4
        %v995 = vrot.slane %v979, 6
        %v996 = vrot.slane %v989, 4
        %v997 = vrot.slane %v986, 6
        %v998 = vrot.slane %v990, 4
        %v1001 = vsel %vm344, %v943, %v991
        %v1003 = vsel %vm348, %v1001, %v992
        %v1006 = vsel %vm344, %v944, %v993
        %v1008 = vsel %vm348, %v1006, %v994
        %v1011 = vsel %vm344, %v945, %v995
        %v1013 = vsel %vm348, %v1011, %v996
        %v1016 = vsel %vm344, %v946, %v997
        %v1018 = vsel %vm348, %v1016, %v998
        %s1019 = scalar_lea.vmem [#allocation3], 384
        %v1020 = vld [vmem:[%s1019] sm:$0xf]
        %v1021 = vld [vmem:[%s1019 + $0x4] sm:$0xf]
        %v1022 = vld [vmem:[%s1019 + $0x8] sm:$0xf]
        %v1023 = vld [vmem:[%s1019 + $0xc] sm:$0xf]
        %v1024 = vld [vmem:[%s1019 + $0x10] sm:$0xf]
        %v1025 = vld [vmem:[%s1019 + $0x14] sm:$0xf]
        %v1026 = vld [vmem:[%s1019 + $0x18] sm:$0xf]
        %v1027 = vld [vmem:[%s1019 + $0x1c] sm:$0xf]
        %v1028 = vld [vmem:[%s1019 + $0x20] sm:$0xf]
        %v1029 = vld [vmem:[%s1019 + $0x24] sm:$0xf]
        %v1030 = vld [vmem:[%s1019 + $0x28] sm:$0xf]
        %v1031 = vld [vmem:[%s1019 + $0x2c] sm:$0xf]
        %v1032 = vld [vmem:[%s1019 + $0x30] sm:$0xf]
        %v1033 = vld [vmem:[%s1019 + $0x34] sm:$0xf]
        %v1034 = vld [vmem:[%s1019 + $0x38] sm:$0xf]
        %v1035 = vld [vmem:[%s1019 + $0x3c] sm:$0xf]
        %v1036 = vld [vmem:[%s1019 + $0x40] sm:$0xf]
        %v1037 = vld [vmem:[%s1019 + $0x44] sm:$0xf]
        %v1038 = vld [vmem:[%s1019 + $0x48] sm:$0xf]
        %v1039 = vld [vmem:[%s1019 + $0x4c] sm:$0xf]
        %v1040 = vld [vmem:[%s1019 + $0x50] sm:$0xf]
        %v1041 = vld [vmem:[%s1019 + $0x54] sm:$0xf]
        %v1042 = vld [vmem:[%s1019 + $0x58] sm:$0xf]
        %v1043 = vld [vmem:[%s1019 + $0x5c] sm:$0xf]
        %v1044 = vld [vmem:[%s1019 + $0x60] sm:$0xf]
        %v1045 = vld [vmem:[%s1019 + $0x64] sm:$0xf]
        %v1046 = vld [vmem:[%s1019 + $0x68] sm:$0xf]
        %v1047 = vld [vmem:[%s1019 + $0x6c] sm:$0xf]
        %v1048 = vld [vmem:[%s1019 + $0x70] sm:$0xf]
        %v1049 = vld [vmem:[%s1019 + $0x74] sm:$0xf]
        %v1050 = vld [vmem:[%s1019 + $0x78] sm:$0xf]
        %v1051 = vld [vmem:[%s1019 + $0x7c] sm:$0xf]
        %v1052 = vld [vmem:[%s1019 + $0x80] sm:$0xf]
        %v1053 = vld [vmem:[%s1019 + $0x84] sm:$0xf]
        %v1054 = vld [vmem:[%s1019 + $0x88] sm:$0xf]
        %v1055 = vld [vmem:[%s1019 + $0x8c] sm:$0xf]
        %v1056 = vld [vmem:[%s1019 + $0x90] sm:$0xf]
        %v1057 = vld [vmem:[%s1019 + $0x94] sm:$0xf]
        %v1058 = vld [vmem:[%s1019 + $0x98] sm:$0xf]
        %v1059 = vld [vmem:[%s1019 + $0x9c] sm:$0xf]
        %v1060 = vld [vmem:[%s1019 + $0xa0] sm:$0xf]
        %v1061 = vld [vmem:[%s1019 + $0xa4] sm:$0xf]
        %v1062 = vld [vmem:[%s1019 + $0xa8] sm:$0xf]
        %v1063 = vld [vmem:[%s1019 + $0xac] sm:$0xf]
        %v1064 = vld [vmem:[%s1019 + $0xb0] sm:$0xf]
        %v1065 = vld [vmem:[%s1019 + $0xb4] sm:$0xf]
        %v1066 = vld [vmem:[%s1019 + $0xb8] sm:$0xf]
        %v1067 = vld [vmem:[%s1019 + $0xbc] sm:$0xf]
        %1068 = vst [vmem:[#allocation1] ss:$4 sm:$0xff] %v1003
        %s1069 = scalar_lea.vmem [#allocation1], 1
        %1070 = vst [vmem:[%s1069] ss:$4 sm:$0xff] %v1008
        %s1071 = scalar_lea.vmem [#allocation1], 2
        %1072 = vst [vmem:[%s1071] ss:$4 sm:$0xff] %v1013
        %s1073 = scalar_lea.vmem [#allocation1], 3
        %1074 = vst [vmem:[%s1073] ss:$4 sm:$0xff] %v1018
        %v1075 = vld.sshfl [vmem:[#allocation1] sm:$0xff pattern:$0x73625140]
        %v1076 = vld.sshfl [vmem:[#allocation1 + $0x8] sm:$0xff pattern:$0x73625140]
        %v1077 = vld.sshfl [vmem:[#allocation1 + $0x10] sm:$0xff pattern:$0x73625140]
        %v1129 = vunpack.c.l.b16 %v1020
        %v1130 = vunpack.c.l.b16 %v1021
        %v1131 = vunpack.c.l.b16 %v1022
        %v1132 = vunpack.c.l.b16 %v1023
        %v1133 = vunpack.c.l.b16 %v1024
        %v1134 = vunpack.c.l.b16 %v1025
        %v1135 = vunpack.c.l.b16 %v1026
        %v1136 = vunpack.c.l.b16 %v1027
        %v1137 = vunpack.c.l.b16 %v1028
        %v1138 = vunpack.c.l.b16 %v1029
        %v1139 = vunpack.c.l.b16 %v1030
        %v1140 = vunpack.c.l.b16 %v1031
        %v1141 = vunpack.c.l.b16 %v1032
        %v1142 = vunpack.c.l.b16 %v1033
        %v1143 = vunpack.c.l.b16 %v1034
        %v1144 = vunpack.c.l.b16 %v1035
        %v1145 = vunpack.c.l.b16 %v1036
        %v1146 = vunpack.c.l.b16 %v1037
        %v1147 = vunpack.c.l.b16 %v1038
        %v1148 = vunpack.c.l.b16 %v1039
        %v1149 = vunpack.c.l.b16 %v1040
        %v1150 = vunpack.c.l.b16 %v1041
        %v1151 = vunpack.c.l.b16 %v1042
        %v1152 = vunpack.c.l.b16 %v1043
        %v1153 = vunpack.c.l.b16 %v1044
        %v1154 = vunpack.c.l.b16 %v1045
        %v1155 = vunpack.c.l.b16 %v1046
        %v1156 = vunpack.c.l.b16 %v1047
        %v1157 = vunpack.c.l.b16 %v1048
        %v1158 = vunpack.c.l.b16 %v1049
        %v1159 = vunpack.c.l.b16 %v1050
        %v1160 = vunpack.c.l.b16 %v1051
        %v1161 = vunpack.c.l.b16 %v1052
        %v1162 = vunpack.c.l.b16 %v1053
        %v1163 = vunpack.c.l.b16 %v1054
        %v1164 = vunpack.c.l.b16 %v1055
        %v1165 = vunpack.c.l.b16 %v1056
        %v1166 = vunpack.c.l.b16 %v1057
        %v1167 = vunpack.c.l.b16 %v1058
        %v1168 = vunpack.c.l.b16 %v1059
        %v1169 = vunpack.c.l.b16 %v1060
        %v1170 = vunpack.c.l.b16 %v1061
        %v1171 = vunpack.c.l.b16 %v1062
        %v1172 = vunpack.c.l.b16 %v1063
        %v1173 = vunpack.c.l.b16 %v1064
        %v1174 = vunpack.c.l.b16 %v1065
        %v1175 = vunpack.c.l.b16 %v1066
        %v1176 = vunpack.c.l.b16 %v1067
        %v1177 = vpack.c.b16 %v1130, %v1129
        %v1178 = vpack.c.b16 %v1132, %v1131
        %v1179 = vpack.c.b16 %v1134, %v1133
        %v1180 = vpack.c.b16 %v1136, %v1135
        %v1181 = vpack.c.b16 %v1138, %v1137
        %v1182 = vpack.c.b16 %v1140, %v1139
        %v1183 = vpack.c.b16 %v1142, %v1141
        %v1184 = vpack.c.b16 %v1144, %v1143
        %v1185 = vpack.c.b16 %v1146, %v1145
        %v1186 = vpack.c.b16 %v1148, %v1147
        %v1187 = vpack.c.b16 %v1150, %v1149
        %v1188 = vpack.c.b16 %v1152, %v1151
        %v1189 = vpack.c.b16 %v1154, %v1153
        %v1190 = vpack.c.b16 %v1156, %v1155
        %v1191 = vpack.c.b16 %v1158, %v1157
        %v1192 = vpack.c.b16 %v1160, %v1159
        %v1193 = vpack.c.b16 %v1162, %v1161
        %v1194 = vpack.c.b16 %v1164, %v1163
        %v1195 = vpack.c.b16 %v1166, %v1165
        %v1196 = vpack.c.b16 %v1168, %v1167
        %v1197 = vpack.c.b16 %v1170, %v1169
        %v1198 = vpack.c.b16 %v1172, %v1171
        %v1199 = vpack.c.b16 %v1174, %v1173
        %v1200 = vpack.c.b16 %v1176, %v1175
        %1225 = vmatpush.bf16.msra.mxu0 %v1184
        %1226 = vmatpush.bf16.msra.mxu0 %v1183
        %1227 = vmatpush.bf16.msra.mxu0 %v1182
        %1228 = vmatpush.bf16.msra.mxu0 %v1181
        %1229 = vmatpush.bf16.msra.mxu0 %v1180
        %1230 = vmatpush.bf16.msra.mxu0 %v1179
        %1231 = vmatpush.bf16.msra.mxu0 %v1178
        %1232 = vmatpush.bf16.msra.mxu0 %v1177
        %1233 = vmatmul.bf16.gmra.mxu0 %v1075
        %v1234 = vpop.f32.mrf.mxu0
        %v1235 = vadd.f32 0.0, %v1234
        %v1236 = vpop.f32.mrf.mxu0
        %v1237 = vadd.f32 0.0, %v1236
        %1238 = vdwg.mxu0
        %1239 = vmatpush.bf16.msra.mxu0 %v1192
        %1240 = vmatpush.bf16.msra.mxu0 %v1191
        %1241 = vmatpush.bf16.msra.mxu0 %v1190
        %1242 = vmatpush.bf16.msra.mxu0 %v1189
        %1243 = vmatpush.bf16.msra.mxu0 %v1188
        %1244 = vmatpush.bf16.msra.mxu0 %v1187
        %1245 = vmatpush.bf16.msra.mxu0 %v1186
        %1246 = vmatpush.bf16.msra.mxu0 %v1185
        %1247 = vmatmul.bf16.gmra.mxu0 %v1076
        %v1248 = vpop.f32.mrf.mxu0
        %v1249 = vadd.f32 %v1235, %v1248
        %v1250 = vpop.f32.mrf.mxu0
        %v1251 = vadd.f32 %v1237, %v1250
        %1252 = vdwg.mxu0
        %1253 = vmatpush.bf16.msra.mxu0 %v1200
        %1254 = vmatpush.bf16.msra.mxu0 %v1199
        %1255 = vmatpush.bf16.msra.mxu0 %v1198
        %1256 = vmatpush.bf16.msra.mxu0 %v1197
        %1257 = vmatpush.bf16.msra.mxu0 %v1196
        %1258 = vmatpush.bf16.msra.mxu0 %v1195
        %1259 = vmatpush.bf16.msra.mxu0 %v1194
        %1260 = vmatpush.bf16.msra.mxu0 %v1193
        %1261 = vmatmul.bf16.gmra.mxu0 %v1077
        %v1262 = vpop.f32.mrf.mxu0
        %v1263 = vadd.f32 %v1249, %v1262
        %v1264 = vpop.f32.mrf.mxu0
        %v1265 = vadd.f32 %v1251, %v1264
        %1266 = vdwg.mxu0
        %v1267 = vadd.f32 %v936, %v1263
        %v1268 = vadd.f32 %v938, %v1265
        %v1269 = vld [vmem:[%s2] sm:$0x1]
        %v1271 = vperm.slane %v1269, 0
        %v1273 = vadd.f32 %v1267, %v1271
        %v1274 = vadd.f32 %v1268, %v1271
        %v1275 = vmul.f32 %v1273, 0.2
        %v1276 = vmul.f32 %v1274, 0.2
        %v1277 = vmax.f32 %v1273, %v1275
        %v1278 = vmax.f32 %v1274, %v1276
        %v1279 = vmul.f32 %v1277, %v1277
        %v1280 = vmul.f32 %v1278, %v1278
        %1281 = vadd.xlane.f32.xlu0 %v1279
        %v1282 = vpop.xlane.xlu0 %1281
        %1283 = vadd.xlane.f32.xlu0 %v1280
        %v1284 = vpop.xlane.xlu0 %1283
        %v1285 = vrcp.pop 128.0
        %v1286 = vmul.f32 128.0, %v1285
        %v1287 = vsub.f32 1.0, %v1286
        %v1288 = vmul.f32 %v1285, %v1287
        %v1289 = vadd.f32 %v1285, %v1288
        %vm1290 = vweird.f32 %v1285
        %v1291 = vsel %vm1290, %v1285, %v1289
        %v1292 = vmul.f32 %v1282, %v1291
        %v1293 = vmul.f32 %v1284, %v1291
        %v1294 = vadd.f32 %v1292, 1e-08
        %v1295 = vadd.f32 %v1293, 1e-08
        %v1296 = vrsqrt.pop %v1294
        %v1297 = vmul.f32 %v1296, %v1294
        %v1298 = vmul.f32 %v1297, %v1296
        %v1299 = vmul.f32 0.5, %v1298
        %v1300 = vsub.f32 1.5, %v1299
        %v1301 = vmul.f32 %v1296, %v1300
        %vm1302 = vweird.f32 %v1294
        %vm1303 = vweird.f32 %v1296
        %vm1304 = vmor %vm1302, %vm1303
        %v1305 = vsel %vm1304, %v1296, %v1301
        %v1306 = vrsqrt.pop %v1295
        %v1307 = vmul.f32 %v1306, %v1295
        %v1308 = vmul.f32 %v1307, %v1306
        %v1309 = vmul.f32 0.5, %v1308
        %v1310 = vsub.f32 1.5, %v1309
        %v1311 = vmul.f32 %v1306, %v1310
        %vm1312 = vweird.f32 %v1295
        %vm1313 = vweird.f32 %v1306
        %vm1314 = vmor %vm1312, %vm1313
        %v1315 = vsel %vm1314, %v1306, %v1311
        %v1316 = vmul.f32 %v1277, %v1305
        %v1317 = vmul.f32 %v1278, %v1315
        %v1320 = vrot.slane %v1316, 4
        %v1321 = vrot.slane %v1317, 4
        %v1324 = vpack.c.bf16 %v1316, %v1316
        %v1325 = vpack.c.bf16 %v1320, %v1320
        %v1326 = vpack.c.bf16 %v1317, %v1317
        %v1327 = vpack.c.bf16 %v1321, %v1321
        %1328 = vst [vmem:[%s209] sm:$0x3] %v1324
        %1329 = vst [vmem:[%s209 + $0x2] sm:$0x3] %v1325
        %1330 = vst [vmem:[%s209 + $0x4] sm:$0x3] %v1326
        %1331 = vst [vmem:[%s209 + $0x6] sm:$0x3] %v1327
        %s1332 = smul.u32 4, %s20
        %p1333 = scmp.lt.s32.totalorder %s19, 1
        %s1334 = scalar_select %p1333, %s19, 1
        %p1335 = scmp.lt.s32.totalorder %s1332, 3
        %s1336 = scalar_select %p1335, %s1332, 3
        %s1337 = smul.addr %s1334, 4
        %s1338 = sadd.s32 %s1336, %s1337
        %s1339 = smul.addr %s1338, 2
        %s1340 = scalar_lea.vmem %s3, %s1339
        // Predicated region
        $region41: #{progan_gen_forward.8} parent=31 // pred_check
          %p1341 = pneg %p115
        $region42: #{progan_gen_forward.8} parent=31 // pred_check_branch
          %1343 = sbr.rel (%p1341) target = $region44
        $region43: #{progan_gen_forward.8} parent=31 // pred_region
          %s1344 = smul.u32 4, %s20
        $region44: #{progan_gen_forward.8} parent=31 // pred_fallthru
          _
      $region32: #{progan_gen_forward.8} parent=5 // pred_fallthru
        _
      %p1345 = scmp.le.s32.totalorder 2, %s10
      // Predicated region
      $region45: #{progan_gen_forward.8} parent=5 // pred_check
        %p1346 = pneg %p1345
      $region46: #{progan_gen_forward.8} parent=5 // pred_check_branch
        %1348 = sbr.rel (%p1346) target = $region48
      $region47: #{progan_gen_forward.8} parent=5 // pred_region
        %s1349 = ssub.s32 %s10, 2
        // Predicated region
        $region49: #{progan_gen_forward.8} parent=47 // pred_check
          %p1350 = pneg %p121
        $region50: #{progan_gen_forward.8} parent=47 // pred_check_branch
          %1352 = sbr.rel (%p1350) target = $region52
        $region51: #{progan_gen_forward.8} parent=47 // pred_region
          %s1353 = smul.u32 4, %s22
          %p1354 = scmp.lt.s32.totalorder %s21, 1
          %s1355 = scalar_select %p1354, %s21, 1
          %p1356 = scmp.lt.s32.totalorder %s1353, 3
          %s1357 = scalar_select %p1356, %s1353, 3
          %s1358 = smul.addr %s1355, 4
          %s1359 = sadd.s32 %s1357, %s1358
          %s1360 = smul.addr %s1359, 2
          %s1361 = scalar_lea.vmem %s3, %s1360
        $region52: #{progan_gen_forward.8} parent=47 // pred_fallthru
          _
      $region48: #{progan_gen_forward.8} parent=5 // pred_fallthru
        _
    $region6: #{progan_gen_forward.8} parent=1 // loop_footer
      %s14 = sadd.s32 1, %s10
    $region7: #{progan_gen_forward.8} parent=1 // loop_footer_branch
      %9 = sbr.rel target = $region3
    $region8: #{progan_gen_forward.8} parent=1 // loop_exit
      _
    %1362 = vsyncpa [#allocation4], 1
    %s1363 = scalar_lea.sflag [#allocation4], 1
    %1364 = vsyncpa %s1363, 1

// kernel: progan_gen_forward.9
$region0: #{progan_gen_forward.9}
  #allocation0 [shape = 'u32[]', space=smem, size = 0x4, offset = 0x4, fixed_abs, tag = 'smem constant byte address 0x4 - core index']
  #allocation1 [shape = 'u32[72,128]{1,0:T(1,128)}', space=vmem, size = 0x9000, scoped, tag = 'internal scratch']
  #allocation2 [shape = 'bf16[10,10,128]{2,1,0:T(8,128)(2,1)}', space=vmem, size = 0xa000, scoped, tag = 'scratch operand']
  %s0 = inlined_call_operand.vmem [shape: bf16[2,8,8,128], index: 0, kind: input, shape index: {}]
  %s1 = inlined_call_operand.hbm [shape: bf16[3,384,128], index: 1, kind: input, shape index: {}]
  %s2 = inlined_call_operand.vmem [shape: f32[1,128], index: 2, kind: input, shape index: {}]
  %s3 = inlined_call_operand.vmem [shape: bf16[2,8,8,128], index: 3, kind: output, shape index: {}]
  %s4 = sld [smem:[#allocation0]]
  $region53: #{progan_gen_forward.9} parent=0
    _
  %s6 = ssub.s32 1, %s4
  %s7 = scalar_select 0, %s6, %s4
  $region1: #{progan_gen_forward.9} parent=0
    #allocation3 [shape = 'u8[294912]{0}', space=vmem, size = 0x48000, scoped, tag = 'input window, operand 1, single buffered']
    #allocation4 [shape = 's32[2]{0}', space=sflag, size = 0x8, scoped, tag = 'scoped memory for progan_gen_forward.9']
    %8 = vsyncpa [#allocation4], 0
    loop: start=0, step=1, limit=4
    $region2: #{progan_gen_forward.9} parent=1 // loop_pre_header
      _
    $region3: #{progan_gen_forward.9} parent=1 // loop_header
      %s10 = sphi 0, %s14
      %p11 = scmp.ge.s32.totalorder %s10, 4
      %s17 = sphi 0, %s29
      %s18 = sphi 0, %s25
      %s19 = sphi 0, %s17
      %s20 = sphi 0, %s18
      %s21 = sphi 0, %s19
      %s22 = sphi 0, %s20
      %s32 = sphi 0, %s34
      %s35 = sphi 0, %s32
      %s36 = sphi 0, %s35
      %s52 = sphi 0, %s36
      %s56 = sphi 0, %s56
      %s58 = sphi 0, %s56
      %s59 = sphi 0, %s58
      %s73 = sphi 0, %s59
      %s77 = sphi 0, %s77
      %s79 = sphi 0, %s77
      %s80 = sphi 0, %s79
      %s94 = sphi 0, %s80
      %s102 = sphi 0, %s104
      %s105 = sphi 0, %s102
      %s106 = sphi 0, %s105
      %s122 = sphi 0, %s106
    $region4: #{progan_gen_forward.9} parent=1 // loop_header_branch
      %13 = sbr.rel (%p11) target = $region8
    $region5: #{progan_gen_forward.9} parent=1 // loop_body
      %s15 = ssub.s32 %s10, 1
      %s16 = ssub.s32 %s10, 2
      %s23 = sadd.s32 1, %s18
      %p24 = scmp.ge.s32.totalorder %s23, 1
      %s25 = scalar_select %p24, 0, %s23
      %s26 = sadd.s32 1, %s17
      %s27 = scalar_select %p24, %s26, %s17
      %p28 = scmp.ge.s32.totalorder %s27, 2
      %s29 = scalar_select %p28, 0, %s27
      %s30 = ssub.s32 %s17, %s29
      %p31 = scmp.eq.s32.totalorder %s30, 0
      %s33 = sadd.s32 %s32, 1
      %s34 = scalar_select %p31, %s32, %s33
      %p37 = pneg %p31
      %p38 = scmp.eq.s32.totalorder %s10, 1
      %p39 = por %p37, %p38
      %p40 = scmp.ne.s32.totalorder %s32, %s35
      %p41 = scmp.eq.s32.totalorder %s10, 0
      %p42 = por %p40, %p41
      %p43 = scmp.ne.s32.totalorder %s32, %s35
      %p44 = scmp.eq.s32.totalorder %s15, 1
      %p45 = por %p43, %p44
      %p46 = scmp.ne.s32.totalorder %s35, %s36
      %p47 = scmp.eq.s32.totalorder %s15, 0
      %p48 = por %p46, %p47
      %p49 = scmp.ne.s32.totalorder %s35, %s36
      %p50 = scmp.eq.s32.totalorder %s16, 1
      %p51 = por %p49, %p50
      %p53 = scmp.ne.s32.totalorder %s36, %s52
      %p54 = scmp.eq.s32.totalorder %s16, 0
      %p55 = por %p53, %p54
      %s57 = sadd.s32 %s56, 1
      %p60 = scmp.eq.s32.totalorder %s10, 1
      %p61 = scmp.ne.s32.totalorder %s56, %s58
      %p62 = scmp.eq.s32.totalorder %s10, 0
      %p63 = por %p61, %p62
      %p64 = scmp.ne.s32.totalorder %s56, %s58
      %p65 = scmp.eq.s32.totalorder %s15, 1
      %p66 = por %p64, %p65
      %p67 = scmp.ne.s32.totalorder %s58, %s59
      %p68 = scmp.eq.s32.totalorder %s15, 0
      %p69 = por %p67, %p68
      %p70 = scmp.ne.s32.totalorder %s58, %s59
      %p71 = scmp.eq.s32.totalorder %s16, 1
      %p72 = por %p70, %p71
      %p74 = scmp.ne.s32.totalorder %s59, %s73
      %p75 = scmp.eq.s32.totalorder %s16, 0
      %p76 = por %p74, %p75
      %s78 = sadd.s32 %s77, 1
      %p81 = scmp.eq.s32.totalorder %s10, 1
      %p82 = scmp.ne.s32.totalorder %s77, %s79
      %p83 = scmp.eq.s32.totalorder %s10, 0
      %p84 = por %p82, %p83
      %p85 = scmp.ne.s32.totalorder %s77, %s79
      %p86 = scmp.eq.s32.totalorder %s15, 1
      %p87 = por %p85, %p86
      %p88 = scmp.ne.s32.totalorder %s79, %s80
      %p89 = scmp.eq.s32.totalorder %s15, 0
      %p90 = por %p88, %p89
      %p91 = scmp.ne.s32.totalorder %s79, %s80
      %p92 = scmp.eq.s32.totalorder %s16, 1
      %p93 = por %p91, %p92
      %p95 = scmp.ne.s32.totalorder %s80, %s94
      %p96 = scmp.eq.s32.totalorder %s16, 0
      %p97 = por %p95, %p96
      %s98 = ssub.s32 %s17, %s29
      %s99 = ssub.s32 %s18, %s25
      %s100 = sor.u32 %s98, %s99
      %p101 = scmp.eq.s32.totalorder %s100, 0
      %s103 = sadd.s32 %s102, 1
      %s104 = scalar_select %p101, %s102, %s103
      %p107 = pneg %p101
      %p108 = scmp.eq.s32.totalorder %s10, 1
      %p109 = por %p107, %p108
      %p110 = scmp.ne.s32.totalorder %s102, %s105
      %p111 = scmp.eq.s32.totalorder %s10, 0
      %p112 = por %p110, %p111
      %p113 = scmp.ne.s32.totalorder %s102, %s105
      %p114 = scmp.eq.s32.totalorder %s15, 1
      %p115 = por %p113, %p114
      %p116 = scmp.ne.s32.totalorder %s105, %s106
      %p117 = scmp.eq.s32.totalorder %s15, 0
      %p118 = por %p116, %p117
      %p119 = scmp.ne.s32.totalorder %s105, %s106
      %p120 = scmp.eq.s32.totalorder %s16, 1
      %p121 = por %p119, %p120
      %p123 = scmp.ne.s32.totalorder %s106, %s122
      %p124 = scmp.eq.s32.totalorder %s16, 0
      %p125 = por %p123, %p124
      %p126 = scmp.le.s32.totalorder 1, %s10
      %p127 = scmp.lt.s32.totalorder %s10, 3
      %p128 = pnand %p126, %p127
      %p129 = pneg %p128
      // Predicated region
      $region9: #{progan_gen_forward.9} parent=5 // pred_check
        _
      $region10: #{progan_gen_forward.9} parent=5 // pred_check_branch
        %131 = sbr.rel (%p128) target = $region12
      $region11: #{progan_gen_forward.9} parent=5 // pred_region
        %s132 = ssub.s32 %s10, 1
        // Predicated region
        $region13: #{progan_gen_forward.9} parent=11 // pred_check
          %p133 = pneg %p69
        $region14: #{progan_gen_forward.9} parent=11 // pred_check_branch
          %135 = sbr.rel (%p133) target = $region16
        $region15: #{progan_gen_forward.9} parent=11 // pred_region
          %137 = vsyncadd [#allocation4], 0
          %s138 = sshll.u32 %s1, 4
          %s139 = int_to_ptr.hbm [resolvable:$true] %s138
          %s140 = sshll.u32 [#allocation3], 4
          %s141 = int_to_ptr.vmem [resolvable:$true] %s140
          %146 = dma.hbm_to_vmem [thread:$0]  %s139, 9216, %s141, [#allocation4], 64, 64, 4
        $region16: #{progan_gen_forward.9} parent=11 // pred_fallthru
          _
        // Predicated region
        $region17: #{progan_gen_forward.9} parent=11 // pred_check
          %p147 = pneg %p90
        $region18: #{progan_gen_forward.9} parent=11 // pred_check_branch
          %149 = sbr.rel (%p147) target = $region20
        $region19: #{progan_gen_forward.9} parent=11 // pred_region
          _
        $region20: #{progan_gen_forward.9} parent=11 // pred_fallthru
          _
      $region12: #{progan_gen_forward.9} parent=5 // pred_fallthru
        _
      %p150 = scmp.lt.s32.totalorder %s10, 2
      // Predicated region
      $region21: #{progan_gen_forward.9} parent=5 // pred_check
        %p151 = pneg %p150
      $region22: #{progan_gen_forward.9} parent=5 // pred_check_branch
        %153 = sbr.rel (%p151) target = $region24
      $region23: #{progan_gen_forward.9} parent=5 // pred_region
        // Predicated region
        $region25: #{progan_gen_forward.9} parent=23 // pred_check
          %p154 = pneg %p42
        $region26: #{progan_gen_forward.9} parent=23 // pred_check_branch
          %156 = sbr.rel (%p154) target = $region28
        $region27: #{progan_gen_forward.9} parent=23 // pred_region
          %p157 = scmp.lt.s32.totalorder %s17, 1
          %s158 = scalar_select %p157, %s17, 1
          %s159 = smul.addr %s158, 8
          %s160 = smul.addr %s159, 4
          %s161 = scalar_lea.vmem %s0, %s160
        $region28: #{progan_gen_forward.9} parent=23 // pred_fallthru
          _
      $region24: #{progan_gen_forward.9} parent=5 // pred_fallthru
        _
      %p162 = scmp.le.s32.totalorder 1, %s10
      %p163 = scmp.lt.s32.totalorder %s10, 3
      %p164 = pnand %p162, %p163
      %p165 = pneg %p164
      // Predicated region
      $region29: #{progan_gen_forward.9} parent=5 // pred_check
        _
      $region30: #{progan_gen_forward.9} parent=5 // pred_check_branch
        %167 = sbr.rel (%p164) target = $region32
      $region31: #{progan_gen_forward.9} parent=5 // pred_region
        %s168 = ssub.s32 %s10, 1
        // Predicated region
        $region33: #{progan_gen_forward.9} parent=31 // pred_check
          %p169 = pneg %p69
        $region34: #{progan_gen_forward.9} parent=31 // pred_check_branch
          %171 = sbr.rel (%p169) target = $region36
        $region35: #{progan_gen_forward.9} parent=31 // pred_region
          %173 = dma.done [#allocation4], 9216
        $region36: #{progan_gen_forward.9} parent=31 // pred_fallthru
          _
        %p174 = scmp.lt.s32.totalorder %s19, 1
        %s175 = scalar_select %p174, %s19, 1
        %s176 = smul.addr %s175, 8
        %s177 = smul.addr %s176, 4
        %s178 = scalar_lea.vmem %s0, %s177
        %p179 = pneg %p48
        %p180 = pneg %p45
        %p181 = pneg %p69
        %p182 = pneg %p66
        %p183 = pneg %p90
        %p184 = pneg %p87
        %p185 = pneg %p118
        %p186 = pneg %p115
        %s187 = smul.u32 8, %s20
        %p188 = scmp.lt.s32.totalorder %s19, 1
        %s189 = scalar_select %p188, %s19, 1
        %p190 = scmp.lt.s32.totalorder %s187, 7
        %s191 = scalar_select %p190, %s187, 7
        %s192 = smul.addr %s189, 8
        %s193 = sadd.s32 %s191, %s192
        %s194 = smul.addr %s193, 4
        %s195 = scalar_lea.vmem %s3, %s194
        %p196 = scmp.lt.s32.totalorder %s19, 1
        %s197 = scalar_select %p196, %s19, 1
        %s198 = smul.addr %s197, 8
        %s199 = smul.addr %s198, 4
        %s200 = scalar_lea.vmem %s0, %s199
        %s201 = smul.u32 8, %s20
        %p202 = scmp.lt.s32.totalorder %s19, 1
        %s203 = scalar_select %p202, %s19, 1
        %p204 = scmp.lt.s32.totalorder %s201, 7
        %s205 = scalar_select %p204, %s201, 7
        %s206 = smul.addr %s203, 8
        %s207 = sadd.s32 %s205, %s206
        %s208 = smul.addr %s207, 4
        %s209 = scalar_lea.vmem %s3, %s208
        %s210 = smul.u32 8, %s20
        %p212 = scmp.eq.s32.totalorder %s20, 0
        // Predicated region
        $region37: #{progan_gen_forward.9} parent=31 // pred_check
          %p213 = pneg %p212
        $region38: #{progan_gen_forward.9} parent=31 // pred_check_branch
          %215 = sbr.rel (%p213) target = $region40
        $region39: #{progan_gen_forward.9} parent=31 // pred_region
          %216 = vst [vmem:[#allocation2] sm:$0xf] 0
          %217 = vst [vmem:[#allocation2 + $0x4] sm:$0x1] 0
          %218 = vst [vmem:[#allocation2 + $0x8] sm:$0xf] 0
          %219 = vst [vmem:[#allocation2 + $0xc] sm:$0x1] 0
          %220 = vst [vmem:[#allocation2 + $0x10] sm:$0xf] 0
          %221 = vst [vmem:[#allocation2 + $0x14] sm:$0x1] 0
          %222 = vst [vmem:[#allocation2 + $0x18] sm:$0xf] 0
          %223 = vst [vmem:[#allocation2 + $0x1c] sm:$0x1] 0
          %224 = vst [vmem:[#allocation2 + $0x20] sm:$0xf] 0
          %225 = vst [vmem:[#allocation2 + $0x24] sm:$0x1] 0
          %226 = vst [vmem:[#allocation2 + $0x28] sm:$0xf] 0
          %227 = vst [vmem:[#allocation2 + $0x2c] sm:$0x1] 0
          %228 = vst [vmem:[#allocation2 + $0x30] sm:$0xf] 0
          %229 = vst [vmem:[#allocation2 + $0x34] sm:$0x1] 0
          %230 = vst [vmem:[#allocation2 + $0x38] sm:$0xf] 0
          %231 = vst [vmem:[#allocation2 + $0x3c] sm:$0x1] 0
          %232 = vst [vmem:[#allocation2 + $0x40] sm:$0xf] 0
          %233 = vst [vmem:[#allocation2 + $0x44] sm:$0x1] 0
          %234 = vst [vmem:[#allocation2 + $0x48] sm:$0xf] 0
          %235 = vst [vmem:[#allocation2 + $0x4c] sm:$0x1] 0
          %v236 = vld [vmem:[%s200] sm:$0xf]
          %v237 = vld [vmem:[%s200 + $0x4] sm:$0xf]
          %v238 = vld [vmem:[%s200 + $0x8] sm:$0xf]
          %v239 = vld [vmem:[%s200 + $0xc] sm:$0xf]
          %v240 = vld [vmem:[%s200 + $0x10] sm:$0xf]
          %v241 = vld [vmem:[%s200 + $0x14] sm:$0xf]
          %v242 = vld [vmem:[%s200 + $0x18] sm:$0xf]
          %v243 = vld [vmem:[%s200 + $0x1c] sm:$0xf]
          %v245 = vshrl.u32 %v236, 16
          %v247 = vrot.slane %v245, 7
          %v248 = vshll.u32 %v236, 16
          %v250 = vor.u32 %v247, %v248
          %v251 = vrot.slane %v247, 4
          %v253 = vshrl.u32 %v237, 16
          %v255 = vrot.slane %v253, 7
          %v256 = vshll.u32 %v237, 16
          %v258 = vor.u32 %v255, %v256
          %v259 = vrot.slane %v255, 4
          %v261 = vshrl.u32 %v238, 16
          %v263 = vrot.slane %v261, 7
          %v264 = vshll.u32 %v238, 16
          %v266 = vor.u32 %v263, %v264
          %v267 = vrot.slane %v263, 4
          %v269 = vshrl.u32 %v239, 16
          %v271 = vrot.slane %v269, 7
          %v272 = vshll.u32 %v239, 16
          %v274 = vor.u32 %v271, %v272
          %v275 = vrot.slane %v271, 4
          %v277 = vshrl.u32 %v240, 16
          %v279 = vrot.slane %v277, 7
          %v280 = vshll.u32 %v240, 16
          %v282 = vor.u32 %v279, %v280
          %v283 = vrot.slane %v279, 4
          %v285 = vshrl.u32 %v241, 16
          %v287 = vrot.slane %v285, 7
          %v288 = vshll.u32 %v241, 16
          %v290 = vor.u32 %v287, %v288
          %v291 = vrot.slane %v287, 4
          %v293 = vshrl.u32 %v242, 16
          %v295 = vrot.slane %v293, 7
          %v296 = vshll.u32 %v242, 16
          %v298 = vor.u32 %v295, %v296
          %v299 = vrot.slane %v295, 4
          %v301 = vshrl.u32 %v243, 16
          %v303 = vrot.slane %v301, 7
          %v304 = vshll.u32 %v243, 16
          %v306 = vor.u32 %v303, %v304
          %v307 = vrot.slane %v303, 4
          %s324 = scalar_lea.vmem [#allocation2], 8
          %vm325 = vcmask 1043456
          %vm326 = vsmask.f32 7938
          %vm327 = vmand %vm325, %vm326
          %v328 = vld [vmem:[%s324] sm:$0xf]
          %v329 = vsel %vm327, %v250, %v328
          %330 = vst [vmem:[%s324] sm:$0xf] %v329
          %vm331 = vcmask 1040384
          %vm332 = vsmask.f32 256
          %vm333 = vmand %vm331, %vm332
          %v334 = vld [vmem:[%s324 + $0x4] sm:$0x1]
          %v335 = vsel %vm333, %v251, %v334
          %336 = vst [vmem:[%s324 + $0x4] sm:$0x1] %v335
          %v337 = vld [vmem:[%s324 + $0x8] sm:$0xf]
          %v338 = vsel %vm327, %v258, %v337
          %339 = vst [vmem:[%s324 + $0x8] sm:$0xf] %v338
          %v340 = vld [vmem:[%s324 + $0xc] sm:$0x1]
          %v341 = vsel %vm333, %v259, %v340
          %342 = vst [vmem:[%s324 + $0xc] sm:$0x1] %v341
          %v343 = vld [vmem:[%s324 + $0x10] sm:$0xf]
          %v344 = vsel %vm327, %v266, %v343
          %345 = vst [vmem:[%s324 + $0x10] sm:$0xf] %v344
          %v346 = vld [vmem:[%s324 + $0x14] sm:$0x1]
          %v347 = vsel %vm333, %v267, %v346
          %348 = vst [vmem:[%s324 + $0x14] sm:$0x1] %v347
          %v349 = vld [vmem:[%s324 + $0x18] sm:$0xf]
          %v350 = vsel %vm327, %v274, %v349
          %351 = vst [vmem:[%s324 + $0x18] sm:$0xf] %v350
          %v352 = vld [vmem:[%s324 + $0x1c] sm:$0x1]
          %v353 = vsel %vm333, %v275, %v352
          %354 = vst [vmem:[%s324 + $0x1c] sm:$0x1] %v353
          %v355 = vld [vmem:[%s324 + $0x20] sm:$0xf]
          %v356 = vsel %vm327, %v282, %v355
          %357 = vst [vmem:[%s324 + $0x20] sm:$0xf] %v356
          %v358 = vld [vmem:[%s324 + $0x24] sm:$0x1]
          %v359 = vsel %vm333, %v283, %v358
          %360 = vst [vmem:[%s324 + $0x24] sm:$0x1] %v359
          %v361 = vld [vmem:[%s324 + $0x28] sm:$0xf]
          %v362 = vsel %vm327, %v290, %v361
          %363 = vst [vmem:[%s324 + $0x28] sm:$0xf] %v362
          %v364 = vld [vmem:[%s324 + $0x2c] sm:$0x1]
          %v365 = vsel %vm333, %v291, %v364
          %366 = vst [vmem:[%s324 + $0x2c] sm:$0x1] %v365
          %v367 = vld [vmem:[%s324 + $0x30] sm:$0xf]
          %v368 = vsel %vm327, %v298, %v367
          %369 = vst [vmem:[%s324 + $0x30] sm:$0xf] %v368
          %v370 = vld [vmem:[%s324 + $0x34] sm:$0x1]
          %v371 = vsel %vm333, %v299, %v370
          %372 = vst [vmem:[%s324 + $0x34] sm:$0x1] %v371
          %v373 = vld [vmem:[%s324 + $0x38] sm:$0xf]
          %v374 = vsel %vm327, %v306, %v373
          %375 = vst [vmem:[%s324 + $0x38] sm:$0xf] %v374
          %v376 = vld [vmem:[%s324 + $0x3c] sm:$0x1]
          %v377 = vsel %vm333, %v307, %v376
          %378 = vst [vmem:[%s324 + $0x3c] sm:$0x1] %v377
        $region40: #{progan_gen_forward.9} parent=31 // pred_fallthru
          _
        %s379 = smul.u32 %s20, 8
        %s380 = smul.u32 %s379, 2
        %s381 = smul.addr %s380, 4
        %s382 = scalar_lea.vmem [#allocation2], %s381
        %v383 = vld [vmem:[%s382] sm:$0xf]
        %v384 = vld [vmem:[%s382 + $0x4] sm:$0x1]
        %v385 = vld [vmem:[%s382 + $0x8] sm:$0xf]
        %v386 = vld [vmem:[%s382 + $0xc] sm:$0x1]
        %v387 = vld [vmem:[%s382 + $0x10] sm:$0xf]
        %v388 = vld [vmem:[%s382 + $0x14] sm:$0x1]
        %v389 = vld [vmem:[%s382 + $0x18] sm:$0xf]
        %v390 = vld [vmem:[%s382 + $0x1c] sm:$0x1]
        %v391 = vld [vmem:[%s382 + $0x20] sm:$0xf]
        %v392 = vld [vmem:[%s382 + $0x24] sm:$0x1]
        %v393 = vld [vmem:[%s382 + $0x28] sm:$0xf]
        %v394 = vld [vmem:[%s382 + $0x2c] sm:$0x1]
        %v395 = vld [vmem:[%s382 + $0x30] sm:$0xf]
        %v396 = vld [vmem:[%s382 + $0x34] sm:$0x1]
        %v397 = vld [vmem:[%s382 + $0x38] sm:$0xf]
        %v398 = vld [vmem:[%s382 + $0x3c] sm:$0x1]
        %v415 = vunpack.c.l.b16 %v383
        %v416 = vunpack.c.l.b16 %v384
        %v417 = vunpack.c.l.b16 %v385
        %v418 = vunpack.c.l.b16 %v386
        %v419 = vunpack.c.l.b16 %v387
        %v420 = vunpack.c.l.b16 %v388
        %v421 = vunpack.c.l.b16 %v389
        %v422 = vunpack.c.l.b16 %v390
        %v423 = vunpack.c.l.b16 %v391
        %v424 = vunpack.c.l.b16 %v392
        %v425 = vunpack.c.l.b16 %v393
        %v426 = vunpack.c.l.b16 %v394
        %v427 = vunpack.c.l.b16 %v395
        %v428 = vunpack.c.l.b16 %v396
        %v429 = vunpack.c.l.b16 %v397
        %v430 = vunpack.c.l.b16 %v398
        %v431 = vpack.c.b16 %v416, %v415
        %v432 = vpack.c.b16 %v418, %v417
        %v433 = vpack.c.b16 %v420, %v419
        %v434 = vpack.c.b16 %v422, %v421
        %v435 = vpack.c.b16 %v424, %v423
        %v436 = vpack.c.b16 %v426, %v425
        %v437 = vpack.c.b16 %v428, %v427
        %v438 = vpack.c.b16 %v430, %v429
        %v440 = vshrl.u32 %v431, 16
        %v442 = vshll.u32 %v431, 16
        %v444 = vrot.slane %v442, 1
        %v445 = vor.u32 %v440, %v444
        %v447 = vshrl.u32 %v432, 16
        %v449 = vshll.u32 %v432, 16
        %v451 = vrot.slane %v449, 1
        %v452 = vor.u32 %v447, %v451
        %v454 = vshrl.u32 %v433, 16
        %v456 = vshll.u32 %v433, 16
        %v458 = vrot.slane %v456, 1
        %v459 = vor.u32 %v454, %v458
        %v461 = vshrl.u32 %v434, 16
        %v463 = vshll.u32 %v434, 16
        %v465 = vrot.slane %v463, 1
        %v466 = vor.u32 %v461, %v465
        %v468 = vshrl.u32 %v435, 16
        %v470 = vshll.u32 %v435, 16
        %v472 = vrot.slane %v470, 1
        %v473 = vor.u32 %v468, %v472
        %v475 = vshrl.u32 %v436, 16
        %v477 = vshll.u32 %v436, 16
        %v479 = vrot.slane %v477, 1
        %v480 = vor.u32 %v475, %v479
        %v482 = vshrl.u32 %v437, 16
        %v484 = vshll.u32 %v437, 16
        %v486 = vrot.slane %v484, 1
        %v487 = vor.u32 %v482, %v486
        %v489 = vshrl.u32 %v438, 16
        %v491 = vshll.u32 %v438, 16
        %v493 = vrot.slane %v491, 1
        %v494 = vor.u32 %v489, %v493
        %v495 = vrot.slane %v431, 1
        %v496 = vrot.slane %v432, 1
        %v497 = vrot.slane %v433, 1
        %v498 = vrot.slane %v434, 1
        %v499 = vrot.slane %v435, 1
        %v500 = vrot.slane %v436, 1
        %v501 = vrot.slane %v437, 1
        %v502 = vrot.slane %v438, 1
        %v503 = vunpack.c.l.b16 %v445
        %v504 = vunpack.c.l.b16 %v495
        %v505 = vunpack.c.l.b16 %v452
        %v506 = vunpack.c.l.b16 %v496
        %v507 = vunpack.c.l.b16 %v459
        %v508 = vunpack.c.l.b16 %v497
        %v509 = vunpack.c.l.b16 %v466
        %v510 = vunpack.c.l.b16 %v498
        %v511 = vunpack.c.l.b16 %v473
        %v512 = vunpack.c.l.b16 %v499
        %v513 = vunpack.c.l.b16 %v480
        %v514 = vunpack.c.l.b16 %v500
        %v515 = vunpack.c.l.b16 %v487
        %v516 = vunpack.c.l.b16 %v501
        %v517 = vunpack.c.l.b16 %v494
        %v518 = vunpack.c.l.b16 %v502
        %v519 = vld [vmem:[#allocation3] sm:$0xf]
        %v520 = vld [vmem:[#allocation3 + $0x4] sm:$0xf]
        %v521 = vld [vmem:[#allocation3 + $0x8] sm:$0xf]
        %v522 = vld [vmem:[#allocation3 + $0xc] sm:$0xf]
        %v523 = vld [vmem:[#allocation3 + $0x10] sm:$0xf]
        %v524 = vld [vmem:[#allocation3 + $0x14] sm:$0xf]
        %v525 = vld [vmem:[#allocation3 + $0x18] sm:$0xf]
        %v526 = vld [vmem:[#allocation3 + $0x1c] sm:$0xf]
        %v527 = vld [vmem:[#allocation3 + $0x20] sm:$0xf]
        %v528 = vld [vmem:[#allocation3 + $0x24] sm:$0xf]
        %v529 = vld [vmem:[#allocation3 + $0x28] sm:$0xf]
        %v530 = vld [vmem:[#allocation3 + $0x2c] sm:$0xf]
        %v531 = vld [vmem:[#allocation3 + $0x30] sm:$0xf]
        %v532 = vld [vmem:[#allocation3 + $0x34] sm:$0xf]
        %v533 = vld [vmem:[#allocation3 + $0x38] sm:$0xf]
        %v534 = vld [vmem:[#allocation3 + $0x3c] sm:$0xf]
        %v535 = vld [vmem:[#allocation3 + $0x40] sm:$0xf]
        %v536 = vld [vmem:[#allocation3 + $0x44] sm:$0xf]
        %v537 = vld [vmem:[#allocation3 + $0x48] sm:$0xf]
        %v538 = vld [vmem:[#allocation3 + $0x4c] sm:$0xf]
        %v539 = vld [vmem:[#allocation3 + $0x50] sm:$0xf]
        %v540 = vld [vmem:[#allocation3 + $0x54] sm:$0xf]
        %v541 = vld [vmem:[#allocation3 + $0x58] sm:$0xf]
        %v542 = vld [vmem:[#allocation3 + $0x5c] sm:$0xf]
        %v543 = vld [vmem:[#allocation3 + $0x60] sm:$0xf]
        %v544 = vld [vmem:[#allocation3 + $0x64] sm:$0xf]
        %v545 = vld [vmem:[#allocation3 + $0x68] sm:$0xf]
        %v546 = vld [vmem:[#allocation3 + $0x6c] sm:$0xf]
        %v547 = vld [vmem:[#allocation3 + $0x70] sm:$0xf]
        %v548 = vld [vmem:[#allocation3 + $0x74] sm:$0xf]
        %v549 = vld [vmem:[#allocation3 + $0x78] sm:$0xf]
        %v550 = vld [vmem:[#allocation3 + $0x7c] sm:$0xf]
        %v551 = vld [vmem:[#allocation3 + $0x80] sm:$0xf]
        %v552 = vld [vmem:[#allocation3 + $0x84] sm:$0xf]
        %v553 = vld [vmem:[#allocation3 + $0x88] sm:$0xf]
        %v554 = vld [vmem:[#allocation3 + $0x8c] sm:$0xf]
        %v555 = vld [vmem:[#allocation3 + $0x90] sm:$0xf]
        %v556 = vld [vmem:[#allocation3 + $0x94] sm:$0xf]
        %v557 = vld [vmem:[#allocation3 + $0x98] sm:$0xf]
        %v558 = vld [vmem:[#allocation3 + $0x9c] sm:$0xf]
        %v559 = vld [vmem:[#allocation3 + $0xa0] sm:$0xf]
        %v560 = vld [vmem:[#allocation3 + $0xa4] sm:$0xf]
        %v561 = vld [vmem:[#allocation3 + $0xa8] sm:$0xf]
        %v562 = vld [vmem:[#allocation3 + $0xac] sm:$0xf]
        %v563 = vld [vmem:[#allocation3 + $0xb0] sm:$0xf]
        %v564 = vld [vmem:[#allocation3 + $0xb4] sm:$0xf]
        %v565 = vld [vmem:[#allocation3 + $0xb8] sm:$0xf]
        %v566 = vld [vmem:[#allocation3 + $0xbc] sm:$0xf]
        %s567 = sadd.s32 %s379, 1
        %s568 = smul.u32 %s567, 2
        %s569 = smul.addr %s568, 4
        %s570 = scalar_lea.vmem [#allocation2], %s569
        %v571 = vld [vmem:[%s570] sm:$0xf]
        %v572 = vld [vmem:[%s570 + $0x4] sm:$0x1]
        %v573 = vld [vmem:[%s570 + $0x8] sm:$0xf]
        %v574 = vld [vmem:[%s570 + $0xc] sm:$0x1]
        %v575 = vld [vmem:[%s570 + $0x10] sm:$0xf]
        %v576 = vld [vmem:[%s570 + $0x14] sm:$0x1]
        %v577 = vld [vmem:[%s570 + $0x18] sm:$0xf]
        %v578 = vld [vmem:[%s570 + $0x1c] sm:$0x1]
        %v579 = vld [vmem:[%s570 + $0x20] sm:$0xf]
        %v580 = vld [vmem:[%s570 + $0x24] sm:$0x1]
        %v581 = vld [vmem:[%s570 + $0x28] sm:$0xf]
        %v582 = vld [vmem:[%s570 + $0x2c] sm:$0x1]
        %v583 = vld [vmem:[%s570 + $0x30] sm:$0xf]
        %v584 = vld [vmem:[%s570 + $0x34] sm:$0x1]
        %v585 = vld [vmem:[%s570 + $0x38] sm:$0xf]
        %v586 = vld [vmem:[%s570 + $0x3c] sm:$0x1]
        %v603 = vunpack.c.l.b16 %v571
        %v604 = vunpack.c.l.b16 %v572
        %v605 = vunpack.c.l.b16 %v573
        %v606 = vunpack.c.l.b16 %v574
        %v607 = vunpack.c.l.b16 %v575
        %v608 = vunpack.c.l.b16 %v576
        %v609 = vunpack.c.l.b16 %v577
        %v610 = vunpack.c.l.b16 %v578
        %v611 = vunpack.c.l.b16 %v579
        %v612 = vunpack.c.l.b16 %v580
        %v613 = vunpack.c.l.b16 %v581
        %v614 = vunpack.c.l.b16 %v582
        %v615 = vunpack.c.l.b16 %v583
        %v616 = vunpack.c.l.b16 %v584
        %v617 = vunpack.c.l.b16 %v585
        %v618 = vunpack.c.l.b16 %v586
        %v619 = vpack.c.b16 %v604, %v603
        %v620 = vpack.c.b16 %v606, %v605
        %v621 = vpack.c.b16 %v608, %v607
        %v622 = vpack.c.b16 %v610, %v609
        %v623 = vpack.c.b16 %v612, %v611
        %v624 = vpack.c.b16 %v614, %v613
        %v625 = vpack.c.b16 %v616, %v615
        %v626 = vpack.c.b16 %v618, %v617
        %v628 = vshrl.u32 %v619, 16
        %v630 = vshll.u32 %v619, 16
        %v632 = vrot.slane %v630, 1
        %v633 = vor.u32 %v628, %v632
        %v635 = vshrl.u32 %v620, 16
        %v637 = vshll.u32 %v620, 16
        %v639 = vrot.slane %v637, 1
        %v640 = vor.u32 %v635, %v639
        %v642 = vshrl.u32 %v621, 16
        %v644 = vshll.u32 %v621, 16
        %v646 = vrot.slane %v644, 1
        %v647 = vor.u32 %v642, %v646
        %v649 = vshrl.u32 %v622, 16
        %v651 = vshll.u32 %v622, 16
        %v653 = vrot.slane %v651, 1
        %v654 = vor.u32 %v649, %v653
        %v656 = vshrl.u32 %v623, 16
        %v658 = vshll.u32 %v623, 16
        %v660 = vrot.slane %v658, 1
        %v661 = vor.u32 %v656, %v660
        %v663 = vshrl.u32 %v624, 16
        %v665 = vshll.u32 %v624, 16
        %v667 = vrot.slane %v665, 1
        %v668 = vor.u32 %v663, %v667
        %v670 = vshrl.u32 %v625, 16
        %v672 = vshll.u32 %v625, 16
        %v674 = vrot.slane %v672, 1
        %v675 = vor.u32 %v670, %v674
        %v677 = vshrl.u32 %v626, 16
        %v679 = vshll.u32 %v626, 16
        %v681 = vrot.slane %v679, 1
        %v682 = vor.u32 %v677, %v681
        %v683 = vrot.slane %v619, 1
        %v684 = vrot.slane %v620, 1
        %v685 = vrot.slane %v621, 1
        %v686 = vrot.slane %v622, 1
        %v687 = vrot.slane %v623, 1
        %v688 = vrot.slane %v624, 1
        %v689 = vrot.slane %v625, 1
        %v690 = vrot.slane %v626, 1
        %v691 = vunpack.c.l.b16 %v633
        %v692 = vunpack.c.l.b16 %v683
        %v693 = vunpack.c.l.b16 %v640
        %v694 = vunpack.c.l.b16 %v684
        %v695 = vunpack.c.l.b16 %v647
        %v696 = vunpack.c.l.b16 %v685
        %v697 = vunpack.c.l.b16 %v654
        %v698 = vunpack.c.l.b16 %v686
        %v699 = vunpack.c.l.b16 %v661
        %v700 = vunpack.c.l.b16 %v687
        %v701 = vunpack.c.l.b16 %v668
        %v702 = vunpack.c.l.b16 %v688
        %v703 = vunpack.c.l.b16 %v675
        %v704 = vunpack.c.l.b16 %v689
        %v705 = vunpack.c.l.b16 %v682
        %v706 = vunpack.c.l.b16 %v690
        %s707 = scalar_lea.vmem [#allocation3], 192
        %v708 = vld [vmem:[%s707] sm:$0xf]
        %v709 = vld [vmem:[%s707 + $0x4] sm:$0xf]
        %v710 = vld [vmem:[%s707 + $0x8] sm:$0xf]
        %v711 = vld [vmem:[%s707 + $0xc] sm:$0xf]
        %v712 = vld [vmem:[%s707 + $0x10] sm:$0xf]
        %v713 = vld [vmem:[%s707 + $0x14] sm:$0xf]
        %v714 = vld [vmem:[%s707 + $0x18] sm:$0xf]
        %v715 = vld [vmem:[%s707 + $0x1c] sm:$0xf]
        %v716 = vld [vmem:[%s707 + $0x20] sm:$0xf]
        %v717 = vld [vmem:[%s707 + $0x24] sm:$0xf]
        %v718 = vld [vmem:[%s707 + $0x28] sm:$0xf]
        %v719 = vld [vmem:[%s707 + $0x2c] sm:$0xf]
        %v720 = vld [vmem:[%s707 + $0x30] sm:$0xf]
        %v721 = vld [vmem:[%s707 + $0x34] sm:$0xf]
        %v722 = vld [vmem:[%s707 + $0x38] sm:$0xf]
        %v723 = vld [vmem:[%s707 + $0x3c] sm:$0xf]
        %v724 = vld [vmem:[%s707 + $0x40] sm:$0xf]
        %v725 = vld [vmem:[%s707 + $0x44] sm:$0xf]
        %v726 = vld [vmem:[%s707 + $0x48] sm:$0xf]
        %v727 = vld [vmem:[%s707 + $0x4c] sm:$0xf]
        %v728 = vld [vmem:[%s707 + $0x50] sm:$0xf]
        %v729 = vld [vmem:[%s707 + $0x54] sm:$0xf]
        %v730 = vld [vmem:[%s707 + $0x58] sm:$0xf]
        %v731 = vld [vmem:[%s707 + $0x5c] sm:$0xf]
        %v732 = vld [vmem:[%s707 + $0x60] sm:$0xf]
        %v733 = vld [vmem:[%s707 + $0x64] sm:$0xf]
        %v734 = vld [vmem:[%s707 + $0x68] sm:$0xf]
        %v735 = vld [vmem:[%s707 + $0x6c] sm:$0xf]
        %v736 = vld [vmem:[%s707 + $0x70] sm:$0xf]
        %v737 = vld [vmem:[%s707 + $0x74] sm:$0xf]
        %v738 = vld [vmem:[%s707 + $0x78] sm:$0xf]
        %v739 = vld [vmem:[%s707 + $0x7c] sm:$0xf]
        %v740 = vld [vmem:[%s707 + $0x80] sm:$0xf]
        %v741 = vld [vmem:[%s707 + $0x84] sm:$0xf]
        %v742 = vld [vmem:[%s707 + $0x88] sm:$0xf]
        %v743 = vld [vmem:[%s707 + $0x8c] sm:$0xf]
        %v744 = vld [vmem:[%s707 + $0x90] sm:$0xf]
        %v745 = vld [vmem:[%s707 + $0x94] sm:$0xf]
        %v746 = vld [vmem:[%s707 + $0x98] sm:$0xf]
        %v747 = vld [vmem:[%s707 + $0x9c] sm:$0xf]
        %v748 = vld [vmem:[%s707 + $0xa0] sm:$0xf]
        %v749 = vld [vmem:[%s707 + $0xa4] sm:$0xf]
        %v750 = vld [vmem:[%s707 + $0xa8] sm:$0xf]
        %v751 = vld [vmem:[%s707 + $0xac] sm:$0xf]
        %v752 = vld [vmem:[%s707 + $0xb0] sm:$0xf]
        %v753 = vld [vmem:[%s707 + $0xb4] sm:$0xf]
        %v754 = vld [vmem:[%s707 + $0xb8] sm:$0xf]
        %v755 = vld [vmem:[%s707 + $0xbc] sm:$0xf]
        %v756 = vpack.c.b16 %v605, %v603
        %v757 = vpack.c.b16 %v693, %v691
        %v758 = vpack.c.b16 %v694, %v692
        %v759 = vpack.c.b16 %v609, %v607
        %v760 = vpack.c.b16 %v697, %v695
        %v761 = vpack.c.b16 %v698, %v696
        %v762 = vpack.c.b16 %v613, %v611
        %v763 = vpack.c.b16 %v701, %v699
        %v764 = vpack.c.b16 %v702, %v700
        %v765 = vpack.c.b16 %v617, %v615
        %v766 = vpack.c.b16 %v705, %v703
        %v767 = vpack.c.b16 %v706, %v704
        %v828 = vunpack.c.l.b16 %v708
        %v829 = vunpack.c.l.b16 %v709
        %v830 = vunpack.c.l.b16 %v710
        %v831 = vunpack.c.l.b16 %v711
        %v832 = vunpack.c.l.b16 %v712
        %v833 = vunpack.c.l.b16 %v713
        %v834 = vunpack.c.l.b16 %v714
        %v835 = vunpack.c.l.b16 %v715
        %v836 = vunpack.c.l.b16 %v716
        %v837 = vunpack.c.l.b16 %v717
        %v838 = vunpack.c.l.b16 %v718
        %v839 = vunpack.c.l.b16 %v719
        %v840 = vunpack.c.l.b16 %v720
        %v841 = vunpack.c.l.b16 %v721
        %v842 = vunpack.c.l.b16 %v722
        %v843 = vunpack.c.l.b16 %v723
        %v844 = vunpack.c.l.b16 %v724
        %v845 = vunpack.c.l.b16 %v725
        %v846 = vunpack.c.l.b16 %v726
        %v847 = vunpack.c.l.b16 %v727
        %v848 = vunpack.c.l.b16 %v728
        %v849 = vunpack.c.l.b16 %v729
        %v850 = vunpack.c.l.b16 %v730
        %v851 = vunpack.c.l.b16 %v731
        %v852 = vunpack.c.l.b16 %v732
        %v853 = vunpack.c.l.b16 %v733
        %v854 = vunpack.c.l.b16 %v734
        %v855 = vunpack.c.l.b16 %v735
        %v856 = vunpack.c.l.b16 %v736
        %v857 = vunpack.c.l.b16 %v737
        %v858 = vunpack.c.l.b16 %v738
        %v859 = vunpack.c.l.b16 %v739
        %v860 = vunpack.c.l.b16 %v740
        %v861 = vunpack.c.l.b16 %v741
        %v862 = vunpack.c.l.b16 %v742
        %v863 = vunpack.c.l.b16 %v743
        %v864 = vunpack.c.l.b16 %v744
        %v865 = vunpack.c.l.b16 %v745
        %v866 = vunpack.c.l.b16 %v746
        %v867 = vunpack.c.l.b16 %v747
        %v868 = vunpack.c.l.b16 %v748
        %v869 = vunpack.c.l.b16 %v749
        %v870 = vunpack.c.l.b16 %v750
        %v871 = vunpack.c.l.b16 %v751
        %v872 = vunpack.c.l.b16 %v752
        %v873 = vunpack.c.l.b16 %v753
        %v874 = vunpack.c.l.b16 %v754
        %v875 = vunpack.c.l.b16 %v755
        %v876 = vpack.c.b16 %v829, %v828
        %v877 = vpack.c.b16 %v831, %v830
        %v878 = vpack.c.b16 %v833, %v832
        %v879 = vpack.c.b16 %v835, %v834
        %v880 = vpack.c.b16 %v837, %v836
        %v881 = vpack.c.b16 %v839, %v838
        %v882 = vpack.c.b16 %v841, %v840
        %v883 = vpack.c.b16 %v843, %v842
        %v884 = vpack.c.b16 %v845, %v844
        %v885 = vpack.c.b16 %v847, %v846
        %v886 = vpack.c.b16 %v849, %v848
        %v887 = vpack.c.b16 %v851, %v850
        %v888 = vpack.c.b16 %v853, %v852
        %v889 = vpack.c.b16 %v855, %v854
        %v890 = vpack.c.b16 %v857, %v856
        %v891 = vpack.c.b16 %v859, %v858
        %v892 = vpack.c.b16 %v861, %v860
        %v893 = vpack.c.b16 %v863, %v862
        %v894 = vpack.c.b16 %v865, %v864
        %v895 = vpack.c.b16 %v867, %v866
        %v896 = vpack.c.b16 %v869, %v868
        %v897 = vpack.c.b16 %v871, %v870
        %v898 = vpack.c.b16 %v873, %v872
        %v899 = vpack.c.b16 %v875, %v874
        %924 = vmatpush.bf16.msra.mxu0 %v883
        %925 = vmatpush.bf16.msra.mxu0 %v882
        %926 = vmatpush.bf16.msra.mxu0 %v881
        %927 = vmatpush.bf16.msra.mxu0 %v880
        %928 = vmatpush.bf16.msra.mxu0 %v879
        %929 = vmatpush.bf16.msra.mxu0 %v878
        %930 = vmatpush.bf16.msra.mxu0 %v877
        %931 = vmatpush.bf16.msra.mxu0 %v876
        %932 = vmatmul.bf16.gmra.mxu0 %v756
        %v933 = vpop.f32.mrf.mxu0
        %v934 = vadd.f32 0.0, %v933
        %v935 = vpop.f32.mrf.mxu0
        %v936 = vadd.f32 0.0, %v935
        %937 = vmatmul.bf16.gmra.mxu0 %v759
        %v938 = vpop.f32.mrf.mxu0
        %v939 = vadd.f32 0.0, %v938
        %v940 = vpop.f32.mrf.mxu0
        %v941 = vadd.f32 0.0, %v940
        %942 = vmatmul.bf16.gmra.mxu0 %v762
        %v943 = vpop.f32.mrf.mxu0
        %v944 = vadd.f32 0.0, %v943
        %v945 = vpop.f32.mrf.mxu0
        %v946 = vadd.f32 0.0, %v945
        %947 = vmatmul.bf16.gmra.mxu0 %v765
        %v948 = vpop.f32.mrf.mxu0
        %v949 = vadd.f32 0.0, %v948
        %v950 = vpop.f32.mrf.mxu0
        %v951 = vadd.f32 0.0, %v950
        %952 = vdwg.mxu0
        %953 = vmatpush.bf16.msra.mxu0 %v891
        %954 = vmatpush.bf16.msra.mxu0 %v890
        %955 = vmatpush.bf16.msra.mxu0 %v889
        %956 = vmatpush.bf16.msra.mxu0 %v888
        %957 = vmatpush.bf16.msra.mxu0 %v887
        %958 = vmatpush.bf16.msra.mxu0 %v886
        %959 = vmatpush.bf16.msra.mxu0 %v885
        %960 = vmatpush.bf16.msra.mxu0 %v884
        %961 = vmatmul.bf16.gmra.mxu0 %v757
        %v962 = vpop.f32.mrf.mxu0
        %v963 = vadd.f32 %v934, %v962
        %v964 = vpop.f32.mrf.mxu0
        %v965 = vadd.f32 %v936, %v964
        %966 = vmatmul.bf16.gmra.mxu0 %v760
        %v967 = vpop.f32.mrf.mxu0
        %v968 = vadd.f32 %v939, %v967
        %v969 = vpop.f32.mrf.mxu0
        %v970 = vadd.f32 %v941, %v969
        %971 = vmatmul.bf16.gmra.mxu0 %v763
        %v972 = vpop.f32.mrf.mxu0
        %v973 = vadd.f32 %v944, %v972
        %v974 = vpop.f32.mrf.mxu0
        %v975 = vadd.f32 %v946, %v974
        %976 = vmatmul.bf16.gmra.mxu0 %v766
        %v977 = vpop.f32.mrf.mxu0
        %v978 = vadd.f32 %v949, %v977
        %v979 = vpop.f32.mrf.mxu0
        %v980 = vadd.f32 %v951, %v979
        %981 = vdwg.mxu0
        %982 = vmatpush.bf16.msra.mxu0 %v899
        %983 = vmatpush.bf16.msra.mxu0 %v898
        %984 = vmatpush.bf16.msra.mxu0 %v897
        %985 = vmatpush.bf16.msra.mxu0 %v896
        %986 = vmatpush.bf16.msra.mxu0 %v895
        %987 = vmatpush.bf16.msra.mxu0 %v894
        %988 = vmatpush.bf16.msra.mxu0 %v893
        %989 = vmatpush.bf16.msra.mxu0 %v892
        %990 = vmatmul.bf16.gmra.mxu0 %v758
        %v991 = vpop.f32.mrf.mxu0
        %v992 = vadd.f32 %v963, %v991
        %v993 = vpop.f32.mrf.mxu0
        %v994 = vadd.f32 %v965, %v993
        %995 = vmatmul.bf16.gmra.mxu0 %v761
        %v996 = vpop.f32.mrf.mxu0
        %v997 = vadd.f32 %v968, %v996
        %v998 = vpop.f32.mrf.mxu0
        %v999 = vadd.f32 %v970, %v998
        %1000 = vmatmul.bf16.gmra.mxu0 %v764
        %v1001 = vpop.f32.mrf.mxu0
        %v1002 = vadd.f32 %v973, %v1001
        %v1003 = vpop.f32.mrf.mxu0
        %v1004 = vadd.f32 %v975, %v1003
        %1005 = vmatmul.bf16.gmra.mxu0 %v767
        %v1006 = vpop.f32.mrf.mxu0
        %v1007 = vadd.f32 %v978, %v1006
        %v1008 = vpop.f32.mrf.mxu0
        %v1009 = vadd.f32 %v980, %v1008
        %1010 = vdwg.mxu0
        %v1011 = vpack.c.b16 %v417, %v415
        %v1012 = vpack.c.b16 %v505, %v503
        %v1013 = vpack.c.b16 %v506, %v504
        %v1014 = vpack.c.b16 %v421, %v419
        %v1015 = vpack.c.b16 %v509, %v507
        %v1016 = vpack.c.b16 %v510, %v508
        %v1017 = vpack.c.b16 %v425, %v423
        %v1018 = vpack.c.b16 %v513, %v511
        %v1019 = vpack.c.b16 %v514, %v512
        %v1020 = vpack.c.b16 %v429, %v427
        %v1021 = vpack.c.b16 %v517, %v515
        %v1022 = vpack.c.b16 %v518, %v516
        %v1083 = vunpack.c.l.b16 %v519
        %v1084 = vunpack.c.l.b16 %v520
        %v1085 = vunpack.c.l.b16 %v521
        %v1086 = vunpack.c.l.b16 %v522
        %v1087 = vunpack.c.l.b16 %v523
        %v1088 = vunpack.c.l.b16 %v524
        %v1089 = vunpack.c.l.b16 %v525
        %v1090 = vunpack.c.l.b16 %v526
        %v1091 = vunpack.c.l.b16 %v527
        %v1092 = vunpack.c.l.b16 %v528
        %v1093 = vunpack.c.l.b16 %v529
        %v1094 = vunpack.c.l.b16 %v530
        %v1095 = vunpack.c.l.b16 %v531
        %v1096 = vunpack.c.l.b16 %v532
        %v1097 = vunpack.c.l.b16 %v533
        %v1098 = vunpack.c.l.b16 %v534
        %v1099 = vunpack.c.l.b16 %v535
        %v1100 = vunpack.c.l.b16 %v536
        %v1101 = vunpack.c.l.b16 %v537
        %v1102 = vunpack.c.l.b16 %v538
        %v1103 = vunpack.c.l.b16 %v539
        %v1104 = vunpack.c.l.b16 %v540
        %v1105 = vunpack.c.l.b16 %v541
        %v1106 = vunpack.c.l.b16 %v542
        %v1107 = vunpack.c.l.b16 %v543
        %v1108 = vunpack.c.l.b16 %v544
        %v1109 = vunpack.c.l.b16 %v545
        %v1110 = vunpack.c.l.b16 %v546
        %v1111 = vunpack.c.l.b16 %v547
        %v1112 = vunpack.c.l.b16 %v548
        %v1113 = vunpack.c.l.b16 %v549
        %v1114 = vunpack.c.l.b16 %v550
        %v1115 = vunpack.c.l.b16 %v551
        %v1116 = vunpack.c.l.b16 %v552
        %v1117 = vunpack.c.l.b16 %v553
        %v1118 = vunpack.c.l.b16 %v554
        %v1119 = vunpack.c.l.b16 %v555
        %v1120 = vunpack.c.l.b16 %v556
        %v1121 = vunpack.c.l.b16 %v557
        %v1122 = vunpack.c.l.b16 %v558
        %v1123 = vunpack.c.l.b16 %v559
        %v1124 = vunpack.c.l.b16 %v560
        %v1125 = vunpack.c.l.b16 %v561
        %v1126 = vunpack.c.l.b16 %v562
        %v1127 = vunpack.c.l.b16 %v563
        %v1128 = vunpack.c.l.b16 %v564
        %v1129 = vunpack.c.l.b16 %v565
        %v1130 = vunpack.c.l.b16 %v566
        %v1131 = vpack.c.b16 %v1084, %v1083
        %v1132 = vpack.c.b16 %v1086, %v1085
        %v1133 = vpack.c.b16 %v1088, %v1087
        %v1134 = vpack.c.b16 %v1090, %v1089
        %v1135 = vpack.c.b16 %v1092, %v1091
        %v1136 = vpack.c.b16 %v1094, %v1093
        %v1137 = vpack.c.b16 %v1096, %v1095
        %v1138 = vpack.c.b16 %v1098, %v1097
        %v1139 = vpack.c.b16 %v1100, %v1099
        %v1140 = vpack.c.b16 %v1102, %v1101
        %v1141 = vpack.c.b16 %v1104, %v1103
        %v1142 = vpack.c.b16 %v1106, %v1105
        %v1143 = vpack.c.b16 %v1108, %v1107
        %v1144 = vpack.c.b16 %v1110, %v1109
        %v1145 = vpack.c.b16 %v1112, %v1111
        %v1146 = vpack.c.b16 %v1114, %v1113
        %v1147 = vpack.c.b16 %v1116, %v1115
        %v1148 = vpack.c.b16 %v1118, %v1117
        %v1149 = vpack.c.b16 %v1120, %v1119
        %v1150 = vpack.c.b16 %v1122, %v1121
        %v1151 = vpack.c.b16 %v1124, %v1123
        %v1152 = vpack.c.b16 %v1126, %v1125
        %v1153 = vpack.c.b16 %v1128, %v1127
        %v1154 = vpack.c.b16 %v1130, %v1129
        %1179 = vmatpush.bf16.msra.mxu0 %v1138
        %1180 = vmatpush.bf16.msra.mxu0 %v1137
        %1181 = vmatpush.bf16.msra.mxu0 %v1136
        %1182 = vmatpush.bf16.msra.mxu0 %v1135
        %1183 = vmatpush.bf16.msra.mxu0 %v1134
        %1184 = vmatpush.bf16.msra.mxu0 %v1133
        %1185 = vmatpush.bf16.msra.mxu0 %v1132
        %1186 = vmatpush.bf16.msra.mxu0 %v1131
        %1187 = vmatmul.bf16.gmra.mxu0 %v1011
        %v1188 = vpop.f32.mrf.mxu0
        %v1189 = vadd.f32 %v992, %v1188
        %v1190 = vpop.f32.mrf.mxu0
        %v1191 = vadd.f32 %v994, %v1190
        %1192 = vmatmul.bf16.gmra.mxu0 %v1014
        %v1193 = vpop.f32.mrf.mxu0
        %v1194 = vadd.f32 %v997, %v1193
        %v1195 = vpop.f32.mrf.mxu0
        %v1196 = vadd.f32 %v999, %v1195
        %1197 = vmatmul.bf16.gmra.mxu0 %v1017
        %v1198 = vpop.f32.mrf.mxu0
        %v1199 = vadd.f32 %v1002, %v1198
        %v1200 = vpop.f32.mrf.mxu0
        %v1201 = vadd.f32 %v1004, %v1200
        %1202 = vmatmul.bf16.gmra.mxu0 %v1020
        %v1203 = vpop.f32.mrf.mxu0
        %v1204 = vadd.f32 %v1007, %v1203
        %v1205 = vpop.f32.mrf.mxu0
        %v1206 = vadd.f32 %v1009, %v1205
        %1207 = vdwg.mxu0
        %1208 = vmatpush.bf16.msra.mxu0 %v1146
        %1209 = vmatpush.bf16.msra.mxu0 %v1145
        %1210 = vmatpush.bf16.msra.mxu0 %v1144
        %1211 = vmatpush.bf16.msra.mxu0 %v1143
        %1212 = vmatpush.bf16.msra.mxu0 %v1142
        %1213 = vmatpush.bf16.msra.mxu0 %v1141
        %1214 = vmatpush.bf16.msra.mxu0 %v1140
        %1215 = vmatpush.bf16.msra.mxu0 %v1139
        %1216 = vmatmul.bf16.gmra.mxu0 %v1012
        %v1217 = vpop.f32.mrf.mxu0
        %v1218 = vadd.f32 %v1189, %v1217
        %v1219 = vpop.f32.mrf.mxu0
        %v1220 = vadd.f32 %v1191, %v1219
        %1221 = vmatmul.bf16.gmra.mxu0 %v1015
        %v1222 = vpop.f32.mrf.mxu0
        %v1223 = vadd.f32 %v1194, %v1222
        %v1224 = vpop.f32.mrf.mxu0
        %v1225 = vadd.f32 %v1196, %v1224
        %1226 = vmatmul.bf16.gmra.mxu0 %v1018
        %v1227 = vpop.f32.mrf.mxu0
        %v1228 = vadd.f32 %v1199, %v1227
        %v1229 = vpop.f32.mrf.mxu0
        %v1230 = vadd.f32 %v1201, %v1229
        %1231 = vmatmul.bf16.gmra.mxu0 %v1021
        %v1232 = vpop.f32.mrf.mxu0
        %v1233 = vadd.f32 %v1204, %v1232
        %v1234 = vpop.f32.mrf.mxu0
        %v1235 = vadd.f32 %v1206, %v1234
        %1236 = vdwg.mxu0
        %1237 = vmatpush.bf16.msra.mxu0 %v1154
        %1238 = vmatpush.bf16.msra.mxu0 %v1153
        %1239 = vmatpush.bf16.msra.mxu0 %v1152
        %1240 = vmatpush.bf16.msra.mxu0 %v1151
        %1241 = vmatpush.bf16.msra.mxu0 %v1150
        %1242 = vmatpush.bf16.msra.mxu0 %v1149
        %1243 = vmatpush.bf16.msra.mxu0 %v1148
        %1244 = vmatpush.bf16.msra.mxu0 %v1147
        %1245 = vmatmul.bf16.gmra.mxu0 %v1013
        %v1246 = vpop.f32.mrf.mxu0
        %v1247 = vadd.f32 %v1218, %v1246
        %v1248 = vpop.f32.mrf.mxu0
        %v1249 = vadd.f32 %v1220, %v1248
        %1250 = vmatmul.bf16.gmra.mxu0 %v1016
        %v1251 = vpop.f32.mrf.mxu0
        %v1252 = vadd.f32 %v1223, %v1251
        %v1253 = vpop.f32.mrf.mxu0
        %v1254 = vadd.f32 %v1225, %v1253
        %1255 = vmatmul.bf16.gmra.mxu0 %v1019
        %v1256 = vpop.f32.mrf.mxu0
        %v1257 = vadd.f32 %v1228, %v1256
        %v1258 = vpop.f32.mrf.mxu0
        %v1259 = vadd.f32 %v1230, %v1258
        %1260 = vmatmul.bf16.gmra.mxu0 %v1022
        %v1261 = vpop.f32.mrf.mxu0
        %v1262 = vadd.f32 %v1233, %v1261
        %v1263 = vpop.f32.mrf.mxu0
        %v1264 = vadd.f32 %v1235, %v1263
        %1265 = vdwg.mxu0
        %s1266 = sadd.s32 %s379, 2
        %s1267 = smul.u32 %s1266, 2
        %s1268 = smul.addr %s1267, 4
        %s1269 = scalar_lea.vmem [#allocation2], %s1268
        %v1270 = vld [vmem:[%s1269] sm:$0xf]
        %v1271 = vld [vmem:[%s1269 + $0x4] sm:$0x1]
        %v1272 = vld [vmem:[%s1269 + $0x8] sm:$0xf]
        %v1273 = vld [vmem:[%s1269 + $0xc] sm:$0x1]
        %v1274 = vld [vmem:[%s1269 + $0x10] sm:$0xf]
        %v1275 = vld [vmem:[%s1269 + $0x14] sm:$0x1]
        %v1276 = vld [vmem:[%s1269 + $0x18] sm:$0xf]
        %v1277 = vld [vmem:[%s1269 + $0x1c] sm:$0x1]
        %v1278 = vld [vmem:[%s1269 + $0x20] sm:$0xf]
        %v1279 = vld [vmem:[%s1269 + $0x24] sm:$0x1]
        %v1280 = vld [vmem:[%s1269 + $0x28] sm:$0xf]
        %v1281 = vld [vmem:[%s1269 + $0x2c] sm:$0x1]
        %v1282 = vld [vmem:[%s1269 + $0x30] sm:$0xf]
        %v1283 = vld [vmem:[%s1269 + $0x34] sm:$0x1]
        %v1284 = vld [vmem:[%s1269 + $0x38] sm:$0xf]
        %v1285 = vld [vmem:[%s1269 + $0x3c] sm:$0x1]
        %v1302 = vunpack.c.l.b16 %v1270
        %v1303 = vunpack.c.l.b16 %v1271
        %v1304 = vunpack.c.l.b16 %v1272
        %v1305 = vunpack.c.l.b16 %v1273
        %v1306 = vunpack.c.l.b16 %v1274
        %v1307 = vunpack.c.l.b16 %v1275
        %v1308 = vunpack.c.l.b16 %v1276
        %v1309 = vunpack.c.l.b16 %v1277
        %v1310 = vunpack.c.l.b16 %v1278
        %v1311 = vunpack.c.l.b16 %v1279
        %v1312 = vunpack.c.l.b16 %v1280
        %v1313 = vunpack.c.l.b16 %v1281
        %v1314 = vunpack.c.l.b16 %v1282
        %v1315 = vunpack.c.l.b16 %v1283
        %v1316 = vunpack.c.l.b16 %v1284
        %v1317 = vunpack.c.l.b16 %v1285
        %v1318 = vpack.c.b16 %v1303, %v1302
        %v1319 = vpack.c.b16 %v1305, %v1304
        %v1320 = vpack.c.b16 %v1307, %v1306
        %v1321 = vpack.c.b16 %v1309, %v1308
        %v1322 = vpack.c.b16 %v1311, %v1310
        %v1323 = vpack.c.b16 %v1313, %v1312
        %v1324 = vpack.c.b16 %v1315, %v1314
        %v1325 = vpack.c.b16 %v1317, %v1316
        %v1327 = vshrl.u32 %v1318, 16
        %v1329 = vshll.u32 %v1318, 16
        %v1331 = vrot.slane %v1329, 1
        %v1332 = vor.u32 %v1327, %v1331
        %v1334 = vshrl.u32 %v1319, 16
        %v1336 = vshll.u32 %v1319, 16
        %v1338 = vrot.slane %v1336, 1
        %v1339 = vor.u32 %v1334, %v1338
        %v1341 = vshrl.u32 %v1320, 16
        %v1343 = vshll.u32 %v1320, 16
        %v1345 = vrot.slane %v1343, 1
        %v1346 = vor.u32 %v1341, %v1345
        %v1348 = vshrl.u32 %v1321, 16
        %v1350 = vshll.u32 %v1321, 16
        %v1352 = vrot.slane %v1350, 1
        %v1353 = vor.u32 %v1348, %v1352
        %v1355 = vshrl.u32 %v1322, 16
        %v1357 = vshll.u32 %v1322, 16
        %v1359 = vrot.slane %v1357, 1
        %v1360 = vor.u32 %v1355, %v1359
        %v1362 = vshrl.u32 %v1323, 16
        %v1364 = vshll.u32 %v1323, 16
        %v1366 = vrot.slane %v1364, 1
        %v1367 = vor.u32 %v1362, %v1366
        %v1369 = vshrl.u32 %v1324, 16
        %v1371 = vshll.u32 %v1324, 16
        %v1373 = vrot.slane %v1371, 1
        %v1374 = vor.u32 %v1369, %v1373
        %v1376 = vshrl.u32 %v1325, 16
        %v1378 = vshll.u32 %v1325, 16
        %v1380 = vrot.slane %v1378, 1
        %v1381 = vor.u32 %v1376, %v1380
        %v1382 = vrot.slane %v1318, 1
        %v1383 = vrot.slane %v1319, 1
        %v1384 = vrot.slane %v1320, 1
        %v1385 = vrot.slane %v1321, 1
        %v1386 = vrot.slane %v1322, 1
        %v1387 = vrot.slane %v1323, 1
        %v1388 = vrot.slane %v1324, 1
        %v1389 = vrot.slane %v1325, 1
        %v1390 = vunpack.c.l.b16 %v1332
        %v1391 = vunpack.c.l.b16 %v1382
        %v1392 = vunpack.c.l.b16 %v1339
        %v1393 = vunpack.c.l.b16 %v1383
        %v1394 = vunpack.c.l.b16 %v1346
        %v1395 = vunpack.c.l.b16 %v1384
        %v1396 = vunpack.c.l.b16 %v1353
        %v1397 = vunpack.c.l.b16 %v1385
        %v1398 = vunpack.c.l.b16 %v1360
        %v1399 = vunpack.c.l.b16 %v1386
        %v1400 = vunpack.c.l.b16 %v1367
        %v1401 = vunpack.c.l.b16 %v1387
        %v1402 = vunpack.c.l.b16 %v1374
        %v1403 = vunpack.c.l.b16 %v1388
        %v1404 = vunpack.c.l.b16 %v1381
        %v1405 = vunpack.c.l.b16 %v1389
        %s1406 = scalar_lea.vmem [#allocation3], 384
        %v1407 = vld [vmem:[%s1406] sm:$0xf]
        %v1408 = vld [vmem:[%s1406 + $0x4] sm:$0xf]
        %v1409 = vld [vmem:[%s1406 + $0x8] sm:$0xf]
        %v1410 = vld [vmem:[%s1406 + $0xc] sm:$0xf]
        %v1411 = vld [vmem:[%s1406 + $0x10] sm:$0xf]
        %v1412 = vld [vmem:[%s1406 + $0x14] sm:$0xf]
        %v1413 = vld [vmem:[%s1406 + $0x18] sm:$0xf]
        %v1414 = vld [vmem:[%s1406 + $0x1c] sm:$0xf]
        %v1415 = vld [vmem:[%s1406 + $0x20] sm:$0xf]
        %v1416 = vld [vmem:[%s1406 + $0x24] sm:$0xf]
        %v1417 = vld [vmem:[%s1406 + $0x28] sm:$0xf]
        %v1418 = vld [vmem:[%s1406 + $0x2c] sm:$0xf]
        %v1419 = vld [vmem:[%s1406 + $0x30] sm:$0xf]
        %v1420 = vld [vmem:[%s1406 + $0x34] sm:$0xf]
        %v1421 = vld [vmem:[%s1406 + $0x38] sm:$0xf]
        %v1422 = vld [vmem:[%s1406 + $0x3c] sm:$0xf]
        %v1423 = vld [vmem:[%s1406 + $0x40] sm:$0xf]
        %v1424 = vld [vmem:[%s1406 + $0x44] sm:$0xf]
        %v1425 = vld [vmem:[%s1406 + $0x48] sm:$0xf]
        %v1426 = vld [vmem:[%s1406 + $0x4c] sm:$0xf]
        %v1427 = vld [vmem:[%s1406 + $0x50] sm:$0xf]
        %v1428 = vld [vmem:[%s1406 + $0x54] sm:$0xf]
        %v1429 = vld [vmem:[%s1406 + $0x58] sm:$0xf]
        %v1430 = vld [vmem:[%s1406 + $0x5c] sm:$0xf]
        %v1431 = vld [vmem:[%s1406 + $0x60] sm:$0xf]
        %v1432 = vld [vmem:[%s1406 + $0x64] sm:$0xf]
        %v1433 = vld [vmem:[%s1406 + $0x68] sm:$0xf]
        %v1434 = vld [vmem:[%s1406 + $0x6c] sm:$0xf]
        %v1435 = vld [vmem:[%s1406 + $0x70] sm:$0xf]
        %v1436 = vld [vmem:[%s1406 + $0x74] sm:$0xf]
        %v1437 = vld [vmem:[%s1406 + $0x78] sm:$0xf]
        %v1438 = vld [vmem:[%s1406 + $0x7c] sm:$0xf]
        %v1439 = vld [vmem:[%s1406 + $0x80] sm:$0xf]
        %v1440 = vld [vmem:[%s1406 + $0x84] sm:$0xf]
        %v1441 = vld [vmem:[%s1406 + $0x88] sm:$0xf]
        %v1442 = vld [vmem:[%s1406 + $0x8c] sm:$0xf]
        %v1443 = vld [vmem:[%s1406 + $0x90] sm:$0xf]
        %v1444 = vld [vmem:[%s1406 + $0x94] sm:$0xf]
        %v1445 = vld [vmem:[%s1406 + $0x98] sm:$0xf]
        %v1446 = vld [vmem:[%s1406 + $0x9c] sm:$0xf]
        %v1447 = vld [vmem:[%s1406 + $0xa0] sm:$0xf]
        %v1448 = vld [vmem:[%s1406 + $0xa4] sm:$0xf]
        %v1449 = vld [vmem:[%s1406 + $0xa8] sm:$0xf]
        %v1450 = vld [vmem:[%s1406 + $0xac] sm:$0xf]
        %v1451 = vld [vmem:[%s1406 + $0xb0] sm:$0xf]
        %v1452 = vld [vmem:[%s1406 + $0xb4] sm:$0xf]
        %v1453 = vld [vmem:[%s1406 + $0xb8] sm:$0xf]
        %v1454 = vld [vmem:[%s1406 + $0xbc] sm:$0xf]
        %v1455 = vpack.c.b16 %v1304, %v1302
        %v1456 = vpack.c.b16 %v1392, %v1390
        %v1457 = vpack.c.b16 %v1393, %v1391
        %v1458 = vpack.c.b16 %v1308, %v1306
        %v1459 = vpack.c.b16 %v1396, %v1394
        %v1460 = vpack.c.b16 %v1397, %v1395
        %v1461 = vpack.c.b16 %v1312, %v1310
        %v1462 = vpack.c.b16 %v1400, %v1398
        %v1463 = vpack.c.b16 %v1401, %v1399
        %v1464 = vpack.c.b16 %v1316, %v1314
        %v1465 = vpack.c.b16 %v1404, %v1402
        %v1466 = vpack.c.b16 %v1405, %v1403
        %v1527 = vunpack.c.l.b16 %v1407
        %v1528 = vunpack.c.l.b16 %v1408
        %v1529 = vunpack.c.l.b16 %v1409
        %v1530 = vunpack.c.l.b16 %v1410
        %v1531 = vunpack.c.l.b16 %v1411
        %v1532 = vunpack.c.l.b16 %v1412
        %v1533 = vunpack.c.l.b16 %v1413
        %v1534 = vunpack.c.l.b16 %v1414
        %v1535 = vunpack.c.l.b16 %v1415
        %v1536 = vunpack.c.l.b16 %v1416
        %v1537 = vunpack.c.l.b16 %v1417
        %v1538 = vunpack.c.l.b16 %v1418
        %v1539 = vunpack.c.l.b16 %v1419
        %v1540 = vunpack.c.l.b16 %v1420
        %v1541 = vunpack.c.l.b16 %v1421
        %v1542 = vunpack.c.l.b16 %v1422
        %v1543 = vunpack.c.l.b16 %v1423
        %v1544 = vunpack.c.l.b16 %v1424
        %v1545 = vunpack.c.l.b16 %v1425
        %v1546 = vunpack.c.l.b16 %v1426
        %v1547 = vunpack.c.l.b16 %v1427
        %v1548 = vunpack.c.l.b16 %v1428
        %v1549 = vunpack.c.l.b16 %v1429
        %v1550 = vunpack.c.l.b16 %v1430
        %v1551 = vunpack.c.l.b16 %v1431
        %v1552 = vunpack.c.l.b16 %v1432
        %v1553 = vunpack.c.l.b16 %v1433
        %v1554 = vunpack.c.l.b16 %v1434
        %v1555 = vunpack.c.l.b16 %v1435
        %v1556 = vunpack.c.l.b16 %v1436
        %v1557 = vunpack.c.l.b16 %v1437
        %v1558 = vunpack.c.l.b16 %v1438
        %v1559 = vunpack.c.l.b16 %v1439
        %v1560 = vunpack.c.l.b16 %v1440
        %v1561 = vunpack.c.l.b16 %v1441
        %v1562 = vunpack.c.l.b16 %v1442
        %v1563 = vunpack.c.l.b16 %v1443
        %v1564 = vunpack.c.l.b16 %v1444
        %v1565 = vunpack.c.l.b16 %v1445
        %v1566 = vunpack.c.l.b16 %v1446
        %v1567 = vunpack.c.l.b16 %v1447
        %v1568 = vunpack.c.l.b16 %v1448
        %v1569 = vunpack.c.l.b16 %v1449
        %v1570 = vunpack.c.l.b16 %v1450
        %v1571 = vunpack.c.l.b16 %v1451
        %v1572 = vunpack.c.l.b16 %v1452
        %v1573 = vunpack.c.l.b16 %v1453
        %v1574 = vunpack.c.l.b16 %v1454
        %v1575 = vpack.c.b16 %v1528, %v1527
        %v1576 = vpack.c.b16 %v1530, %v1529
        %v1577 = vpack.c.b16 %v1532, %v1531
        %v1578 = vpack.c.b16 %v1534, %v1533
        %v1579 = vpack.c.b16 %v1536, %v1535
        %v1580 = vpack.c.b16 %v1538, %v1537
        %v1581 = vpack.c.b16 %v1540, %v1539
        %v1582 = vpack.c.b16 %v1542, %v1541
        %v1583 = vpack.c.b16 %v1544, %v1543
        %v1584 = vpack.c.b16 %v1546, %v1545
        %v1585 = vpack.c.b16 %v1548, %v1547
        %v1586 = vpack.c.b16 %v1550, %v1549
        %v1587 = vpack.c.b16 %v1552, %v1551
        %v1588 = vpack.c.b16 %v1554, %v1553
        %v1589 = vpack.c.b16 %v1556, %v1555
        %v1590 = vpack.c.b16 %v1558, %v1557
        %v1591 = vpack.c.b16 %v1560, %v1559
        %v1592 = vpack.c.b16 %v1562, %v1561
        %v1593 = vpack.c.b16 %v1564, %v1563
        %v1594 = vpack.c.b16 %v1566, %v1565
        %v1595 = vpack.c.b16 %v1568, %v1567
        %v1596 = vpack.c.b16 %v1570, %v1569
        %v1597 = vpack.c.b16 %v1572, %v1571
        %v1598 = vpack.c.b16 %v1574, %v1573
        %1623 = vmatpush.bf16.msra.mxu0 %v1582
        %1624 = vmatpush.bf16.msra.mxu0 %v1581
        %1625 = vmatpush.bf16.msra.mxu0 %v1580
        %1626 = vmatpush.bf16.msra.mxu0 %v1579
        %1627 = vmatpush.bf16.msra.mxu0 %v1578
        %1628 = vmatpush.bf16.msra.mxu0 %v1577
        %1629 = vmatpush.bf16.msra.mxu0 %v1576
        %1630 = vmatpush.bf16.msra.mxu0 %v1575
        %1631 = vmatmul.bf16.gmra.mxu0 %v1455
        %v1632 = vpop.f32.mrf.mxu0
        %v1633 = vadd.f32 0.0, %v1632
        %v1634 = vpop.f32.mrf.mxu0
        %v1635 = vadd.f32 0.0, %v1634
        %1636 = vmatmul.bf16.gmra.mxu0 %v1458
        %v1637 = vpop.f32.mrf.mxu0
        %v1638 = vadd.f32 0.0, %v1637
        %v1639 = vpop.f32.mrf.mxu0
        %v1640 = vadd.f32 0.0, %v1639
        %1641 = vmatmul.bf16.gmra.mxu0 %v1461
        %v1642 = vpop.f32.mrf.mxu0
        %v1643 = vadd.f32 0.0, %v1642
        %v1644 = vpop.f32.mrf.mxu0
        %v1645 = vadd.f32 0.0, %v1644
        %1646 = vmatmul.bf16.gmra.mxu0 %v1464
        %v1647 = vpop.f32.mrf.mxu0
        %v1648 = vadd.f32 0.0, %v1647
        %v1649 = vpop.f32.mrf.mxu0
        %v1650 = vadd.f32 0.0, %v1649
        %1651 = vdwg.mxu0
        %1652 = vmatpush.bf16.msra.mxu0 %v1590
        %1653 = vmatpush.bf16.msra.mxu0 %v1589
        %1654 = vmatpush.bf16.msra.mxu0 %v1588
        %1655 = vmatpush.bf16.msra.mxu0 %v1587
        %1656 = vmatpush.bf16.msra.mxu0 %v1586
        %1657 = vmatpush.bf16.msra.mxu0 %v1585
        %1658 = vmatpush.bf16.msra.mxu0 %v1584
        %1659 = vmatpush.bf16.msra.mxu0 %v1583
        %1660 = vmatmul.bf16.gmra.mxu0 %v1456
        %v1661 = vpop.f32.mrf.mxu0
        %v1662 = vadd.f32 %v1633, %v1661
        %v1663 = vpop.f32.mrf.mxu0
        %v1664 = vadd.f32 %v1635, %v1663
        %1665 = vmatmul.bf16.gmra.mxu0 %v1459
        %v1666 = vpop.f32.mrf.mxu0
        %v1667 = vadd.f32 %v1638, %v1666
        %v1668 = vpop.f32.mrf.mxu0
        %v1669 = vadd.f32 %v1640, %v1668
        %1670 = vmatmul.bf16.gmra.mxu0 %v1462
        %v1671 = vpop.f32.mrf.mxu0
        %v1672 = vadd.f32 %v1643, %v1671
        %v1673 = vpop.f32.mrf.mxu0
        %v1674 = vadd.f32 %v1645, %v1673
        %1675 = vmatmul.bf16.gmra.mxu0 %v1465
        %v1676 = vpop.f32.mrf.mxu0
        %v1677 = vadd.f32 %v1648, %v1676
        %v1678 = vpop.f32.mrf.mxu0
        %v1679 = vadd.f32 %v1650, %v1678
        %1680 = vdwg.mxu0
        %1681 = vmatpush.bf16.msra.mxu0 %v1598
        %1682 = vmatpush.bf16.msra.mxu0 %v1597
        %1683 = vmatpush.bf16.msra.mxu0 %v1596
        %1684 = vmatpush.bf16.msra.mxu0 %v1595
        %1685 = vmatpush.bf16.msra.mxu0 %v1594
        %1686 = vmatpush.bf16.msra.mxu0 %v1593
        %1687 = vmatpush.bf16.msra.mxu0 %v1592
        %1688 = vmatpush.bf16.msra.mxu0 %v1591
        %1689 = vmatmul.bf16.gmra.mxu0 %v1457
        %v1690 = vpop.f32.mrf.mxu0
        %v1691 = vadd.f32 %v1662, %v1690
        %v1692 = vpop.f32.mrf.mxu0
        %v1693 = vadd.f32 %v1664, %v1692
        %1694 = vmatmul.bf16.gmra.mxu0 %v1460
        %v1695 = vpop.f32.mrf.mxu0
        %v1696 = vadd.f32 %v1667, %v1695
        %v1697 = vpop.f32.mrf.mxu0
        %v1698 = vadd.f32 %v1669, %v1697
        %1699 = vmatmul.bf16.gmra.mxu0 %v1463
        %v1700 = vpop.f32.mrf.mxu0
        %v1701 = vadd.f32 %v1672, %v1700
        %v1702 = vpop.f32.mrf.mxu0
        %v1703 = vadd.f32 %v1674, %v1702
        %1704 = vmatmul.bf16.gmra.mxu0 %v1466
        %v1705 = vpop.f32.mrf.mxu0
        %v1706 = vadd.f32 %v1677, %v1705
        %v1707 = vpop.f32.mrf.mxu0
        %v1708 = vadd.f32 %v1679, %v1707
        %1709 = vdwg.mxu0
        %v1710 = vadd.f32 %v1247, %v1691
        %v1711 = vadd.f32 %v1249, %v1693
        %v1712 = vadd.f32 %v1252, %v1696
        %v1713 = vadd.f32 %v1254, %v1698
        %v1714 = vadd.f32 %v1257, %v1701
        %v1715 = vadd.f32 %v1259, %v1703
        %v1716 = vadd.f32 %v1262, %v1706
        %v1717 = vadd.f32 %v1264, %v1708
        %v1718 = vld [vmem:[%s2] sm:$0x1]
        %v1720 = vperm.slane %v1718, 0
        %v1722 = vadd.f32 %v1710, %v1720
        %v1723 = vadd.f32 %v1711, %v1720
        %v1724 = vadd.f32 %v1712, %v1720
        %v1725 = vadd.f32 %v1713, %v1720
        %v1726 = vadd.f32 %v1714, %v1720
        %v1727 = vadd.f32 %v1715, %v1720
        %v1728 = vadd.f32 %v1716, %v1720
        %v1729 = vadd.f32 %v1717, %v1720
        %v1730 = vmul.f32 %v1722, 0.2
        %v1731 = vmul.f32 %v1723, 0.2
        %v1732 = vmul.f32 %v1724, 0.2
        %v1733 = vmul.f32 %v1725, 0.2
        %v1734 = vmul.f32 %v1726, 0.2
        %v1735 = vmul.f32 %v1727, 0.2
        %v1736 = vmul.f32 %v1728, 0.2
        %v1737 = vmul.f32 %v1729, 0.2
        %v1738 = vmax.f32 %v1722, %v1730
        %v1739 = vmax.f32 %v1723, %v1731
        %v1740 = vmax.f32 %v1724, %v1732
        %v1741 = vmax.f32 %v1725, %v1733
        %v1742 = vmax.f32 %v1726, %v1734
        %v1743 = vmax.f32 %v1727, %v1735
        %v1744 = vmax.f32 %v1728, %v1736
        %v1745 = vmax.f32 %v1729, %v1737
        %v1746 = vmul.f32 %v1738, %v1738
        %v1747 = vmul.f32 %v1739, %v1739
        %v1748 = vmul.f32 %v1740, %v1740
        %v1749 = vmul.f32 %v1741, %v1741
        %v1750 = vmul.f32 %v1742, %v1742
        %v1751 = vmul.f32 %v1743, %v1743
        %v1752 = vmul.f32 %v1744, %v1744
        %v1753 = vmul.f32 %v1745, %v1745
        %1754 = vadd.xlane.f32.xlu0 %v1746
        %v1755 = vpop.xlane.xlu0 %1754
        %1756 = vadd.xlane.f32.xlu0 %v1747
        %v1757 = vpop.xlane.xlu0 %1756
        %1758 = vadd.xlane.f32.xlu0 %v1748
        %v1759 = vpop.xlane.xlu0 %1758
        %1760 = vadd.xlane.f32.xlu0 %v1749
        %v1761 = vpop.xlane.xlu0 %1760
        %1762 = vadd.xlane.f32.xlu0 %v1750
        %v1763 = vpop.xlane.xlu0 %1762
        %1764 = vadd.xlane.f32.xlu0 %v1751
        %v1765 = vpop.xlane.xlu0 %1764
        %1766 = vadd.xlane.f32.xlu0 %v1752
        %v1767 = vpop.xlane.xlu0 %1766
        %1768 = vadd.xlane.f32.xlu0 %v1753
        %v1769 = vpop.xlane.xlu0 %1768
        %v1770 = vrcp.pop 128.0
        %v1771 = vmul.f32 128.0, %v1770
        %v1772 = vsub.f32 1.0, %v1771
        %v1773 = vmul.f32 %v1770, %v1772
        %v1774 = vadd.f32 %v1770, %v1773
        %vm1775 = vweird.f32 %v1770
        %v1776 = vsel %vm1775, %v1770, %v1774
        %v1777 = vmul.f32 %v1755, %v1776
        %v1778 = vmul.f32 %v1757, %v1776
        %v1779 = vmul.f32 %v1759, %v1776
        %v1780 = vmul.f32 %v1761, %v1776
        %v1781 = vmul.f32 %v1763, %v1776
        %v1782 = vmul.f32 %v1765, %v1776
        %v1783 = vmul.f32 %v1767, %v1776
        %v1784 = vmul.f32 %v1769, %v1776
        %v1785 = vadd.f32 %v1777, 1e-08
        %v1786 = vadd.f32 %v1778, 1e-08
        %v1787 = vadd.f32 %v1779, 1e-08
        %v1788 = vadd.f32 %v1780, 1e-08
        %v1789 = vadd.f32 %v1781, 1e-08
        %v1790 = vadd.f32 %v1782, 1e-08
        %v1791 = vadd.f32 %v1783, 1e-08
        %v1792 = vadd.f32 %v1784, 1e-08
        %v1793 = vrsqrt.pop %v1785
        %v1794 = vmul.f32 %v1793, %v1785
        %v1795 = vmul.f32 %v1794, %v1793
        %v1796 = vmul.f32 0.5, %v1795
        %v1797 = vsub.f32 1.5, %v1796
        %v1798 = vmul.f32 %v1793, %v1797
        %vm1799 = vweird.f32 %v1785
        %vm1800 = vweird.f32 %v1793
        %vm1801 = vmor %vm1799, %vm1800
        %v1802 = vsel %vm1801, %v1793, %v1798
        %v1803 = vrsqrt.pop %v1786
        %v1804 = vmul.f32 %v1803, %v1786
        %v1805 = vmul.f32 %v1804, %v1803
        %v1806 = vmul.f32 0.5, %v1805
        %v1807 = vsub.f32 1.5, %v1806
        %v1808 = vmul.f32 %v1803, %v1807
        %vm1809 = vweird.f32 %v1786
        %vm1810 = vweird.f32 %v1803
        %vm1811 = vmor %vm1809, %vm1810
        %v1812 = vsel %vm1811, %v1803, %v1808
        %v1813 = vrsqrt.pop %v1787
        %v1814 = vmul.f32 %v1813, %v1787
        %v1815 = vmul.f32 %v1814, %v1813
        %v1816 = vmul.f32 0.5, %v1815
        %v1817 = vsub.f32 1.5, %v1816
        %v1818 = vmul.f32 %v1813, %v1817
        %vm1819 = vweird.f32 %v1787
        %vm1820 = vweird.f32 %v1813
        %vm1821 = vmor %vm1819, %vm1820
        %v1822 = vsel %vm1821, %v1813, %v1818
        %v1823 = vrsqrt.pop %v1788
        %v1824 = vmul.f32 %v1823, %v1788
        %v1825 = vmul.f32 %v1824, %v1823
        %v1826 = vmul.f32 0.5, %v1825
        %v1827 = vsub.f32 1.5, %v1826
        %v1828 = vmul.f32 %v1823, %v1827
        %vm1829 = vweird.f32 %v1788
        %vm1830 = vweird.f32 %v1823
        %vm1831 = vmor %vm1829, %vm1830
        %v1832 = vsel %vm1831, %v1823, %v1828
        %v1833 = vrsqrt.pop %v1789
        %v1834 = vmul.f32 %v1833, %v1789
        %v1835 = vmul.f32 %v1834, %v1833
        %v1836 = vmul.f32 0.5, %v1835
        %v1837 = vsub.f32 1.5, %v1836
        %v1838 = vmul.f32 %v1833, %v1837
        %vm1839 = vweird.f32 %v1789
        %vm1840 = vweird.f32 %v1833
        %vm1841 = vmor %vm1839, %vm1840
        %v1842 = vsel %vm1841, %v1833, %v1838
        %v1843 = vrsqrt.pop %v1790
        %v1844 = vmul.f32 %v1843, %v1790
        %v1845 = vmul.f32 %v1844, %v1843
        %v1846 = vmul.f32 0.5, %v1845
        %v1847 = vsub.f32 1.5, %v1846
        %v1848 = vmul.f32 %v1843, %v1847
        %vm1849 = vweird.f32 %v1790
        %vm1850 = vweird.f32 %v1843
        %vm1851 = vmor %vm1849, %vm1850
        %v1852 = vsel %vm1851, %v1843, %v1848
        %v1853 = vrsqrt.pop %v1791
        %v1854 = vmul.f32 %v1853, %v1791
        %v1855 = vmul.f32 %v1854, %v1853
        %v1856 = vmul.f32 0.5, %v1855
        %v1857 = vsub.f32 1.5, %v1856
        %v1858 = vmul.f32 %v1853, %v1857
        %vm1859 = vweird.f32 %v1791
        %vm1860 = vweird.f32 %v1853
        %vm1861 = vmor %vm1859, %vm1860
        %v1862 = vsel %vm1861, %v1853, %v1858
        %v1863 = vrsqrt.pop %v1792
        %v1864 = vmul.f32 %v1863, %v1792
        %v1865 = vmul.f32 %v1864, %v1863
        %v1866 = vmul.f32 0.5, %v1865
        %v1867 = vsub.f32 1.5, %v1866
        %v1868 = vmul.f32 %v1863, %v1867
        %vm1869 = vweird.f32 %v1792
        %vm1870 = vweird.f32 %v1863
        %vm1871 = vmor %vm1869, %vm1870
        %v1872 = vsel %vm1871, %v1863, %v1868
        %v1873 = vmul.f32 %v1738, %v1802
        %v1874 = vmul.f32 %v1739, %v1812
        %v1875 = vmul.f32 %v1740, %v1822
        %v1876 = vmul.f32 %v1741, %v1832
        %v1877 = vmul.f32 %v1742, %v1842
        %v1878 = vmul.f32 %v1743, %v1852
        %v1879 = vmul.f32 %v1744, %v1862
        %v1880 = vmul.f32 %v1745, %v1872
        %v1881 = vpack.c.bf16 %v1873, %v1873
        %v1882 = vpack.c.bf16 %v1874, %v1874
        %v1883 = vpack.c.bf16 %v1875, %v1875
        %v1884 = vpack.c.bf16 %v1876, %v1876
        %v1885 = vpack.c.bf16 %v1877, %v1877
        %v1886 = vpack.c.bf16 %v1878, %v1878
        %v1887 = vpack.c.bf16 %v1879, %v1879
        %v1888 = vpack.c.bf16 %v1880, %v1880
        %1889 = vst [vmem:[%s209] sm:$0xf] %v1881
        %1890 = vst [vmem:[%s209 + $0x4] sm:$0xf] %v1882
        %1891 = vst [vmem:[%s209 + $0x8] sm:$0xf] %v1883
        %1892 = vst [vmem:[%s209 + $0xc] sm:$0xf] %v1884
        %1893 = vst [vmem:[%s209 + $0x10] sm:$0xf] %v1885
        %1894 = vst [vmem:[%s209 + $0x14] sm:$0xf] %v1886
        %1895 = vst [vmem:[%s209 + $0x18] sm:$0xf] %v1887
        %1896 = vst [vmem:[%s209 + $0x1c] sm:$0xf] %v1888
        %s1897 = smul.u32 8, %s20
        %p1898 = scmp.lt.s32.totalorder %s19, 1
        %s1899 = scalar_select %p1898, %s19, 1
        %p1900 = scmp.lt.s32.totalorder %s1897, 7
        %s1901 = scalar_select %p1900, %s1897, 7
        %s1902 = smul.addr %s1899, 8
        %s1903 = sadd.s32 %s1901, %s1902
        %s1904 = smul.addr %s1903, 4
        %s1905 = scalar_lea.vmem %s3, %s1904
        // Predicated region
        $region41: #{progan_gen_forward.9} parent=31 // pred_check
          %p1906 = pneg %p115
        $region42: #{progan_gen_forward.9} parent=31 // pred_check_branch
          %1908 = sbr.rel (%p1906) target = $region44
        $region43: #{progan_gen_forward.9} parent=31 // pred_region
          %s1909 = smul.u32 8, %s20
        $region44: #{progan_gen_forward.9} parent=31 // pred_fallthru
          _
      $region32: #{progan_gen_forward.9} parent=5 // pred_fallthru
        _
      %p1910 = scmp.le.s32.totalorder 2, %s10
      // Predicated region
      $region45: #{progan_gen_forward.9} parent=5 // pred_check
        %p1911 = pneg %p1910
      $region46: #{progan_gen_forward.9} parent=5 // pred_check_branch
        %1913 = sbr.rel (%p1911) target = $region48
      $region47: #{progan_gen_forward.9} parent=5 // pred_region
        %s1914 = ssub.s32 %s10, 2
        // Predicated region
        $region49: #{progan_gen_forward.9} parent=47 // pred_check
          %p1915 = pneg %p121
        $region50: #{progan_gen_forward.9} parent=47 // pred_check_branch
          %1917 = sbr.rel (%p1915) target = $region52
        $region51: #{progan_gen_forward.9} parent=47 // pred_region
          %s1918 = smul.u32 8, %s22
          %p1919 = scmp.lt.s32.totalorder %s21, 1
          %s1920 = scalar_select %p1919, %s21, 1
          %p1921 = scmp.lt.s32.totalorder %s1918, 7
          %s1922 = scalar_select %p1921, %s1918, 7
          %s1923 = smul.addr %s1920, 8
          %s1924 = sadd.s32 %s1922, %s1923
          %s1925 = smul.addr %s1924, 4
          %s1926 = scalar_lea.vmem %s3, %s1925
        $region52: #{progan_gen_forward.9} parent=47 // pred_fallthru
          _
      $region48: #{progan_gen_forward.9} parent=5 // pred_fallthru
        _
    $region6: #{progan_gen_forward.9} parent=1 // loop_footer
      %s14 = sadd.s32 1, %s10
    $region7: #{progan_gen_forward.9} parent=1 // loop_footer_branch
      %9 = sbr.rel target = $region3
    $region8: #{progan_gen_forward.9} parent=1 // loop_exit
      _
    %1927 = vsyncpa [#allocation4], 1
    %s1928 = scalar_lea.sflag [#allocation4], 1
    %1929 = vsyncpa %s1928, 1

// kernel: progan_gen_forward.13
$region0: #{progan_gen_forward.13}
  #allocation0 [shape = 'u32[]', space=smem, size = 0x4, offset = 0x4, fixed_abs, tag = 'smem constant byte address 0x4 - core index']
  #allocation1 [shape = 'u32[72,128]{1,0:T(1,128)}', space=vmem, size = 0x9000, scoped, tag = 'internal scratch']
  %s0 = inlined_call_operand.vmem [shape: bf16[512,128], index: 0, kind: input, shape index: {}]
  %s1 = inlined_call_operand.vmem [shape: bf16[128,3], index: 1, kind: input, shape index: {}]
  %s2 = inlined_call_operand.vmem [shape: f32[1,3], index: 2, kind: input, shape index: {}]
  %s3 = inlined_call_operand.vmem [shape: f32[512,3], index: 3, kind: output, shape index: {}]
  %s4 = sld [smem:[#allocation0]]
  $region22: #{progan_gen_forward.13} parent=0
    _
  %s6 = ssub.s32 1, %s4
  %s7 = scalar_select 0, %s6, %s4
  // Predicated region
  $region2: #{progan_gen_forward.13} parent=0 // pred_check
    _
  $region3: #{progan_gen_forward.13} parent=0 // pred_check_branch
    %9 = sbr.rel (0) target = $region5
  $region4: #{progan_gen_forward.13} parent=0 // pred_region
    _
  $region5: #{progan_gen_forward.13} parent=0 // pred_fallthru
    _
  // Predicated region
  $region6: #{progan_gen_forward.13} parent=0 // pred_check
    _
  $region7: #{progan_gen_forward.13} parent=0 // pred_check_branch
    %11 = sbr.rel (0) target = $region9
  $region8: #{progan_gen_forward.13} parent=0 // pred_region
    _
  $region9: #{progan_gen_forward.13} parent=0 // pred_fallthru
    _
  // Predicated region
  $region10: #{progan_gen_forward.13} parent=0 // pred_check
    _
  $region11: #{progan_gen_forward.13} parent=0 // pred_check_branch
    %13 = sbr.rel (0) target = $region13
  $region12: #{progan_gen_forward.13} parent=0 // pred_region
    _
  $region13: #{progan_gen_forward.13} parent=0 // pred_fallthru
    _
  %v14 = vld [vmem:[%s0] sm:$0xf]
  %v15 = vld [vmem:[%s0 + $0x4] sm:$0xf]
  %v16 = vld [vmem:[%s0 + $0x8] sm:$0xf]
  %v17 = vld [vmem:[%s0 + $0xc] sm:$0xf]
  %v18 = vld [vmem:[%s0 + $0x10] sm:$0xf]
  %v19 = vld [vmem:[%s0 + $0x14] sm:$0xf]
  %v20 = vld [vmem:[%s0 + $0x18] sm:$0xf]
  %v21 = vld [vmem:[%s0 + $0x1c] sm:$0xf]
  %v22 = vld [vmem:[%s0 + $0x20] sm:$0xf]
  %v23 = vld [vmem:[%s0 + $0x24] sm:$0xf]
  %v24 = vld [vmem:[%s0 + $0x28] sm:$0xf]
  %v25 = vld [vmem:[%s0 + $0x2c] sm:$0xf]
  %v26 = vld [vmem:[%s0 + $0x30] sm:$0xf]
  %v27 = vld [vmem:[%s0 + $0x34] sm:$0xf]
  %v28 = vld [vmem:[%s0 + $0x38] sm:$0xf]
  %v29 = vld [vmem:[%s0 + $0x3c] sm:$0xf]
  %v30 = vld [vmem:[%s0 + $0x40] sm:$0xf]
  %v31 = vld [vmem:[%s0 + $0x44] sm:$0xf]
  %v32 = vld [vmem:[%s0 + $0x48] sm:$0xf]
  %v33 = vld [vmem:[%s0 + $0x4c] sm:$0xf]
  %v34 = vld [vmem:[%s0 + $0x50] sm:$0xf]
  %v35 = vld [vmem:[%s0 + $0x54] sm:$0xf]
  %v36 = vld [vmem:[%s0 + $0x58] sm:$0xf]
  %v37 = vld [vmem:[%s0 + $0x5c] sm:$0xf]
  %v38 = vld [vmem:[%s0 + $0x60] sm:$0xf]
  %v39 = vld [vmem:[%s0 + $0x64] sm:$0xf]
  %v40 = vld [vmem:[%s0 + $0x68] sm:$0xf]
  %v41 = vld [vmem:[%s0 + $0x6c] sm:$0xf]
  %v42 = vld [vmem:[%s0 + $0x70] sm:$0xf]
  %v43 = vld [vmem:[%s0 + $0x74] sm:$0xf]
  %v44 = vld [vmem:[%s0 + $0x78] sm:$0xf]
  %v45 = vld [vmem:[%s0 + $0x7c] sm:$0xf]
  %v46 = vld [vmem:[%s0 + $0x80] sm:$0xf]
  %v47 = vld [vmem:[%s0 + $0x84] sm:$0xf]
  %v48 = vld [vmem:[%s0 + $0x88] sm:$0xf]
  %v49 = vld [vmem:[%s0 + $0x8c] sm:$0xf]
  %v50 = vld [vmem:[%s0 + $0x90] sm:$0xf]
  %v51 = vld [vmem:[%s0 + $0x94] sm:$0xf]
  %v52 = vld [vmem:[%s0 + $0x98] sm:$0xf]
  %v53 = vld [vmem:[%s0 + $0x9c] sm:$0xf]
  %v54 = vld [vmem:[%s0 + $0xa0] sm:$0xf]
  %v55 = vld [vmem:[%s0 + $0xa4] sm:$0xf]
  %v56 = vld [vmem:[%s0 + $0xa8] sm:$0xf]
  %v57 = vld [vmem:[%s0 + $0xac] sm:$0xf]
  %v58 = vld [vmem:[%s0 + $0xb0] sm:$0xf]
  %v59 = vld [vmem:[%s0 + $0xb4] sm:$0xf]
  %v60 = vld [vmem:[%s0 + $0xb8] sm:$0xf]
  %v61 = vld [vmem:[%s0 + $0xbc] sm:$0xf]
  %v62 = vld [vmem:[%s0 + $0xc0] sm:$0xf]
  %v63 = vld [vmem:[%s0 + $0xc4] sm:$0xf]
  %v64 = vld [vmem:[%s0 + $0xc8] sm:$0xf]
  %v65 = vld [vmem:[%s0 + $0xcc] sm:$0xf]
  %v66 = vld [vmem:[%s0 + $0xd0] sm:$0xf]
  %v67 = vld [vmem:[%s0 + $0xd4] sm:$0xf]
  %v68 = vld [vmem:[%s0 + $0xd8] sm:$0xf]
  %v69 = vld [vmem:[%s0 + $0xdc] sm:$0xf]
  %v70 = vld [vmem:[%s0 + $0xe0] sm:$0xf]
  %v71 = vld [vmem:[%s0 + $0xe4] sm:$0xf]
  %v72 = vld [vmem:[%s0 + $0xe8] sm:$0xf]
  %v73 = vld [vmem:[%s0 + $0xec] sm:$0xf]
  %v74 = vld [vmem:[%s0 + $0xf0] sm:$0xf]
  %v75 = vld [vmem:[%s0 + $0xf4] sm:$0xf]
  %v76 = vld [vmem:[%s0 + $0xf8] sm:$0xf]
  %v77 = vld [vmem:[%s0 + $0xfc] sm:$0xf]
  %v78 = vld [vmem:[%s1] sm:$0xf]
  %v79 = vld [vmem:[%s1 + $0x4] sm:$0xf]
  %v80 = vld [vmem:[%s1 + $0x8] sm:$0xf]
  %v81 = vld [vmem:[%s1 + $0xc] sm:$0xf]
  %v82 = vld [vmem:[%s1 + $0x10] sm:$0xf]
  %v83 = vld [vmem:[%s1 + $0x14] sm:$0xf]
  %v84 = vld [vmem:[%s1 + $0x18] sm:$0xf]
  %v85 = vld [vmem:[%s1 + $0x1c] sm:$0xf]
  %v86 = vld [vmem:[%s1 + $0x20] sm:$0xf]
  %v87 = vld [vmem:[%s1 + $0x24] sm:$0xf]
  %v88 = vld [vmem:[%s1 + $0x28] sm:$0xf]
  %v89 = vld [vmem:[%s1 + $0x2c] sm:$0xf]
  %v90 = vld [vmem:[%s1 + $0x30] sm:$0xf]
  %v91 = vld [vmem:[%s1 + $0x34] sm:$0xf]
  %v92 = vld [vmem:[%s1 + $0x38] sm:$0xf]
  %v93 = vld [vmem:[%s1 + $0x3c] sm:$0xf]
  %v94 = vld [vmem:[%s2] sm:$0x1]
  %v96 = vperm.slane %v94, 0
  %v162 = vunpack.c.l.b16 %v14
  %v163 = vunpack.c.l.b16 %v15
  %v164 = vunpack.c.l.b16 %v16
  %v165 = vunpack.c.l.b16 %v17
  %v166 = vunpack.c.l.b16 %v18
  %v167 = vunpack.c.l.b16 %v19
  %v168 = vunpack.c.l.b16 %v20
  %v169 = vunpack.c.l.b16 %v21
  %v170 = vunpack.c.l.b16 %v22
  %v171 = vunpack.c.l.b16 %v23
  %v172 = vunpack.c.l.b16 %v24
  %v173 = vunpack.c.l.b16 %v25
  %v174 = vunpack.c.l.b16 %v26
  %v175 = vunpack.c.l.b16 %v27
  %v176 = vunpack.c.l.b16 %v28
  %v177 = vunpack.c.l.b16 %v29
  %v178 = vunpack.c.l.b16 %v30
  %v179 = vunpack.c.l.b16 %v31
  %v180 = vunpack.c.l.b16 %v32
  %v181 = vunpack.c.l.b16 %v33
  %v182 = vunpack.c.l.b16 %v34
  %v183 = vunpack.c.l.b16 %v35
  %v184 = vunpack.c.l.b16 %v36
  %v185 = vunpack.c.l.b16 %v37
  %v186 = vunpack.c.l.b16 %v38
  %v187 = vunpack.c.l.b16 %v39
  %v188 = vunpack.c.l.b16 %v40
  %v189 = vunpack.c.l.b16 %v41
  %v190 = vunpack.c.l.b16 %v42
  %v191 = vunpack.c.l.b16 %v43
  %v192 = vunpack.c.l.b16 %v44
  %v193 = vunpack.c.l.b16 %v45
  %v194 = vunpack.c.l.b16 %v46
  %v195 = vunpack.c.l.b16 %v47
  %v196 = vunpack.c.l.b16 %v48
  %v197 = vunpack.c.l.b16 %v49
  %v198 = vunpack.c.l.b16 %v50
  %v199 = vunpack.c.l.b16 %v51
  %v200 = vunpack.c.l.b16 %v52
  %v201 = vunpack.c.l.b16 %v53
  %v202 = vunpack.c.l.b16 %v54
  %v203 = vunpack.c.l.b16 %v55
  %v204 = vunpack.c.l.b16 %v56
  %v205 = vunpack.c.l.b16 %v57
  %v206 = vunpack.c.l.b16 %v58
  %v207 = vunpack.c.l.b16 %v59
  %v208 = vunpack.c.l.b16 %v60
  %v209 = vunpack.c.l.b16 %v61
  %v210 = vunpack.c.l.b16 %v62
  %v211 = vunpack.c.l.b16 %v63
  %v212 = vunpack.c.l.b16 %v64
  %v213 = vunpack.c.l.b16 %v65
  %v214 = vunpack.c.l.b16 %v66
  %v215 = vunpack.c.l.b16 %v67
  %v216 = vunpack.c.l.b16 %v68
  %v217 = vunpack.c.l.b16 %v69
  %v218 = vunpack.c.l.b16 %v70
  %v219 = vunpack.c.l.b16 %v71
  %v220 = vunpack.c.l.b16 %v72
  %v221 = vunpack.c.l.b16 %v73
  %v222 = vunpack.c.l.b16 %v74
  %v223 = vunpack.c.l.b16 %v75
  %v224 = vunpack.c.l.b16 %v76
  %v225 = vunpack.c.l.b16 %v77
  %v226 = vpack.c.b16 %v163, %v162
  %v227 = vpack.c.b16 %v165, %v164
  %v228 = vpack.c.b16 %v167, %v166
  %v229 = vpack.c.b16 %v169, %v168
  %v230 = vpack.c.b16 %v171, %v170
  %v231 = vpack.c.b16 %v173, %v172
  %v232 = vpack.c.b16 %v175, %v174
  %v233 = vpack.c.b16 %v177, %v176
  %v234 = vpack.c.b16 %v179, %v178
  %v235 = vpack.c.b16 %v181, %v180
  %v236 = vpack.c.b16 %v183, %v182
  %v237 = vpack.c.b16 %v185, %v184
  %v238 = vpack.c.b16 %v187, %v186
  %v239 = vpack.c.b16 %v189, %v188
  %v240 = vpack.c.b16 %v191, %v190
  %v241 = vpack.c.b16 %v193, %v192
  %v242 = vpack.c.b16 %v195, %v194
  %v243 = vpack.c.b16 %v197, %v196
  %v244 = vpack.c.b16 %v199, %v198
  %v245 = vpack.c.b16 %v201, %v200
  %v246 = vpack.c.b16 %v203, %v202
  %v247 = vpack.c.b16 %v205, %v204
  %v248 = vpack.c.b16 %v207, %v206
  %v249 = vpack.c.b16 %v209, %v208
  %v250 = vpack.c.b16 %v211, %v210
  %v251 = vpack.c.b16 %v213, %v212
  %v252 = vpack.c.b16 %v215, %v214
  %v253 = vpack.c.b16 %v217, %v216
  %v254 = vpack.c.b16 %v219, %v218
  %v255 = vpack.c.b16 %v221, %v220
  %v256 = vpack.c.b16 %v223, %v222
  %v257 = vpack.c.b16 %v225, %v224
  %v306 = vunpack.c.l.b16 %v78
  %v307 = vunpack.c.l.b16 %v79
  %v308 = vunpack.c.l.b16 %v80
  %v309 = vunpack.c.l.b16 %v81
  %v310 = vunpack.c.l.b16 %v82
  %v311 = vunpack.c.l.b16 %v83
  %v312 = vunpack.c.l.b16 %v84
  %v313 = vunpack.c.l.b16 %v85
  %v314 = vunpack.c.l.b16 %v86
  %v315 = vunpack.c.l.b16 %v87
  %v316 = vunpack.c.l.b16 %v88
  %v317 = vunpack.c.l.b16 %v89
  %v318 = vunpack.c.l.b16 %v90
  %v319 = vunpack.c.l.b16 %v91
  %v320 = vunpack.c.l.b16 %v92
  %v321 = vunpack.c.l.b16 %v93
  %v322 = vpack.c.b16 %v307, %v306
  %v323 = vpack.c.b16 %v309, %v308
  %v324 = vpack.c.b16 %v311, %v310
  %v325 = vpack.c.b16 %v313, %v312
  %v326 = vpack.c.b16 %v315, %v314
  %v327 = vpack.c.b16 %v317, %v316
  %v328 = vpack.c.b16 %v319, %v318
  %v329 = vpack.c.b16 %v321, %v320
  %338 = vmatpush.bf16.msra.mxu0 %v329
  %339 = vmatpush.bf16.msra.mxu0 %v328
  %340 = vmatpush.bf16.msra.mxu0 %v327
  %341 = vmatpush.bf16.msra.mxu0 %v326
  %342 = vmatpush.bf16.msra.mxu0 %v325
  %343 = vmatpush.bf16.msra.mxu0 %v324
  %344 = vmatpush.bf16.msra.mxu0 %v323
  %345 = vmatpush.bf16.msra.mxu0 %v322
  %346 = vmatmul.bf16.gmra.mxu0 %v226
  %v347 = vpop.f32.mrf.mxu0
  %v348 = vadd.f32 %v96, %v347
  %v349 = vpop.f32.mrf.mxu0
  %v350 = vadd.f32 %v96, %v349
  %351 = vmatmul.bf16.gmra.mxu0 %v227
  %v352 = vpop.f32.mrf.mxu0
  %v353 = vadd.f32 %v96, %v352
  %v354 = vpop.f32.mrf.mxu0
  %v355 = vadd.f32 %v96, %v354
  %356 = vmatmul.bf16.gmra.mxu0 %v228
  %v357 = vpop.f32.mrf.mxu0
  %v358 = vadd.f32 %v96, %v357
  %v359 = vpop.f32.mrf.mxu0
  %v360 = vadd.f32 %v96, %v359
  %361 = vmatmul.bf16.gmra.mxu0 %v229
  %v362 = vpop.f32.mrf.mxu0
  %v363 = vadd.f32 %v96, %v362
  %v364 = vpop.f32.mrf.mxu0
  %v365 = vadd.f32 %v96, %v364
  %366 = vmatmul.bf16.gmra.mxu0 %v230
  %v367 = vpop.f32.mrf.mxu0
  %v368 = vadd.f32 %v96, %v367
  %v369 = vpop.f32.mrf.mxu0
  %v370 = vadd.f32 %v96, %v369
  %371 = vmatmul.bf16.gmra.mxu0 %v231
  %v372 = vpop.f32.mrf.mxu0
  %v373 = vadd.f32 %v96, %v372
  %v374 = vpop.f32.mrf.mxu0
  %v375 = vadd.f32 %v96, %v374
  %376 = vmatmul.bf16.gmra.mxu0 %v232
  %v377 = vpop.f32.mrf.mxu0
  %v378 = vadd.f32 %v96, %v377
  %v379 = vpop.f32.mrf.mxu0
  %v380 = vadd.f32 %v96, %v379
  %381 = vmatmul.bf16.gmra.mxu0 %v233
  %v382 = vpop.f32.mrf.mxu0
  %v383 = vadd.f32 %v96, %v382
  %v384 = vpop.f32.mrf.mxu0
  %v385 = vadd.f32 %v96, %v384
  %386 = vmatmul.bf16.gmra.mxu0 %v234
  %v387 = vpop.f32.mrf.mxu0
  %v388 = vadd.f32 %v96, %v387
  %v389 = vpop.f32.mrf.mxu0
  %v390 = vadd.f32 %v96, %v389
  %391 = vmatmul.bf16.gmra.mxu0 %v235
  %v392 = vpop.f32.mrf.mxu0
  %v393 = vadd.f32 %v96, %v392
  %v394 = vpop.f32.mrf.mxu0
  %v395 = vadd.f32 %v96, %v394
  %396 = vmatmul.bf16.gmra.mxu0 %v236
  %v397 = vpop.f32.mrf.mxu0
  %v398 = vadd.f32 %v96, %v397
  %v399 = vpop.f32.mrf.mxu0
  %v400 = vadd.f32 %v96, %v399
  %401 = vmatmul.bf16.gmra.mxu0 %v237
  %v402 = vpop.f32.mrf.mxu0
  %v403 = vadd.f32 %v96, %v402
  %v404 = vpop.f32.mrf.mxu0
  %v405 = vadd.f32 %v96, %v404
  %406 = vmatmul.bf16.gmra.mxu0 %v238
  %v407 = vpop.f32.mrf.mxu0
  %v408 = vadd.f32 %v96, %v407
  %v409 = vpop.f32.mrf.mxu0
  %v410 = vadd.f32 %v96, %v409
  %411 = vmatmul.bf16.gmra.mxu0 %v239
  %v412 = vpop.f32.mrf.mxu0
  %v413 = vadd.f32 %v96, %v412
  %v414 = vpop.f32.mrf.mxu0
  %v415 = vadd.f32 %v96, %v414
  %416 = vmatmul.bf16.gmra.mxu0 %v240
  %v417 = vpop.f32.mrf.mxu0
  %v418 = vadd.f32 %v96, %v417
  %v419 = vpop.f32.mrf.mxu0
  %v420 = vadd.f32 %v96, %v419
  %421 = vmatmul.bf16.gmra.mxu0 %v241
  %v422 = vpop.f32.mrf.mxu0
  %v423 = vadd.f32 %v96, %v422
  %v424 = vpop.f32.mrf.mxu0
  %v425 = vadd.f32 %v96, %v424
  %426 = vmatmul.bf16.gmra.mxu0 %v242
  %v427 = vpop.f32.mrf.mxu0
  %v428 = vadd.f32 %v96, %v427
  %v429 = vpop.f32.mrf.mxu0
  %v430 = vadd.f32 %v96, %v429
  %431 = vmatmul.bf16.gmra.mxu0 %v243
  %v432 = vpop.f32.mrf.mxu0
  %v433 = vadd.f32 %v96, %v432
  %v434 = vpop.f32.mrf.mxu0
  %v435 = vadd.f32 %v96, %v434
  %436 = vmatmul.bf16.gmra.mxu0 %v244
  %v437 = vpop.f32.mrf.mxu0
  %v438 = vadd.f32 %v96, %v437
  %v439 = vpop.f32.mrf.mxu0
  %v440 = vadd.f32 %v96, %v439
  %441 = vmatmul.bf16.gmra.mxu0 %v245
  %v442 = vpop.f32.mrf.mxu0
  %v443 = vadd.f32 %v96, %v442
  %v444 = vpop.f32.mrf.mxu0
  %v445 = vadd.f32 %v96, %v444
  %446 = vmatmul.bf16.gmra.mxu0 %v246
  %v447 = vpop.f32.mrf.mxu0
  %v448 = vadd.f32 %v96, %v447
  %v449 = vpop.f32.mrf.mxu0
  %v450 = vadd.f32 %v96, %v449
  %451 = vmatmul.bf16.gmra.mxu0 %v247
  %v452 = vpop.f32.mrf.mxu0
  %v453 = vadd.f32 %v96, %v452
  %v454 = vpop.f32.mrf.mxu0
  %v455 = vadd.f32 %v96, %v454
  %456 = vmatmul.bf16.gmra.mxu0 %v248
  %v457 = vpop.f32.mrf.mxu0
  %v458 = vadd.f32 %v96, %v457
  %v459 = vpop.f32.mrf.mxu0
  %v460 = vadd.f32 %v96, %v459
  %461 = vmatmul.bf16.gmra.mxu0 %v249
  %v462 = vpop.f32.mrf.mxu0
  %v463 = vadd.f32 %v96, %v462
  %v464 = vpop.f32.mrf.mxu0
  %v465 = vadd.f32 %v96, %v464
  %466 = vmatmul.bf16.gmra.mxu0 %v250
  %v467 = vpop.f32.mrf.mxu0
  %v468 = vadd.f32 %v96, %v467
  %v469 = vpop.f32.mrf.mxu0
  %v470 = vadd.f32 %v96, %v469
  %471 = vmatmul.bf16.gmra.mxu0 %v251
  %v472 = vpop.f32.mrf.mxu0
  %v473 = vadd.f32 %v96, %v472
  %v474 = vpop.f32.mrf.mxu0
  %v475 = vadd.f32 %v96, %v474
  %476 = vmatmul.bf16.gmra.mxu0 %v252
  %v477 = vpop.f32.mrf.mxu0
  %v478 = vadd.f32 %v96, %v477
  %v479 = vpop.f32.mrf.mxu0
  %v480 = vadd.f32 %v96, %v479
  %481 = vmatmul.bf16.gmra.mxu0 %v253
  %v482 = vpop.f32.mrf.mxu0
  %v483 = vadd.f32 %v96, %v482
  %v484 = vpop.f32.mrf.mxu0
  %v485 = vadd.f32 %v96, %v484
  %486 = vmatmul.bf16.gmra.mxu0 %v254
  %v487 = vpop.f32.mrf.mxu0
  %v488 = vadd.f32 %v96, %v487
  %v489 = vpop.f32.mrf.mxu0
  %v490 = vadd.f32 %v96, %v489
  %491 = vmatmul.bf16.gmra.mxu0 %v255
  %v492 = vpop.f32.mrf.mxu0
  %v493 = vadd.f32 %v96, %v492
  %v494 = vpop.f32.mrf.mxu0
  %v495 = vadd.f32 %v96, %v494
  %496 = vmatmul.bf16.gmra.mxu0 %v256
  %v497 = vpop.f32.mrf.mxu0
  %v498 = vadd.f32 %v96, %v497
  %v499 = vpop.f32.mrf.mxu0
  %v500 = vadd.f32 %v96, %v499
  %501 = vmatmul.bf16.gmra.mxu0 %v257
  %v502 = vpop.f32.mrf.mxu0
  %v503 = vadd.f32 %v96, %v502
  %v504 = vpop.f32.mrf.mxu0
  %v505 = vadd.f32 %v96, %v504
  %506 = vdwg.mxu0
  %vm507 = vcmask 23552
  %508 = vst.msk [vmem:[%s3] sm:$0xff] %vm507, %v348
  %509 = vst.msk [vmem:[%s3 + $0x8] sm:$0xff] %vm507, %v350
  %510 = vst.msk [vmem:[%s3 + $0x10] sm:$0xff] %vm507, %v353
  %511 = vst.msk [vmem:[%s3 + $0x18] sm:$0xff] %vm507, %v355
  %512 = vst.msk [vmem:[%s3 + $0x20] sm:$0xff] %vm507, %v358
  %513 = vst.msk [vmem:[%s3 + $0x28] sm:$0xff] %vm507, %v360
  %514 = vst.msk [vmem:[%s3 + $0x30] sm:$0xff] %vm507, %v363
  %515 = vst.msk [vmem:[%s3 + $0x38] sm:$0xff] %vm507, %v365
  %516 = vst.msk [vmem:[%s3 + $0x40] sm:$0xff] %vm507, %v368
  %517 = vst.msk [vmem:[%s3 + $0x48] sm:$0xff] %vm507, %v370
  %518 = vst.msk [vmem:[%s3 + $0x50] sm:$0xff] %vm507, %v373
  %519 = vst.msk [vmem:[%s3 + $0x58] sm:$0xff] %vm507, %v375
  %520 = vst.msk [vmem:[%s3 + $0x60] sm:$0xff] %vm507, %v378
  %521 = vst.msk [vmem:[%s3 + $0x68] sm:$0xff] %vm507, %v380
  %522 = vst.msk [vmem:[%s3 + $0x70] sm:$0xff] %vm507, %v383
  %523 = vst.msk [vmem:[%s3 + $0x78] sm:$0xff] %vm507, %v385
  %524 = vst.msk [vmem:[%s3 + $0x80] sm:$0xff] %vm507, %v388
  %525 = vst.msk [vmem:[%s3 + $0x88] sm:$0xff] %vm507, %v390
  %526 = vst.msk [vmem:[%s3 + $0x90] sm:$0xff] %vm507, %v393
  %527 = vst.msk [vmem:[%s3 + $0x98] sm:$0xff] %vm507, %v395
  %528 = vst.msk [vmem:[%s3 + $0xa0] sm:$0xff] %vm507, %v398
  %529 = vst.msk [vmem:[%s3 + $0xa8] sm:$0xff] %vm507, %v400
  %530 = vst.msk [vmem:[%s3 + $0xb0] sm:$0xff] %vm507, %v403
  %531 = vst.msk [vmem:[%s3 + $0xb8] sm:$0xff] %vm507, %v405
  %532 = vst.msk [vmem:[%s3 + $0xc0] sm:$0xff] %vm507, %v408
  %533 = vst.msk [vmem:[%s3 + $0xc8] sm:$0xff] %vm507, %v410
  %534 = vst.msk [vmem:[%s3 + $0xd0] sm:$0xff] %vm507, %v413
  %535 = vst.msk [vmem:[%s3 + $0xd8] sm:$0xff] %vm507, %v415
  %536 = vst.msk [vmem:[%s3 + $0xe0] sm:$0xff] %vm507, %v418
  %537 = vst.msk [vmem:[%s3 + $0xe8] sm:$0xff] %vm507, %v420
  %538 = vst.msk [vmem:[%s3 + $0xf0] sm:$0xff] %vm507, %v423
  %539 = vst.msk [vmem:[%s3 + $0xf8] sm:$0xff] %vm507, %v425
  %540 = vst.msk [vmem:[%s3 + $0x100] sm:$0xff] %vm507, %v428
  %541 = vst.msk [vmem:[%s3 + $0x108] sm:$0xff] %vm507, %v430
  %542 = vst.msk [vmem:[%s3 + $0x110] sm:$0xff] %vm507, %v433
  %543 = vst.msk [vmem:[%s3 + $0x118] sm:$0xff] %vm507, %v435
  %544 = vst.msk [vmem:[%s3 + $0x120] sm:$0xff] %vm507, %v438
  %545 = vst.msk [vmem:[%s3 + $0x128] sm:$0xff] %vm507, %v440
  %546 = vst.msk [vmem:[%s3 + $0x130] sm:$0xff] %vm507, %v443
  %547 = vst.msk [vmem:[%s3 + $0x138] sm:$0xff] %vm507, %v445
  %548 = vst.msk [vmem:[%s3 + $0x140] sm:$0xff] %vm507, %v448
  %549 = vst.msk [vmem:[%s3 + $0x148] sm:$0xff] %vm507, %v450
  %550 = vst.msk [vmem:[%s3 + $0x150] sm:$0xff] %vm507, %v453
  %551 = vst.msk [vmem:[%s3 + $0x158] sm:$0xff] %vm507, %v455
  %552 = vst.msk [vmem:[%s3 + $0x160] sm:$0xff] %vm507, %v458
  %553 = vst.msk [vmem:[%s3 + $0x168] sm:$0xff] %vm507, %v460
  %554 = vst.msk [vmem:[%s3 + $0x170] sm:$0xff] %vm507, %v463
  %555 = vst.msk [vmem:[%s3 + $0x178] sm:$0xff] %vm507, %v465
  %556 = vst.msk [vmem:[%s3 + $0x180] sm:$0xff] %vm507, %v468
  %557 = vst.msk [vmem:[%s3 + $0x188] sm:$0xff] %vm507, %v470
  %558 = vst.msk [vmem:[%s3 + $0x190] sm:$0xff] %vm507, %v473
  %559 = vst.msk [vmem:[%s3 + $0x198] sm:$0xff] %vm507, %v475
  %560 = vst.msk [vmem:[%s3 + $0x1a0] sm:$0xff] %vm507, %v478
  %561 = vst.msk [vmem:[%s3 + $0x1a8] sm:$0xff] %vm507, %v480
  %562 = vst.msk [vmem:[%s3 + $0x1b0] sm:$0xff] %vm507, %v483
  %563 = vst.msk [vmem:[%s3 + $0x1b8] sm:$0xff] %vm507, %v485
  %564 = vst.msk [vmem:[%s3 + $0x1c0] sm:$0xff] %vm507, %v488
  %565 = vst.msk [vmem:[%s3 + $0x1c8] sm:$0xff] %vm507, %v490
  %566 = vst.msk [vmem:[%s3 + $0x1d0] sm:$0xff] %vm507, %v493
  %567 = vst.msk [vmem:[%s3 + $0x1d8] sm:$0xff] %vm507, %v495
  %568 = vst.msk [vmem:[%s3 + $0x1e0] sm:$0xff] %vm507, %v498
  %569 = vst.msk [vmem:[%s3 + $0x1e8] sm:$0xff] %vm507, %v500
  %570 = vst.msk [vmem:[%s3 + $0x1f0] sm:$0xff] %vm507, %v503
  %571 = vst.msk [vmem:[%s3 + $0x1f8] sm:$0xff] %vm507, %v505
  // Predicated region
  $region14: #{progan_gen_forward.13} parent=0 // pred_check
    _
  $region15: #{progan_gen_forward.13} parent=0 // pred_check_branch
    %573 = sbr.rel (0) target = $region17
  $region16: #{progan_gen_forward.13} parent=0 // pred_region
    _
  $region17: #{progan_gen_forward.13} parent=0 // pred_fallthru
    _
  // Predicated region
  $region18: #{progan_gen_forward.13} parent=0 // pred_check
    _
  $region19: #{progan_gen_forward.13} parent=0 // pred_check_branch
    %575 = sbr.rel (0) target = $region21
  $region20: #{progan_gen_forward.13} parent=0 // pred_region
    _
  $region21: #{progan_gen_forward.13} parent=0 // pred_fallthru
    _

// kernel: progan_gen_forward.11
$region0: #{progan_gen_forward.11}
  #allocation0 [shape = 'u32[]', space=smem, size = 0x4, offset = 0x4, fixed_abs, tag = 'smem constant byte address 0x4 - core index']
  #allocation1 [shape = 'u32[72,128]{1,0:T(1,128)}', space=vmem, size = 0x9000, scoped, tag = 'internal scratch']
  #allocation2 [shape = 'bf16[18,18,128]{2,1,0:T(8,128)(2,1)}', space=vmem, size = 0x1b000, scoped, tag = 'scratch operand']
  %s0 = inlined_call_operand.vmem [shape: bf16[2,16,16,128], index: 0, kind: input, shape index: {}]
  %s1 = inlined_call_operand.vmem [shape: bf16[3,384,128], index: 1, kind: input, shape index: {}]
  %s2 = inlined_call_operand.vmem [shape: f32[1,128], index: 2, kind: input, shape index: {}]
  %s3 = inlined_call_operand.vmem [shape: bf16[2,16,16,128], index: 3, kind: output, shape index: {}]
  %s4 = sld [smem:[#allocation0]]
  $region49: #{progan_gen_forward.11} parent=0
    _
  %s6 = ssub.s32 1, %s4
  %s7 = scalar_select 0, %s6, %s4
  loop: start=0, step=1, limit=6
  $region2: #{progan_gen_forward.11} parent=0 // loop_pre_header
    _
  $region3: #{progan_gen_forward.11} parent=0 // loop_header
    %s9 = sphi 0, %s13
    %p10 = scmp.ge.s32.totalorder %s9, 6
    %s16 = sphi 0, %s28
    %s17 = sphi 0, %s24
    %s18 = sphi 0, %s16
    %s19 = sphi 0, %s17
    %s20 = sphi 0, %s18
    %s21 = sphi 0, %s19
    %s31 = sphi 0, %s33
    %s34 = sphi 0, %s31
    %s35 = sphi 0, %s34
    %s51 = sphi 0, %s35
    %s55 = sphi 0, %s55
    %s57 = sphi 0, %s55
    %s58 = sphi 0, %s57
    %s72 = sphi 0, %s58
    %s76 = sphi 0, %s76
    %s78 = sphi 0, %s76
    %s79 = sphi 0, %s78
    %s93 = sphi 0, %s79
    %s101 = sphi 0, %s103
    %s104 = sphi 0, %s101
    %s105 = sphi 0, %s104
    %s121 = sphi 0, %s105
  $region4: #{progan_gen_forward.11} parent=0 // loop_header_branch
    %12 = sbr.rel (%p10) target = $region8
  $region5: #{progan_gen_forward.11} parent=0 // loop_body
    %s14 = ssub.s32 %s9, 1
    %s15 = ssub.s32 %s9, 2
    %s22 = sadd.s32 1, %s17
    %p23 = scmp.ge.s32.totalorder %s22, 2
    %s24 = scalar_select %p23, 0, %s22
    %s25 = sadd.s32 1, %s16
    %s26 = scalar_select %p23, %s25, %s16
    %p27 = scmp.ge.s32.totalorder %s26, 2
    %s28 = scalar_select %p27, 0, %s26
    %s29 = ssub.s32 %s16, %s28
    %p30 = scmp.eq.s32.totalorder %s29, 0
    %s32 = sadd.s32 %s31, 1
    %s33 = scalar_select %p30, %s31, %s32
    %p36 = pneg %p30
    %p37 = scmp.eq.s32.totalorder %s9, 3
    %p38 = por %p36, %p37
    %p39 = scmp.ne.s32.totalorder %s31, %s34
    %p40 = scmp.eq.s32.totalorder %s9, 0
    %p41 = por %p39, %p40
    %p42 = scmp.ne.s32.totalorder %s31, %s34
    %p43 = scmp.eq.s32.totalorder %s14, 3
    %p44 = por %p42, %p43
    %p45 = scmp.ne.s32.totalorder %s34, %s35
    %p46 = scmp.eq.s32.totalorder %s14, 0
    %p47 = por %p45, %p46
    %p48 = scmp.ne.s32.totalorder %s34, %s35
    %p49 = scmp.eq.s32.totalorder %s15, 3
    %p50 = por %p48, %p49
    %p52 = scmp.ne.s32.totalorder %s35, %s51
    %p53 = scmp.eq.s32.totalorder %s15, 0
    %p54 = por %p52, %p53
    %s56 = sadd.s32 %s55, 1
    %p59 = scmp.eq.s32.totalorder %s9, 3
    %p60 = scmp.ne.s32.totalorder %s55, %s57
    %p61 = scmp.eq.s32.totalorder %s9, 0
    %p62 = por %p60, %p61
    %p63 = scmp.ne.s32.totalorder %s55, %s57
    %p64 = scmp.eq.s32.totalorder %s14, 3
    %p65 = por %p63, %p64
    %p66 = scmp.ne.s32.totalorder %s57, %s58
    %p67 = scmp.eq.s32.totalorder %s14, 0
    %p68 = por %p66, %p67
    %p69 = scmp.ne.s32.totalorder %s57, %s58
    %p70 = scmp.eq.s32.totalorder %s15, 3
    %p71 = por %p69, %p70
    %p73 = scmp.ne.s32.totalorder %s58, %s72
    %p74 = scmp.eq.s32.totalorder %s15, 0
    %p75 = por %p73, %p74
    %s77 = sadd.s32 %s76, 1
    %p80 = scmp.eq.s32.totalorder %s9, 3
    %p81 = scmp.ne.s32.totalorder %s76, %s78
    %p82 = scmp.eq.s32.totalorder %s9, 0
    %p83 = por %p81, %p82
    %p84 = scmp.ne.s32.totalorder %s76, %s78
    %p85 = scmp.eq.s32.totalorder %s14, 3
    %p86 = por %p84, %p85
    %p87 = scmp.ne.s32.totalorder %s78, %s79
    %p88 = scmp.eq.s32.totalorder %s14, 0
    %p89 = por %p87, %p88
    %p90 = scmp.ne.s32.totalorder %s78, %s79
    %p91 = scmp.eq.s32.totalorder %s15, 3
    %p92 = por %p90, %p91
    %p94 = scmp.ne.s32.totalorder %s79, %s93
    %p95 = scmp.eq.s32.totalorder %s15, 0
    %p96 = por %p94, %p95
    %s97 = ssub.s32 %s16, %s28
    %s98 = ssub.s32 %s17, %s24
    %s99 = sor.u32 %s97, %s98
    %p100 = scmp.eq.s32.totalorder %s99, 0
    %s102 = sadd.s32 %s101, 1
    %s103 = scalar_select %p100, %s101, %s102
    %p106 = pneg %p100
    %p107 = scmp.eq.s32.totalorder %s9, 3
    %p108 = por %p106, %p107
    %p109 = scmp.ne.s32.totalorder %s101, %s104
    %p110 = scmp.eq.s32.totalorder %s9, 0
    %p111 = por %p109, %p110
    %p112 = scmp.ne.s32.totalorder %s101, %s104
    %p113 = scmp.eq.s32.totalorder %s14, 3
    %p114 = por %p112, %p113
    %p115 = scmp.ne.s32.totalorder %s104, %s105
    %p116 = scmp.eq.s32.totalorder %s14, 0
    %p117 = por %p115, %p116
    %p118 = scmp.ne.s32.totalorder %s104, %s105
    %p119 = scmp.eq.s32.totalorder %s15, 3
    %p120 = por %p118, %p119
    %p122 = scmp.ne.s32.totalorder %s105, %s121
    %p123 = scmp.eq.s32.totalorder %s15, 0
    %p124 = por %p122, %p123
    %p125 = scmp.le.s32.totalorder 1, %s9
    %p126 = scmp.lt.s32.totalorder %s9, 5
    %p127 = pnand %p125, %p126
    %p128 = pneg %p127
    // Predicated region
    $region9: #{progan_gen_forward.11} parent=5 // pred_check
      _
    $region10: #{progan_gen_forward.11} parent=5 // pred_check_branch
      %130 = sbr.rel (%p127) target = $region12
    $region11: #{progan_gen_forward.11} parent=5 // pred_region
      %s131 = ssub.s32 %s9, 1
      // Predicated region
      $region13: #{progan_gen_forward.11} parent=11 // pred_check
        %p132 = pneg %p68
      $region14: #{progan_gen_forward.11} parent=11 // pred_check_branch
        %134 = sbr.rel (%p132) target = $region16
      $region15: #{progan_gen_forward.11} parent=11 // pred_region
        _
      $region16: #{progan_gen_forward.11} parent=11 // pred_fallthru
        _
      // Predicated region
      $region17: #{progan_gen_forward.11} parent=11 // pred_check
        %p135 = pneg %p89
      $region18: #{progan_gen_forward.11} parent=11 // pred_check_branch
        %137 = sbr.rel (%p135) target = $region20
      $region19: #{progan_gen_forward.11} parent=11 // pred_region
        _
      $region20: #{progan_gen_forward.11} parent=11 // pred_fallthru
        _
    $region12: #{progan_gen_forward.11} parent=5 // pred_fallthru
      _
    %p138 = scmp.lt.s32.totalorder %s9, 4
    // Predicated region
    $region21: #{progan_gen_forward.11} parent=5 // pred_check
      %p139 = pneg %p138
    $region22: #{progan_gen_forward.11} parent=5 // pred_check_branch
      %141 = sbr.rel (%p139) target = $region24
    $region23: #{progan_gen_forward.11} parent=5 // pred_region
      // Predicated region
      $region25: #{progan_gen_forward.11} parent=23 // pred_check
        %p142 = pneg %p41
      $region26: #{progan_gen_forward.11} parent=23 // pred_check_branch
        %144 = sbr.rel (%p142) target = $region28
      $region27: #{progan_gen_forward.11} parent=23 // pred_region
        %p145 = scmp.lt.s32.totalorder %s16, 1
        %s146 = scalar_select %p145, %s16, 1
        %s147 = smul.addr %s146, 32
        %s148 = smul.addr %s147, 4
        %s149 = scalar_lea.vmem %s0, %s148
      $region28: #{progan_gen_forward.11} parent=23 // pred_fallthru
        _
    $region24: #{progan_gen_forward.11} parent=5 // pred_fallthru
      _
    %p150 = scmp.le.s32.totalorder 1, %s9
    %p151 = scmp.lt.s32.totalorder %s9, 5
    %p152 = pnand %p150, %p151
    %p153 = pneg %p152
    // Predicated region
    $region29: #{progan_gen_forward.11} parent=5 // pred_check
      _
    $region30: #{progan_gen_forward.11} parent=5 // pred_check_branch
      %155 = sbr.rel (%p152) target = $region32
    $region31: #{progan_gen_forward.11} parent=5 // pred_region
      %s156 = ssub.s32 %s9, 1
      %p157 = scmp.lt.s32.totalorder %s18, 1
      %s158 = scalar_select %p157, %s18, 1
      %s159 = smul.addr %s158, 32
      %s160 = smul.addr %s159, 4
      %s161 = scalar_lea.vmem %s0, %s160
      %p162 = pneg %p47
      %p163 = pneg %p44
      %p164 = pneg %p68
      %p165 = pneg %p65
      %p166 = pneg %p89
      %p167 = pneg %p86
      %p168 = pneg %p117
      %p169 = pneg %p114
      %s170 = smul.u32 8, %s19
      %p171 = scmp.lt.s32.totalorder %s18, 1
      %s172 = scalar_select %p171, %s18, 1
      %p173 = scmp.lt.s32.totalorder %s170, 15
      %s174 = scalar_select %p173, %s170, 15
      %s175 = smul.addr %s174, 2
      %s176 = smul.addr %s172, 32
      %s177 = sadd.s32 %s175, %s176
      %s178 = smul.addr %s177, 4
      %s179 = scalar_lea.vmem %s3, %s178
      %p180 = scmp.lt.s32.totalorder %s18, 1
      %s181 = scalar_select %p180, %s18, 1
      %s182 = smul.addr %s181, 32
      %s183 = smul.addr %s182, 4
      %s184 = scalar_lea.vmem %s0, %s183
      %s185 = smul.u32 8, %s19
      %p186 = scmp.lt.s32.totalorder %s18, 1
      %s187 = scalar_select %p186, %s18, 1
      %p188 = scmp.lt.s32.totalorder %s185, 15
      %s189 = scalar_select %p188, %s185, 15
      %s190 = smul.addr %s189, 2
      %s191 = smul.addr %s187, 32
      %s192 = sadd.s32 %s190, %s191
      %s193 = smul.addr %s192, 4
      %s194 = scalar_lea.vmem %s3, %s193
      %s195 = smul.u32 8, %s19
      %p197 = scmp.eq.s32.totalorder %s19, 0
      // Predicated region
      $region33: #{progan_gen_forward.11} parent=31 // pred_check
        %p198 = pneg %p197
      $region34: #{progan_gen_forward.11} parent=31 // pred_check_branch
        %200 = sbr.rel (%p198) target = $region36
      $region35: #{progan_gen_forward.11} parent=31 // pred_region
        %201 = vst [vmem:[#allocation2] sm:$0xf] 0
        %202 = vst [vmem:[#allocation2 + $0x4] sm:$0xf] 0
        %203 = vst [vmem:[#allocation2 + $0x8] sm:$0x1] 0
        %204 = vst [vmem:[#allocation2 + $0xc] sm:$0xf] 0
        %205 = vst [vmem:[#allocation2 + $0x10] sm:$0xf] 0
        %206 = vst [vmem:[#allocation2 + $0x14] sm:$0x1] 0
        %207 = vst [vmem:[#allocation2 + $0x18] sm:$0xf] 0
        %208 = vst [vmem:[#allocation2 + $0x1c] sm:$0xf] 0
        %209 = vst [vmem:[#allocation2 + $0x20] sm:$0x1] 0
        %210 = vst [vmem:[#allocation2 + $0x24] sm:$0xf] 0
        %211 = vst [vmem:[#allocation2 + $0x28] sm:$0xf] 0
        %212 = vst [vmem:[#allocation2 + $0x2c] sm:$0x1] 0
        %213 = vst [vmem:[#allocation2 + $0x30] sm:$0xf] 0
        %214 = vst [vmem:[#allocation2 + $0x34] sm:$0xf] 0
        %215 = vst [vmem:[#allocation2 + $0x38] sm:$0x1] 0
        %216 = vst [vmem:[#allocation2 + $0x3c] sm:$0xf] 0
        %217 = vst [vmem:[#allocation2 + $0x40] sm:$0xf] 0
        %218 = vst [vmem:[#allocation2 + $0x44] sm:$0x1] 0
        %219 = vst [vmem:[#allocation2 + $0x48] sm:$0xf] 0
        %220 = vst [vmem:[#allocation2 + $0x4c] sm:$0xf] 0
        %221 = vst [vmem:[#allocation2 + $0x50] sm:$0x1] 0
        %222 = vst [vmem:[#allocation2 + $0x54] sm:$0xf] 0
        %223 = vst [vmem:[#allocation2 + $0x58] sm:$0xf] 0
        %224 = vst [vmem:[#allocation2 + $0x5c] sm:$0x1] 0
        %225 = vst [vmem:[#allocation2 + $0x60] sm:$0xf] 0
        %226 = vst [vmem:[#allocation2 + $0x64] sm:$0xf] 0
        %227 = vst [vmem:[#allocation2 + $0x68] sm:$0x1] 0
        %228 = vst [vmem:[#allocation2 + $0x6c] sm:$0xf] 0
        %229 = vst [vmem:[#allocation2 + $0x70] sm:$0xf] 0
        %230 = vst [vmem:[#allocation2 + $0x74] sm:$0x1] 0
        %231 = vst [vmem:[#allocation2 + $0x78] sm:$0xf] 0
        %232 = vst [vmem:[#allocation2 + $0x7c] sm:$0xf] 0
        %233 = vst [vmem:[#allocation2 + $0x80] sm:$0x1] 0
        %234 = vst [vmem:[#allocation2 + $0x84] sm:$0xf] 0
        %235 = vst [vmem:[#allocation2 + $0x88] sm:$0xf] 0
        %236 = vst [vmem:[#allocation2 + $0x8c] sm:$0x1] 0
        %237 = vst [vmem:[#allocation2 + $0x90] sm:$0xf] 0
        %238 = vst [vmem:[#allocation2 + $0x94] sm:$0xf] 0
        %239 = vst [vmem:[#allocation2 + $0x98] sm:$0x1] 0
        %240 = vst [vmem:[#allocation2 + $0x9c] sm:$0xf] 0
        %241 = vst [vmem:[#allocation2 + $0xa0] sm:$0xf] 0
        %242 = vst [vmem:[#allocation2 + $0xa4] sm:$0x1] 0
        %243 = vst [vmem:[#allocation2 + $0xa8] sm:$0xf] 0
        %244 = vst [vmem:[#allocation2 + $0xac] sm:$0xf] 0
        %245 = vst [vmem:[#allocation2 + $0xb0] sm:$0x1] 0
        %246 = vst [vmem:[#allocation2 + $0xb4] sm:$0xf] 0
        %247 = vst [vmem:[#allocation2 + $0xb8] sm:$0xf] 0
        %248 = vst [vmem:[#allocation2 + $0xbc] sm:$0x1] 0
        %249 = vst [vmem:[#allocation2 + $0xc0] sm:$0xf] 0
        %250 = vst [vmem:[#allocation2 + $0xc4] sm:$0xf] 0
        %251 = vst [vmem:[#allocation2 + $0xc8] sm:$0x1] 0
        %252 = vst [vmem:[#allocation2 + $0xcc] sm:$0xf] 0
        %253 = vst [vmem:[#allocation2 + $0xd0] sm:$0xf] 0
        %254 = vst [vmem:[#allocation2 + $0xd4] sm:$0x1] 0
        %v255 = vld [vmem:[%s184] sm:$0xf]
        %v256 = vld [vmem:[%s184 + $0x4] sm:$0xf]
        %v257 = vld [vmem:[%s184 + $0x8] sm:$0xf]
        %v258 = vld [vmem:[%s184 + $0xc] sm:$0xf]
        %v259 = vld [vmem:[%s184 + $0x10] sm:$0xf]
        %v260 = vld [vmem:[%s184 + $0x14] sm:$0xf]
        %v261 = vld [vmem:[%s184 + $0x18] sm:$0xf]
        %v262 = vld [vmem:[%s184 + $0x1c] sm:$0xf]
        %v263 = vld [vmem:[%s184 + $0x20] sm:$0xf]
        %v264 = vld [vmem:[%s184 + $0x24] sm:$0xf]
        %v265 = vld [vmem:[%s184 + $0x28] sm:$0xf]
        %v266 = vld [vmem:[%s184 + $0x2c] sm:$0xf]
        %v267 = vld [vmem:[%s184 + $0x30] sm:$0xf]
        %v268 = vld [vmem:[%s184 + $0x34] sm:$0xf]
        %v269 = vld [vmem:[%s184 + $0x38] sm:$0xf]
        %v270 = vld [vmem:[%s184 + $0x3c] sm:$0xf]
        %v271 = vld [vmem:[%s184 + $0x40] sm:$0xf]
        %v272 = vld [vmem:[%s184 + $0x44] sm:$0xf]
        %v273 = vld [vmem:[%s184 + $0x48] sm:$0xf]
        %v274 = vld [vmem:[%s184 + $0x4c] sm:$0xf]
        %v275 = vld [vmem:[%s184 + $0x50] sm:$0xf]
        %v276 = vld [vmem:[%s184 + $0x54] sm:$0xf]
        %v277 = vld [vmem:[%s184 + $0x58] sm:$0xf]
        %v278 = vld [vmem:[%s184 + $0x5c] sm:$0xf]
        %v279 = vld [vmem:[%s184 + $0x60] sm:$0xf]
        %v280 = vld [vmem:[%s184 + $0x64] sm:$0xf]
        %v281 = vld [vmem:[%s184 + $0x68] sm:$0xf]
        %v282 = vld [vmem:[%s184 + $0x6c] sm:$0xf]
        %v283 = vld [vmem:[%s184 + $0x70] sm:$0xf]
        %v284 = vld [vmem:[%s184 + $0x74] sm:$0xf]
        %v285 = vld [vmem:[%s184 + $0x78] sm:$0xf]
        %v286 = vld [vmem:[%s184 + $0x7c] sm:$0xf]
        %vm287 = vsmask.f32 256
        %vm288 = vsmask.f32 4368
        %vm289 = vmor %vm287, %vm288
        %v291 = vshrl.u32 %v255, 16
        %v293 = vrot.slane %v291, 7
        %v294 = vshll.u32 %v255, 16
        %v296 = vor.u32 %v293, %v294
        %v297 = vrot.slane %v293, 4
        %v299 = vshrl.u32 %v256, 16
        %v301 = vrot.slane %v299, 7
        %v302 = vshll.u32 %v256, 16
        %v304 = vor.u32 %v301, %v302
        %v305 = vsel %vm289, %v297, %v304
        %v306 = vrot.slane %v301, 4
        %v308 = vshrl.u32 %v257, 16
        %v310 = vrot.slane %v308, 7
        %v311 = vshll.u32 %v257, 16
        %v313 = vor.u32 %v310, %v311
        %v314 = vrot.slane %v310, 4
        %v316 = vshrl.u32 %v258, 16
        %v318 = vrot.slane %v316, 7
        %v319 = vshll.u32 %v258, 16
        %v321 = vor.u32 %v318, %v319
        %v322 = vsel %vm289, %v314, %v321
        %v323 = vrot.slane %v318, 4
        %v325 = vshrl.u32 %v259, 16
        %v327 = vrot.slane %v325, 7
        %v328 = vshll.u32 %v259, 16
        %v330 = vor.u32 %v327, %v328
        %v331 = vrot.slane %v327, 4
        %v333 = vshrl.u32 %v260, 16
        %v335 = vrot.slane %v333, 7
        %v336 = vshll.u32 %v260, 16
        %v338 = vor.u32 %v335, %v336
        %v339 = vsel %vm289, %v331, %v338
        %v340 = vrot.slane %v335, 4
        %v342 = vshrl.u32 %v261, 16
        %v344 = vrot.slane %v342, 7
        %v345 = vshll.u32 %v261, 16
        %v347 = vor.u32 %v344, %v345
        %v348 = vrot.slane %v344, 4
        %v350 = vshrl.u32 %v262, 16
        %v352 = vrot.slane %v350, 7
        %v353 = vshll.u32 %v262, 16
        %v355 = vor.u32 %v352, %v353
        %v356 = vsel %vm289, %v348, %v355
        %v357 = vrot.slane %v352, 4
        %v359 = vshrl.u32 %v263, 16
        %v361 = vrot.slane %v359, 7
        %v362 = vshll.u32 %v263, 16
        %v364 = vor.u32 %v361, %v362
        %v365 = vrot.slane %v361, 4
        %v367 = vshrl.u32 %v264, 16
        %v369 = vrot.slane %v367, 7
        %v370 = vshll.u32 %v264, 16
        %v372 = vor.u32 %v369, %v370
        %v373 = vsel %vm289, %v365, %v372
        %v374 = vrot.slane %v369, 4
        %v376 = vshrl.u32 %v265, 16
        %v378 = vrot.slane %v376, 7
        %v379 = vshll.u32 %v265, 16
        %v381 = vor.u32 %v378, %v379
        %v382 = vrot.slane %v378, 4
        %v384 = vshrl.u32 %v266, 16
        %v386 = vrot.slane %v384, 7
        %v387 = vshll.u32 %v266, 16
        %v389 = vor.u32 %v386, %v387
        %v390 = vsel %vm289, %v382, %v389
        %v391 = vrot.slane %v386, 4
        %v393 = vshrl.u32 %v267, 16
        %v395 = vrot.slane %v393, 7
        %v396 = vshll.u32 %v267, 16
        %v398 = vor.u32 %v395, %v396
        %v399 = vrot.slane %v395, 4
        %v401 = vshrl.u32 %v268, 16
        %v403 = vrot.slane %v401, 7
        %v404 = vshll.u32 %v268, 16
        %v406 = vor.u32 %v403, %v404
        %v407 = vsel %vm289, %v399, %v406
        %v408 = vrot.slane %v403, 4
        %v410 = vshrl.u32 %v269, 16
        %v412 = vrot.slane %v410, 7
        %v413 = vshll.u32 %v269, 16
        %v415 = vor.u32 %v412, %v413
        %v416 = vrot.slane %v412, 4
        %v418 = vshrl.u32 %v270, 16
        %v420 = vrot.slane %v418, 7
        %v421 = vshll.u32 %v270, 16
        %v423 = vor.u32 %v420, %v421
        %v424 = vsel %vm289, %v416, %v423
        %v425 = vrot.slane %v420, 4
        %v427 = vshrl.u32 %v271, 16
        %v429 = vrot.slane %v427, 7
        %v430 = vshll.u32 %v271, 16
        %v432 = vor.u32 %v429, %v430
        %v433 = vrot.slane %v429, 4
        %v435 = vshrl.u32 %v272, 16
        %v437 = vrot.slane %v435, 7
        %v438 = vshll.u32 %v272, 16
        %v440 = vor.u32 %v437, %v438
        %v441 = vsel %vm289, %v433, %v440
        %v442 = vrot.slane %v437, 4
        %v444 = vshrl.u32 %v273, 16
        %v446 = vrot.slane %v444, 7
        %v447 = vshll.u32 %v273, 16
        %v449 = vor.u32 %v446, %v447
        %v450 = vrot.slane %v446, 4
        %v452 = vshrl.u32 %v274, 16
        %v454 = vrot.slane %v452, 7
        %v455 = vshll.u32 %v274, 16
        %v457 = vor.u32 %v454, %v455
        %v458 = vsel %vm289, %v450, %v457
        %v459 = vrot.slane %v454, 4
        %v461 = vshrl.u32 %v275, 16
        %v463 = vrot.slane %v461, 7
        %v464 = vshll.u32 %v275, 16
        %v466 = vor.u32 %v463, %v464
        %v467 = vrot.slane %v463, 4
        %v469 = vshrl.u32 %v276, 16
        %v471 = vrot.slane %v469, 7
        %v472 = vshll.u32 %v276, 16
        %v474 = vor.u32 %v471, %v472
        %v475 = vsel %vm289, %v467, %v474
        %v476 = vrot.slane %v471, 4
        %v478 = vshrl.u32 %v277, 16
        %v480 = vrot.slane %v478, 7
        %v481 = vshll.u32 %v277, 16
        %v483 = vor.u32 %v480, %v481
        %v484 = vrot.slane %v480, 4
        %v486 = vshrl.u32 %v278, 16
        %v488 = vrot.slane %v486, 7
        %v489 = vshll.u32 %v278, 16
        %v491 = vor.u32 %v488, %v489
        %v492 = vsel %vm289, %v484, %v491
        %v493 = vrot.slane %v488, 4
        %v495 = vshrl.u32 %v279, 16
        %v497 = vrot.slane %v495, 7
        %v498 = vshll.u32 %v279, 16
        %v500 = vor.u32 %v497, %v498
        %v501 = vrot.slane %v497, 4
        %v503 = vshrl.u32 %v280, 16
        %v505 = vrot.slane %v503, 7
        %v506 = vshll.u32 %v280, 16
        %v508 = vor.u32 %v505, %v506
        %v509 = vsel %vm289, %v501, %v508
        %v510 = vrot.slane %v505, 4
        %v512 = vshrl.u32 %v281, 16
        %v514 = vrot.slane %v512, 7
        %v515 = vshll.u32 %v281, 16
        %v517 = vor.u32 %v514, %v515
        %v518 = vrot.slane %v514, 4
        %v520 = vshrl.u32 %v282, 16
        %v522 = vrot.slane %v520, 7
        %v523 = vshll.u32 %v282, 16
        %v525 = vor.u32 %v522, %v523
        %v526 = vsel %vm289, %v518, %v525
        %v527 = vrot.slane %v522, 4
        %v529 = vshrl.u32 %v283, 16
        %v531 = vrot.slane %v529, 7
        %v532 = vshll.u32 %v283, 16
        %v534 = vor.u32 %v531, %v532
        %v535 = vrot.slane %v531, 4
        %v537 = vshrl.u32 %v284, 16
        %v539 = vrot.slane %v537, 7
        %v540 = vshll.u32 %v284, 16
        %v542 = vor.u32 %v539, %v540
        %v543 = vsel %vm289, %v535, %v542
        %v544 = vrot.slane %v539, 4
        %v546 = vshrl.u32 %v285, 16
        %v548 = vrot.slane %v546, 7
        %v549 = vshll.u32 %v285, 16
        %v551 = vor.u32 %v548, %v549
        %v552 = vrot.slane %v548, 4
        %v554 = vshrl.u32 %v286, 16
        %v556 = vrot.slane %v554, 7
        %v557 = vshll.u32 %v286, 16
        %v559 = vor.u32 %v556, %v557
        %v560 = vsel %vm289, %v552, %v559
        %v561 = vrot.slane %v556, 4
        %s610 = scalar_lea.vmem [#allocation2], 12
        %vm611 = vcmask 1043456
        %vm612 = vsmask.f32 7938
        %vm613 = vmand %vm611, %vm612
        %v614 = vld [vmem:[%s610] sm:$0xf]
        %v615 = vsel %vm613, %v296, %v614
        %616 = vst [vmem:[%s610] sm:$0xf] %v615
        %617 = vst [vmem:[%s610 + $0x4] sm:$0xf] %v305
        %vm618 = vcmask 1040384
        %vm619 = vmand %vm618, %vm287
        %v620 = vld [vmem:[%s610 + $0x8] sm:$0x1]
        %v621 = vsel %vm619, %v306, %v620
        %622 = vst [vmem:[%s610 + $0x8] sm:$0x1] %v621
        %v623 = vld [vmem:[%s610 + $0xc] sm:$0xf]
        %v624 = vsel %vm613, %v313, %v623
        %625 = vst [vmem:[%s610 + $0xc] sm:$0xf] %v624
        %626 = vst [vmem:[%s610 + $0x10] sm:$0xf] %v322
        %v627 = vld [vmem:[%s610 + $0x14] sm:$0x1]
        %v628 = vsel %vm619, %v323, %v627
        %629 = vst [vmem:[%s610 + $0x14] sm:$0x1] %v628
        %v630 = vld [vmem:[%s610 + $0x18] sm:$0xf]
        %v631 = vsel %vm613, %v330, %v630
        %632 = vst [vmem:[%s610 + $0x18] sm:$0xf] %v631
        %633 = vst [vmem:[%s610 + $0x1c] sm:$0xf] %v339
        %v634 = vld [vmem:[%s610 + $0x20] sm:$0x1]
        %v635 = vsel %vm619, %v340, %v634
        %636 = vst [vmem:[%s610 + $0x20] sm:$0x1] %v635
        %v637 = vld [vmem:[%s610 + $0x24] sm:$0xf]
        %v638 = vsel %vm613, %v347, %v637
        %639 = vst [vmem:[%s610 + $0x24] sm:$0xf] %v638
        %640 = vst [vmem:[%s610 + $0x28] sm:$0xf] %v356
        %v641 = vld [vmem:[%s610 + $0x2c] sm:$0x1]
        %v642 = vsel %vm619, %v357, %v641
        %643 = vst [vmem:[%s610 + $0x2c] sm:$0x1] %v642
        %v644 = vld [vmem:[%s610 + $0x30] sm:$0xf]
        %v645 = vsel %vm613, %v364, %v644
        %646 = vst [vmem:[%s610 + $0x30] sm:$0xf] %v645
        %647 = vst [vmem:[%s610 + $0x34] sm:$0xf] %v373
        %v648 = vld [vmem:[%s610 + $0x38] sm:$0x1]
        %v649 = vsel %vm619, %v374, %v648
        %650 = vst [vmem:[%s610 + $0x38] sm:$0x1] %v649
        %v651 = vld [vmem:[%s610 + $0x3c] sm:$0xf]
        %v652 = vsel %vm613, %v381, %v651
        %653 = vst [vmem:[%s610 + $0x3c] sm:$0xf] %v652
        %654 = vst [vmem:[%s610 + $0x40] sm:$0xf] %v390
        %v655 = vld [vmem:[%s610 + $0x44] sm:$0x1]
        %v656 = vsel %vm619, %v391, %v655
        %657 = vst [vmem:[%s610 + $0x44] sm:$0x1] %v656
        %v658 = vld [vmem:[%s610 + $0x48] sm:$0xf]
        %v659 = vsel %vm613, %v398, %v658
        %660 = vst [vmem:[%s610 + $0x48] sm:$0xf] %v659
        %661 = vst [vmem:[%s610 + $0x4c] sm:$0xf] %v407
        %v662 = vld [vmem:[%s610 + $0x50] sm:$0x1]
        %v663 = vsel %vm619, %v408, %v662
        %664 = vst [vmem:[%s610 + $0x50] sm:$0x1] %v663
        %v665 = vld [vmem:[%s610 + $0x54] sm:$0xf]
        %v666 = vsel %vm613, %v415, %v665
        %667 = vst [vmem:[%s610 + $0x54] sm:$0xf] %v666
        %668 = vst [vmem:[%s610 + $0x58] sm:$0xf] %v424
        %v669 = vld [vmem:[%s610 + $0x5c] sm:$0x1]
        %v670 = vsel %vm619, %v425, %v669
        %671 = vst [vmem:[%s610 + $0x5c] sm:$0x1] %v670
        %v672 = vld [vmem:[%s610 + $0x60] sm:$0xf]
        %v673 = vsel %vm613, %v432, %v672
        %674 = vst [vmem:[%s610 + $0x60] sm:$0xf] %v673
        %675 = vst [vmem:[%s610 + $0x64] sm:$0xf] %v441
        %v676 = vld [vmem:[%s610 + $0x68] sm:$0x1]
        %v677 = vsel %vm619, %v442, %v676
        %678 = vst [vmem:[%s610 + $0x68] sm:$0x1] %v677
        %v679 = vld [vmem:[%s610 + $0x6c] sm:$0xf]
        %v680 = vsel %vm613, %v449, %v679
        %681 = vst [vmem:[%s610 + $0x6c] sm:$0xf] %v680
        %682 = vst [vmem:[%s610 + $0x70] sm:$0xf] %v458
        %v683 = vld [vmem:[%s610 + $0x74] sm:$0x1]
        %v684 = vsel %vm619, %v459, %v683
        %685 = vst [vmem:[%s610 + $0x74] sm:$0x1] %v684
        %v686 = vld [vmem:[%s610 + $0x78] sm:$0xf]
        %v687 = vsel %vm613, %v466, %v686
        %688 = vst [vmem:[%s610 + $0x78] sm:$0xf] %v687
        %689 = vst [vmem:[%s610 + $0x7c] sm:$0xf] %v475
        %v690 = vld [vmem:[%s610 + $0x80] sm:$0x1]
        %v691 = vsel %vm619, %v476, %v690
        %692 = vst [vmem:[%s610 + $0x80] sm:$0x1] %v691
        %v693 = vld [vmem:[%s610 + $0x84] sm:$0xf]
        %v694 = vsel %vm613, %v483, %v693
        %695 = vst [vmem:[%s610 + $0x84] sm:$0xf] %v694
        %696 = vst [vmem:[%s610 + $0x88] sm:$0xf] %v492
        %v697 = vld [vmem:[%s610 + $0x8c] sm:$0x1]
        %v698 = vsel %vm619, %v493, %v697
        %699 = vst [vmem:[%s610 + $0x8c] sm:$0x1] %v698
        %v700 = vld [vmem:[%s610 + $0x90] sm:$0xf]
        %v701 = vsel %vm613, %v500, %v700
        %702 = vst [vmem:[%s610 + $0x90] sm:$0xf] %v701
        %703 = vst [vmem:[%s610 + $0x94] sm:$0xf] %v509
        %v704 = vld [vmem:[%s610 + $0x98] sm:$0x1]
        %v705 = vsel %vm619, %v510, %v704
        %706 = vst [vmem:[%s610 + $0x98] sm:$0x1] %v705
        %v707 = vld [vmem:[%s610 + $0x9c] sm:$0xf]
        %v708 = vsel %vm613, %v517, %v707
        %709 = vst [vmem:[%s610 + $0x9c] sm:$0xf] %v708
        %710 = vst [vmem:[%s610 + $0xa0] sm:$0xf] %v526
        %v711 = vld [vmem:[%s610 + $0xa4] sm:$0x1]
        %v712 = vsel %vm619, %v527, %v711
        %713 = vst [vmem:[%s610 + $0xa4] sm:$0x1] %v712
        %v714 = vld [vmem:[%s610 + $0xa8] sm:$0xf]
        %v715 = vsel %vm613, %v534, %v714
        %716 = vst [vmem:[%s610 + $0xa8] sm:$0xf] %v715
        %717 = vst [vmem:[%s610 + $0xac] sm:$0xf] %v543
        %v718 = vld [vmem:[%s610 + $0xb0] sm:$0x1]
        %v719 = vsel %vm619, %v544, %v718
        %720 = vst [vmem:[%s610 + $0xb0] sm:$0x1] %v719
        %v721 = vld [vmem:[%s610 + $0xb4] sm:$0xf]
        %v722 = vsel %vm613, %v551, %v721
        %723 = vst [vmem:[%s610 + $0xb4] sm:$0xf] %v722
        %724 = vst [vmem:[%s610 + $0xb8] sm:$0xf] %v560
        %v725 = vld [vmem:[%s610 + $0xbc] sm:$0x1]
        %v726 = vsel %vm619, %v561, %v725
        %727 = vst [vmem:[%s610 + $0xbc] sm:$0x1] %v726
      $region36: #{progan_gen_forward.11} parent=31 // pred_fallthru
        _
      %s728 = smul.u32 %s19, 8
      %s729 = smul.u32 %s728, 3
      %s730 = smul.addr %s729, 4
      %s731 = scalar_lea.vmem [#allocation2], %s730
      %v732 = vld [vmem:[%s731] sm:$0xf]
      %v733 = vld [vmem:[%s731 + $0x4] sm:$0xf]
      %v734 = vld [vmem:[%s731 + $0x8] sm:$0x1]
      %v735 = vld [vmem:[%s731 + $0xc] sm:$0xf]
      %v736 = vld [vmem:[%s731 + $0x10] sm:$0xf]
      %v737 = vld [vmem:[%s731 + $0x14] sm:$0x1]
      %v738 = vld [vmem:[%s731 + $0x18] sm:$0xf]
      %v739 = vld [vmem:[%s731 + $0x1c] sm:$0xf]
      %v740 = vld [vmem:[%s731 + $0x20] sm:$0x1]
      %v741 = vld [vmem:[%s731 + $0x24] sm:$0xf]
      %v742 = vld [vmem:[%s731 + $0x28] sm:$0xf]
      %v743 = vld [vmem:[%s731 + $0x2c] sm:$0x1]
      %v744 = vld [vmem:[%s731 + $0x30] sm:$0xf]
      %v745 = vld [vmem:[%s731 + $0x34] sm:$0xf]
      %v746 = vld [vmem:[%s731 + $0x38] sm:$0x1]
      %v747 = vld [vmem:[%s731 + $0x3c] sm:$0xf]
      %v748 = vld [vmem:[%s731 + $0x40] sm:$0xf]
      %v749 = vld [vmem:[%s731 + $0x44] sm:$0x1]
      %v750 = vld [vmem:[%s731 + $0x48] sm:$0xf]
      %v751 = vld [vmem:[%s731 + $0x4c] sm:$0xf]
      %v752 = vld [vmem:[%s731 + $0x50] sm:$0x1]
      %v753 = vld [vmem:[%s731 + $0x54] sm:$0xf]
      %v754 = vld [vmem:[%s731 + $0x58] sm:$0xf]
      %v755 = vld [vmem:[%s731 + $0x5c] sm:$0x1]
      %v772 = vunpack.c.l.b16 %v732
      %v773 = vunpack.c.l.b16 %v733
      %v774 = vunpack.c.l.b16 %v735
      %v775 = vunpack.c.l.b16 %v736
      %v776 = vunpack.c.l.b16 %v738
      %v777 = vunpack.c.l.b16 %v739
      %v778 = vunpack.c.l.b16 %v741
      %v779 = vunpack.c.l.b16 %v742
      %v780 = vunpack.c.l.b16 %v744
      %v781 = vunpack.c.l.b16 %v745
      %v782 = vunpack.c.l.b16 %v747
      %v783 = vunpack.c.l.b16 %v748
      %v784 = vunpack.c.l.b16 %v750
      %v785 = vunpack.c.l.b16 %v751
      %v786 = vunpack.c.l.b16 %v753
      %v787 = vunpack.c.l.b16 %v754
      %v788 = vpack.c.b16 %v773, %v772
      %v789 = vpack.c.b16 %v775, %v774
      %v790 = vpack.c.b16 %v777, %v776
      %v791 = vpack.c.b16 %v779, %v778
      %v792 = vpack.c.b16 %v781, %v780
      %v793 = vpack.c.b16 %v783, %v782
      %v794 = vpack.c.b16 %v785, %v784
      %v795 = vpack.c.b16 %v787, %v786
      %v812 = vunpack.c.l.b16 %v734
      %v813 = vunpack.c.l.b16 %v737
      %v814 = vunpack.c.l.b16 %v740
      %v815 = vunpack.c.l.b16 %v743
      %v816 = vunpack.c.l.b16 %v746
      %v817 = vunpack.c.l.b16 %v749
      %v818 = vunpack.c.l.b16 %v752
      %v819 = vunpack.c.l.b16 %v755
      %v820 = vpack.c.b16 %v812, %v812
      %v821 = vpack.c.b16 %v813, %v813
      %v822 = vpack.c.b16 %v814, %v814
      %v823 = vpack.c.b16 %v815, %v815
      %v824 = vpack.c.b16 %v816, %v816
      %v825 = vpack.c.b16 %v817, %v817
      %v826 = vpack.c.b16 %v818, %v818
      %v827 = vpack.c.b16 %v819, %v819
      %vm828 = vsmask.f32 7424
      %v830 = vshrl.u32 %v788, 16
      %v832 = vshll.u32 %v788, 16
      %v834 = vrot.slane %v832, 1
      %v835 = vor.u32 %v830, %v834
      %v837 = vshll.u32 %v820, 16
      %v839 = vrot.slane %v837, 1
      %v840 = vsel %vm828, %v835, %v839
      %v842 = vshrl.u32 %v789, 16
      %v844 = vshll.u32 %v789, 16
      %v846 = vrot.slane %v844, 1
      %v847 = vor.u32 %v842, %v846
      %v849 = vshll.u32 %v821, 16
      %v851 = vrot.slane %v849, 1
      %v852 = vsel %vm828, %v847, %v851
      %v854 = vshrl.u32 %v790, 16
      %v856 = vshll.u32 %v790, 16
      %v858 = vrot.slane %v856, 1
      %v859 = vor.u32 %v854, %v858
      %v861 = vshll.u32 %v822, 16
      %v863 = vrot.slane %v861, 1
      %v864 = vsel %vm828, %v859, %v863
      %v866 = vshrl.u32 %v791, 16
      %v868 = vshll.u32 %v791, 16
      %v870 = vrot.slane %v868, 1
      %v871 = vor.u32 %v866, %v870
      %v873 = vshll.u32 %v823, 16
      %v875 = vrot.slane %v873, 1
      %v876 = vsel %vm828, %v871, %v875
      %v878 = vshrl.u32 %v792, 16
      %v880 = vshll.u32 %v792, 16
      %v882 = vrot.slane %v880, 1
      %v883 = vor.u32 %v878, %v882
      %v885 = vshll.u32 %v824, 16
      %v887 = vrot.slane %v885, 1
      %v888 = vsel %vm828, %v883, %v887
      %v890 = vshrl.u32 %v793, 16
      %v892 = vshll.u32 %v793, 16
      %v894 = vrot.slane %v892, 1
      %v895 = vor.u32 %v890, %v894
      %v897 = vshll.u32 %v825, 16
      %v899 = vrot.slane %v897, 1
      %v900 = vsel %vm828, %v895, %v899
      %v902 = vshrl.u32 %v794, 16
      %v904 = vshll.u32 %v794, 16
      %v906 = vrot.slane %v904, 1
      %v907 = vor.u32 %v902, %v906
      %v909 = vshll.u32 %v826, 16
      %v911 = vrot.slane %v909, 1
      %v912 = vsel %vm828, %v907, %v911
      %v914 = vshrl.u32 %v795, 16
      %v916 = vshll.u32 %v795, 16
      %v918 = vrot.slane %v916, 1
      %v919 = vor.u32 %v914, %v918
      %v921 = vshll.u32 %v827, 16
      %v923 = vrot.slane %v921, 1
      %v924 = vsel %vm828, %v919, %v923
      %vm933 = vcmask 1046528
      %v934 = vrot.slane %v788, 1
      %v935 = vrot.slane %v820, 1
      %v936 = vsel %vm933, %v934, %v935
      %v937 = vrot.slane %v789, 1
      %v938 = vrot.slane %v821, 1
      %v939 = vsel %vm933, %v937, %v938
      %v940 = vrot.slane %v790, 1
      %v941 = vrot.slane %v822, 1
      %v942 = vsel %vm933, %v940, %v941
      %v943 = vrot.slane %v791, 1
      %v944 = vrot.slane %v823, 1
      %v945 = vsel %vm933, %v943, %v944
      %v946 = vrot.slane %v792, 1
      %v947 = vrot.slane %v824, 1
      %v948 = vsel %vm933, %v946, %v947
      %v949 = vrot.slane %v793, 1
      %v950 = vrot.slane %v825, 1
      %v951 = vsel %vm933, %v949, %v950
      %v952 = vrot.slane %v794, 1
      %v953 = vrot.slane %v826, 1
      %v954 = vsel %vm933, %v952, %v953
      %v955 = vrot.slane %v795, 1
      %v956 = vrot.slane %v827, 1
      %v957 = vsel %vm933, %v955, %v956
      %v966 = vld [vmem:[%s1] sm:$0xf]
      %v967 = vld [vmem:[%s1 + $0x4] sm:$0xf]
      %v968 = vld [vmem:[%s1 + $0x8] sm:$0xf]
      %v969 = vld [vmem:[%s1 + $0xc] sm:$0xf]
      %v970 = vld [vmem:[%s1 + $0x10] sm:$0xf]
      %v971 = vld [vmem:[%s1 + $0x14] sm:$0xf]
      %v972 = vld [vmem:[%s1 + $0x18] sm:$0xf]
      %v973 = vld [vmem:[%s1 + $0x1c] sm:$0xf]
      %v974 = vld [vmem:[%s1 + $0x20] sm:$0xf]
      %v975 = vld [vmem:[%s1 + $0x24] sm:$0xf]
      %v976 = vld [vmem:[%s1 + $0x28] sm:$0xf]
      %v977 = vld [vmem:[%s1 + $0x2c] sm:$0xf]
      %v978 = vld [vmem:[%s1 + $0x30] sm:$0xf]
      %v979 = vld [vmem:[%s1 + $0x34] sm:$0xf]
      %v980 = vld [vmem:[%s1 + $0x38] sm:$0xf]
      %v981 = vld [vmem:[%s1 + $0x3c] sm:$0xf]
      %v982 = vld [vmem:[%s1 + $0x40] sm:$0xf]
      %v983 = vld [vmem:[%s1 + $0x44] sm:$0xf]
      %v984 = vld [vmem:[%s1 + $0x48] sm:$0xf]
      %v985 = vld [vmem:[%s1 + $0x4c] sm:$0xf]
      %v986 = vld [vmem:[%s1 + $0x50] sm:$0xf]
      %v987 = vld [vmem:[%s1 + $0x54] sm:$0xf]
      %v988 = vld [vmem:[%s1 + $0x58] sm:$0xf]
      %v989 = vld [vmem:[%s1 + $0x5c] sm:$0xf]
      %v990 = vld [vmem:[%s1 + $0x60] sm:$0xf]
      %v991 = vld [vmem:[%s1 + $0x64] sm:$0xf]
      %v992 = vld [vmem:[%s1 + $0x68] sm:$0xf]
      %v993 = vld [vmem:[%s1 + $0x6c] sm:$0xf]
      %v994 = vld [vmem:[%s1 + $0x70] sm:$0xf]
      %v995 = vld [vmem:[%s1 + $0x74] sm:$0xf]
      %v996 = vld [vmem:[%s1 + $0x78] sm:$0xf]
      %v997 = vld [vmem:[%s1 + $0x7c] sm:$0xf]
      %v998 = vld [vmem:[%s1 + $0x80] sm:$0xf]
      %v999 = vld [vmem:[%s1 + $0x84] sm:$0xf]
      %v1000 = vld [vmem:[%s1 + $0x88] sm:$0xf]
      %v1001 = vld [vmem:[%s1 + $0x8c] sm:$0xf]
      %v1002 = vld [vmem:[%s1 + $0x90] sm:$0xf]
      %v1003 = vld [vmem:[%s1 + $0x94] sm:$0xf]
      %v1004 = vld [vmem:[%s1 + $0x98] sm:$0xf]
      %v1005 = vld [vmem:[%s1 + $0x9c] sm:$0xf]
      %v1006 = vld [vmem:[%s1 + $0xa0] sm:$0xf]
      %v1007 = vld [vmem:[%s1 + $0xa4] sm:$0xf]
      %v1008 = vld [vmem:[%s1 + $0xa8] sm:$0xf]
      %v1009 = vld [vmem:[%s1 + $0xac] sm:$0xf]
      %v1010 = vld [vmem:[%s1 + $0xb0] sm:$0xf]
      %v1011 = vld [vmem:[%s1 + $0xb4] sm:$0xf]
      %v1012 = vld [vmem:[%s1 + $0xb8] sm:$0xf]
      %v1013 = vld [vmem:[%s1 + $0xbc] sm:$0xf]
      %s1014 = sadd.s32 %s728, 1
      %s1015 = smul.u32 %s1014, 3
      %s1016 = smul.addr %s1015, 4
      %s1017 = scalar_lea.vmem [#allocation2], %s1016
      %v1018 = vld [vmem:[%s1017] sm:$0xf]
      %v1019 = vld [vmem:[%s1017 + $0x4] sm:$0xf]
      %v1020 = vld [vmem:[%s1017 + $0x8] sm:$0x1]
      %v1021 = vld [vmem:[%s1017 + $0xc] sm:$0xf]
      %v1022 = vld [vmem:[%s1017 + $0x10] sm:$0xf]
      %v1023 = vld [vmem:[%s1017 + $0x14] sm:$0x1]
      %v1024 = vld [vmem:[%s1017 + $0x18] sm:$0xf]
      %v1025 = vld [vmem:[%s1017 + $0x1c] sm:$0xf]
      %v1026 = vld [vmem:[%s1017 + $0x20] sm:$0x1]
      %v1027 = vld [vmem:[%s1017 + $0x24] sm:$0xf]
      %v1028 = vld [vmem:[%s1017 + $0x28] sm:$0xf]
      %v1029 = vld [vmem:[%s1017 + $0x2c] sm:$0x1]
      %v1030 = vld [vmem:[%s1017 + $0x30] sm:$0xf]
      %v1031 = vld [vmem:[%s1017 + $0x34] sm:$0xf]
      %v1032 = vld [vmem:[%s1017 + $0x38] sm:$0x1]
      %v1033 = vld [vmem:[%s1017 + $0x3c] sm:$0xf]
      %v1034 = vld [vmem:[%s1017 + $0x40] sm:$0xf]
      %v1035 = vld [vmem:[%s1017 + $0x44] sm:$0x1]
      %v1036 = vld [vmem:[%s1017 + $0x48] sm:$0xf]
      %v1037 = vld [vmem:[%s1017 + $0x4c] sm:$0xf]
      %v1038 = vld [vmem:[%s1017 + $0x50] sm:$0x1]
      %v1039 = vld [vmem:[%s1017 + $0x54] sm:$0xf]
      %v1040 = vld [vmem:[%s1017 + $0x58] sm:$0xf]
      %v1041 = vld [vmem:[%s1017 + $0x5c] sm:$0x1]
      %v1058 = vunpack.c.l.b16 %v1018
      %v1059 = vunpack.c.l.b16 %v1019
      %v1060 = vunpack.c.l.b16 %v1021
      %v1061 = vunpack.c.l.b16 %v1022
      %v1062 = vunpack.c.l.b16 %v1024
      %v1063 = vunpack.c.l.b16 %v1025
      %v1064 = vunpack.c.l.b16 %v1027
      %v1065 = vunpack.c.l.b16 %v1028
      %v1066 = vunpack.c.l.b16 %v1030
      %v1067 = vunpack.c.l.b16 %v1031
      %v1068 = vunpack.c.l.b16 %v1033
      %v1069 = vunpack.c.l.b16 %v1034
      %v1070 = vunpack.c.l.b16 %v1036
      %v1071 = vunpack.c.l.b16 %v1037
      %v1072 = vunpack.c.l.b16 %v1039
      %v1073 = vunpack.c.l.b16 %v1040
      %v1074 = vpack.c.b16 %v1059, %v1058
      %v1075 = vpack.c.b16 %v1061, %v1060
      %v1076 = vpack.c.b16 %v1063, %v1062
      %v1077 = vpack.c.b16 %v1065, %v1064
      %v1078 = vpack.c.b16 %v1067, %v1066
      %v1079 = vpack.c.b16 %v1069, %v1068
      %v1080 = vpack.c.b16 %v1071, %v1070
      %v1081 = vpack.c.b16 %v1073, %v1072
      %v1098 = vunpack.c.l.b16 %v1020
      %v1099 = vunpack.c.l.b16 %v1023
      %v1100 = vunpack.c.l.b16 %v1026
      %v1101 = vunpack.c.l.b16 %v1029
      %v1102 = vunpack.c.l.b16 %v1032
      %v1103 = vunpack.c.l.b16 %v1035
      %v1104 = vunpack.c.l.b16 %v1038
      %v1105 = vunpack.c.l.b16 %v1041
      %v1106 = vpack.c.b16 %v1098, %v1098
      %v1107 = vpack.c.b16 %v1099, %v1099
      %v1108 = vpack.c.b16 %v1100, %v1100
      %v1109 = vpack.c.b16 %v1101, %v1101
      %v1110 = vpack.c.b16 %v1102, %v1102
      %v1111 = vpack.c.b16 %v1103, %v1103
      %v1112 = vpack.c.b16 %v1104, %v1104
      %v1113 = vpack.c.b16 %v1105, %v1105
      %v1115 = vshrl.u32 %v1074, 16
      %v1117 = vshll.u32 %v1074, 16
      %v1119 = vrot.slane %v1117, 1
      %v1120 = vor.u32 %v1115, %v1119
      %v1122 = vshll.u32 %v1106, 16
      %v1124 = vrot.slane %v1122, 1
      %v1125 = vsel %vm828, %v1120, %v1124
      %v1127 = vshrl.u32 %v1075, 16
      %v1129 = vshll.u32 %v1075, 16
      %v1131 = vrot.slane %v1129, 1
      %v1132 = vor.u32 %v1127, %v1131
      %v1134 = vshll.u32 %v1107, 16
      %v1136 = vrot.slane %v1134, 1
      %v1137 = vsel %vm828, %v1132, %v1136
      %v1139 = vshrl.u32 %v1076, 16
      %v1141 = vshll.u32 %v1076, 16
      %v1143 = vrot.slane %v1141, 1
      %v1144 = vor.u32 %v1139, %v1143
      %v1146 = vshll.u32 %v1108, 16
      %v1148 = vrot.slane %v1146, 1
      %v1149 = vsel %vm828, %v1144, %v1148
      %v1151 = vshrl.u32 %v1077, 16
      %v1153 = vshll.u32 %v1077, 16
      %v1155 = vrot.slane %v1153, 1
      %v1156 = vor.u32 %v1151, %v1155
      %v1158 = vshll.u32 %v1109, 16
      %v1160 = vrot.slane %v1158, 1
      %v1161 = vsel %vm828, %v1156, %v1160
      %v1163 = vshrl.u32 %v1078, 16
      %v1165 = vshll.u32 %v1078, 16
      %v1167 = vrot.slane %v1165, 1
      %v1168 = vor.u32 %v1163, %v1167
      %v1170 = vshll.u32 %v1110, 16
      %v1172 = vrot.slane %v1170, 1
      %v1173 = vsel %vm828, %v1168, %v1172
      %v1175 = vshrl.u32 %v1079, 16
      %v1177 = vshll.u32 %v1079, 16
      %v1179 = vrot.slane %v1177, 1
      %v1180 = vor.u32 %v1175, %v1179
      %v1182 = vshll.u32 %v1111, 16
      %v1184 = vrot.slane %v1182, 1
      %v1185 = vsel %vm828, %v1180, %v1184
      %v1187 = vshrl.u32 %v1080, 16
      %v1189 = vshll.u32 %v1080, 16
      %v1191 = vrot.slane %v1189, 1
      %v1192 = vor.u32 %v1187, %v1191
      %v1194 = vshll.u32 %v1112, 16
      %v1196 = vrot.slane %v1194, 1
      %v1197 = vsel %vm828, %v1192, %v1196
      %v1199 = vshrl.u32 %v1081, 16
      %v1201 = vshll.u32 %v1081, 16
      %v1203 = vrot.slane %v1201, 1
      %v1204 = vor.u32 %v1199, %v1203
      %v1206 = vshll.u32 %v1113, 16
      %v1208 = vrot.slane %v1206, 1
      %v1209 = vsel %vm828, %v1204, %v1208
      %v1218 = vrot.slane %v1074, 1
      %v1219 = vrot.slane %v1106, 1
      %v1220 = vsel %vm933, %v1218, %v1219
      %v1221 = vrot.slane %v1075, 1
      %v1222 = vrot.slane %v1107, 1
      %v1223 = vsel %vm933, %v1221, %v1222
      %v1224 = vrot.slane %v1076, 1
      %v1225 = vrot.slane %v1108, 1
      %v1226 = vsel %vm933, %v1224, %v1225
      %v1227 = vrot.slane %v1077, 1
      %v1228 = vrot.slane %v1109, 1
      %v1229 = vsel %vm933, %v1227, %v1228
      %v1230 = vrot.slane %v1078, 1
      %v1231 = vrot.slane %v1110, 1
      %v1232 = vsel %vm933, %v1230, %v1231
      %v1233 = vrot.slane %v1079, 1
      %v1234 = vrot.slane %v1111, 1
      %v1235 = vsel %vm933, %v1233, %v1234
      %v1236 = vrot.slane %v1080, 1
      %v1237 = vrot.slane %v1112, 1
      %v1238 = vsel %vm933, %v1236, %v1237
      %v1239 = vrot.slane %v1081, 1
      %v1240 = vrot.slane %v1113, 1
      %v1241 = vsel %vm933, %v1239, %v1240
      %s1250 = scalar_lea.vmem %s1, 192
      %v1251 = vld [vmem:[%s1250] sm:$0xf]
      %v1252 = vld [vmem:[%s1250 + $0x4] sm:$0xf]
      %v1253 = vld [vmem:[%s1250 + $0x8] sm:$0xf]
      %v1254 = vld [vmem:[%s1250 + $0xc] sm:$0xf]
      %v1255 = vld [vmem:[%s1250 + $0x10] sm:$0xf]
      %v1256 = vld [vmem:[%s1250 + $0x14] sm:$0xf]
      %v1257 = vld [vmem:[%s1250 + $0x18] sm:$0xf]
      %v1258 = vld [vmem:[%s1250 + $0x1c] sm:$0xf]
      %v1259 = vld [vmem:[%s1250 + $0x20] sm:$0xf]
      %v1260 = vld [vmem:[%s1250 + $0x24] sm:$0xf]
      %v1261 = vld [vmem:[%s1250 + $0x28] sm:$0xf]
      %v1262 = vld [vmem:[%s1250 + $0x2c] sm:$0xf]
      %v1263 = vld [vmem:[%s1250 + $0x30] sm:$0xf]
      %v1264 = vld [vmem:[%s1250 + $0x34] sm:$0xf]
      %v1265 = vld [vmem:[%s1250 + $0x38] sm:$0xf]
      %v1266 = vld [vmem:[%s1250 + $0x3c] sm:$0xf]
      %v1267 = vld [vmem:[%s1250 + $0x40] sm:$0xf]
      %v1268 = vld [vmem:[%s1250 + $0x44] sm:$0xf]
      %v1269 = vld [vmem:[%s1250 + $0x48] sm:$0xf]
      %v1270 = vld [vmem:[%s1250 + $0x4c] sm:$0xf]
      %v1271 = vld [vmem:[%s1250 + $0x50] sm:$0xf]
      %v1272 = vld [vmem:[%s1250 + $0x54] sm:$0xf]
      %v1273 = vld [vmem:[%s1250 + $0x58] sm:$0xf]
      %v1274 = vld [vmem:[%s1250 + $0x5c] sm:$0xf]
      %v1275 = vld [vmem:[%s1250 + $0x60] sm:$0xf]
      %v1276 = vld [vmem:[%s1250 + $0x64] sm:$0xf]
      %v1277 = vld [vmem:[%s1250 + $0x68] sm:$0xf]
      %v1278 = vld [vmem:[%s1250 + $0x6c] sm:$0xf]
      %v1279 = vld [vmem:[%s1250 + $0x70] sm:$0xf]
      %v1280 = vld [vmem:[%s1250 + $0x74] sm:$0xf]
      %v1281 = vld [vmem:[%s1250 + $0x78] sm:$0xf]
      %v1282 = vld [vmem:[%s1250 + $0x7c] sm:$0xf]
      %v1283 = vld [vmem:[%s1250 + $0x80] sm:$0xf]
      %v1284 = vld [vmem:[%s1250 + $0x84] sm:$0xf]
      %v1285 = vld [vmem:[%s1250 + $0x88] sm:$0xf]
      %v1286 = vld [vmem:[%s1250 + $0x8c] sm:$0xf]
      %v1287 = vld [vmem:[%s1250 + $0x90] sm:$0xf]
      %v1288 = vld [vmem:[%s1250 + $0x94] sm:$0xf]
      %v1289 = vld [vmem:[%s1250 + $0x98] sm:$0xf]
      %v1290 = vld [vmem:[%s1250 + $0x9c] sm:$0xf]
      %v1291 = vld [vmem:[%s1250 + $0xa0] sm:$0xf]
      %v1292 = vld [vmem:[%s1250 + $0xa4] sm:$0xf]
      %v1293 = vld [vmem:[%s1250 + $0xa8] sm:$0xf]
      %v1294 = vld [vmem:[%s1250 + $0xac] sm:$0xf]
      %v1295 = vld [vmem:[%s1250 + $0xb0] sm:$0xf]
      %v1296 = vld [vmem:[%s1250 + $0xb4] sm:$0xf]
      %v1297 = vld [vmem:[%s1250 + $0xb8] sm:$0xf]
      %v1298 = vld [vmem:[%s1250 + $0xbc] sm:$0xf]
      %v1347 = vunpack.c.l.b16 %v1251
      %v1348 = vunpack.c.l.b16 %v1252
      %v1349 = vunpack.c.l.b16 %v1253
      %v1350 = vunpack.c.l.b16 %v1254
      %v1351 = vunpack.c.l.b16 %v1255
      %v1352 = vunpack.c.l.b16 %v1256
      %v1353 = vunpack.c.l.b16 %v1257
      %v1354 = vunpack.c.l.b16 %v1258
      %v1355 = vunpack.c.l.b16 %v1259
      %v1356 = vunpack.c.l.b16 %v1260
      %v1357 = vunpack.c.l.b16 %v1261
      %v1358 = vunpack.c.l.b16 %v1262
      %v1359 = vunpack.c.l.b16 %v1263
      %v1360 = vunpack.c.l.b16 %v1264
      %v1361 = vunpack.c.l.b16 %v1265
      %v1362 = vunpack.c.l.b16 %v1266
      %v1363 = vunpack.c.l.b16 %v1267
      %v1364 = vunpack.c.l.b16 %v1268
      %v1365 = vunpack.c.l.b16 %v1269
      %v1366 = vunpack.c.l.b16 %v1270
      %v1367 = vunpack.c.l.b16 %v1271
      %v1368 = vunpack.c.l.b16 %v1272
      %v1369 = vunpack.c.l.b16 %v1273
      %v1370 = vunpack.c.l.b16 %v1274
      %v1371 = vunpack.c.l.b16 %v1275
      %v1372 = vunpack.c.l.b16 %v1276
      %v1373 = vunpack.c.l.b16 %v1277
      %v1374 = vunpack.c.l.b16 %v1278
      %v1375 = vunpack.c.l.b16 %v1279
      %v1376 = vunpack.c.l.b16 %v1280
      %v1377 = vunpack.c.l.b16 %v1281
      %v1378 = vunpack.c.l.b16 %v1282
      %v1379 = vunpack.c.l.b16 %v1283
      %v1380 = vunpack.c.l.b16 %v1284
      %v1381 = vunpack.c.l.b16 %v1285
      %v1382 = vunpack.c.l.b16 %v1286
      %v1383 = vunpack.c.l.b16 %v1287
      %v1384 = vunpack.c.l.b16 %v1288
      %v1385 = vunpack.c.l.b16 %v1289
      %v1386 = vunpack.c.l.b16 %v1290
      %v1387 = vunpack.c.l.b16 %v1291
      %v1388 = vunpack.c.l.b16 %v1292
      %v1389 = vunpack.c.l.b16 %v1293
      %v1390 = vunpack.c.l.b16 %v1294
      %v1391 = vunpack.c.l.b16 %v1295
      %v1392 = vunpack.c.l.b16 %v1296
      %v1393 = vunpack.c.l.b16 %v1297
      %v1394 = vunpack.c.l.b16 %v1298
      %v1395 = vpack.c.b16 %v1348, %v1347
      %v1396 = vpack.c.b16 %v1350, %v1349
      %v1397 = vpack.c.b16 %v1352, %v1351
      %v1398 = vpack.c.b16 %v1354, %v1353
      %v1399 = vpack.c.b16 %v1356, %v1355
      %v1400 = vpack.c.b16 %v1358, %v1357
      %v1401 = vpack.c.b16 %v1360, %v1359
      %v1402 = vpack.c.b16 %v1362, %v1361
      %v1403 = vpack.c.b16 %v1364, %v1363
      %v1404 = vpack.c.b16 %v1366, %v1365
      %v1405 = vpack.c.b16 %v1368, %v1367
      %v1406 = vpack.c.b16 %v1370, %v1369
      %v1407 = vpack.c.b16 %v1372, %v1371
      %v1408 = vpack.c.b16 %v1374, %v1373
      %v1409 = vpack.c.b16 %v1376, %v1375
      %v1410 = vpack.c.b16 %v1378, %v1377
      %v1411 = vpack.c.b16 %v1380, %v1379
      %v1412 = vpack.c.b16 %v1382, %v1381
      %v1413 = vpack.c.b16 %v1384, %v1383
      %v1414 = vpack.c.b16 %v1386, %v1385
      %v1415 = vpack.c.b16 %v1388, %v1387
      %v1416 = vpack.c.b16 %v1390, %v1389
      %v1417 = vpack.c.b16 %v1392, %v1391
      %v1418 = vpack.c.b16 %v1394, %v1393
      %1443 = vmatpush.bf16.msra.mxu0 %v1402
      %1444 = vmatpush.bf16.msra.mxu0 %v1401
      %1445 = vmatpush.bf16.msra.mxu0 %v1400
      %1446 = vmatpush.bf16.msra.mxu0 %v1399
      %1447 = vmatpush.bf16.msra.mxu0 %v1398
      %1448 = vmatpush.bf16.msra.mxu0 %v1397
      %1449 = vmatpush.bf16.msra.mxu0 %v1396
      %1450 = vmatpush.bf16.msra.mxu0 %v1395
      %1451 = vmatmul.bf16.gmra.mxu0 %v1074
      %v1452 = vpop.f32.mrf.mxu0
      %v1453 = vadd.f32 0.0, %v1452
      %v1454 = vpop.f32.mrf.mxu0
      %v1455 = vadd.f32 0.0, %v1454
      %1456 = vmatmul.bf16.gmra.mxu0 %v1075
      %v1457 = vpop.f32.mrf.mxu0
      %v1458 = vadd.f32 0.0, %v1457
      %v1459 = vpop.f32.mrf.mxu0
      %v1460 = vadd.f32 0.0, %v1459
      %1461 = vmatmul.bf16.gmra.mxu0 %v1076
      %v1462 = vpop.f32.mrf.mxu0
      %v1463 = vadd.f32 0.0, %v1462
      %v1464 = vpop.f32.mrf.mxu0
      %v1465 = vadd.f32 0.0, %v1464
      %1466 = vmatmul.bf16.gmra.mxu0 %v1077
      %v1467 = vpop.f32.mrf.mxu0
      %v1468 = vadd.f32 0.0, %v1467
      %v1469 = vpop.f32.mrf.mxu0
      %v1470 = vadd.f32 0.0, %v1469
      %1471 = vmatmul.bf16.gmra.mxu0 %v1078
      %v1472 = vpop.f32.mrf.mxu0
      %v1473 = vadd.f32 0.0, %v1472
      %v1474 = vpop.f32.mrf.mxu0
      %v1475 = vadd.f32 0.0, %v1474
      %1476 = vmatmul.bf16.gmra.mxu0 %v1079
      %v1477 = vpop.f32.mrf.mxu0
      %v1478 = vadd.f32 0.0, %v1477
      %v1479 = vpop.f32.mrf.mxu0
      %v1480 = vadd.f32 0.0, %v1479
      %1481 = vmatmul.bf16.gmra.mxu0 %v1080
      %v1482 = vpop.f32.mrf.mxu0
      %v1483 = vadd.f32 0.0, %v1482
      %v1484 = vpop.f32.mrf.mxu0
      %v1485 = vadd.f32 0.0, %v1484
      %1486 = vmatmul.bf16.gmra.mxu0 %v1081
      %v1487 = vpop.f32.mrf.mxu0
      %v1488 = vadd.f32 0.0, %v1487
      %v1489 = vpop.f32.mrf.mxu0
      %v1490 = vadd.f32 0.0, %v1489
      %1491 = vdwg.mxu0
      %1492 = vmatpush.bf16.msra.mxu0 %v1410
      %1493 = vmatpush.bf16.msra.mxu0 %v1409
      %1494 = vmatpush.bf16.msra.mxu0 %v1408
      %1495 = vmatpush.bf16.msra.mxu0 %v1407
      %1496 = vmatpush.bf16.msra.mxu0 %v1406
      %1497 = vmatpush.bf16.msra.mxu0 %v1405
      %1498 = vmatpush.bf16.msra.mxu0 %v1404
      %1499 = vmatpush.bf16.msra.mxu0 %v1403
      %1500 = vmatmul.bf16.gmra.mxu0 %v1125
      %v1501 = vpop.f32.mrf.mxu0
      %v1502 = vadd.f32 %v1453, %v1501
      %v1503 = vpop.f32.mrf.mxu0
      %v1504 = vadd.f32 %v1455, %v1503
      %1505 = vmatmul.bf16.gmra.mxu0 %v1137
      %v1506 = vpop.f32.mrf.mxu0
      %v1507 = vadd.f32 %v1458, %v1506
      %v1508 = vpop.f32.mrf.mxu0
      %v1509 = vadd.f32 %v1460, %v1508
      %1510 = vmatmul.bf16.gmra.mxu0 %v1149
      %v1511 = vpop.f32.mrf.mxu0
      %v1512 = vadd.f32 %v1463, %v1511
      %v1513 = vpop.f32.mrf.mxu0
      %v1514 = vadd.f32 %v1465, %v1513
      %1515 = vmatmul.bf16.gmra.mxu0 %v1161
      %v1516 = vpop.f32.mrf.mxu0
      %v1517 = vadd.f32 %v1468, %v1516
      %v1518 = vpop.f32.mrf.mxu0
      %v1519 = vadd.f32 %v1470, %v1518
      %1520 = vmatmul.bf16.gmra.mxu0 %v1173
      %v1521 = vpop.f32.mrf.mxu0
      %v1522 = vadd.f32 %v1473, %v1521
      %v1523 = vpop.f32.mrf.mxu0
      %v1524 = vadd.f32 %v1475, %v1523
      %1525 = vmatmul.bf16.gmra.mxu0 %v1185
      %v1526 = vpop.f32.mrf.mxu0
      %v1527 = vadd.f32 %v1478, %v1526
      %v1528 = vpop.f32.mrf.mxu0
      %v1529 = vadd.f32 %v1480, %v1528
      %1530 = vmatmul.bf16.gmra.mxu0 %v1197
      %v1531 = vpop.f32.mrf.mxu0
      %v1532 = vadd.f32 %v1483, %v1531
      %v1533 = vpop.f32.mrf.mxu0
      %v1534 = vadd.f32 %v1485, %v1533
      %1535 = vmatmul.bf16.gmra.mxu0 %v1209
      %v1536 = vpop.f32.mrf.mxu0
      %v1537 = vadd.f32 %v1488, %v1536
      %v1538 = vpop.f32.mrf.mxu0
      %v1539 = vadd.f32 %v1490, %v1538
      %1540 = vdwg.mxu0
      %1541 = vmatpush.bf16.msra.mxu0 %v1418
      %1542 = vmatpush.bf16.msra.mxu0 %v1417
      %1543 = vmatpush.bf16.msra.mxu0 %v1416
      %1544 = vmatpush.bf16.msra.mxu0 %v1415
      %1545 = vmatpush.bf16.msra.mxu0 %v1414
      %1546 = vmatpush.bf16.msra.mxu0 %v1413
      %1547 = vmatpush.bf16.msra.mxu0 %v1412
      %1548 = vmatpush.bf16.msra.mxu0 %v1411
      %1549 = vmatmul.bf16.gmra.mxu0 %v1220
      %v1550 = vpop.f32.mrf.mxu0
      %v1551 = vadd.f32 %v1502, %v1550
      %v1552 = vpop.f32.mrf.mxu0
      %v1553 = vadd.f32 %v1504, %v1552
      %1554 = vmatmul.bf16.gmra.mxu0 %v1223
      %v1555 = vpop.f32.mrf.mxu0
      %v1556 = vadd.f32 %v1507, %v1555
      %v1557 = vpop.f32.mrf.mxu0
      %v1558 = vadd.f32 %v1509, %v1557
      %1559 = vmatmul.bf16.gmra.mxu0 %v1226
      %v1560 = vpop.f32.mrf.mxu0
      %v1561 = vadd.f32 %v1512, %v1560
      %v1562 = vpop.f32.mrf.mxu0
      %v1563 = vadd.f32 %v1514, %v1562
      %1564 = vmatmul.bf16.gmra.mxu0 %v1229
      %v1565 = vpop.f32.mrf.mxu0
      %v1566 = vadd.f32 %v1517, %v1565
      %v1567 = vpop.f32.mrf.mxu0
      %v1568 = vadd.f32 %v1519, %v1567
      %1569 = vmatmul.bf16.gmra.mxu0 %v1232
      %v1570 = vpop.f32.mrf.mxu0
      %v1571 = vadd.f32 %v1522, %v1570
      %v1572 = vpop.f32.mrf.mxu0
      %v1573 = vadd.f32 %v1524, %v1572
      %1574 = vmatmul.bf16.gmra.mxu0 %v1235
      %v1575 = vpop.f32.mrf.mxu0
      %v1576 = vadd.f32 %v1527, %v1575
      %v1577 = vpop.f32.mrf.mxu0
      %v1578 = vadd.f32 %v1529, %v1577
      %1579 = vmatmul.bf16.gmra.mxu0 %v1238
      %v1580 = vpop.f32.mrf.mxu0
      %v1581 = vadd.f32 %v1532, %v1580
      %v1582 = vpop.f32.mrf.mxu0
      %v1583 = vadd.f32 %v1534, %v1582
      %1584 = vmatmul.bf16.gmra.mxu0 %v1241
      %v1585 = vpop.f32.mrf.mxu0
      %v1586 = vadd.f32 %v1537, %v1585
      %v1587 = vpop.f32.mrf.mxu0
      %v1588 = vadd.f32 %v1539, %v1587
      %1589 = vdwg.mxu0
      %v1638 = vunpack.c.l.b16 %v966
      %v1639 = vunpack.c.l.b16 %v967
      %v1640 = vunpack.c.l.b16 %v968
      %v1641 = vunpack.c.l.b16 %v969
      %v1642 = vunpack.c.l.b16 %v970
      %v1643 = vunpack.c.l.b16 %v971
      %v1644 = vunpack.c.l.b16 %v972
      %v1645 = vunpack.c.l.b16 %v973
      %v1646 = vunpack.c.l.b16 %v974
      %v1647 = vunpack.c.l.b16 %v975
      %v1648 = vunpack.c.l.b16 %v976
      %v1649 = vunpack.c.l.b16 %v977
      %v1650 = vunpack.c.l.b16 %v978
      %v1651 = vunpack.c.l.b16 %v979
      %v1652 = vunpack.c.l.b16 %v980
      %v1653 = vunpack.c.l.b16 %v981
      %v1654 = vunpack.c.l.b16 %v982
      %v1655 = vunpack.c.l.b16 %v983
      %v1656 = vunpack.c.l.b16 %v984
      %v1657 = vunpack.c.l.b16 %v985
      %v1658 = vunpack.c.l.b16 %v986
      %v1659 = vunpack.c.l.b16 %v987
      %v1660 = vunpack.c.l.b16 %v988
      %v1661 = vunpack.c.l.b16 %v989
      %v1662 = vunpack.c.l.b16 %v990
      %v1663 = vunpack.c.l.b16 %v991
      %v1664 = vunpack.c.l.b16 %v992
      %v1665 = vunpack.c.l.b16 %v993
      %v1666 = vunpack.c.l.b16 %v994
      %v1667 = vunpack.c.l.b16 %v995
      %v1668 = vunpack.c.l.b16 %v996
      %v1669 = vunpack.c.l.b16 %v997
      %v1670 = vunpack.c.l.b16 %v998
      %v1671 = vunpack.c.l.b16 %v999
      %v1672 = vunpack.c.l.b16 %v1000
      %v1673 = vunpack.c.l.b16 %v1001
      %v1674 = vunpack.c.l.b16 %v1002
      %v1675 = vunpack.c.l.b16 %v1003
      %v1676 = vunpack.c.l.b16 %v1004
      %v1677 = vunpack.c.l.b16 %v1005
      %v1678 = vunpack.c.l.b16 %v1006
      %v1679 = vunpack.c.l.b16 %v1007
      %v1680 = vunpack.c.l.b16 %v1008
      %v1681 = vunpack.c.l.b16 %v1009
      %v1682 = vunpack.c.l.b16 %v1010
      %v1683 = vunpack.c.l.b16 %v1011
      %v1684 = vunpack.c.l.b16 %v1012
      %v1685 = vunpack.c.l.b16 %v1013
      %v1686 = vpack.c.b16 %v1639, %v1638
      %v1687 = vpack.c.b16 %v1641, %v1640
      %v1688 = vpack.c.b16 %v1643, %v1642
      %v1689 = vpack.c.b16 %v1645, %v1644
      %v1690 = vpack.c.b16 %v1647, %v1646
      %v1691 = vpack.c.b16 %v1649, %v1648
      %v1692 = vpack.c.b16 %v1651, %v1650
      %v1693 = vpack.c.b16 %v1653, %v1652
      %v1694 = vpack.c.b16 %v1655, %v1654
      %v1695 = vpack.c.b16 %v1657, %v1656
      %v1696 = vpack.c.b16 %v1659, %v1658
      %v1697 = vpack.c.b16 %v1661, %v1660
      %v1698 = vpack.c.b16 %v1663, %v1662
      %v1699 = vpack.c.b16 %v1665, %v1664
      %v1700 = vpack.c.b16 %v1667, %v1666
      %v1701 = vpack.c.b16 %v1669, %v1668
      %v1702 = vpack.c.b16 %v1671, %v1670
      %v1703 = vpack.c.b16 %v1673, %v1672
      %v1704 = vpack.c.b16 %v1675, %v1674
      %v1705 = vpack.c.b16 %v1677, %v1676
      %v1706 = vpack.c.b16 %v1679, %v1678
      %v1707 = vpack.c.b16 %v1681, %v1680
      %v1708 = vpack.c.b16 %v1683, %v1682
      %v1709 = vpack.c.b16 %v1685, %v1684
      %1734 = vmatpush.bf16.msra.mxu0 %v1693
      %1735 = vmatpush.bf16.msra.mxu0 %v1692
      %1736 = vmatpush.bf16.msra.mxu0 %v1691
      %1737 = vmatpush.bf16.msra.mxu0 %v1690
      %1738 = vmatpush.bf16.msra.mxu0 %v1689
      %1739 = vmatpush.bf16.msra.mxu0 %v1688
      %1740 = vmatpush.bf16.msra.mxu0 %v1687
      %1741 = vmatpush.bf16.msra.mxu0 %v1686
      %1742 = vmatmul.bf16.gmra.mxu0 %v788
      %v1743 = vpop.f32.mrf.mxu0
      %v1744 = vadd.f32 %v1551, %v1743
      %v1745 = vpop.f32.mrf.mxu0
      %v1746 = vadd.f32 %v1553, %v1745
      %1747 = vmatmul.bf16.gmra.mxu0 %v789
      %v1748 = vpop.f32.mrf.mxu0
      %v1749 = vadd.f32 %v1556, %v1748
      %v1750 = vpop.f32.mrf.mxu0
      %v1751 = vadd.f32 %v1558, %v1750
      %1752 = vmatmul.bf16.gmra.mxu0 %v790
      %v1753 = vpop.f32.mrf.mxu0
      %v1754 = vadd.f32 %v1561, %v1753
      %v1755 = vpop.f32.mrf.mxu0
      %v1756 = vadd.f32 %v1563, %v1755
      %1757 = vmatmul.bf16.gmra.mxu0 %v791
      %v1758 = vpop.f32.mrf.mxu0
      %v1759 = vadd.f32 %v1566, %v1758
      %v1760 = vpop.f32.mrf.mxu0
      %v1761 = vadd.f32 %v1568, %v1760
      %1762 = vmatmul.bf16.gmra.mxu0 %v792
      %v1763 = vpop.f32.mrf.mxu0
      %v1764 = vadd.f32 %v1571, %v1763
      %v1765 = vpop.f32.mrf.mxu0
      %v1766 = vadd.f32 %v1573, %v1765
      %1767 = vmatmul.bf16.gmra.mxu0 %v793
      %v1768 = vpop.f32.mrf.mxu0
      %v1769 = vadd.f32 %v1576, %v1768
      %v1770 = vpop.f32.mrf.mxu0
      %v1771 = vadd.f32 %v1578, %v1770
      %1772 = vmatmul.bf16.gmra.mxu0 %v794
      %v1773 = vpop.f32.mrf.mxu0
      %v1774 = vadd.f32 %v1581, %v1773
      %v1775 = vpop.f32.mrf.mxu0
      %v1776 = vadd.f32 %v1583, %v1775
      %1777 = vmatmul.bf16.gmra.mxu0 %v795
      %v1778 = vpop.f32.mrf.mxu0
      %v1779 = vadd.f32 %v1586, %v1778
      %v1780 = vpop.f32.mrf.mxu0
      %v1781 = vadd.f32 %v1588, %v1780
      %1782 = vdwg.mxu0
      %1783 = vmatpush.bf16.msra.mxu0 %v1701
      %1784 = vmatpush.bf16.msra.mxu0 %v1700
      %1785 = vmatpush.bf16.msra.mxu0 %v1699
      %1786 = vmatpush.bf16.msra.mxu0 %v1698
      %1787 = vmatpush.bf16.msra.mxu0 %v1697
      %1788 = vmatpush.bf16.msra.mxu0 %v1696
      %1789 = vmatpush.bf16.msra.mxu0 %v1695
      %1790 = vmatpush.bf16.msra.mxu0 %v1694
      %1791 = vmatmul.bf16.gmra.mxu0 %v840
      %v1792 = vpop.f32.mrf.mxu0
      %v1793 = vadd.f32 %v1744, %v1792
      %v1794 = vpop.f32.mrf.mxu0
      %v1795 = vadd.f32 %v1746, %v1794
      %1796 = vmatmul.bf16.gmra.mxu0 %v852
      %v1797 = vpop.f32.mrf.mxu0
      %v1798 = vadd.f32 %v1749, %v1797
      %v1799 = vpop.f32.mrf.mxu0
      %v1800 = vadd.f32 %v1751, %v1799
      %1801 = vmatmul.bf16.gmra.mxu0 %v864
      %v1802 = vpop.f32.mrf.mxu0
      %v1803 = vadd.f32 %v1754, %v1802
      %v1804 = vpop.f32.mrf.mxu0
      %v1805 = vadd.f32 %v1756, %v1804
      %1806 = vmatmul.bf16.gmra.mxu0 %v876
      %v1807 = vpop.f32.mrf.mxu0
      %v1808 = vadd.f32 %v1759, %v1807
      %v1809 = vpop.f32.mrf.mxu0
      %v1810 = vadd.f32 %v1761, %v1809
      %1811 = vmatmul.bf16.gmra.mxu0 %v888
      %v1812 = vpop.f32.mrf.mxu0
      %v1813 = vadd.f32 %v1764, %v1812
      %v1814 = vpop.f32.mrf.mxu0
      %v1815 = vadd.f32 %v1766, %v1814
      %1816 = vmatmul.bf16.gmra.mxu0 %v900
      %v1817 = vpop.f32.mrf.mxu0
      %v1818 = vadd.f32 %v1769, %v1817
      %v1819 = vpop.f32.mrf.mxu0
      %v1820 = vadd.f32 %v1771, %v1819
      %1821 = vmatmul.bf16.gmra.mxu0 %v912
      %v1822 = vpop.f32.mrf.mxu0
      %v1823 = vadd.f32 %v1774, %v1822
      %v1824 = vpop.f32.mrf.mxu0
      %v1825 = vadd.f32 %v1776, %v1824
      %1826 = vmatmul.bf16.gmra.mxu0 %v924
      %v1827 = vpop.f32.mrf.mxu0
      %v1828 = vadd.f32 %v1779, %v1827
      %v1829 = vpop.f32.mrf.mxu0
      %v1830 = vadd.f32 %v1781, %v1829
      %1831 = vdwg.mxu0
      %1832 = vmatpush.bf16.msra.mxu0 %v1709
      %1833 = vmatpush.bf16.msra.mxu0 %v1708
      %1834 = vmatpush.bf16.msra.mxu0 %v1707
      %1835 = vmatpush.bf16.msra.mxu0 %v1706
      %1836 = vmatpush.bf16.msra.mxu0 %v1705
      %1837 = vmatpush.bf16.msra.mxu0 %v1704
      %1838 = vmatpush.bf16.msra.mxu0 %v1703
      %1839 = vmatpush.bf16.msra.mxu0 %v1702
      %1840 = vmatmul.bf16.gmra.mxu0 %v936
      %v1841 = vpop.f32.mrf.mxu0
      %v1842 = vadd.f32 %v1793, %v1841
      %v1843 = vpop.f32.mrf.mxu0
      %v1844 = vadd.f32 %v1795, %v1843
      %1845 = vmatmul.bf16.gmra.mxu0 %v939
      %v1846 = vpop.f32.mrf.mxu0
      %v1847 = vadd.f32 %v1798, %v1846
      %v1848 = vpop.f32.mrf.mxu0
      %v1849 = vadd.f32 %v1800, %v1848
      %1850 = vmatmul.bf16.gmra.mxu0 %v942
      %v1851 = vpop.f32.mrf.mxu0
      %v1852 = vadd.f32 %v1803, %v1851
      %v1853 = vpop.f32.mrf.mxu0
      %v1854 = vadd.f32 %v1805, %v1853
      %1855 = vmatmul.bf16.gmra.mxu0 %v945
      %v1856 = vpop.f32.mrf.mxu0
      %v1857 = vadd.f32 %v1808, %v1856
      %v1858 = vpop.f32.mrf.mxu0
      %v1859 = vadd.f32 %v1810, %v1858
      %1860 = vmatmul.bf16.gmra.mxu0 %v948
      %v1861 = vpop.f32.mrf.mxu0
      %v1862 = vadd.f32 %v1813, %v1861
      %v1863 = vpop.f32.mrf.mxu0
      %v1864 = vadd.f32 %v1815, %v1863
      %1865 = vmatmul.bf16.gmra.mxu0 %v951
      %v1866 = vpop.f32.mrf.mxu0
      %v1867 = vadd.f32 %v1818, %v1866
      %v1868 = vpop.f32.mrf.mxu0
      %v1869 = vadd.f32 %v1820, %v1868
      %1870 = vmatmul.bf16.gmra.mxu0 %v954
      %v1871 = vpop.f32.mrf.mxu0
      %v1872 = vadd.f32 %v1823, %v1871
      %v1873 = vpop.f32.mrf.mxu0
      %v1874 = vadd.f32 %v1825, %v1873
      %1875 = vmatmul.bf16.gmra.mxu0 %v957
      %v1876 = vpop.f32.mrf.mxu0
      %v1877 = vadd.f32 %v1828, %v1876
      %v1878 = vpop.f32.mrf.mxu0
      %v1879 = vadd.f32 %v1830, %v1878
      %1880 = vdwg.mxu0
      %s1881 = sadd.s32 %s728, 2
      %s1882 = smul.u32 %s1881, 3
      %s1883 = smul.addr %s1882, 4
      %s1884 = scalar_lea.vmem [#allocation2], %s1883
      %v1885 = vld [vmem:[%s1884] sm:$0xf]
      %v1886 = vld [vmem:[%s1884 + $0x4] sm:$0xf]
      %v1887 = vld [vmem:[%s1884 + $0x8] sm:$0x1]
      %v1888 = vld [vmem:[%s1884 + $0xc] sm:$0xf]
      %v1889 = vld [vmem:[%s1884 + $0x10] sm:$0xf]
      %v1890 = vld [vmem:[%s1884 + $0x14] sm:$0x1]
      %v1891 = vld [vmem:[%s1884 + $0x18] sm:$0xf]
      %v1892 = vld [vmem:[%s1884 + $0x1c] sm:$0xf]
      %v1893 = vld [vmem:[%s1884 + $0x20] sm:$0x1]
      %v1894 = vld [vmem:[%s1884 + $0x24] sm:$0xf]
      %v1895 = vld [vmem:[%s1884 + $0x28] sm:$0xf]
      %v1896 = vld [vmem:[%s1884 + $0x2c] sm:$0x1]
      %v1897 = vld [vmem:[%s1884 + $0x30] sm:$0xf]
      %v1898 = vld [vmem:[%s1884 + $0x34] sm:$0xf]
      %v1899 = vld [vmem:[%s1884 + $0x38] sm:$0x1]
      %v1900 = vld [vmem:[%s1884 + $0x3c] sm:$0xf]
      %v1901 = vld [vmem:[%s1884 + $0x40] sm:$0xf]
      %v1902 = vld [vmem:[%s1884 + $0x44] sm:$0x1]
      %v1903 = vld [vmem:[%s1884 + $0x48] sm:$0xf]
      %v1904 = vld [vmem:[%s1884 + $0x4c] sm:$0xf]
      %v1905 = vld [vmem:[%s1884 + $0x50] sm:$0x1]
      %v1906 = vld [vmem:[%s1884 + $0x54] sm:$0xf]
      %v1907 = vld [vmem:[%s1884 + $0x58] sm:$0xf]
      %v1908 = vld [vmem:[%s1884 + $0x5c] sm:$0x1]
      %v1925 = vunpack.c.l.b16 %v1885
      %v1926 = vunpack.c.l.b16 %v1886
      %v1927 = vunpack.c.l.b16 %v1888
      %v1928 = vunpack.c.l.b16 %v1889
      %v1929 = vunpack.c.l.b16 %v1891
      %v1930 = vunpack.c.l.b16 %v1892
      %v1931 = vunpack.c.l.b16 %v1894
      %v1932 = vunpack.c.l.b16 %v1895
      %v1933 = vunpack.c.l.b16 %v1897
      %v1934 = vunpack.c.l.b16 %v1898
      %v1935 = vunpack.c.l.b16 %v1900
      %v1936 = vunpack.c.l.b16 %v1901
      %v1937 = vunpack.c.l.b16 %v1903
      %v1938 = vunpack.c.l.b16 %v1904
      %v1939 = vunpack.c.l.b16 %v1906
      %v1940 = vunpack.c.l.b16 %v1907
      %v1941 = vpack.c.b16 %v1926, %v1925
      %v1942 = vpack.c.b16 %v1928, %v1927
      %v1943 = vpack.c.b16 %v1930, %v1929
      %v1944 = vpack.c.b16 %v1932, %v1931
      %v1945 = vpack.c.b16 %v1934, %v1933
      %v1946 = vpack.c.b16 %v1936, %v1935
      %v1947 = vpack.c.b16 %v1938, %v1937
      %v1948 = vpack.c.b16 %v1940, %v1939
      %v1965 = vunpack.c.l.b16 %v1887
      %v1966 = vunpack.c.l.b16 %v1890
      %v1967 = vunpack.c.l.b16 %v1893
      %v1968 = vunpack.c.l.b16 %v1896
      %v1969 = vunpack.c.l.b16 %v1899
      %v1970 = vunpack.c.l.b16 %v1902
      %v1971 = vunpack.c.l.b16 %v1905
      %v1972 = vunpack.c.l.b16 %v1908
      %v1973 = vpack.c.b16 %v1965, %v1965
      %v1974 = vpack.c.b16 %v1966, %v1966
      %v1975 = vpack.c.b16 %v1967, %v1967
      %v1976 = vpack.c.b16 %v1968, %v1968
      %v1977 = vpack.c.b16 %v1969, %v1969
      %v1978 = vpack.c.b16 %v1970, %v1970
      %v1979 = vpack.c.b16 %v1971, %v1971
      %v1980 = vpack.c.b16 %v1972, %v1972
      %v1982 = vshrl.u32 %v1941, 16
      %v1984 = vshll.u32 %v1941, 16
      %v1986 = vrot.slane %v1984, 1
      %v1987 = vor.u32 %v1982, %v1986
      %v1989 = vshll.u32 %v1973, 16
      %v1991 = vrot.slane %v1989, 1
      %v1992 = vsel %vm828, %v1987, %v1991
      %v1994 = vshrl.u32 %v1942, 16
      %v1996 = vshll.u32 %v1942, 16
      %v1998 = vrot.slane %v1996, 1
      %v1999 = vor.u32 %v1994, %v1998
      %v2001 = vshll.u32 %v1974, 16
      %v2003 = vrot.slane %v2001, 1
      %v2004 = vsel %vm828, %v1999, %v2003
      %v2006 = vshrl.u32 %v1943, 16
      %v2008 = vshll.u32 %v1943, 16
      %v2010 = vrot.slane %v2008, 1
      %v2011 = vor.u32 %v2006, %v2010
      %v2013 = vshll.u32 %v1975, 16
      %v2015 = vrot.slane %v2013, 1
      %v2016 = vsel %vm828, %v2011, %v2015
      %v2018 = vshrl.u32 %v1944, 16
      %v2020 = vshll.u32 %v1944, 16
      %v2022 = vrot.slane %v2020, 1
      %v2023 = vor.u32 %v2018, %v2022
      %v2025 = vshll.u32 %v1976, 16
      %v2027 = vrot.slane %v2025, 1
      %v2028 = vsel %vm828, %v2023, %v2027
      %v2030 = vshrl.u32 %v1945, 16
      %v2032 = vshll.u32 %v1945, 16
      %v2034 = vrot.slane %v2032, 1
      %v2035 = vor.u32 %v2030, %v2034
      %v2037 = vshll.u32 %v1977, 16
      %v2039 = vrot.slane %v2037, 1
      %v2040 = vsel %vm828, %v2035, %v2039
      %v2042 = vshrl.u32 %v1946, 16
      %v2044 = vshll.u32 %v1946, 16
      %v2046 = vrot.slane %v2044, 1
      %v2047 = vor.u32 %v2042, %v2046
      %v2049 = vshll.u32 %v1978, 16
      %v2051 = vrot.slane %v2049, 1
      %v2052 = vsel %vm828, %v2047, %v2051
      %v2054 = vshrl.u32 %v1947, 16
      %v2056 = vshll.u32 %v1947, 16
      %v2058 = vrot.slane %v2056, 1
      %v2059 = vor.u32 %v2054, %v2058
      %v2061 = vshll.u32 %v1979, 16
      %v2063 = vrot.slane %v2061, 1
      %v2064 = vsel %vm828, %v2059, %v2063
      %v2066 = vshrl.u32 %v1948, 16
      %v2068 = vshll.u32 %v1948, 16
      %v2070 = vrot.slane %v2068, 1
      %v2071 = vor.u32 %v2066, %v2070
      %v2073 = vshll.u32 %v1980, 16
      %v2075 = vrot.slane %v2073, 1
      %v2076 = vsel %vm828, %v2071, %v2075
      %v2085 = vrot.slane %v1941, 1
      %v2086 = vrot.slane %v1973, 1
      %v2087 = vsel %vm933, %v2085, %v2086
      %v2088 = vrot.slane %v1942, 1
      %v2089 = vrot.slane %v1974, 1
      %v2090 = vsel %vm933, %v2088, %v2089
      %v2091 = vrot.slane %v1943, 1
      %v2092 = vrot.slane %v1975, 1
      %v2093 = vsel %vm933, %v2091, %v2092
      %v2094 = vrot.slane %v1944, 1
      %v2095 = vrot.slane %v1976, 1
      %v2096 = vsel %vm933, %v2094, %v2095
      %v2097 = vrot.slane %v1945, 1
      %v2098 = vrot.slane %v1977, 1
      %v2099 = vsel %vm933, %v2097, %v2098
      %v2100 = vrot.slane %v1946, 1
      %v2101 = vrot.slane %v1978, 1
      %v2102 = vsel %vm933, %v2100, %v2101
      %v2103 = vrot.slane %v1947, 1
      %v2104 = vrot.slane %v1979, 1
      %v2105 = vsel %vm933, %v2103, %v2104
      %v2106 = vrot.slane %v1948, 1
      %v2107 = vrot.slane %v1980, 1
      %v2108 = vsel %vm933, %v2106, %v2107
      %s2117 = scalar_lea.vmem %s1, 384
      %v2118 = vld [vmem:[%s2117] sm:$0xf]
      %v2119 = vld [vmem:[%s2117 + $0x4] sm:$0xf]
      %v2120 = vld [vmem:[%s2117 + $0x8] sm:$0xf]
      %v2121 = vld [vmem:[%s2117 + $0xc] sm:$0xf]
      %v2122 = vld [vmem:[%s2117 + $0x10] sm:$0xf]
      %v2123 = vld [vmem:[%s2117 + $0x14] sm:$0xf]
      %v2124 = vld [vmem:[%s2117 + $0x18] sm:$0xf]
      %v2125 = vld [vmem:[%s2117 + $0x1c] sm:$0xf]
      %v2126 = vld [vmem:[%s2117 + $0x20] sm:$0xf]
      %v2127 = vld [vmem:[%s2117 + $0x24] sm:$0xf]
      %v2128 = vld [vmem:[%s2117 + $0x28] sm:$0xf]
      %v2129 = vld [vmem:[%s2117 + $0x2c] sm:$0xf]
      %v2130 = vld [vmem:[%s2117 + $0x30] sm:$0xf]
      %v2131 = vld [vmem:[%s2117 + $0x34] sm:$0xf]
      %v2132 = vld [vmem:[%s2117 + $0x38] sm:$0xf]
      %v2133 = vld [vmem:[%s2117 + $0x3c] sm:$0xf]
      %v2134 = vld [vmem:[%s2117 + $0x40] sm:$0xf]
      %v2135 = vld [vmem:[%s2117 + $0x44] sm:$0xf]
      %v2136 = vld [vmem:[%s2117 + $0x48] sm:$0xf]
      %v2137 = vld [vmem:[%s2117 + $0x4c] sm:$0xf]
      %v2138 = vld [vmem:[%s2117 + $0x50] sm:$0xf]
      %v2139 = vld [vmem:[%s2117 + $0x54] sm:$0xf]
      %v2140 = vld [vmem:[%s2117 + $0x58] sm:$0xf]
      %v2141 = vld [vmem:[%s2117 + $0x5c] sm:$0xf]
      %v2142 = vld [vmem:[%s2117 + $0x60] sm:$0xf]
      %v2143 = vld [vmem:[%s2117 + $0x64] sm:$0xf]
      %v2144 = vld [vmem:[%s2117 + $0x68] sm:$0xf]
      %v2145 = vld [vmem:[%s2117 + $0x6c] sm:$0xf]
      %v2146 = vld [vmem:[%s2117 + $0x70] sm:$0xf]
      %v2147 = vld [vmem:[%s2117 + $0x74] sm:$0xf]
      %v2148 = vld [vmem:[%s2117 + $0x78] sm:$0xf]
      %v2149 = vld [vmem:[%s2117 + $0x7c] sm:$0xf]
      %v2150 = vld [vmem:[%s2117 + $0x80] sm:$0xf]
      %v2151 = vld [vmem:[%s2117 + $0x84] sm:$0xf]
      %v2152 = vld [vmem:[%s2117 + $0x88] sm:$0xf]
      %v2153 = vld [vmem:[%s2117 + $0x8c] sm:$0xf]
      %v2154 = vld [vmem:[%s2117 + $0x90] sm:$0xf]
      %v2155 = vld [vmem:[%s2117 + $0x94] sm:$0xf]
      %v2156 = vld [vmem:[%s2117 + $0x98] sm:$0xf]
      %v2157 = vld [vmem:[%s2117 + $0x9c] sm:$0xf]
      %v2158 = vld [vmem:[%s2117 + $0xa0] sm:$0xf]
      %v2159 = vld [vmem:[%s2117 + $0xa4] sm:$0xf]
      %v2160 = vld [vmem:[%s2117 + $0xa8] sm:$0xf]
      %v2161 = vld [vmem:[%s2117 + $0xac] sm:$0xf]
      %v2162 = vld [vmem:[%s2117 + $0xb0] sm:$0xf]
      %v2163 = vld [vmem:[%s2117 + $0xb4] sm:$0xf]
      %v2164 = vld [vmem:[%s2117 + $0xb8] sm:$0xf]
      %v2165 = vld [vmem:[%s2117 + $0xbc] sm:$0xf]
      %v2214 = vunpack.c.l.b16 %v2118
      %v2215 = vunpack.c.l.b16 %v2119
      %v2216 = vunpack.c.l.b16 %v2120
      %v2217 = vunpack.c.l.b16 %v2121
      %v2218 = vunpack.c.l.b16 %v2122
      %v2219 = vunpack.c.l.b16 %v2123
      %v2220 = vunpack.c.l.b16 %v2124
      %v2221 = vunpack.c.l.b16 %v2125
      %v2222 = vunpack.c.l.b16 %v2126
      %v2223 = vunpack.c.l.b16 %v2127
      %v2224 = vunpack.c.l.b16 %v2128
      %v2225 = vunpack.c.l.b16 %v2129
      %v2226 = vunpack.c.l.b16 %v2130
      %v2227 = vunpack.c.l.b16 %v2131
      %v2228 = vunpack.c.l.b16 %v2132
      %v2229 = vunpack.c.l.b16 %v2133
      %v2230 = vunpack.c.l.b16 %v2134
      %v2231 = vunpack.c.l.b16 %v2135
      %v2232 = vunpack.c.l.b16 %v2136
      %v2233 = vunpack.c.l.b16 %v2137
      %v2234 = vunpack.c.l.b16 %v2138
      %v2235 = vunpack.c.l.b16 %v2139
      %v2236 = vunpack.c.l.b16 %v2140
      %v2237 = vunpack.c.l.b16 %v2141
      %v2238 = vunpack.c.l.b16 %v2142
      %v2239 = vunpack.c.l.b16 %v2143
      %v2240 = vunpack.c.l.b16 %v2144
      %v2241 = vunpack.c.l.b16 %v2145
      %v2242 = vunpack.c.l.b16 %v2146
      %v2243 = vunpack.c.l.b16 %v2147
      %v2244 = vunpack.c.l.b16 %v2148
      %v2245 = vunpack.c.l.b16 %v2149
      %v2246 = vunpack.c.l.b16 %v2150
      %v2247 = vunpack.c.l.b16 %v2151
      %v2248 = vunpack.c.l.b16 %v2152
      %v2249 = vunpack.c.l.b16 %v2153
      %v2250 = vunpack.c.l.b16 %v2154
      %v2251 = vunpack.c.l.b16 %v2155
      %v2252 = vunpack.c.l.b16 %v2156
      %v2253 = vunpack.c.l.b16 %v2157
      %v2254 = vunpack.c.l.b16 %v2158
      %v2255 = vunpack.c.l.b16 %v2159
      %v2256 = vunpack.c.l.b16 %v2160
      %v2257 = vunpack.c.l.b16 %v2161
      %v2258 = vunpack.c.l.b16 %v2162
      %v2259 = vunpack.c.l.b16 %v2163
      %v2260 = vunpack.c.l.b16 %v2164
      %v2261 = vunpack.c.l.b16 %v2165
      %v2262 = vpack.c.b16 %v2215, %v2214
      %v2263 = vpack.c.b16 %v2217, %v2216
      %v2264 = vpack.c.b16 %v2219, %v2218
      %v2265 = vpack.c.b16 %v2221, %v2220
      %v2266 = vpack.c.b16 %v2223, %v2222
      %v2267 = vpack.c.b16 %v2225, %v2224
      %v2268 = vpack.c.b16 %v2227, %v2226
      %v2269 = vpack.c.b16 %v2229, %v2228
      %v2270 = vpack.c.b16 %v2231, %v2230
      %v2271 = vpack.c.b16 %v2233, %v2232
      %v2272 = vpack.c.b16 %v2235, %v2234
      %v2273 = vpack.c.b16 %v2237, %v2236
      %v2274 = vpack.c.b16 %v2239, %v2238
      %v2275 = vpack.c.b16 %v2241, %v2240
      %v2276 = vpack.c.b16 %v2243, %v2242
      %v2277 = vpack.c.b16 %v2245, %v2244
      %v2278 = vpack.c.b16 %v2247, %v2246
      %v2279 = vpack.c.b16 %v2249, %v2248
      %v2280 = vpack.c.b16 %v2251, %v2250
      %v2281 = vpack.c.b16 %v2253, %v2252
      %v2282 = vpack.c.b16 %v2255, %v2254
      %v2283 = vpack.c.b16 %v2257, %v2256
      %v2284 = vpack.c.b16 %v2259, %v2258
      %v2285 = vpack.c.b16 %v2261, %v2260
      %2310 = vmatpush.bf16.msra.mxu0 %v2269
      %2311 = vmatpush.bf16.msra.mxu0 %v2268
      %2312 = vmatpush.bf16.msra.mxu0 %v2267
      %2313 = vmatpush.bf16.msra.mxu0 %v2266
      %2314 = vmatpush.bf16.msra.mxu0 %v2265
      %2315 = vmatpush.bf16.msra.mxu0 %v2264
      %2316 = vmatpush.bf16.msra.mxu0 %v2263
      %2317 = vmatpush.bf16.msra.mxu0 %v2262
      %2318 = vmatmul.bf16.gmra.mxu0 %v1941
      %v2319 = vpop.f32.mrf.mxu0
      %v2320 = vadd.f32 0.0, %v2319
      %v2321 = vpop.f32.mrf.mxu0
      %v2322 = vadd.f32 0.0, %v2321
      %2323 = vmatmul.bf16.gmra.mxu0 %v1942
      %v2324 = vpop.f32.mrf.mxu0
      %v2325 = vadd.f32 0.0, %v2324
      %v2326 = vpop.f32.mrf.mxu0
      %v2327 = vadd.f32 0.0, %v2326
      %2328 = vmatmul.bf16.gmra.mxu0 %v1943
      %v2329 = vpop.f32.mrf.mxu0
      %v2330 = vadd.f32 0.0, %v2329
      %v2331 = vpop.f32.mrf.mxu0
      %v2332 = vadd.f32 0.0, %v2331
      %2333 = vmatmul.bf16.gmra.mxu0 %v1944
      %v2334 = vpop.f32.mrf.mxu0
      %v2335 = vadd.f32 0.0, %v2334
      %v2336 = vpop.f32.mrf.mxu0
      %v2337 = vadd.f32 0.0, %v2336
      %2338 = vmatmul.bf16.gmra.mxu0 %v1945
      %v2339 = vpop.f32.mrf.mxu0
      %v2340 = vadd.f32 0.0, %v2339
      %v2341 = vpop.f32.mrf.mxu0
      %v2342 = vadd.f32 0.0, %v2341
      %2343 = vmatmul.bf16.gmra.mxu0 %v1946
      %v2344 = vpop.f32.mrf.mxu0
      %v2345 = vadd.f32 0.0, %v2344
      %v2346 = vpop.f32.mrf.mxu0
      %v2347 = vadd.f32 0.0, %v2346
      %2348 = vmatmul.bf16.gmra.mxu0 %v1947
      %v2349 = vpop.f32.mrf.mxu0
      %v2350 = vadd.f32 0.0, %v2349
      %v2351 = vpop.f32.mrf.mxu0
      %v2352 = vadd.f32 0.0, %v2351
      %2353 = vmatmul.bf16.gmra.mxu0 %v1948
      %v2354 = vpop.f32.mrf.mxu0
      %v2355 = vadd.f32 0.0, %v2354
      %v2356 = vpop.f32.mrf.mxu0
      %v2357 = vadd.f32 0.0, %v2356
      %2358 = vdwg.mxu0
      %2359 = vmatpush.bf16.msra.mxu0 %v2277
      %2360 = vmatpush.bf16.msra.mxu0 %v2276
      %2361 = vmatpush.bf16.msra.mxu0 %v2275
      %2362 = vmatpush.bf16.msra.mxu0 %v2274
      %2363 = vmatpush.bf16.msra.mxu0 %v2273
      %2364 = vmatpush.bf16.msra.mxu0 %v2272
      %2365 = vmatpush.bf16.msra.mxu0 %v2271
      %2366 = vmatpush.bf16.msra.mxu0 %v2270
      %2367 = vmatmul.bf16.gmra.mxu0 %v1992
      %v2368 = vpop.f32.mrf.mxu0
      %v2369 = vadd.f32 %v2320, %v2368
      %v2370 = vpop.f32.mrf.mxu0
      %v2371 = vadd.f32 %v2322, %v2370
      %2372 = vmatmul.bf16.gmra.mxu0 %v2004
      %v2373 = vpop.f32.mrf.mxu0
      %v2374 = vadd.f32 %v2325, %v2373
      %v2375 = vpop.f32.mrf.mxu0
      %v2376 = vadd.f32 %v2327, %v2375
      %2377 = vmatmul.bf16.gmra.mxu0 %v2016
      %v2378 = vpop.f32.mrf.mxu0
      %v2379 = vadd.f32 %v2330, %v2378
      %v2380 = vpop.f32.mrf.mxu0
      %v2381 = vadd.f32 %v2332, %v2380
      %2382 = vmatmul.bf16.gmra.mxu0 %v2028
      %v2383 = vpop.f32.mrf.mxu0
      %v2384 = vadd.f32 %v2335, %v2383
      %v2385 = vpop.f32.mrf.mxu0
      %v2386 = vadd.f32 %v2337, %v2385
      %2387 = vmatmul.bf16.gmra.mxu0 %v2040
      %v2388 = vpop.f32.mrf.mxu0
      %v2389 = vadd.f32 %v2340, %v2388
      %v2390 = vpop.f32.mrf.mxu0
      %v2391 = vadd.f32 %v2342, %v2390
      %2392 = vmatmul.bf16.gmra.mxu0 %v2052
      %v2393 = vpop.f32.mrf.mxu0
      %v2394 = vadd.f32 %v2345, %v2393
      %v2395 = vpop.f32.mrf.mxu0
      %v2396 = vadd.f32 %v2347, %v2395
      %2397 = vmatmul.bf16.gmra.mxu0 %v2064
      %v2398 = vpop.f32.mrf.mxu0
      %v2399 = vadd.f32 %v2350, %v2398
      %v2400 = vpop.f32.mrf.mxu0
      %v2401 = vadd.f32 %v2352, %v2400
      %2402 = vmatmul.bf16.gmra.mxu0 %v2076
      %v2403 = vpop.f32.mrf.mxu0
      %v2404 = vadd.f32 %v2355, %v2403
      %v2405 = vpop.f32.mrf.mxu0
      %v2406 = vadd.f32 %v2357, %v2405
      %2407 = vdwg.mxu0
      %2408 = vmatpush.bf16.msra.mxu0 %v2285
      %2409 = vmatpush.bf16.msra.mxu0 %v2284
      %2410 = vmatpush.bf16.msra.mxu0 %v2283
      %2411 = vmatpush.bf16.msra.mxu0 %v2282
      %2412 = vmatpush.bf16.msra.mxu0 %v2281
      %2413 = vmatpush.bf16.msra.mxu0 %v2280
      %2414 = vmatpush.bf16.msra.mxu0 %v2279
      %2415 = vmatpush.bf16.msra.mxu0 %v2278
      %2416 = vmatmul.bf16.gmra.mxu0 %v2087
      %v2417 = vpop.f32.mrf.mxu0
      %v2418 = vadd.f32 %v2369, %v2417
      %v2419 = vpop.f32.mrf.mxu0
      %v2420 = vadd.f32 %v2371, %v2419
      %2421 = vmatmul.bf16.gmra.mxu0 %v2090
      %v2422 = vpop.f32.mrf.mxu0
      %v2423 = vadd.f32 %v2374, %v2422
      %v2424 = vpop.f32.mrf.mxu0
      %v2425 = vadd.f32 %v2376, %v2424
      %2426 = vmatmul.bf16.gmra.mxu0 %v2093
      %v2427 = vpop.f32.mrf.mxu0
      %v2428 = vadd.f32 %v2379, %v2427
      %v2429 = vpop.f32.mrf.mxu0
      %v2430 = vadd.f32 %v2381, %v2429
      %2431 = vmatmul.bf16.gmra.mxu0 %v2096
      %v2432 = vpop.f32.mrf.mxu0
      %v2433 = vadd.f32 %v2384, %v2432
      %v2434 = vpop.f32.mrf.mxu0
      %v2435 = vadd.f32 %v2386, %v2434
      %2436 = vmatmul.bf16.gmra.mxu0 %v2099
      %v2437 = vpop.f32.mrf.mxu0
      %v2438 = vadd.f32 %v2389, %v2437
      %v2439 = vpop.f32.mrf.mxu0
      %v2440 = vadd.f32 %v2391, %v2439
      %2441 = vmatmul.bf16.gmra.mxu0 %v2102
      %v2442 = vpop.f32.mrf.mxu0
      %v2443 = vadd.f32 %v2394, %v2442
      %v2444 = vpop.f32.mrf.mxu0
      %v2445 = vadd.f32 %v2396, %v2444
      %2446 = vmatmul.bf16.gmra.mxu0 %v2105
      %v2447 = vpop.f32.mrf.mxu0
      %v2448 = vadd.f32 %v2399, %v2447
      %v2449 = vpop.f32.mrf.mxu0
      %v2450 = vadd.f32 %v2401, %v2449
      %2451 = vmatmul.bf16.gmra.mxu0 %v2108
      %v2452 = vpop.f32.mrf.mxu0
      %v2453 = vadd.f32 %v2404, %v2452
      %v2454 = vpop.f32.mrf.mxu0
      %v2455 = vadd.f32 %v2406, %v2454
      %2456 = vdwg.mxu0
      %v2457 = vadd.f32 %v1842, %v2418
      %v2458 = vadd.f32 %v1844, %v2420
      %v2459 = vadd.f32 %v1847, %v2423
      %v2460 = vadd.f32 %v1849, %v2425
      %v2461 = vadd.f32 %v1852, %v2428
      %v2462 = vadd.f32 %v1854, %v2430
      %v2463 = vadd.f32 %v1857, %v2433
      %v2464 = vadd.f32 %v1859, %v2435
      %v2465 = vadd.f32 %v1862, %v2438
      %v2466 = vadd.f32 %v1864, %v2440
      %v2467 = vadd.f32 %v1867, %v2443
      %v2468 = vadd.f32 %v1869, %v2445
      %v2469 = vadd.f32 %v1872, %v2448
      %v2470 = vadd.f32 %v1874, %v2450
      %v2471 = vadd.f32 %v1877, %v2453
      %v2472 = vadd.f32 %v1879, %v2455
      %v2473 = vld [vmem:[%s2] sm:$0x1]
      %v2475 = vperm.slane %v2473, 0
      %v2477 = vadd.f32 %v2457, %v2475
      %v2478 = vadd.f32 %v2458, %v2475
      %v2479 = vadd.f32 %v2459, %v2475
      %v2480 = vadd.f32 %v2460, %v2475
      %v2481 = vadd.f32 %v2461, %v2475
      %v2482 = vadd.f32 %v2462, %v2475
      %v2483 = vadd.f32 %v2463, %v2475
      %v2484 = vadd.f32 %v2464, %v2475
      %v2485 = vadd.f32 %v2465, %v2475
      %v2486 = vadd.f32 %v2466, %v2475
      %v2487 = vadd.f32 %v2467, %v2475
      %v2488 = vadd.f32 %v2468, %v2475
      %v2489 = vadd.f32 %v2469, %v2475
      %v2490 = vadd.f32 %v2470, %v2475
      %v2491 = vadd.f32 %v2471, %v2475
      %v2492 = vadd.f32 %v2472, %v2475
      %v2493 = vmul.f32 %v2477, 0.2
      %v2494 = vmul.f32 %v2478, 0.2
      %v2495 = vmul.f32 %v2479, 0.2
      %v2496 = vmul.f32 %v2480, 0.2
      %v2497 = vmul.f32 %v2481, 0.2
      %v2498 = vmul.f32 %v2482, 0.2
      %v2499 = vmul.f32 %v2483, 0.2
      %v2500 = vmul.f32 %v2484, 0.2
      %v2501 = vmul.f32 %v2485, 0.2
      %v2502 = vmul.f32 %v2486, 0.2
      %v2503 = vmul.f32 %v2487, 0.2
      %v2504 = vmul.f32 %v2488, 0.2
      %v2505 = vmul.f32 %v2489, 0.2
      %v2506 = vmul.f32 %v2490, 0.2
      %v2507 = vmul.f32 %v2491, 0.2
      %v2508 = vmul.f32 %v2492, 0.2
      %v2509 = vmax.f32 %v2477, %v2493
      %v2510 = vmax.f32 %v2478, %v2494
      %v2511 = vmax.f32 %v2479, %v2495
      %v2512 = vmax.f32 %v2480, %v2496
      %v2513 = vmax.f32 %v2481, %v2497
      %v2514 = vmax.f32 %v2482, %v2498
      %v2515 = vmax.f32 %v2483, %v2499
      %v2516 = vmax.f32 %v2484, %v2500
      %v2517 = vmax.f32 %v2485, %v2501
      %v2518 = vmax.f32 %v2486, %v2502
      %v2519 = vmax.f32 %v2487, %v2503
      %v2520 = vmax.f32 %v2488, %v2504
      %v2521 = vmax.f32 %v2489, %v2505
      %v2522 = vmax.f32 %v2490, %v2506
      %v2523 = vmax.f32 %v2491, %v2507
      %v2524 = vmax.f32 %v2492, %v2508
      %v2525 = vmul.f32 %v2509, %v2509
      %v2526 = vmul.f32 %v2510, %v2510
      %v2527 = vmul.f32 %v2511, %v2511
      %v2528 = vmul.f32 %v2512, %v2512
      %v2529 = vmul.f32 %v2513, %v2513
      %v2530 = vmul.f32 %v2514, %v2514
      %v2531 = vmul.f32 %v2515, %v2515
      %v2532 = vmul.f32 %v2516, %v2516
      %v2533 = vmul.f32 %v2517, %v2517
      %v2534 = vmul.f32 %v2518, %v2518
      %v2535 = vmul.f32 %v2519, %v2519
      %v2536 = vmul.f32 %v2520, %v2520
      %v2537 = vmul.f32 %v2521, %v2521
      %v2538 = vmul.f32 %v2522, %v2522
      %v2539 = vmul.f32 %v2523, %v2523
      %v2540 = vmul.f32 %v2524, %v2524
      %2541 = vadd.xlane.f32.xlu0 %v2525
      %v2542 = vpop.xlane.xlu0 %2541
      %2543 = vadd.xlane.f32.xlu0 %v2526
      %v2544 = vpop.xlane.xlu0 %2543
      %2545 = vadd.xlane.f32.xlu0 %v2527
      %v2546 = vpop.xlane.xlu0 %2545
      %2547 = vadd.xlane.f32.xlu0 %v2528
      %v2548 = vpop.xlane.xlu0 %2547
      %2549 = vadd.xlane.f32.xlu0 %v2529
      %v2550 = vpop.xlane.xlu0 %2549
      %2551 = vadd.xlane.f32.xlu0 %v2530
      %v2552 = vpop.xlane.xlu0 %2551
      %2553 = vadd.xlane.f32.xlu0 %v2531
      %v2554 = vpop.xlane.xlu0 %2553
      %2555 = vadd.xlane.f32.xlu0 %v2532
      %v2556 = vpop.xlane.xlu0 %2555
      %2557 = vadd.xlane.f32.xlu0 %v2533
      %v2558 = vpop.xlane.xlu0 %2557
      %2559 = vadd.xlane.f32.xlu0 %v2534
      %v2560 = vpop.xlane.xlu0 %2559
      %2561 = vadd.xlane.f32.xlu0 %v2535
      %v2562 = vpop.xlane.xlu0 %2561
      %2563 = vadd.xlane.f32.xlu0 %v2536
      %v2564 = vpop.xlane.xlu0 %2563
      %2565 = vadd.xlane.f32.xlu0 %v2537
      %v2566 = vpop.xlane.xlu0 %2565
      %2567 = vadd.xlane.f32.xlu0 %v2538
      %v2568 = vpop.xlane.xlu0 %2567
      %2569 = vadd.xlane.f32.xlu0 %v2539
      %v2570 = vpop.xlane.xlu0 %2569
      %2571 = vadd.xlane.f32.xlu0 %v2540
      %v2572 = vpop.xlane.xlu0 %2571
      %v2573 = vrcp.pop 128.0
      %v2574 = vmul.f32 128.0, %v2573
      %v2575 = vsub.f32 1.0, %v2574
      %v2576 = vmul.f32 %v2573, %v2575
      %v2577 = vadd.f32 %v2573, %v2576
      %vm2578 = vweird.f32 %v2573
      %v2579 = vsel %vm2578, %v2573, %v2577
      %v2580 = vmul.f32 %v2542, %v2579
      %v2581 = vmul.f32 %v2544, %v2579
      %v2582 = vmul.f32 %v2546, %v2579
      %v2583 = vmul.f32 %v2548, %v2579
      %v2584 = vmul.f32 %v2550, %v2579
      %v2585 = vmul.f32 %v2552, %v2579
      %v2586 = vmul.f32 %v2554, %v2579
      %v2587 = vmul.f32 %v2556, %v2579
      %v2588 = vmul.f32 %v2558, %v2579
      %v2589 = vmul.f32 %v2560, %v2579
      %v2590 = vmul.f32 %v2562, %v2579
      %v2591 = vmul.f32 %v2564, %v2579
      %v2592 = vmul.f32 %v2566, %v2579
      %v2593 = vmul.f32 %v2568, %v2579
      %v2594 = vmul.f32 %v2570, %v2579
      %v2595 = vmul.f32 %v2572, %v2579
      %v2596 = vadd.f32 %v2580, 1e-08
      %v2597 = vadd.f32 %v2581, 1e-08
      %v2598 = vadd.f32 %v2582, 1e-08
      %v2599 = vadd.f32 %v2583, 1e-08
      %v2600 = vadd.f32 %v2584, 1e-08
      %v2601 = vadd.f32 %v2585, 1e-08
      %v2602 = vadd.f32 %v2586, 1e-08
      %v2603 = vadd.f32 %v2587, 1e-08
      %v2604 = vadd.f32 %v2588, 1e-08
      %v2605 = vadd.f32 %v2589, 1e-08
      %v2606 = vadd.f32 %v2590, 1e-08
      %v2607 = vadd.f32 %v2591, 1e-08
      %v2608 = vadd.f32 %v2592, 1e-08
      %v2609 = vadd.f32 %v2593, 1e-08
      %v2610 = vadd.f32 %v2594, 1e-08
      %v2611 = vadd.f32 %v2595, 1e-08
      %v2612 = vrsqrt.pop %v2596
      %v2613 = vmul.f32 %v2612, %v2596
      %v2614 = vmul.f32 %v2613, %v2612
      %v2615 = vmul.f32 0.5, %v2614
      %v2616 = vsub.f32 1.5, %v2615
      %v2617 = vmul.f32 %v2612, %v2616
      %vm2618 = vweird.f32 %v2596
      %vm2619 = vweird.f32 %v2612
      %vm2620 = vmor %vm2618, %vm2619
      %v2621 = vsel %vm2620, %v2612, %v2617
      %v2622 = vrsqrt.pop %v2597
      %v2623 = vmul.f32 %v2622, %v2597
      %v2624 = vmul.f32 %v2623, %v2622
      %v2625 = vmul.f32 0.5, %v2624
      %v2626 = vsub.f32 1.5, %v2625
      %v2627 = vmul.f32 %v2622, %v2626
      %vm2628 = vweird.f32 %v2597
      %vm2629 = vweird.f32 %v2622
      %vm2630 = vmor %vm2628, %vm2629
      %v2631 = vsel %vm2630, %v2622, %v2627
      %v2632 = vrsqrt.pop %v2598
      %v2633 = vmul.f32 %v2632, %v2598
      %v2634 = vmul.f32 %v2633, %v2632
      %v2635 = vmul.f32 0.5, %v2634
      %v2636 = vsub.f32 1.5, %v2635
      %v2637 = vmul.f32 %v2632, %v2636
      %vm2638 = vweird.f32 %v2598
      %vm2639 = vweird.f32 %v2632
      %vm2640 = vmor %vm2638, %vm2639
      %v2641 = vsel %vm2640, %v2632, %v2637
      %v2642 = vrsqrt.pop %v2599
      %v2643 = vmul.f32 %v2642, %v2599
      %v2644 = vmul.f32 %v2643, %v2642
      %v2645 = vmul.f32 0.5, %v2644
      %v2646 = vsub.f32 1.5, %v2645
      %v2647 = vmul.f32 %v2642, %v2646
      %vm2648 = vweird.f32 %v2599
      %vm2649 = vweird.f32 %v2642
      %vm2650 = vmor %vm2648, %vm2649
      %v2651 = vsel %vm2650, %v2642, %v2647
      %v2652 = vrsqrt.pop %v2600
      %v2653 = vmul.f32 %v2652, %v2600
      %v2654 = vmul.f32 %v2653, %v2652
      %v2655 = vmul.f32 0.5, %v2654
      %v2656 = vsub.f32 1.5, %v2655
      %v2657 = vmul.f32 %v2652, %v2656
      %vm2658 = vweird.f32 %v2600
      %vm2659 = vweird.f32 %v2652
      %vm2660 = vmor %vm2658, %vm2659
      %v2661 = vsel %vm2660, %v2652, %v2657
      %v2662 = vrsqrt.pop %v2601
      %v2663 = vmul.f32 %v2662, %v2601
      %v2664 = vmul.f32 %v2663, %v2662
      %v2665 = vmul.f32 0.5, %v2664
      %v2666 = vsub.f32 1.5, %v2665
      %v2667 = vmul.f32 %v2662, %v2666
      %vm2668 = vweird.f32 %v2601
      %vm2669 = vweird.f32 %v2662
      %vm2670 = vmor %vm2668, %vm2669
      %v2671 = vsel %vm2670, %v2662, %v2667
      %v2672 = vrsqrt.pop %v2602
      %v2673 = vmul.f32 %v2672, %v2602
      %v2674 = vmul.f32 %v2673, %v2672
      %v2675 = vmul.f32 0.5, %v2674
      %v2676 = vsub.f32 1.5, %v2675
      %v2677 = vmul.f32 %v2672, %v2676
      %vm2678 = vweird.f32 %v2602
      %vm2679 = vweird.f32 %v2672
      %vm2680 = vmor %vm2678, %vm2679
      %v2681 = vsel %vm2680, %v2672, %v2677
      %v2682 = vrsqrt.pop %v2603
      %v2683 = vmul.f32 %v2682, %v2603
      %v2684 = vmul.f32 %v2683, %v2682
      %v2685 = vmul.f32 0.5, %v2684
      %v2686 = vsub.f32 1.5, %v2685
      %v2687 = vmul.f32 %v2682, %v2686
      %vm2688 = vweird.f32 %v2603
      %vm2689 = vweird.f32 %v2682
      %vm2690 = vmor %vm2688, %vm2689
      %v2691 = vsel %vm2690, %v2682, %v2687
      %v2692 = vrsqrt.pop %v2604
      %v2693 = vmul.f32 %v2692, %v2604
      %v2694 = vmul.f32 %v2693, %v2692
      %v2695 = vmul.f32 0.5, %v2694
      %v2696 = vsub.f32 1.5, %v2695
      %v2697 = vmul.f32 %v2692, %v2696
      %vm2698 = vweird.f32 %v2604
      %vm2699 = vweird.f32 %v2692
      %vm2700 = vmor %vm2698, %vm2699
      %v2701 = vsel %vm2700, %v2692, %v2697
      %v2702 = vrsqrt.pop %v2605
      %v2703 = vmul.f32 %v2702, %v2605
      %v2704 = vmul.f32 %v2703, %v2702
      %v2705 = vmul.f32 0.5, %v2704
      %v2706 = vsub.f32 1.5, %v2705
      %v2707 = vmul.f32 %v2702, %v2706
      %vm2708 = vweird.f32 %v2605
      %vm2709 = vweird.f32 %v2702
      %vm2710 = vmor %vm2708, %vm2709
      %v2711 = vsel %vm2710, %v2702, %v2707
      %v2712 = vrsqrt.pop %v2606
      %v2713 = vmul.f32 %v2712, %v2606
      %v2714 = vmul.f32 %v2713, %v2712
      %v2715 = vmul.f32 0.5, %v2714
      %v2716 = vsub.f32 1.5, %v2715
      %v2717 = vmul.f32 %v2712, %v2716
      %vm2718 = vweird.f32 %v2606
      %vm2719 = vweird.f32 %v2712
      %vm2720 = vmor %vm2718, %vm2719
      %v2721 = vsel %vm2720, %v2712, %v2717
      %v2722 = vrsqrt.pop %v2607
      %v2723 = vmul.f32 %v2722, %v2607
      %v2724 = vmul.f32 %v2723, %v2722
      %v2725 = vmul.f32 0.5, %v2724
      %v2726 = vsub.f32 1.5, %v2725
      %v2727 = vmul.f32 %v2722, %v2726
      %vm2728 = vweird.f32 %v2607
      %vm2729 = vweird.f32 %v2722
      %vm2730 = vmor %vm2728, %vm2729
      %v2731 = vsel %vm2730, %v2722, %v2727
      %v2732 = vrsqrt.pop %v2608
      %v2733 = vmul.f32 %v2732, %v2608
      %v2734 = vmul.f32 %v2733, %v2732
      %v2735 = vmul.f32 0.5, %v2734
      %v2736 = vsub.f32 1.5, %v2735
      %v2737 = vmul.f32 %v2732, %v2736
      %vm2738 = vweird.f32 %v2608
      %vm2739 = vweird.f32 %v2732
      %vm2740 = vmor %vm2738, %vm2739
      %v2741 = vsel %vm2740, %v2732, %v2737
      %v2742 = vrsqrt.pop %v2609
      %v2743 = vmul.f32 %v2742, %v2609
      %v2744 = vmul.f32 %v2743, %v2742
      %v2745 = vmul.f32 0.5, %v2744
      %v2746 = vsub.f32 1.5, %v2745
      %v2747 = vmul.f32 %v2742, %v2746
      %vm2748 = vweird.f32 %v2609
      %vm2749 = vweird.f32 %v2742
      %vm2750 = vmor %vm2748, %vm2749
      %v2751 = vsel %vm2750, %v2742, %v2747
      %v2752 = vrsqrt.pop %v2610
      %v2753 = vmul.f32 %v2752, %v2610
      %v2754 = vmul.f32 %v2753, %v2752
      %v2755 = vmul.f32 0.5, %v2754
      %v2756 = vsub.f32 1.5, %v2755
      %v2757 = vmul.f32 %v2752, %v2756
      %vm2758 = vweird.f32 %v2610
      %vm2759 = vweird.f32 %v2752
      %vm2760 = vmor %vm2758, %vm2759
      %v2761 = vsel %vm2760, %v2752, %v2757
      %v2762 = vrsqrt.pop %v2611
      %v2763 = vmul.f32 %v2762, %v2611
      %v2764 = vmul.f32 %v2763, %v2762
      %v2765 = vmul.f32 0.5, %v2764
      %v2766 = vsub.f32 1.5, %v2765
      %v2767 = vmul.f32 %v2762, %v2766
      %vm2768 = vweird.f32 %v2611
      %vm2769 = vweird.f32 %v2762
      %vm2770 = vmor %vm2768, %vm2769
      %v2771 = vsel %vm2770, %v2762, %v2767
      %v2772 = vmul.f32 %v2509, %v2621
      %v2773 = vmul.f32 %v2510, %v2631
      %v2774 = vmul.f32 %v2511, %v2641
      %v2775 = vmul.f32 %v2512, %v2651
      %v2776 = vmul.f32 %v2513, %v2661
      %v2777 = vmul.f32 %v2514, %v2671
      %v2778 = vmul.f32 %v2515, %v2681
      %v2779 = vmul.f32 %v2516, %v2691
      %v2780 = vmul.f32 %v2517, %v2701
      %v2781 = vmul.f32 %v2518, %v2711
      %v2782 = vmul.f32 %v2519, %v2721
      %v2783 = vmul.f32 %v2520, %v2731
      %v2784 = vmul.f32 %v2521, %v2741
      %v2785 = vmul.f32 %v2522, %v2751
      %v2786 = vmul.f32 %v2523, %v2761
      %v2787 = vmul.f32 %v2524, %v2771
      %v2788 = vpack.c.bf16 %v2772, %v2772
      %v2789 = vpack.c.bf16 %v2773, %v2773
      %v2790 = vpack.c.bf16 %v2774, %v2774
      %v2791 = vpack.c.bf16 %v2775, %v2775
      %v2792 = vpack.c.bf16 %v2776, %v2776
      %v2793 = vpack.c.bf16 %v2777, %v2777
      %v2794 = vpack.c.bf16 %v2778, %v2778
      %v2795 = vpack.c.bf16 %v2779, %v2779
      %v2796 = vpack.c.bf16 %v2780, %v2780
      %v2797 = vpack.c.bf16 %v2781, %v2781
      %v2798 = vpack.c.bf16 %v2782, %v2782
      %v2799 = vpack.c.bf16 %v2783, %v2783
      %v2800 = vpack.c.bf16 %v2784, %v2784
      %v2801 = vpack.c.bf16 %v2785, %v2785
      %v2802 = vpack.c.bf16 %v2786, %v2786
      %v2803 = vpack.c.bf16 %v2787, %v2787
      %2804 = vst [vmem:[%s194] sm:$0xf] %v2788
      %2805 = vst [vmem:[%s194 + $0x4] sm:$0xf] %v2789
      %2806 = vst [vmem:[%s194 + $0x8] sm:$0xf] %v2790
      %2807 = vst [vmem:[%s194 + $0xc] sm:$0xf] %v2791
      %2808 = vst [vmem:[%s194 + $0x10] sm:$0xf] %v2792
      %2809 = vst [vmem:[%s194 + $0x14] sm:$0xf] %v2793
      %2810 = vst [vmem:[%s194 + $0x18] sm:$0xf] %v2794
      %2811 = vst [vmem:[%s194 + $0x1c] sm:$0xf] %v2795
      %2812 = vst [vmem:[%s194 + $0x20] sm:$0xf] %v2796
      %2813 = vst [vmem:[%s194 + $0x24] sm:$0xf] %v2797
      %2814 = vst [vmem:[%s194 + $0x28] sm:$0xf] %v2798
      %2815 = vst [vmem:[%s194 + $0x2c] sm:$0xf] %v2799
      %2816 = vst [vmem:[%s194 + $0x30] sm:$0xf] %v2800
      %2817 = vst [vmem:[%s194 + $0x34] sm:$0xf] %v2801
      %2818 = vst [vmem:[%s194 + $0x38] sm:$0xf] %v2802
      %2819 = vst [vmem:[%s194 + $0x3c] sm:$0xf] %v2803
      %s2820 = smul.u32 8, %s19
      %p2821 = scmp.lt.s32.totalorder %s18, 1
      %s2822 = scalar_select %p2821, %s18, 1
      %p2823 = scmp.lt.s32.totalorder %s2820, 15
      %s2824 = scalar_select %p2823, %s2820, 15
      %s2825 = smul.addr %s2824, 2
      %s2826 = smul.addr %s2822, 32
      %s2827 = sadd.s32 %s2825, %s2826
      %s2828 = smul.addr %s2827, 4
      %s2829 = scalar_lea.vmem %s3, %s2828
      // Predicated region
      $region37: #{progan_gen_forward.11} parent=31 // pred_check
        %p2830 = pneg %p114
      $region38: #{progan_gen_forward.11} parent=31 // pred_check_branch
        %2832 = sbr.rel (%p2830) target = $region40
      $region39: #{progan_gen_forward.11} parent=31 // pred_region
        %s2833 = smul.u32 8, %s19
      $region40: #{progan_gen_forward.11} parent=31 // pred_fallthru
        _
    $region32: #{progan_gen_forward.11} parent=5 // pred_fallthru
      _
    %p2834 = scmp.le.s32.totalorder 2, %s9
    // Predicated region
    $region41: #{progan_gen_forward.11} parent=5 // pred_check
      %p2835 = pneg %p2834
    $region42: #{progan_gen_forward.11} parent=5 // pred_check_branch
      %2837 = sbr.rel (%p2835) target = $region44
    $region43: #{progan_gen_forward.11} parent=5 // pred_region
      %s2838 = ssub.s32 %s9, 2
      // Predicated region
      $region45: #{progan_gen_forward.11} parent=43 // pred_check
        %p2839 = pneg %p120
      $region46: #{progan_gen_forward.11} parent=43 // pred_check_branch
        %2841 = sbr.rel (%p2839) target = $region48
      $region47: #{progan_gen_forward.11} parent=43 // pred_region
        %s2842 = smul.u32 8, %s21
        %p2843 = scmp.lt.s32.totalorder %s20, 1
        %s2844 = scalar_select %p2843, %s20, 1
        %p2845 = scmp.lt.s32.totalorder %s2842, 15
        %s2846 = scalar_select %p2845, %s2842, 15
        %s2847 = smul.addr %s2846, 2
        %s2848 = smul.addr %s2844, 32
        %s2849 = sadd.s32 %s2847, %s2848
        %s2850 = smul.addr %s2849, 4
        %s2851 = scalar_lea.vmem %s3, %s2850
      $region48: #{progan_gen_forward.11} parent=43 // pred_fallthru
        _
    $region44: #{progan_gen_forward.11} parent=5 // pred_fallthru
      _
  $region6: #{progan_gen_forward.11} parent=0 // loop_footer
    %s13 = sadd.s32 1, %s9
  $region7: #{progan_gen_forward.11} parent=0 // loop_footer_branch
    %8 = sbr.rel target = $region3
  $region8: #{progan_gen_forward.11} parent=0 // loop_exit
    _

// kernel: progan_gen_forward.12
$region0: #{progan_gen_forward.12}
  #allocation0 [shape = 'u32[]', space=smem, size = 0x4, offset = 0x4, fixed_abs, tag = 'smem constant byte address 0x4 - core index']
  #allocation1 [shape = 'u32[72,128]{1,0:T(1,128)}', space=vmem, size = 0x9000, scoped, tag = 'internal scratch']
  #allocation2 [shape = 'bf16[18,18,128]{2,1,0:T(8,128)(2,1)}', space=vmem, size = 0x1b000, scoped, tag = 'scratch operand']
  %s0 = inlined_call_operand.vmem [shape: bf16[2,16,16,128], index: 0, kind: input, shape index: {}]
  %s1 = inlined_call_operand.hbm [shape: bf16[3,384,128], index: 1, kind: input, shape index: {}]
  %s2 = inlined_call_operand.vmem [shape: f32[1,128], index: 2, kind: input, shape index: {}]
  %s3 = inlined_call_operand.vmem [shape: bf16[2,16,16,128], index: 3, kind: output, shape index: {}]
  %s4 = sld [smem:[#allocation0]]
  $region53: #{progan_gen_forward.12} parent=0
    _
  %s6 = ssub.s32 1, %s4
  %s7 = scalar_select 0, %s6, %s4
  $region1: #{progan_gen_forward.12} parent=0
    #allocation3 [shape = 'u8[294912]{0}', space=vmem, size = 0x48000, scoped, tag = 'input window, operand 1, single buffered']
    #allocation4 [shape = 's32[2]{0}', space=sflag, size = 0x8, scoped, tag = 'scoped memory for progan_gen_forward.12']
    %8 = vsyncpa [#allocation4], 0
    loop: start=0, step=1, limit=6
    $region2: #{progan_gen_forward.12} parent=1 // loop_pre_header
      _
    $region3: #{progan_gen_forward.12} parent=1 // loop_header
      %s10 = sphi 0, %s14
      %p11 = scmp.ge.s32.totalorder %s10, 6
      %s17 = sphi 0, %s29
      %s18 = sphi 0, %s25
      %s19 = sphi 0, %s17
      %s20 = sphi 0, %s18
      %s21 = sphi 0, %s19
      %s22 = sphi 0, %s20
      %s32 = sphi 0, %s34
      %s35 = sphi 0, %s32
      %s36 = sphi 0, %s35
      %s52 = sphi 0, %s36
      %s56 = sphi 0, %s56
      %s58 = sphi 0, %s56
      %s59 = sphi 0, %s58
      %s73 = sphi 0, %s59
      %s77 = sphi 0, %s77
      %s79 = sphi 0, %s77
      %s80 = sphi 0, %s79
      %s94 = sphi 0, %s80
      %s102 = sphi 0, %s104
      %s105 = sphi 0, %s102
      %s106 = sphi 0, %s105
      %s122 = sphi 0, %s106
    $region4: #{progan_gen_forward.12} parent=1 // loop_header_branch
      %13 = sbr.rel (%p11) target = $region8
    $region5: #{progan_gen_forward.12} parent=1 // loop_body
      %s15 = ssub.s32 %s10, 1
      %s16 = ssub.s32 %s10, 2
      %s23 = sadd.s32 1, %s18
      %p24 = scmp.ge.s32.totalorder %s23, 2
      %s25 = scalar_select %p24, 0, %s23
      %s26 = sadd.s32 1, %s17
      %s27 = scalar_select %p24, %s26, %s17
      %p28 = scmp.ge.s32.totalorder %s27, 2
      %s29 = scalar_select %p28, 0, %s27
      %s30 = ssub.s32 %s17, %s29
      %p31 = scmp.eq.s32.totalorder %s30, 0
      %s33 = sadd.s32 %s32, 1
      %s34 = scalar_select %p31, %s32, %s33
      %p37 = pneg %p31
      %p38 = scmp.eq.s32.totalorder %s10, 3
      %p39 = por %p37, %p38
      %p40 = scmp.ne.s32.totalorder %s32, %s35
      %p41 = scmp.eq.s32.totalorder %s10, 0
      %p42 = por %p40, %p41
      %p43 = scmp.ne.s32.totalorder %s32, %s35
      %p44 = scmp.eq.s32.totalorder %s15, 3
      %p45 = por %p43, %p44
      %p46 = scmp.ne.s32.totalorder %s35, %s36
      %p47 = scmp.eq.s32.totalorder %s15, 0
      %p48 = por %p46, %p47
      %p49 = scmp.ne.s32.totalorder %s35, %s36
      %p50 = scmp.eq.s32.totalorder %s16, 3
      %p51 = por %p49, %p50
      %p53 = scmp.ne.s32.totalorder %s36, %s52
      %p54 = scmp.eq.s32.totalorder %s16, 0
      %p55 = por %p53, %p54
      %s57 = sadd.s32 %s56, 1
      %p60 = scmp.eq.s32.totalorder %s10, 3
      %p61 = scmp.ne.s32.totalorder %s56, %s58
      %p62 = scmp.eq.s32.totalorder %s10, 0
      %p63 = por %p61, %p62
      %p64 = scmp.ne.s32.totalorder %s56, %s58
      %p65 = scmp.eq.s32.totalorder %s15, 3
      %p66 = por %p64, %p65
      %p67 = scmp.ne.s32.totalorder %s58, %s59
      %p68 = scmp.eq.s32.totalorder %s15, 0
      %p69 = por %p67, %p68
      %p70 = scmp.ne.s32.totalorder %s58, %s59
      %p71 = scmp.eq.s32.totalorder %s16, 3
      %p72 = por %p70, %p71
      %p74 = scmp.ne.s32.totalorder %s59, %s73
      %p75 = scmp.eq.s32.totalorder %s16, 0
      %p76 = por %p74, %p75
      %s78 = sadd.s32 %s77, 1
      %p81 = scmp.eq.s32.totalorder %s10, 3
      %p82 = scmp.ne.s32.totalorder %s77, %s79
      %p83 = scmp.eq.s32.totalorder %s10, 0
      %p84 = por %p82, %p83
      %p85 = scmp.ne.s32.totalorder %s77, %s79
      %p86 = scmp.eq.s32.totalorder %s15, 3
      %p87 = por %p85, %p86
      %p88 = scmp.ne.s32.totalorder %s79, %s80
      %p89 = scmp.eq.s32.totalorder %s15, 0
      %p90 = por %p88, %p89
      %p91 = scmp.ne.s32.totalorder %s79, %s80
      %p92 = scmp.eq.s32.totalorder %s16, 3
      %p93 = por %p91, %p92
      %p95 = scmp.ne.s32.totalorder %s80, %s94
      %p96 = scmp.eq.s32.totalorder %s16, 0
      %p97 = por %p95, %p96
      %s98 = ssub.s32 %s17, %s29
      %s99 = ssub.s32 %s18, %s25
      %s100 = sor.u32 %s98, %s99
      %p101 = scmp.eq.s32.totalorder %s100, 0
      %s103 = sadd.s32 %s102, 1
      %s104 = scalar_select %p101, %s102, %s103
      %p107 = pneg %p101
      %p108 = scmp.eq.s32.totalorder %s10, 3
      %p109 = por %p107, %p108
      %p110 = scmp.ne.s32.totalorder %s102, %s105
      %p111 = scmp.eq.s32.totalorder %s10, 0
      %p112 = por %p110, %p111
      %p113 = scmp.ne.s32.totalorder %s102, %s105
      %p114 = scmp.eq.s32.totalorder %s15, 3
      %p115 = por %p113, %p114
      %p116 = scmp.ne.s32.totalorder %s105, %s106
      %p117 = scmp.eq.s32.totalorder %s15, 0
      %p118 = por %p116, %p117
      %p119 = scmp.ne.s32.totalorder %s105, %s106
      %p120 = scmp.eq.s32.totalorder %s16, 3
      %p121 = por %p119, %p120
      %p123 = scmp.ne.s32.totalorder %s106, %s122
      %p124 = scmp.eq.s32.totalorder %s16, 0
      %p125 = por %p123, %p124
      %p126 = scmp.le.s32.totalorder 1, %s10
      %p127 = scmp.lt.s32.totalorder %s10, 5
      %p128 = pnand %p126, %p127
      %p129 = pneg %p128
      // Predicated region
      $region9: #{progan_gen_forward.12} parent=5 // pred_check
        _
      $region10: #{progan_gen_forward.12} parent=5 // pred_check_branch
        %131 = sbr.rel (%p128) target = $region12
      $region11: #{progan_gen_forward.12} parent=5 // pred_region
        %s132 = ssub.s32 %s10, 1
        // Predicated region
        $region13: #{progan_gen_forward.12} parent=11 // pred_check
          %p133 = pneg %p69
        $region14: #{progan_gen_forward.12} parent=11 // pred_check_branch
          %135 = sbr.rel (%p133) target = $region16
        $region15: #{progan_gen_forward.12} parent=11 // pred_region
          %137 = vsyncadd [#allocation4], 0
          %s138 = sshll.u32 %s1, 4
          %s139 = int_to_ptr.hbm [resolvable:$true] %s138
          %s140 = sshll.u32 [#allocation3], 4
          %s141 = int_to_ptr.vmem [resolvable:$true] %s140
          %146 = dma.hbm_to_vmem [thread:$0]  %s139, 9216, %s141, [#allocation4], 64, 64, 4
        $region16: #{progan_gen_forward.12} parent=11 // pred_fallthru
          _
        // Predicated region
        $region17: #{progan_gen_forward.12} parent=11 // pred_check
          %p147 = pneg %p90
        $region18: #{progan_gen_forward.12} parent=11 // pred_check_branch
          %149 = sbr.rel (%p147) target = $region20
        $region19: #{progan_gen_forward.12} parent=11 // pred_region
          _
        $region20: #{progan_gen_forward.12} parent=11 // pred_fallthru
          _
      $region12: #{progan_gen_forward.12} parent=5 // pred_fallthru
        _
      %p150 = scmp.lt.s32.totalorder %s10, 4
      // Predicated region
      $region21: #{progan_gen_forward.12} parent=5 // pred_check
        %p151 = pneg %p150
      $region22: #{progan_gen_forward.12} parent=5 // pred_check_branch
        %153 = sbr.rel (%p151) target = $region24
      $region23: #{progan_gen_forward.12} parent=5 // pred_region
        // Predicated region
        $region25: #{progan_gen_forward.12} parent=23 // pred_check
          %p154 = pneg %p42
        $region26: #{progan_gen_forward.12} parent=23 // pred_check_branch
          %156 = sbr.rel (%p154) target = $region28
        $region27: #{progan_gen_forward.12} parent=23 // pred_region
          %p157 = scmp.lt.s32.totalorder %s17, 1
          %s158 = scalar_select %p157, %s17, 1
          %s159 = smul.addr %s158, 32
          %s160 = smul.addr %s159, 4
          %s161 = scalar_lea.vmem %s0, %s160
        $region28: #{progan_gen_forward.12} parent=23 // pred_fallthru
          _
      $region24: #{progan_gen_forward.12} parent=5 // pred_fallthru
        _
      %p162 = scmp.le.s32.totalorder 1, %s10
      %p163 = scmp.lt.s32.totalorder %s10, 5
      %p164 = pnand %p162, %p163
      %p165 = pneg %p164
      // Predicated region
      $region29: #{progan_gen_forward.12} parent=5 // pred_check
        _
      $region30: #{progan_gen_forward.12} parent=5 // pred_check_branch
        %167 = sbr.rel (%p164) target = $region32
      $region31: #{progan_gen_forward.12} parent=5 // pred_region
        %s168 = ssub.s32 %s10, 1
        // Predicated region
        $region33: #{progan_gen_forward.12} parent=31 // pred_check
          %p169 = pneg %p69
        $region34: #{progan_gen_forward.12} parent=31 // pred_check_branch
          %171 = sbr.rel (%p169) target = $region36
        $region35: #{progan_gen_forward.12} parent=31 // pred_region
          %173 = dma.done [#allocation4], 9216
        $region36: #{progan_gen_forward.12} parent=31 // pred_fallthru
          _
        %p174 = scmp.lt.s32.totalorder %s19, 1
        %s175 = scalar_select %p174, %s19, 1
        %s176 = smul.addr %s175, 32
        %s177 = smul.addr %s176, 4
        %s178 = scalar_lea.vmem %s0, %s177
        %p179 = pneg %p48
        %p180 = pneg %p45
        %p181 = pneg %p69
        %p182 = pneg %p66
        %p183 = pneg %p90
        %p184 = pneg %p87
        %p185 = pneg %p118
        %p186 = pneg %p115
        %s187 = smul.u32 8, %s20
        %p188 = scmp.lt.s32.totalorder %s19, 1
        %s189 = scalar_select %p188, %s19, 1
        %p190 = scmp.lt.s32.totalorder %s187, 15
        %s191 = scalar_select %p190, %s187, 15
        %s192 = smul.addr %s191, 2
        %s193 = smul.addr %s189, 32
        %s194 = sadd.s32 %s192, %s193
        %s195 = smul.addr %s194, 4
        %s196 = scalar_lea.vmem %s3, %s195
        %p197 = scmp.lt.s32.totalorder %s19, 1
        %s198 = scalar_select %p197, %s19, 1
        %s199 = smul.addr %s198, 32
        %s200 = smul.addr %s199, 4
        %s201 = scalar_lea.vmem %s0, %s200
        %s202 = smul.u32 8, %s20
        %p203 = scmp.lt.s32.totalorder %s19, 1
        %s204 = scalar_select %p203, %s19, 1
        %p205 = scmp.lt.s32.totalorder %s202, 15
        %s206 = scalar_select %p205, %s202, 15
        %s207 = smul.addr %s206, 2
        %s208 = smul.addr %s204, 32
        %s209 = sadd.s32 %s207, %s208
        %s210 = smul.addr %s209, 4
        %s211 = scalar_lea.vmem %s3, %s210
        %s212 = smul.u32 8, %s20
        %p214 = scmp.eq.s32.totalorder %s20, 0
        // Predicated region
        $region37: #{progan_gen_forward.12} parent=31 // pred_check
          %p215 = pneg %p214
        $region38: #{progan_gen_forward.12} parent=31 // pred_check_branch
          %217 = sbr.rel (%p215) target = $region40
        $region39: #{progan_gen_forward.12} parent=31 // pred_region
          %218 = vst [vmem:[#allocation2] sm:$0xf] 0
          %219 = vst [vmem:[#allocation2 + $0x4] sm:$0xf] 0
          %220 = vst [vmem:[#allocation2 + $0x8] sm:$0x1] 0
          %221 = vst [vmem:[#allocation2 + $0xc] sm:$0xf] 0
          %222 = vst [vmem:[#allocation2 + $0x10] sm:$0xf] 0
          %223 = vst [vmem:[#allocation2 + $0x14] sm:$0x1] 0
          %224 = vst [vmem:[#allocation2 + $0x18] sm:$0xf] 0
          %225 = vst [vmem:[#allocation2 + $0x1c] sm:$0xf] 0
          %226 = vst [vmem:[#allocation2 + $0x20] sm:$0x1] 0
          %227 = vst [vmem:[#allocation2 + $0x24] sm:$0xf] 0
          %228 = vst [vmem:[#allocation2 + $0x28] sm:$0xf] 0
          %229 = vst [vmem:[#allocation2 + $0x2c] sm:$0x1] 0
          %230 = vst [vmem:[#allocation2 + $0x30] sm:$0xf] 0
          %231 = vst [vmem:[#allocation2 + $0x34] sm:$0xf] 0
          %232 = vst [vmem:[#allocation2 + $0x38] sm:$0x1] 0
          %233 = vst [vmem:[#allocation2 + $0x3c] sm:$0xf] 0
          %234 = vst [vmem:[#allocation2 + $0x40] sm:$0xf] 0
          %235 = vst [vmem:[#allocation2 + $0x44] sm:$0x1] 0
          %236 = vst [vmem:[#allocation2 + $0x48] sm:$0xf] 0
          %237 = vst [vmem:[#allocation2 + $0x4c] sm:$0xf] 0
          %238 = vst [vmem:[#allocation2 + $0x50] sm:$0x1] 0
          %239 = vst [vmem:[#allocation2 + $0x54] sm:$0xf] 0
          %240 = vst [vmem:[#allocation2 + $0x58] sm:$0xf] 0
          %241 = vst [vmem:[#allocation2 + $0x5c] sm:$0x1] 0
          %242 = vst [vmem:[#allocation2 + $0x60] sm:$0xf] 0
          %243 = vst [vmem:[#allocation2 + $0x64] sm:$0xf] 0
          %244 = vst [vmem:[#allocation2 + $0x68] sm:$0x1] 0
          %245 = vst [vmem:[#allocation2 + $0x6c] sm:$0xf] 0
          %246 = vst [vmem:[#allocation2 + $0x70] sm:$0xf] 0
          %247 = vst [vmem:[#allocation2 + $0x74] sm:$0x1] 0
          %248 = vst [vmem:[#allocation2 + $0x78] sm:$0xf] 0
          %249 = vst [vmem:[#allocation2 + $0x7c] sm:$0xf] 0
          %250 = vst [vmem:[#allocation2 + $0x80] sm:$0x1] 0
          %251 = vst [vmem:[#allocation2 + $0x84] sm:$0xf] 0
          %252 = vst [vmem:[#allocation2 + $0x88] sm:$0xf] 0
          %253 = vst [vmem:[#allocation2 + $0x8c] sm:$0x1] 0
          %254 = vst [vmem:[#allocation2 + $0x90] sm:$0xf] 0
          %255 = vst [vmem:[#allocation2 + $0x94] sm:$0xf] 0
          %256 = vst [vmem:[#allocation2 + $0x98] sm:$0x1] 0
          %257 = vst [vmem:[#allocation2 + $0x9c] sm:$0xf] 0
          %258 = vst [vmem:[#allocation2 + $0xa0] sm:$0xf] 0
          %259 = vst [vmem:[#allocation2 + $0xa4] sm:$0x1] 0
          %260 = vst [vmem:[#allocation2 + $0xa8] sm:$0xf] 0
          %261 = vst [vmem:[#allocation2 + $0xac] sm:$0xf] 0
          %262 = vst [vmem:[#allocation2 + $0xb0] sm:$0x1] 0
          %263 = vst [vmem:[#allocation2 + $0xb4] sm:$0xf] 0
          %264 = vst [vmem:[#allocation2 + $0xb8] sm:$0xf] 0
          %265 = vst [vmem:[#allocation2 + $0xbc] sm:$0x1] 0
          %266 = vst [vmem:[#allocation2 + $0xc0] sm:$0xf] 0
          %267 = vst [vmem:[#allocation2 + $0xc4] sm:$0xf] 0
          %268 = vst [vmem:[#allocation2 + $0xc8] sm:$0x1] 0
          %269 = vst [vmem:[#allocation2 + $0xcc] sm:$0xf] 0
          %270 = vst [vmem:[#allocation2 + $0xd0] sm:$0xf] 0
          %271 = vst [vmem:[#allocation2 + $0xd4] sm:$0x1] 0
          %v272 = vld [vmem:[%s201] sm:$0xf]
          %v273 = vld [vmem:[%s201 + $0x4] sm:$0xf]
          %v274 = vld [vmem:[%s201 + $0x8] sm:$0xf]
          %v275 = vld [vmem:[%s201 + $0xc] sm:$0xf]
          %v276 = vld [vmem:[%s201 + $0x10] sm:$0xf]
          %v277 = vld [vmem:[%s201 + $0x14] sm:$0xf]
          %v278 = vld [vmem:[%s201 + $0x18] sm:$0xf]
          %v279 = vld [vmem:[%s201 + $0x1c] sm:$0xf]
          %v280 = vld [vmem:[%s201 + $0x20] sm:$0xf]
          %v281 = vld [vmem:[%s201 + $0x24] sm:$0xf]
          %v282 = vld [vmem:[%s201 + $0x28] sm:$0xf]
          %v283 = vld [vmem:[%s201 + $0x2c] sm:$0xf]
          %v284 = vld [vmem:[%s201 + $0x30] sm:$0xf]
          %v285 = vld [vmem:[%s201 + $0x34] sm:$0xf]
          %v286 = vld [vmem:[%s201 + $0x38] sm:$0xf]
          %v287 = vld [vmem:[%s201 + $0x3c] sm:$0xf]
          %v288 = vld [vmem:[%s201 + $0x40] sm:$0xf]
          %v289 = vld [vmem:[%s201 + $0x44] sm:$0xf]
          %v290 = vld [vmem:[%s201 + $0x48] sm:$0xf]
          %v291 = vld [vmem:[%s201 + $0x4c] sm:$0xf]
          %v292 = vld [vmem:[%s201 + $0x50] sm:$0xf]
          %v293 = vld [vmem:[%s201 + $0x54] sm:$0xf]
          %v294 = vld [vmem:[%s201 + $0x58] sm:$0xf]
          %v295 = vld [vmem:[%s201 + $0x5c] sm:$0xf]
          %v296 = vld [vmem:[%s201 + $0x60] sm:$0xf]
          %v297 = vld [vmem:[%s201 + $0x64] sm:$0xf]
          %v298 = vld [vmem:[%s201 + $0x68] sm:$0xf]
          %v299 = vld [vmem:[%s201 + $0x6c] sm:$0xf]
          %v300 = vld [vmem:[%s201 + $0x70] sm:$0xf]
          %v301 = vld [vmem:[%s201 + $0x74] sm:$0xf]
          %v302 = vld [vmem:[%s201 + $0x78] sm:$0xf]
          %v303 = vld [vmem:[%s201 + $0x7c] sm:$0xf]
          %vm304 = vsmask.f32 256
          %vm305 = vsmask.f32 4368
          %vm306 = vmor %vm304, %vm305
          %v308 = vshrl.u32 %v272, 16
          %v310 = vrot.slane %v308, 7
          %v311 = vshll.u32 %v272, 16
          %v313 = vor.u32 %v310, %v311
          %v314 = vrot.slane %v310, 4
          %v316 = vshrl.u32 %v273, 16
          %v318 = vrot.slane %v316, 7
          %v319 = vshll.u32 %v273, 16
          %v321 = vor.u32 %v318, %v319
          %v322 = vsel %vm306, %v314, %v321
          %v323 = vrot.slane %v318, 4
          %v325 = vshrl.u32 %v274, 16
          %v327 = vrot.slane %v325, 7
          %v328 = vshll.u32 %v274, 16
          %v330 = vor.u32 %v327, %v328
          %v331 = vrot.slane %v327, 4
          %v333 = vshrl.u32 %v275, 16
          %v335 = vrot.slane %v333, 7
          %v336 = vshll.u32 %v275, 16
          %v338 = vor.u32 %v335, %v336
          %v339 = vsel %vm306, %v331, %v338
          %v340 = vrot.slane %v335, 4
          %v342 = vshrl.u32 %v276, 16
          %v344 = vrot.slane %v342, 7
          %v345 = vshll.u32 %v276, 16
          %v347 = vor.u32 %v344, %v345
          %v348 = vrot.slane %v344, 4
          %v350 = vshrl.u32 %v277, 16
          %v352 = vrot.slane %v350, 7
          %v353 = vshll.u32 %v277, 16
          %v355 = vor.u32 %v352, %v353
          %v356 = vsel %vm306, %v348, %v355
          %v357 = vrot.slane %v352, 4
          %v359 = vshrl.u32 %v278, 16
          %v361 = vrot.slane %v359, 7
          %v362 = vshll.u32 %v278, 16
          %v364 = vor.u32 %v361, %v362
          %v365 = vrot.slane %v361, 4
          %v367 = vshrl.u32 %v279, 16
          %v369 = vrot.slane %v367, 7
          %v370 = vshll.u32 %v279, 16
          %v372 = vor.u32 %v369, %v370
          %v373 = vsel %vm306, %v365, %v372
          %v374 = vrot.slane %v369, 4
          %v376 = vshrl.u32 %v280, 16
          %v378 = vrot.slane %v376, 7
          %v379 = vshll.u32 %v280, 16
          %v381 = vor.u32 %v378, %v379
          %v382 = vrot.slane %v378, 4
          %v384 = vshrl.u32 %v281, 16
          %v386 = vrot.slane %v384, 7
          %v387 = vshll.u32 %v281, 16
          %v389 = vor.u32 %v386, %v387
          %v390 = vsel %vm306, %v382, %v389
          %v391 = vrot.slane %v386, 4
          %v393 = vshrl.u32 %v282, 16
          %v395 = vrot.slane %v393, 7
          %v396 = vshll.u32 %v282, 16
          %v398 = vor.u32 %v395, %v396
          %v399 = vrot.slane %v395, 4
          %v401 = vshrl.u32 %v283, 16
          %v403 = vrot.slane %v401, 7
          %v404 = vshll.u32 %v283, 16
          %v406 = vor.u32 %v403, %v404
          %v407 = vsel %vm306, %v399, %v406
          %v408 = vrot.slane %v403, 4
          %v410 = vshrl.u32 %v284, 16
          %v412 = vrot.slane %v410, 7
          %v413 = vshll.u32 %v284, 16
          %v415 = vor.u32 %v412, %v413
          %v416 = vrot.slane %v412, 4
          %v418 = vshrl.u32 %v285, 16
          %v420 = vrot.slane %v418, 7
          %v421 = vshll.u32 %v285, 16
          %v423 = vor.u32 %v420, %v421
          %v424 = vsel %vm306, %v416, %v423
          %v425 = vrot.slane %v420, 4
          %v427 = vshrl.u32 %v286, 16
          %v429 = vrot.slane %v427, 7
          %v430 = vshll.u32 %v286, 16
          %v432 = vor.u32 %v429, %v430
          %v433 = vrot.slane %v429, 4
          %v435 = vshrl.u32 %v287, 16
          %v437 = vrot.slane %v435, 7
          %v438 = vshll.u32 %v287, 16
          %v440 = vor.u32 %v437, %v438
          %v441 = vsel %vm306, %v433, %v440
          %v442 = vrot.slane %v437, 4
          %v444 = vshrl.u32 %v288, 16
          %v446 = vrot.slane %v444, 7
          %v447 = vshll.u32 %v288, 16
          %v449 = vor.u32 %v446, %v447
          %v450 = vrot.slane %v446, 4
          %v452 = vshrl.u32 %v289, 16
          %v454 = vrot.slane %v452, 7
          %v455 = vshll.u32 %v289, 16
          %v457 = vor.u32 %v454, %v455
          %v458 = vsel %vm306, %v450, %v457
          %v459 = vrot.slane %v454, 4
          %v461 = vshrl.u32 %v290, 16
          %v463 = vrot.slane %v461, 7
          %v464 = vshll.u32 %v290, 16
          %v466 = vor.u32 %v463, %v464
          %v467 = vrot.slane %v463, 4
          %v469 = vshrl.u32 %v291, 16
          %v471 = vrot.slane %v469, 7
          %v472 = vshll.u32 %v291, 16
          %v474 = vor.u32 %v471, %v472
          %v475 = vsel %vm306, %v467, %v474
          %v476 = vrot.slane %v471, 4
          %v478 = vshrl.u32 %v292, 16
          %v480 = vrot.slane %v478, 7
          %v481 = vshll.u32 %v292, 16
          %v483 = vor.u32 %v480, %v481
          %v484 = vrot.slane %v480, 4
          %v486 = vshrl.u32 %v293, 16
          %v488 = vrot.slane %v486, 7
          %v489 = vshll.u32 %v293, 16
          %v491 = vor.u32 %v488, %v489
          %v492 = vsel %vm306, %v484, %v491
          %v493 = vrot.slane %v488, 4
          %v495 = vshrl.u32 %v294, 16
          %v497 = vrot.slane %v495, 7
          %v498 = vshll.u32 %v294, 16
          %v500 = vor.u32 %v497, %v498
          %v501 = vrot.slane %v497, 4
          %v503 = vshrl.u32 %v295, 16
          %v505 = vrot.slane %v503, 7
          %v506 = vshll.u32 %v295, 16
          %v508 = vor.u32 %v505, %v506
          %v509 = vsel %vm306, %v501, %v508
          %v510 = vrot.slane %v505, 4
          %v512 = vshrl.u32 %v296, 16
          %v514 = vrot.slane %v512, 7
          %v515 = vshll.u32 %v296, 16
          %v517 = vor.u32 %v514, %v515
          %v518 = vrot.slane %v514, 4
          %v520 = vshrl.u32 %v297, 16
          %v522 = vrot.slane %v520, 7
          %v523 = vshll.u32 %v297, 16
          %v525 = vor.u32 %v522, %v523
          %v526 = vsel %vm306, %v518, %v525
          %v527 = vrot.slane %v522, 4
          %v529 = vshrl.u32 %v298, 16
          %v531 = vrot.slane %v529, 7
          %v532 = vshll.u32 %v298, 16
          %v534 = vor.u32 %v531, %v532
          %v535 = vrot.slane %v531, 4
          %v537 = vshrl.u32 %v299, 16
          %v539 = vrot.slane %v537, 7
          %v540 = vshll.u32 %v299, 16
          %v542 = vor.u32 %v539, %v540
          %v543 = vsel %vm306, %v535, %v542
          %v544 = vrot.slane %v539, 4
          %v546 = vshrl.u32 %v300, 16
          %v548 = vrot.slane %v546, 7
          %v549 = vshll.u32 %v300, 16
          %v551 = vor.u32 %v548, %v549
          %v552 = vrot.slane %v548, 4
          %v554 = vshrl.u32 %v301, 16
          %v556 = vrot.slane %v554, 7
          %v557 = vshll.u32 %v301, 16
          %v559 = vor.u32 %v556, %v557
          %v560 = vsel %vm306, %v552, %v559
          %v561 = vrot.slane %v556, 4
          %v563 = vshrl.u32 %v302, 16
          %v565 = vrot.slane %v563, 7
          %v566 = vshll.u32 %v302, 16
          %v568 = vor.u32 %v565, %v566
          %v569 = vrot.slane %v565, 4
          %v571 = vshrl.u32 %v303, 16
          %v573 = vrot.slane %v571, 7
          %v574 = vshll.u32 %v303, 16
          %v576 = vor.u32 %v573, %v574
          %v577 = vsel %vm306, %v569, %v576
          %v578 = vrot.slane %v573, 4
          %s627 = scalar_lea.vmem [#allocation2], 12
          %vm628 = vcmask 1043456
          %vm629 = vsmask.f32 7938
          %vm630 = vmand %vm628, %vm629
          %v631 = vld [vmem:[%s627] sm:$0xf]
          %v632 = vsel %vm630, %v313, %v631
          %633 = vst [vmem:[%s627] sm:$0xf] %v632
          %634 = vst [vmem:[%s627 + $0x4] sm:$0xf] %v322
          %vm635 = vcmask 1040384
          %vm636 = vmand %vm635, %vm304
          %v637 = vld [vmem:[%s627 + $0x8] sm:$0x1]
          %v638 = vsel %vm636, %v323, %v637
          %639 = vst [vmem:[%s627 + $0x8] sm:$0x1] %v638
          %v640 = vld [vmem:[%s627 + $0xc] sm:$0xf]
          %v641 = vsel %vm630, %v330, %v640
          %642 = vst [vmem:[%s627 + $0xc] sm:$0xf] %v641
          %643 = vst [vmem:[%s627 + $0x10] sm:$0xf] %v339
          %v644 = vld [vmem:[%s627 + $0x14] sm:$0x1]
          %v645 = vsel %vm636, %v340, %v644
          %646 = vst [vmem:[%s627 + $0x14] sm:$0x1] %v645
          %v647 = vld [vmem:[%s627 + $0x18] sm:$0xf]
          %v648 = vsel %vm630, %v347, %v647
          %649 = vst [vmem:[%s627 + $0x18] sm:$0xf] %v648
          %650 = vst [vmem:[%s627 + $0x1c] sm:$0xf] %v356
          %v651 = vld [vmem:[%s627 + $0x20] sm:$0x1]
          %v652 = vsel %vm636, %v357, %v651
          %653 = vst [vmem:[%s627 + $0x20] sm:$0x1] %v652
          %v654 = vld [vmem:[%s627 + $0x24] sm:$0xf]
          %v655 = vsel %vm630, %v364, %v654
          %656 = vst [vmem:[%s627 + $0x24] sm:$0xf] %v655
          %657 = vst [vmem:[%s627 + $0x28] sm:$0xf] %v373
          %v658 = vld [vmem:[%s627 + $0x2c] sm:$0x1]
          %v659 = vsel %vm636, %v374, %v658
          %660 = vst [vmem:[%s627 + $0x2c] sm:$0x1] %v659
          %v661 = vld [vmem:[%s627 + $0x30] sm:$0xf]
          %v662 = vsel %vm630, %v381, %v661
          %663 = vst [vmem:[%s627 + $0x30] sm:$0xf] %v662
          %664 = vst [vmem:[%s627 + $0x34] sm:$0xf] %v390
          %v665 = vld [vmem:[%s627 + $0x38] sm:$0x1]
          %v666 = vsel %vm636, %v391, %v665
          %667 = vst [vmem:[%s627 + $0x38] sm:$0x1] %v666
          %v668 = vld [vmem:[%s627 + $0x3c] sm:$0xf]
          %v669 = vsel %vm630, %v398, %v668
          %670 = vst [vmem:[%s627 + $0x3c] sm:$0xf] %v669
          %671 = vst [vmem:[%s627 + $0x40] sm:$0xf] %v407
          %v672 = vld [vmem:[%s627 + $0x44] sm:$0x1]
          %v673 = vsel %vm636, %v408, %v672
          %674 = vst [vmem:[%s627 + $0x44] sm:$0x1] %v673
          %v675 = vld [vmem:[%s627 + $0x48] sm:$0xf]
          %v676 = vsel %vm630, %v415, %v675
          %677 = vst [vmem:[%s627 + $0x48] sm:$0xf] %v676
          %678 = vst [vmem:[%s627 + $0x4c] sm:$0xf] %v424
          %v679 = vld [vmem:[%s627 + $0x50] sm:$0x1]
          %v680 = vsel %vm636, %v425, %v679
          %681 = vst [vmem:[%s627 + $0x50] sm:$0x1] %v680
          %v682 = vld [vmem:[%s627 + $0x54] sm:$0xf]
          %v683 = vsel %vm630, %v432, %v682
          %684 = vst [vmem:[%s627 + $0x54] sm:$0xf] %v683
          %685 = vst [vmem:[%s627 + $0x58] sm:$0xf] %v441
          %v686 = vld [vmem:[%s627 + $0x5c] sm:$0x1]
          %v687 = vsel %vm636, %v442, %v686
          %688 = vst [vmem:[%s627 + $0x5c] sm:$0x1] %v687
          %v689 = vld [vmem:[%s627 + $0x60] sm:$0xf]
          %v690 = vsel %vm630, %v449, %v689
          %691 = vst [vmem:[%s627 + $0x60] sm:$0xf] %v690
          %692 = vst [vmem:[%s627 + $0x64] sm:$0xf] %v458
          %v693 = vld [vmem:[%s627 + $0x68] sm:$0x1]
          %v694 = vsel %vm636, %v459, %v693
          %695 = vst [vmem:[%s627 + $0x68] sm:$0x1] %v694
          %v696 = vld [vmem:[%s627 + $0x6c] sm:$0xf]
          %v697 = vsel %vm630, %v466, %v696
          %698 = vst [vmem:[%s627 + $0x6c] sm:$0xf] %v697
          %699 = vst [vmem:[%s627 + $0x70] sm:$0xf] %v475
          %v700 = vld [vmem:[%s627 + $0x74] sm:$0x1]
          %v701 = vsel %vm636, %v476, %v700
          %702 = vst [vmem:[%s627 + $0x74] sm:$0x1] %v701
          %v703 = vld [vmem:[%s627 + $0x78] sm:$0xf]
          %v704 = vsel %vm630, %v483, %v703
          %705 = vst [vmem:[%s627 + $0x78] sm:$0xf] %v704
          %706 = vst [vmem:[%s627 + $0x7c] sm:$0xf] %v492
          %v707 = vld [vmem:[%s627 + $0x80] sm:$0x1]
          %v708 = vsel %vm636, %v493, %v707
          %709 = vst [vmem:[%s627 + $0x80] sm:$0x1] %v708
          %v710 = vld [vmem:[%s627 + $0x84] sm:$0xf]
          %v711 = vsel %vm630, %v500, %v710
          %712 = vst [vmem:[%s627 + $0x84] sm:$0xf] %v711
          %713 = vst [vmem:[%s627 + $0x88] sm:$0xf] %v509
          %v714 = vld [vmem:[%s627 + $0x8c] sm:$0x1]
          %v715 = vsel %vm636, %v510, %v714
          %716 = vst [vmem:[%s627 + $0x8c] sm:$0x1] %v715
          %v717 = vld [vmem:[%s627 + $0x90] sm:$0xf]
          %v718 = vsel %vm630, %v517, %v717
          %719 = vst [vmem:[%s627 + $0x90] sm:$0xf] %v718
          %720 = vst [vmem:[%s627 + $0x94] sm:$0xf] %v526
          %v721 = vld [vmem:[%s627 + $0x98] sm:$0x1]
          %v722 = vsel %vm636, %v527, %v721
          %723 = vst [vmem:[%s627 + $0x98] sm:$0x1] %v722
          %v724 = vld [vmem:[%s627 + $0x9c] sm:$0xf]
          %v725 = vsel %vm630, %v534, %v724
          %726 = vst [vmem:[%s627 + $0x9c] sm:$0xf] %v725
          %727 = vst [vmem:[%s627 + $0xa0] sm:$0xf] %v543
          %v728 = vld [vmem:[%s627 + $0xa4] sm:$0x1]
          %v729 = vsel %vm636, %v544, %v728
          %730 = vst [vmem:[%s627 + $0xa4] sm:$0x1] %v729
          %v731 = vld [vmem:[%s627 + $0xa8] sm:$0xf]
          %v732 = vsel %vm630, %v551, %v731
          %733 = vst [vmem:[%s627 + $0xa8] sm:$0xf] %v732
          %734 = vst [vmem:[%s627 + $0xac] sm:$0xf] %v560
          %v735 = vld [vmem:[%s627 + $0xb0] sm:$0x1]
          %v736 = vsel %vm636, %v561, %v735
          %737 = vst [vmem:[%s627 + $0xb0] sm:$0x1] %v736
          %v738 = vld [vmem:[%s627 + $0xb4] sm:$0xf]
          %v739 = vsel %vm630, %v568, %v738
          %740 = vst [vmem:[%s627 + $0xb4] sm:$0xf] %v739
          %741 = vst [vmem:[%s627 + $0xb8] sm:$0xf] %v577
          %v742 = vld [vmem:[%s627 + $0xbc] sm:$0x1]
          %v743 = vsel %vm636, %v578, %v742
          %744 = vst [vmem:[%s627 + $0xbc] sm:$0x1] %v743
        $region40: #{progan_gen_forward.12} parent=31 // pred_fallthru
          _
        %s745 = smul.u32 %s20, 8
        %s746 = smul.u32 %s745, 3
        %s747 = smul.addr %s746, 4
        %s748 = scalar_lea.vmem [#allocation2], %s747
        %v749 = vld [vmem:[%s748] sm:$0xf]
        %v750 = vld [vmem:[%s748 + $0x4] sm:$0xf]
        %v751 = vld [vmem:[%s748 + $0x8] sm:$0x1]
        %v752 = vld [vmem:[%s748 + $0xc] sm:$0xf]
        %v753 = vld [vmem:[%s748 + $0x10] sm:$0xf]
        %v754 = vld [vmem:[%s748 + $0x14] sm:$0x1]
        %v755 = vld [vmem:[%s748 + $0x18] sm:$0xf]
        %v756 = vld [vmem:[%s748 + $0x1c] sm:$0xf]
        %v757 = vld [vmem:[%s748 + $0x20] sm:$0x1]
        %v758 = vld [vmem:[%s748 + $0x24] sm:$0xf]
        %v759 = vld [vmem:[%s748 + $0x28] sm:$0xf]
        %v760 = vld [vmem:[%s748 + $0x2c] sm:$0x1]
        %v761 = vld [vmem:[%s748 + $0x30] sm:$0xf]
        %v762 = vld [vmem:[%s748 + $0x34] sm:$0xf]
        %v763 = vld [vmem:[%s748 + $0x38] sm:$0x1]
        %v764 = vld [vmem:[%s748 + $0x3c] sm:$0xf]
        %v765 = vld [vmem:[%s748 + $0x40] sm:$0xf]
        %v766 = vld [vmem:[%s748 + $0x44] sm:$0x1]
        %v767 = vld [vmem:[%s748 + $0x48] sm:$0xf]
        %v768 = vld [vmem:[%s748 + $0x4c] sm:$0xf]
        %v769 = vld [vmem:[%s748 + $0x50] sm:$0x1]
        %v770 = vld [vmem:[%s748 + $0x54] sm:$0xf]
        %v771 = vld [vmem:[%s748 + $0x58] sm:$0xf]
        %v772 = vld [vmem:[%s748 + $0x5c] sm:$0x1]
        %v789 = vunpack.c.l.b16 %v749
        %v790 = vunpack.c.l.b16 %v750
        %v791 = vunpack.c.l.b16 %v752
        %v792 = vunpack.c.l.b16 %v753
        %v793 = vunpack.c.l.b16 %v755
        %v794 = vunpack.c.l.b16 %v756
        %v795 = vunpack.c.l.b16 %v758
        %v796 = vunpack.c.l.b16 %v759
        %v797 = vunpack.c.l.b16 %v761
        %v798 = vunpack.c.l.b16 %v762
        %v799 = vunpack.c.l.b16 %v764
        %v800 = vunpack.c.l.b16 %v765
        %v801 = vunpack.c.l.b16 %v767
        %v802 = vunpack.c.l.b16 %v768
        %v803 = vunpack.c.l.b16 %v770
        %v804 = vunpack.c.l.b16 %v771
        %v805 = vpack.c.b16 %v790, %v789
        %v806 = vpack.c.b16 %v792, %v791
        %v807 = vpack.c.b16 %v794, %v793
        %v808 = vpack.c.b16 %v796, %v795
        %v809 = vpack.c.b16 %v798, %v797
        %v810 = vpack.c.b16 %v800, %v799
        %v811 = vpack.c.b16 %v802, %v801
        %v812 = vpack.c.b16 %v804, %v803
        %v829 = vunpack.c.l.b16 %v751
        %v830 = vunpack.c.l.b16 %v754
        %v831 = vunpack.c.l.b16 %v757
        %v832 = vunpack.c.l.b16 %v760
        %v833 = vunpack.c.l.b16 %v763
        %v834 = vunpack.c.l.b16 %v766
        %v835 = vunpack.c.l.b16 %v769
        %v836 = vunpack.c.l.b16 %v772
        %v837 = vpack.c.b16 %v829, %v829
        %v838 = vpack.c.b16 %v830, %v830
        %v839 = vpack.c.b16 %v831, %v831
        %v840 = vpack.c.b16 %v832, %v832
        %v841 = vpack.c.b16 %v833, %v833
        %v842 = vpack.c.b16 %v834, %v834
        %v843 = vpack.c.b16 %v835, %v835
        %v844 = vpack.c.b16 %v836, %v836
        %vm845 = vsmask.f32 7424
        %v847 = vshrl.u32 %v805, 16
        %v849 = vshll.u32 %v805, 16
        %v851 = vrot.slane %v849, 1
        %v852 = vor.u32 %v847, %v851
        %v854 = vshll.u32 %v837, 16
        %v856 = vrot.slane %v854, 1
        %v857 = vsel %vm845, %v852, %v856
        %v859 = vshrl.u32 %v806, 16
        %v861 = vshll.u32 %v806, 16
        %v863 = vrot.slane %v861, 1
        %v864 = vor.u32 %v859, %v863
        %v866 = vshll.u32 %v838, 16
        %v868 = vrot.slane %v866, 1
        %v869 = vsel %vm845, %v864, %v868
        %v871 = vshrl.u32 %v807, 16
        %v873 = vshll.u32 %v807, 16
        %v875 = vrot.slane %v873, 1
        %v876 = vor.u32 %v871, %v875
        %v878 = vshll.u32 %v839, 16
        %v880 = vrot.slane %v878, 1
        %v881 = vsel %vm845, %v876, %v880
        %v883 = vshrl.u32 %v808, 16
        %v885 = vshll.u32 %v808, 16
        %v887 = vrot.slane %v885, 1
        %v888 = vor.u32 %v883, %v887
        %v890 = vshll.u32 %v840, 16
        %v892 = vrot.slane %v890, 1
        %v893 = vsel %vm845, %v888, %v892
        %v895 = vshrl.u32 %v809, 16
        %v897 = vshll.u32 %v809, 16
        %v899 = vrot.slane %v897, 1
        %v900 = vor.u32 %v895, %v899
        %v902 = vshll.u32 %v841, 16
        %v904 = vrot.slane %v902, 1
        %v905 = vsel %vm845, %v900, %v904
        %v907 = vshrl.u32 %v810, 16
        %v909 = vshll.u32 %v810, 16
        %v911 = vrot.slane %v909, 1
        %v912 = vor.u32 %v907, %v911
        %v914 = vshll.u32 %v842, 16
        %v916 = vrot.slane %v914, 1
        %v917 = vsel %vm845, %v912, %v916
        %v919 = vshrl.u32 %v811, 16
        %v921 = vshll.u32 %v811, 16
        %v923 = vrot.slane %v921, 1
        %v924 = vor.u32 %v919, %v923
        %v926 = vshll.u32 %v843, 16
        %v928 = vrot.slane %v926, 1
        %v929 = vsel %vm845, %v924, %v928
        %v931 = vshrl.u32 %v812, 16
        %v933 = vshll.u32 %v812, 16
        %v935 = vrot.slane %v933, 1
        %v936 = vor.u32 %v931, %v935
        %v938 = vshll.u32 %v844, 16
        %v940 = vrot.slane %v938, 1
        %v941 = vsel %vm845, %v936, %v940
        %vm950 = vcmask 1046528
        %v951 = vrot.slane %v805, 1
        %v952 = vrot.slane %v837, 1
        %v953 = vsel %vm950, %v951, %v952
        %v954 = vrot.slane %v806, 1
        %v955 = vrot.slane %v838, 1
        %v956 = vsel %vm950, %v954, %v955
        %v957 = vrot.slane %v807, 1
        %v958 = vrot.slane %v839, 1
        %v959 = vsel %vm950, %v957, %v958
        %v960 = vrot.slane %v808, 1
        %v961 = vrot.slane %v840, 1
        %v962 = vsel %vm950, %v960, %v961
        %v963 = vrot.slane %v809, 1
        %v964 = vrot.slane %v841, 1
        %v965 = vsel %vm950, %v963, %v964
        %v966 = vrot.slane %v810, 1
        %v967 = vrot.slane %v842, 1
        %v968 = vsel %vm950, %v966, %v967
        %v969 = vrot.slane %v811, 1
        %v970 = vrot.slane %v843, 1
        %v971 = vsel %vm950, %v969, %v970
        %v972 = vrot.slane %v812, 1
        %v973 = vrot.slane %v844, 1
        %v974 = vsel %vm950, %v972, %v973
        %v983 = vld [vmem:[#allocation3] sm:$0xf]
        %v984 = vld [vmem:[#allocation3 + $0x4] sm:$0xf]
        %v985 = vld [vmem:[#allocation3 + $0x8] sm:$0xf]
        %v986 = vld [vmem:[#allocation3 + $0xc] sm:$0xf]
        %v987 = vld [vmem:[#allocation3 + $0x10] sm:$0xf]
        %v988 = vld [vmem:[#allocation3 + $0x14] sm:$0xf]
        %v989 = vld [vmem:[#allocation3 + $0x18] sm:$0xf]
        %v990 = vld [vmem:[#allocation3 + $0x1c] sm:$0xf]
        %v991 = vld [vmem:[#allocation3 + $0x20] sm:$0xf]
        %v992 = vld [vmem:[#allocation3 + $0x24] sm:$0xf]
        %v993 = vld [vmem:[#allocation3 + $0x28] sm:$0xf]
        %v994 = vld [vmem:[#allocation3 + $0x2c] sm:$0xf]
        %v995 = vld [vmem:[#allocation3 + $0x30] sm:$0xf]
        %v996 = vld [vmem:[#allocation3 + $0x34] sm:$0xf]
        %v997 = vld [vmem:[#allocation3 + $0x38] sm:$0xf]
        %v998 = vld [vmem:[#allocation3 + $0x3c] sm:$0xf]
        %v999 = vld [vmem:[#allocation3 + $0x40] sm:$0xf]
        %v1000 = vld [vmem:[#allocation3 + $0x44] sm:$0xf]
        %v1001 = vld [vmem:[#allocation3 + $0x48] sm:$0xf]
        %v1002 = vld [vmem:[#allocation3 + $0x4c] sm:$0xf]
        %v1003 = vld [vmem:[#allocation3 + $0x50] sm:$0xf]
        %v1004 = vld [vmem:[#allocation3 + $0x54] sm:$0xf]
        %v1005 = vld [vmem:[#allocation3 + $0x58] sm:$0xf]
        %v1006 = vld [vmem:[#allocation3 + $0x5c] sm:$0xf]
        %v1007 = vld [vmem:[#allocation3 + $0x60] sm:$0xf]
        %v1008 = vld [vmem:[#allocation3 + $0x64] sm:$0xf]
        %v1009 = vld [vmem:[#allocation3 + $0x68] sm:$0xf]
        %v1010 = vld [vmem:[#allocation3 + $0x6c] sm:$0xf]
        %v1011 = vld [vmem:[#allocation3 + $0x70] sm:$0xf]
        %v1012 = vld [vmem:[#allocation3 + $0x74] sm:$0xf]
        %v1013 = vld [vmem:[#allocation3 + $0x78] sm:$0xf]
        %v1014 = vld [vmem:[#allocation3 + $0x7c] sm:$0xf]
        %v1015 = vld [vmem:[#allocation3 + $0x80] sm:$0xf]
        %v1016 = vld [vmem:[#allocation3 + $0x84] sm:$0xf]
        %v1017 = vld [vmem:[#allocation3 + $0x88] sm:$0xf]
        %v1018 = vld [vmem:[#allocation3 + $0x8c] sm:$0xf]
        %v1019 = vld [vmem:[#allocation3 + $0x90] sm:$0xf]
        %v1020 = vld [vmem:[#allocation3 + $0x94] sm:$0xf]
        %v1021 = vld [vmem:[#allocation3 + $0x98] sm:$0xf]
        %v1022 = vld [vmem:[#allocation3 + $0x9c] sm:$0xf]
        %v1023 = vld [vmem:[#allocation3 + $0xa0] sm:$0xf]
        %v1024 = vld [vmem:[#allocation3 + $0xa4] sm:$0xf]
        %v1025 = vld [vmem:[#allocation3 + $0xa8] sm:$0xf]
        %v1026 = vld [vmem:[#allocation3 + $0xac] sm:$0xf]
        %v1027 = vld [vmem:[#allocation3 + $0xb0] sm:$0xf]
        %v1028 = vld [vmem:[#allocation3 + $0xb4] sm:$0xf]
        %v1029 = vld [vmem:[#allocation3 + $0xb8] sm:$0xf]
        %v1030 = vld [vmem:[#allocation3 + $0xbc] sm:$0xf]
        %s1031 = sadd.s32 %s745, 1
        %s1032 = smul.u32 %s1031, 3
        %s1033 = smul.addr %s1032, 4
        %s1034 = scalar_lea.vmem [#allocation2], %s1033
        %v1035 = vld [vmem:[%s1034] sm:$0xf]
        %v1036 = vld [vmem:[%s1034 + $0x4] sm:$0xf]
        %v1037 = vld [vmem:[%s1034 + $0x8] sm:$0x1]
        %v1038 = vld [vmem:[%s1034 + $0xc] sm:$0xf]
        %v1039 = vld [vmem:[%s1034 + $0x10] sm:$0xf]
        %v1040 = vld [vmem:[%s1034 + $0x14] sm:$0x1]
        %v1041 = vld [vmem:[%s1034 + $0x18] sm:$0xf]
        %v1042 = vld [vmem:[%s1034 + $0x1c] sm:$0xf]
        %v1043 = vld [vmem:[%s1034 + $0x20] sm:$0x1]
        %v1044 = vld [vmem:[%s1034 + $0x24] sm:$0xf]
        %v1045 = vld [vmem:[%s1034 + $0x28] sm:$0xf]
        %v1046 = vld [vmem:[%s1034 + $0x2c] sm:$0x1]
        %v1047 = vld [vmem:[%s1034 + $0x30] sm:$0xf]
        %v1048 = vld [vmem:[%s1034 + $0x34] sm:$0xf]
        %v1049 = vld [vmem:[%s1034 + $0x38] sm:$0x1]
        %v1050 = vld [vmem:[%s1034 + $0x3c] sm:$0xf]
        %v1051 = vld [vmem:[%s1034 + $0x40] sm:$0xf]
        %v1052 = vld [vmem:[%s1034 + $0x44] sm:$0x1]
        %v1053 = vld [vmem:[%s1034 + $0x48] sm:$0xf]
        %v1054 = vld [vmem:[%s1034 + $0x4c] sm:$0xf]
        %v1055 = vld [vmem:[%s1034 + $0x50] sm:$0x1]
        %v1056 = vld [vmem:[%s1034 + $0x54] sm:$0xf]
        %v1057 = vld [vmem:[%s1034 + $0x58] sm:$0xf]
        %v1058 = vld [vmem:[%s1034 + $0x5c] sm:$0x1]
        %v1075 = vunpack.c.l.b16 %v1035
        %v1076 = vunpack.c.l.b16 %v1036
        %v1077 = vunpack.c.l.b16 %v1038
        %v1078 = vunpack.c.l.b16 %v1039
        %v1079 = vunpack.c.l.b16 %v1041
        %v1080 = vunpack.c.l.b16 %v1042
        %v1081 = vunpack.c.l.b16 %v1044
        %v1082 = vunpack.c.l.b16 %v1045
        %v1083 = vunpack.c.l.b16 %v1047
        %v1084 = vunpack.c.l.b16 %v1048
        %v1085 = vunpack.c.l.b16 %v1050
        %v1086 = vunpack.c.l.b16 %v1051
        %v1087 = vunpack.c.l.b16 %v1053
        %v1088 = vunpack.c.l.b16 %v1054
        %v1089 = vunpack.c.l.b16 %v1056
        %v1090 = vunpack.c.l.b16 %v1057
        %v1091 = vpack.c.b16 %v1076, %v1075
        %v1092 = vpack.c.b16 %v1078, %v1077
        %v1093 = vpack.c.b16 %v1080, %v1079
        %v1094 = vpack.c.b16 %v1082, %v1081
        %v1095 = vpack.c.b16 %v1084, %v1083
        %v1096 = vpack.c.b16 %v1086, %v1085
        %v1097 = vpack.c.b16 %v1088, %v1087
        %v1098 = vpack.c.b16 %v1090, %v1089
        %v1115 = vunpack.c.l.b16 %v1037
        %v1116 = vunpack.c.l.b16 %v1040
        %v1117 = vunpack.c.l.b16 %v1043
        %v1118 = vunpack.c.l.b16 %v1046
        %v1119 = vunpack.c.l.b16 %v1049
        %v1120 = vunpack.c.l.b16 %v1052
        %v1121 = vunpack.c.l.b16 %v1055
        %v1122 = vunpack.c.l.b16 %v1058
        %v1123 = vpack.c.b16 %v1115, %v1115
        %v1124 = vpack.c.b16 %v1116, %v1116
        %v1125 = vpack.c.b16 %v1117, %v1117
        %v1126 = vpack.c.b16 %v1118, %v1118
        %v1127 = vpack.c.b16 %v1119, %v1119
        %v1128 = vpack.c.b16 %v1120, %v1120
        %v1129 = vpack.c.b16 %v1121, %v1121
        %v1130 = vpack.c.b16 %v1122, %v1122
        %v1132 = vshrl.u32 %v1091, 16
        %v1134 = vshll.u32 %v1091, 16
        %v1136 = vrot.slane %v1134, 1
        %v1137 = vor.u32 %v1132, %v1136
        %v1139 = vshll.u32 %v1123, 16
        %v1141 = vrot.slane %v1139, 1
        %v1142 = vsel %vm845, %v1137, %v1141
        %v1144 = vshrl.u32 %v1092, 16
        %v1146 = vshll.u32 %v1092, 16
        %v1148 = vrot.slane %v1146, 1
        %v1149 = vor.u32 %v1144, %v1148
        %v1151 = vshll.u32 %v1124, 16
        %v1153 = vrot.slane %v1151, 1
        %v1154 = vsel %vm845, %v1149, %v1153
        %v1156 = vshrl.u32 %v1093, 16
        %v1158 = vshll.u32 %v1093, 16
        %v1160 = vrot.slane %v1158, 1
        %v1161 = vor.u32 %v1156, %v1160
        %v1163 = vshll.u32 %v1125, 16
        %v1165 = vrot.slane %v1163, 1
        %v1166 = vsel %vm845, %v1161, %v1165
        %v1168 = vshrl.u32 %v1094, 16
        %v1170 = vshll.u32 %v1094, 16
        %v1172 = vrot.slane %v1170, 1
        %v1173 = vor.u32 %v1168, %v1172
        %v1175 = vshll.u32 %v1126, 16
        %v1177 = vrot.slane %v1175, 1
        %v1178 = vsel %vm845, %v1173, %v1177
        %v1180 = vshrl.u32 %v1095, 16
        %v1182 = vshll.u32 %v1095, 16
        %v1184 = vrot.slane %v1182, 1
        %v1185 = vor.u32 %v1180, %v1184
        %v1187 = vshll.u32 %v1127, 16
        %v1189 = vrot.slane %v1187, 1
        %v1190 = vsel %vm845, %v1185, %v1189
        %v1192 = vshrl.u32 %v1096, 16
        %v1194 = vshll.u32 %v1096, 16
        %v1196 = vrot.slane %v1194, 1
        %v1197 = vor.u32 %v1192, %v1196
        %v1199 = vshll.u32 %v1128, 16
        %v1201 = vrot.slane %v1199, 1
        %v1202 = vsel %vm845, %v1197, %v1201
        %v1204 = vshrl.u32 %v1097, 16
        %v1206 = vshll.u32 %v1097, 16
        %v1208 = vrot.slane %v1206, 1
        %v1209 = vor.u32 %v1204, %v1208
        %v1211 = vshll.u32 %v1129, 16
        %v1213 = vrot.slane %v1211, 1
        %v1214 = vsel %vm845, %v1209, %v1213
        %v1216 = vshrl.u32 %v1098, 16
        %v1218 = vshll.u32 %v1098, 16
        %v1220 = vrot.slane %v1218, 1
        %v1221 = vor.u32 %v1216, %v1220
        %v1223 = vshll.u32 %v1130, 16
        %v1225 = vrot.slane %v1223, 1
        %v1226 = vsel %vm845, %v1221, %v1225
        %v1235 = vrot.slane %v1091, 1
        %v1236 = vrot.slane %v1123, 1
        %v1237 = vsel %vm950, %v1235, %v1236
        %v1238 = vrot.slane %v1092, 1
        %v1239 = vrot.slane %v1124, 1
        %v1240 = vsel %vm950, %v1238, %v1239
        %v1241 = vrot.slane %v1093, 1
        %v1242 = vrot.slane %v1125, 1
        %v1243 = vsel %vm950, %v1241, %v1242
        %v1244 = vrot.slane %v1094, 1
        %v1245 = vrot.slane %v1126, 1
        %v1246 = vsel %vm950, %v1244, %v1245
        %v1247 = vrot.slane %v1095, 1
        %v1248 = vrot.slane %v1127, 1
        %v1249 = vsel %vm950, %v1247, %v1248
        %v1250 = vrot.slane %v1096, 1
        %v1251 = vrot.slane %v1128, 1
        %v1252 = vsel %vm950, %v1250, %v1251
        %v1253 = vrot.slane %v1097, 1
        %v1254 = vrot.slane %v1129, 1
        %v1255 = vsel %vm950, %v1253, %v1254
        %v1256 = vrot.slane %v1098, 1
        %v1257 = vrot.slane %v1130, 1
        %v1258 = vsel %vm950, %v1256, %v1257
        %s1267 = scalar_lea.vmem [#allocation3], 192
        %v1268 = vld [vmem:[%s1267] sm:$0xf]
        %v1269 = vld [vmem:[%s1267 + $0x4] sm:$0xf]
        %v1270 = vld [vmem:[%s1267 + $0x8] sm:$0xf]
        %v1271 = vld [vmem:[%s1267 + $0xc] sm:$0xf]
        %v1272 = vld [vmem:[%s1267 + $0x10] sm:$0xf]
        %v1273 = vld [vmem:[%s1267 + $0x14] sm:$0xf]
        %v1274 = vld [vmem:[%s1267 + $0x18] sm:$0xf]
        %v1275 = vld [vmem:[%s1267 + $0x1c] sm:$0xf]
        %v1276 = vld [vmem:[%s1267 + $0x20] sm:$0xf]
        %v1277 = vld [vmem:[%s1267 + $0x24] sm:$0xf]
        %v1278 = vld [vmem:[%s1267 + $0x28] sm:$0xf]
        %v1279 = vld [vmem:[%s1267 + $0x2c] sm:$0xf]
        %v1280 = vld [vmem:[%s1267 + $0x30] sm:$0xf]
        %v1281 = vld [vmem:[%s1267 + $0x34] sm:$0xf]
        %v1282 = vld [vmem:[%s1267 + $0x38] sm:$0xf]
        %v1283 = vld [vmem:[%s1267 + $0x3c] sm:$0xf]
        %v1284 = vld [vmem:[%s1267 + $0x40] sm:$0xf]
        %v1285 = vld [vmem:[%s1267 + $0x44] sm:$0xf]
        %v1286 = vld [vmem:[%s1267 + $0x48] sm:$0xf]
        %v1287 = vld [vmem:[%s1267 + $0x4c] sm:$0xf]
        %v1288 = vld [vmem:[%s1267 + $0x50] sm:$0xf]
        %v1289 = vld [vmem:[%s1267 + $0x54] sm:$0xf]
        %v1290 = vld [vmem:[%s1267 + $0x58] sm:$0xf]
        %v1291 = vld [vmem:[%s1267 + $0x5c] sm:$0xf]
        %v1292 = vld [vmem:[%s1267 + $0x60] sm:$0xf]
        %v1293 = vld [vmem:[%s1267 + $0x64] sm:$0xf]
        %v1294 = vld [vmem:[%s1267 + $0x68] sm:$0xf]
        %v1295 = vld [vmem:[%s1267 + $0x6c] sm:$0xf]
        %v1296 = vld [vmem:[%s1267 + $0x70] sm:$0xf]
        %v1297 = vld [vmem:[%s1267 + $0x74] sm:$0xf]
        %v1298 = vld [vmem:[%s1267 + $0x78] sm:$0xf]
        %v1299 = vld [vmem:[%s1267 + $0x7c] sm:$0xf]
        %v1300 = vld [vmem:[%s1267 + $0x80] sm:$0xf]
        %v1301 = vld [vmem:[%s1267 + $0x84] sm:$0xf]
        %v1302 = vld [vmem:[%s1267 + $0x88] sm:$0xf]
        %v1303 = vld [vmem:[%s1267 + $0x8c] sm:$0xf]
        %v1304 = vld [vmem:[%s1267 + $0x90] sm:$0xf]
        %v1305 = vld [vmem:[%s1267 + $0x94] sm:$0xf]
        %v1306 = vld [vmem:[%s1267 + $0x98] sm:$0xf]
        %v1307 = vld [vmem:[%s1267 + $0x9c] sm:$0xf]
        %v1308 = vld [vmem:[%s1267 + $0xa0] sm:$0xf]
        %v1309 = vld [vmem:[%s1267 + $0xa4] sm:$0xf]
        %v1310 = vld [vmem:[%s1267 + $0xa8] sm:$0xf]
        %v1311 = vld [vmem:[%s1267 + $0xac] sm:$0xf]
        %v1312 = vld [vmem:[%s1267 + $0xb0] sm:$0xf]
        %v1313 = vld [vmem:[%s1267 + $0xb4] sm:$0xf]
        %v1314 = vld [vmem:[%s1267 + $0xb8] sm:$0xf]
        %v1315 = vld [vmem:[%s1267 + $0xbc] sm:$0xf]
        %v1364 = vunpack.c.l.b16 %v1268
        %v1365 = vunpack.c.l.b16 %v1269
        %v1366 = vunpack.c.l.b16 %v1270
        %v1367 = vunpack.c.l.b16 %v1271
        %v1368 = vunpack.c.l.b16 %v1272
        %v1369 = vunpack.c.l.b16 %v1273
        %v1370 = vunpack.c.l.b16 %v1274
        %v1371 = vunpack.c.l.b16 %v1275
        %v1372 = vunpack.c.l.b16 %v1276
        %v1373 = vunpack.c.l.b16 %v1277
        %v1374 = vunpack.c.l.b16 %v1278
        %v1375 = vunpack.c.l.b16 %v1279
        %v1376 = vunpack.c.l.b16 %v1280
        %v1377 = vunpack.c.l.b16 %v1281
        %v1378 = vunpack.c.l.b16 %v1282
        %v1379 = vunpack.c.l.b16 %v1283
        %v1380 = vunpack.c.l.b16 %v1284
        %v1381 = vunpack.c.l.b16 %v1285
        %v1382 = vunpack.c.l.b16 %v1286
        %v1383 = vunpack.c.l.b16 %v1287
        %v1384 = vunpack.c.l.b16 %v1288
        %v1385 = vunpack.c.l.b16 %v1289
        %v1386 = vunpack.c.l.b16 %v1290
        %v1387 = vunpack.c.l.b16 %v1291
        %v1388 = vunpack.c.l.b16 %v1292
        %v1389 = vunpack.c.l.b16 %v1293
        %v1390 = vunpack.c.l.b16 %v1294
        %v1391 = vunpack.c.l.b16 %v1295
        %v1392 = vunpack.c.l.b16 %v1296
        %v1393 = vunpack.c.l.b16 %v1297
        %v1394 = vunpack.c.l.b16 %v1298
        %v1395 = vunpack.c.l.b16 %v1299
        %v1396 = vunpack.c.l.b16 %v1300
        %v1397 = vunpack.c.l.b16 %v1301
        %v1398 = vunpack.c.l.b16 %v1302
        %v1399 = vunpack.c.l.b16 %v1303
        %v1400 = vunpack.c.l.b16 %v1304
        %v1401 = vunpack.c.l.b16 %v1305
        %v1402 = vunpack.c.l.b16 %v1306
        %v1403 = vunpack.c.l.b16 %v1307
        %v1404 = vunpack.c.l.b16 %v1308
        %v1405 = vunpack.c.l.b16 %v1309
        %v1406 = vunpack.c.l.b16 %v1310
        %v1407 = vunpack.c.l.b16 %v1311
        %v1408 = vunpack.c.l.b16 %v1312
        %v1409 = vunpack.c.l.b16 %v1313
        %v1410 = vunpack.c.l.b16 %v1314
        %v1411 = vunpack.c.l.b16 %v1315
        %v1412 = vpack.c.b16 %v1365, %v1364
        %v1413 = vpack.c.b16 %v1367, %v1366
        %v1414 = vpack.c.b16 %v1369, %v1368
        %v1415 = vpack.c.b16 %v1371, %v1370
        %v1416 = vpack.c.b16 %v1373, %v1372
        %v1417 = vpack.c.b16 %v1375, %v1374
        %v1418 = vpack.c.b16 %v1377, %v1376
        %v1419 = vpack.c.b16 %v1379, %v1378
        %v1420 = vpack.c.b16 %v1381, %v1380
        %v1421 = vpack.c.b16 %v1383, %v1382
        %v1422 = vpack.c.b16 %v1385, %v1384
        %v1423 = vpack.c.b16 %v1387, %v1386
        %v1424 = vpack.c.b16 %v1389, %v1388
        %v1425 = vpack.c.b16 %v1391, %v1390
        %v1426 = vpack.c.b16 %v1393, %v1392
        %v1427 = vpack.c.b16 %v1395, %v1394
        %v1428 = vpack.c.b16 %v1397, %v1396
        %v1429 = vpack.c.b16 %v1399, %v1398
        %v1430 = vpack.c.b16 %v1401, %v1400
        %v1431 = vpack.c.b16 %v1403, %v1402
        %v1432 = vpack.c.b16 %v1405, %v1404
        %v1433 = vpack.c.b16 %v1407, %v1406
        %v1434 = vpack.c.b16 %v1409, %v1408
        %v1435 = vpack.c.b16 %v1411, %v1410
        %1460 = vmatpush.bf16.msra.mxu0 %v1419
        %1461 = vmatpush.bf16.msra.mxu0 %v1418
        %1462 = vmatpush.bf16.msra.mxu0 %v1417
        %1463 = vmatpush.bf16.msra.mxu0 %v1416
        %1464 = vmatpush.bf16.msra.mxu0 %v1415
        %1465 = vmatpush.bf16.msra.mxu0 %v1414
        %1466 = vmatpush.bf16.msra.mxu0 %v1413
        %1467 = vmatpush.bf16.msra.mxu0 %v1412
        %1468 = vmatmul.bf16.gmra.mxu0 %v1091
        %v1469 = vpop.f32.mrf.mxu0
        %v1470 = vadd.f32 0.0, %v1469
        %v1471 = vpop.f32.mrf.mxu0
        %v1472 = vadd.f32 0.0, %v1471
        %1473 = vmatmul.bf16.gmra.mxu0 %v1092
        %v1474 = vpop.f32.mrf.mxu0
        %v1475 = vadd.f32 0.0, %v1474
        %v1476 = vpop.f32.mrf.mxu0
        %v1477 = vadd.f32 0.0, %v1476
        %1478 = vmatmul.bf16.gmra.mxu0 %v1093
        %v1479 = vpop.f32.mrf.mxu0
        %v1480 = vadd.f32 0.0, %v1479
        %v1481 = vpop.f32.mrf.mxu0
        %v1482 = vadd.f32 0.0, %v1481
        %1483 = vmatmul.bf16.gmra.mxu0 %v1094
        %v1484 = vpop.f32.mrf.mxu0
        %v1485 = vadd.f32 0.0, %v1484
        %v1486 = vpop.f32.mrf.mxu0
        %v1487 = vadd.f32 0.0, %v1486
        %1488 = vmatmul.bf16.gmra.mxu0 %v1095
        %v1489 = vpop.f32.mrf.mxu0
        %v1490 = vadd.f32 0.0, %v1489
        %v1491 = vpop.f32.mrf.mxu0
        %v1492 = vadd.f32 0.0, %v1491
        %1493 = vmatmul.bf16.gmra.mxu0 %v1096
        %v1494 = vpop.f32.mrf.mxu0
        %v1495 = vadd.f32 0.0, %v1494
        %v1496 = vpop.f32.mrf.mxu0
        %v1497 = vadd.f32 0.0, %v1496
        %1498 = vmatmul.bf16.gmra.mxu0 %v1097
        %v1499 = vpop.f32.mrf.mxu0
        %v1500 = vadd.f32 0.0, %v1499
        %v1501 = vpop.f32.mrf.mxu0
        %v1502 = vadd.f32 0.0, %v1501
        %1503 = vmatmul.bf16.gmra.mxu0 %v1098
        %v1504 = vpop.f32.mrf.mxu0
        %v1505 = vadd.f32 0.0, %v1504
        %v1506 = vpop.f32.mrf.mxu0
        %v1507 = vadd.f32 0.0, %v1506
        %1508 = vdwg.mxu0
        %1509 = vmatpush.bf16.msra.mxu0 %v1427
        %1510 = vmatpush.bf16.msra.mxu0 %v1426
        %1511 = vmatpush.bf16.msra.mxu0 %v1425
        %1512 = vmatpush.bf16.msra.mxu0 %v1424
        %1513 = vmatpush.bf16.msra.mxu0 %v1423
        %1514 = vmatpush.bf16.msra.mxu0 %v1422
        %1515 = vmatpush.bf16.msra.mxu0 %v1421
        %1516 = vmatpush.bf16.msra.mxu0 %v1420
        %1517 = vmatmul.bf16.gmra.mxu0 %v1142
        %v1518 = vpop.f32.mrf.mxu0
        %v1519 = vadd.f32 %v1470, %v1518
        %v1520 = vpop.f32.mrf.mxu0
        %v1521 = vadd.f32 %v1472, %v1520
        %1522 = vmatmul.bf16.gmra.mxu0 %v1154
        %v1523 = vpop.f32.mrf.mxu0
        %v1524 = vadd.f32 %v1475, %v1523
        %v1525 = vpop.f32.mrf.mxu0
        %v1526 = vadd.f32 %v1477, %v1525
        %1527 = vmatmul.bf16.gmra.mxu0 %v1166
        %v1528 = vpop.f32.mrf.mxu0
        %v1529 = vadd.f32 %v1480, %v1528
        %v1530 = vpop.f32.mrf.mxu0
        %v1531 = vadd.f32 %v1482, %v1530
        %1532 = vmatmul.bf16.gmra.mxu0 %v1178
        %v1533 = vpop.f32.mrf.mxu0
        %v1534 = vadd.f32 %v1485, %v1533
        %v1535 = vpop.f32.mrf.mxu0
        %v1536 = vadd.f32 %v1487, %v1535
        %1537 = vmatmul.bf16.gmra.mxu0 %v1190
        %v1538 = vpop.f32.mrf.mxu0
        %v1539 = vadd.f32 %v1490, %v1538
        %v1540 = vpop.f32.mrf.mxu0
        %v1541 = vadd.f32 %v1492, %v1540
        %1542 = vmatmul.bf16.gmra.mxu0 %v1202
        %v1543 = vpop.f32.mrf.mxu0
        %v1544 = vadd.f32 %v1495, %v1543
        %v1545 = vpop.f32.mrf.mxu0
        %v1546 = vadd.f32 %v1497, %v1545
        %1547 = vmatmul.bf16.gmra.mxu0 %v1214
        %v1548 = vpop.f32.mrf.mxu0
        %v1549 = vadd.f32 %v1500, %v1548
        %v1550 = vpop.f32.mrf.mxu0
        %v1551 = vadd.f32 %v1502, %v1550
        %1552 = vmatmul.bf16.gmra.mxu0 %v1226
        %v1553 = vpop.f32.mrf.mxu0
        %v1554 = vadd.f32 %v1505, %v1553
        %v1555 = vpop.f32.mrf.mxu0
        %v1556 = vadd.f32 %v1507, %v1555
        %1557 = vdwg.mxu0
        %1558 = vmatpush.bf16.msra.mxu0 %v1435
        %1559 = vmatpush.bf16.msra.mxu0 %v1434
        %1560 = vmatpush.bf16.msra.mxu0 %v1433
        %1561 = vmatpush.bf16.msra.mxu0 %v1432
        %1562 = vmatpush.bf16.msra.mxu0 %v1431
        %1563 = vmatpush.bf16.msra.mxu0 %v1430
        %1564 = vmatpush.bf16.msra.mxu0 %v1429
        %1565 = vmatpush.bf16.msra.mxu0 %v1428
        %1566 = vmatmul.bf16.gmra.mxu0 %v1237
        %v1567 = vpop.f32.mrf.mxu0
        %v1568 = vadd.f32 %v1519, %v1567
        %v1569 = vpop.f32.mrf.mxu0
        %v1570 = vadd.f32 %v1521, %v1569
        %1571 = vmatmul.bf16.gmra.mxu0 %v1240
        %v1572 = vpop.f32.mrf.mxu0
        %v1573 = vadd.f32 %v1524, %v1572
        %v1574 = vpop.f32.mrf.mxu0
        %v1575 = vadd.f32 %v1526, %v1574
        %1576 = vmatmul.bf16.gmra.mxu0 %v1243
        %v1577 = vpop.f32.mrf.mxu0
        %v1578 = vadd.f32 %v1529, %v1577
        %v1579 = vpop.f32.mrf.mxu0
        %v1580 = vadd.f32 %v1531, %v1579
        %1581 = vmatmul.bf16.gmra.mxu0 %v1246
        %v1582 = vpop.f32.mrf.mxu0
        %v1583 = vadd.f32 %v1534, %v1582
        %v1584 = vpop.f32.mrf.mxu0
        %v1585 = vadd.f32 %v1536, %v1584
        %1586 = vmatmul.bf16.gmra.mxu0 %v1249
        %v1587 = vpop.f32.mrf.mxu0
        %v1588 = vadd.f32 %v1539, %v1587
        %v1589 = vpop.f32.mrf.mxu0
        %v1590 = vadd.f32 %v1541, %v1589
        %1591 = vmatmul.bf16.gmra.mxu0 %v1252
        %v1592 = vpop.f32.mrf.mxu0
        %v1593 = vadd.f32 %v1544, %v1592
        %v1594 = vpop.f32.mrf.mxu0
        %v1595 = vadd.f32 %v1546, %v1594
        %1596 = vmatmul.bf16.gmra.mxu0 %v1255
        %v1597 = vpop.f32.mrf.mxu0
        %v1598 = vadd.f32 %v1549, %v1597
        %v1599 = vpop.f32.mrf.mxu0
        %v1600 = vadd.f32 %v1551, %v1599
        %1601 = vmatmul.bf16.gmra.mxu0 %v1258
        %v1602 = vpop.f32.mrf.mxu0
        %v1603 = vadd.f32 %v1554, %v1602
        %v1604 = vpop.f32.mrf.mxu0
        %v1605 = vadd.f32 %v1556, %v1604
        %1606 = vdwg.mxu0
        %v1655 = vunpack.c.l.b16 %v983
        %v1656 = vunpack.c.l.b16 %v984
        %v1657 = vunpack.c.l.b16 %v985
        %v1658 = vunpack.c.l.b16 %v986
        %v1659 = vunpack.c.l.b16 %v987
        %v1660 = vunpack.c.l.b16 %v988
        %v1661 = vunpack.c.l.b16 %v989
        %v1662 = vunpack.c.l.b16 %v990
        %v1663 = vunpack.c.l.b16 %v991
        %v1664 = vunpack.c.l.b16 %v992
        %v1665 = vunpack.c.l.b16 %v993
        %v1666 = vunpack.c.l.b16 %v994
        %v1667 = vunpack.c.l.b16 %v995
        %v1668 = vunpack.c.l.b16 %v996
        %v1669 = vunpack.c.l.b16 %v997
        %v1670 = vunpack.c.l.b16 %v998
        %v1671 = vunpack.c.l.b16 %v999
        %v1672 = vunpack.c.l.b16 %v1000
        %v1673 = vunpack.c.l.b16 %v1001
        %v1674 = vunpack.c.l.b16 %v1002
        %v1675 = vunpack.c.l.b16 %v1003
        %v1676 = vunpack.c.l.b16 %v1004
        %v1677 = vunpack.c.l.b16 %v1005
        %v1678 = vunpack.c.l.b16 %v1006
        %v1679 = vunpack.c.l.b16 %v1007
        %v1680 = vunpack.c.l.b16 %v1008
        %v1681 = vunpack.c.l.b16 %v1009
        %v1682 = vunpack.c.l.b16 %v1010
        %v1683 = vunpack.c.l.b16 %v1011
        %v1684 = vunpack.c.l.b16 %v1012
        %v1685 = vunpack.c.l.b16 %v1013
        %v1686 = vunpack.c.l.b16 %v1014
        %v1687 = vunpack.c.l.b16 %v1015
        %v1688 = vunpack.c.l.b16 %v1016
        %v1689 = vunpack.c.l.b16 %v1017
        %v1690 = vunpack.c.l.b16 %v1018
        %v1691 = vunpack.c.l.b16 %v1019
        %v1692 = vunpack.c.l.b16 %v1020
        %v1693 = vunpack.c.l.b16 %v1021
        %v1694 = vunpack.c.l.b16 %v1022
        %v1695 = vunpack.c.l.b16 %v1023
        %v1696 = vunpack.c.l.b16 %v1024
        %v1697 = vunpack.c.l.b16 %v1025
        %v1698 = vunpack.c.l.b16 %v1026
        %v1699 = vunpack.c.l.b16 %v1027
        %v1700 = vunpack.c.l.b16 %v1028
        %v1701 = vunpack.c.l.b16 %v1029
        %v1702 = vunpack.c.l.b16 %v1030
        %v1703 = vpack.c.b16 %v1656, %v1655
        %v1704 = vpack.c.b16 %v1658, %v1657
        %v1705 = vpack.c.b16 %v1660, %v1659
        %v1706 = vpack.c.b16 %v1662, %v1661
        %v1707 = vpack.c.b16 %v1664, %v1663
        %v1708 = vpack.c.b16 %v1666, %v1665
        %v1709 = vpack.c.b16 %v1668, %v1667
        %v1710 = vpack.c.b16 %v1670, %v1669
        %v1711 = vpack.c.b16 %v1672, %v1671
        %v1712 = vpack.c.b16 %v1674, %v1673
        %v1713 = vpack.c.b16 %v1676, %v1675
        %v1714 = vpack.c.b16 %v1678, %v1677
        %v1715 = vpack.c.b16 %v1680, %v1679
        %v1716 = vpack.c.b16 %v1682, %v1681
        %v1717 = vpack.c.b16 %v1684, %v1683
        %v1718 = vpack.c.b16 %v1686, %v1685
        %v1719 = vpack.c.b16 %v1688, %v1687
        %v1720 = vpack.c.b16 %v1690, %v1689
        %v1721 = vpack.c.b16 %v1692, %v1691
        %v1722 = vpack.c.b16 %v1694, %v1693
        %v1723 = vpack.c.b16 %v1696, %v1695
        %v1724 = vpack.c.b16 %v1698, %v1697
        %v1725 = vpack.c.b16 %v1700, %v1699
        %v1726 = vpack.c.b16 %v1702, %v1701
        %1751 = vmatpush.bf16.msra.mxu0 %v1710
        %1752 = vmatpush.bf16.msra.mxu0 %v1709
        %1753 = vmatpush.bf16.msra.mxu0 %v1708
        %1754 = vmatpush.bf16.msra.mxu0 %v1707
        %1755 = vmatpush.bf16.msra.mxu0 %v1706
        %1756 = vmatpush.bf16.msra.mxu0 %v1705
        %1757 = vmatpush.bf16.msra.mxu0 %v1704
        %1758 = vmatpush.bf16.msra.mxu0 %v1703
        %1759 = vmatmul.bf16.gmra.mxu0 %v805
        %v1760 = vpop.f32.mrf.mxu0
        %v1761 = vadd.f32 %v1568, %v1760
        %v1762 = vpop.f32.mrf.mxu0
        %v1763 = vadd.f32 %v1570, %v1762
        %1764 = vmatmul.bf16.gmra.mxu0 %v806
        %v1765 = vpop.f32.mrf.mxu0
        %v1766 = vadd.f32 %v1573, %v1765
        %v1767 = vpop.f32.mrf.mxu0
        %v1768 = vadd.f32 %v1575, %v1767
        %1769 = vmatmul.bf16.gmra.mxu0 %v807
        %v1770 = vpop.f32.mrf.mxu0
        %v1771 = vadd.f32 %v1578, %v1770
        %v1772 = vpop.f32.mrf.mxu0
        %v1773 = vadd.f32 %v1580, %v1772
        %1774 = vmatmul.bf16.gmra.mxu0 %v808
        %v1775 = vpop.f32.mrf.mxu0
        %v1776 = vadd.f32 %v1583, %v1775
        %v1777 = vpop.f32.mrf.mxu0
        %v1778 = vadd.f32 %v1585, %v1777
        %1779 = vmatmul.bf16.gmra.mxu0 %v809
        %v1780 = vpop.f32.mrf.mxu0
        %v1781 = vadd.f32 %v1588, %v1780
        %v1782 = vpop.f32.mrf.mxu0
        %v1783 = vadd.f32 %v1590, %v1782
        %1784 = vmatmul.bf16.gmra.mxu0 %v810
        %v1785 = vpop.f32.mrf.mxu0
        %v1786 = vadd.f32 %v1593, %v1785
        %v1787 = vpop.f32.mrf.mxu0
        %v1788 = vadd.f32 %v1595, %v1787
        %1789 = vmatmul.bf16.gmra.mxu0 %v811
        %v1790 = vpop.f32.mrf.mxu0
        %v1791 = vadd.f32 %v1598, %v1790
        %v1792 = vpop.f32.mrf.mxu0
        %v1793 = vadd.f32 %v1600, %v1792
        %1794 = vmatmul.bf16.gmra.mxu0 %v812
        %v1795 = vpop.f32.mrf.mxu0
        %v1796 = vadd.f32 %v1603, %v1795
        %v1797 = vpop.f32.mrf.mxu0
        %v1798 = vadd.f32 %v1605, %v1797
        %1799 = vdwg.mxu0
        %1800 = vmatpush.bf16.msra.mxu0 %v1718
        %1801 = vmatpush.bf16.msra.mxu0 %v1717
        %1802 = vmatpush.bf16.msra.mxu0 %v1716
        %1803 = vmatpush.bf16.msra.mxu0 %v1715
        %1804 = vmatpush.bf16.msra.mxu0 %v1714
        %1805 = vmatpush.bf16.msra.mxu0 %v1713
        %1806 = vmatpush.bf16.msra.mxu0 %v1712
        %1807 = vmatpush.bf16.msra.mxu0 %v1711
        %1808 = vmatmul.bf16.gmra.mxu0 %v857
        %v1809 = vpop.f32.mrf.mxu0
        %v1810 = vadd.f32 %v1761, %v1809
        %v1811 = vpop.f32.mrf.mxu0
        %v1812 = vadd.f32 %v1763, %v1811
        %1813 = vmatmul.bf16.gmra.mxu0 %v869
        %v1814 = vpop.f32.mrf.mxu0
        %v1815 = vadd.f32 %v1766, %v1814
        %v1816 = vpop.f32.mrf.mxu0
        %v1817 = vadd.f32 %v1768, %v1816
        %1818 = vmatmul.bf16.gmra.mxu0 %v881
        %v1819 = vpop.f32.mrf.mxu0
        %v1820 = vadd.f32 %v1771, %v1819
        %v1821 = vpop.f32.mrf.mxu0
        %v1822 = vadd.f32 %v1773, %v1821
        %1823 = vmatmul.bf16.gmra.mxu0 %v893
        %v1824 = vpop.f32.mrf.mxu0
        %v1825 = vadd.f32 %v1776, %v1824
        %v1826 = vpop.f32.mrf.mxu0
        %v1827 = vadd.f32 %v1778, %v1826
        %1828 = vmatmul.bf16.gmra.mxu0 %v905
        %v1829 = vpop.f32.mrf.mxu0
        %v1830 = vadd.f32 %v1781, %v1829
        %v1831 = vpop.f32.mrf.mxu0
        %v1832 = vadd.f32 %v1783, %v1831
        %1833 = vmatmul.bf16.gmra.mxu0 %v917
        %v1834 = vpop.f32.mrf.mxu0
        %v1835 = vadd.f32 %v1786, %v1834
        %v1836 = vpop.f32.mrf.mxu0
        %v1837 = vadd.f32 %v1788, %v1836
        %1838 = vmatmul.bf16.gmra.mxu0 %v929
        %v1839 = vpop.f32.mrf.mxu0
        %v1840 = vadd.f32 %v1791, %v1839
        %v1841 = vpop.f32.mrf.mxu0
        %v1842 = vadd.f32 %v1793, %v1841
        %1843 = vmatmul.bf16.gmra.mxu0 %v941
        %v1844 = vpop.f32.mrf.mxu0
        %v1845 = vadd.f32 %v1796, %v1844
        %v1846 = vpop.f32.mrf.mxu0
        %v1847 = vadd.f32 %v1798, %v1846
        %1848 = vdwg.mxu0
        %1849 = vmatpush.bf16.msra.mxu0 %v1726
        %1850 = vmatpush.bf16.msra.mxu0 %v1725
        %1851 = vmatpush.bf16.msra.mxu0 %v1724
        %1852 = vmatpush.bf16.msra.mxu0 %v1723
        %1853 = vmatpush.bf16.msra.mxu0 %v1722
        %1854 = vmatpush.bf16.msra.mxu0 %v1721
        %1855 = vmatpush.bf16.msra.mxu0 %v1720
        %1856 = vmatpush.bf16.msra.mxu0 %v1719
        %1857 = vmatmul.bf16.gmra.mxu0 %v953
        %v1858 = vpop.f32.mrf.mxu0
        %v1859 = vadd.f32 %v1810, %v1858
        %v1860 = vpop.f32.mrf.mxu0
        %v1861 = vadd.f32 %v1812, %v1860
        %1862 = vmatmul.bf16.gmra.mxu0 %v956
        %v1863 = vpop.f32.mrf.mxu0
        %v1864 = vadd.f32 %v1815, %v1863
        %v1865 = vpop.f32.mrf.mxu0
        %v1866 = vadd.f32 %v1817, %v1865
        %1867 = vmatmul.bf16.gmra.mxu0 %v959
        %v1868 = vpop.f32.mrf.mxu0
        %v1869 = vadd.f32 %v1820, %v1868
        %v1870 = vpop.f32.mrf.mxu0
        %v1871 = vadd.f32 %v1822, %v1870
        %1872 = vmatmul.bf16.gmra.mxu0 %v962
        %v1873 = vpop.f32.mrf.mxu0
        %v1874 = vadd.f32 %v1825, %v1873
        %v1875 = vpop.f32.mrf.mxu0
        %v1876 = vadd.f32 %v1827, %v1875
        %1877 = vmatmul.bf16.gmra.mxu0 %v965
        %v1878 = vpop.f32.mrf.mxu0
        %v1879 = vadd.f32 %v1830, %v1878
        %v1880 = vpop.f32.mrf.mxu0
        %v1881 = vadd.f32 %v1832, %v1880
        %1882 = vmatmul.bf16.gmra.mxu0 %v968
        %v1883 = vpop.f32.mrf.mxu0
        %v1884 = vadd.f32 %v1835, %v1883
        %v1885 = vpop.f32.mrf.mxu0
        %v1886 = vadd.f32 %v1837, %v1885
        %1887 = vmatmul.bf16.gmra.mxu0 %v971
        %v1888 = vpop.f32.mrf.mxu0
        %v1889 = vadd.f32 %v1840, %v1888
        %v1890 = vpop.f32.mrf.mxu0
        %v1891 = vadd.f32 %v1842, %v1890
        %1892 = vmatmul.bf16.gmra.mxu0 %v974
        %v1893 = vpop.f32.mrf.mxu0
        %v1894 = vadd.f32 %v1845, %v1893
        %v1895 = vpop.f32.mrf.mxu0
        %v1896 = vadd.f32 %v1847, %v1895
        %1897 = vdwg.mxu0
        %s1898 = sadd.s32 %s745, 2
        %s1899 = smul.u32 %s1898, 3
        %s1900 = smul.addr %s1899, 4
        %s1901 = scalar_lea.vmem [#allocation2], %s1900
        %v1902 = vld [vmem:[%s1901] sm:$0xf]
        %v1903 = vld [vmem:[%s1901 + $0x4] sm:$0xf]
        %v1904 = vld [vmem:[%s1901 + $0x8] sm:$0x1]
        %v1905 = vld [vmem:[%s1901 + $0xc] sm:$0xf]
        %v1906 = vld [vmem:[%s1901 + $0x10] sm:$0xf]
        %v1907 = vld [vmem:[%s1901 + $0x14] sm:$0x1]
        %v1908 = vld [vmem:[%s1901 + $0x18] sm:$0xf]
        %v1909 = vld [vmem:[%s1901 + $0x1c] sm:$0xf]
        %v1910 = vld [vmem:[%s1901 + $0x20] sm:$0x1]
        %v1911 = vld [vmem:[%s1901 + $0x24] sm:$0xf]
        %v1912 = vld [vmem:[%s1901 + $0x28] sm:$0xf]
        %v1913 = vld [vmem:[%s1901 + $0x2c] sm:$0x1]
        %v1914 = vld [vmem:[%s1901 + $0x30] sm:$0xf]
        %v1915 = vld [vmem:[%s1901 + $0x34] sm:$0xf]
        %v1916 = vld [vmem:[%s1901 + $0x38] sm:$0x1]
        %v1917 = vld [vmem:[%s1901 + $0x3c] sm:$0xf]
        %v1918 = vld [vmem:[%s1901 + $0x40] sm:$0xf]
        %v1919 = vld [vmem:[%s1901 + $0x44] sm:$0x1]
        %v1920 = vld [vmem:[%s1901 + $0x48] sm:$0xf]
        %v1921 = vld [vmem:[%s1901 + $0x4c] sm:$0xf]
        %v1922 = vld [vmem:[%s1901 + $0x50] sm:$0x1]
        %v1923 = vld [vmem:[%s1901 + $0x54] sm:$0xf]
        %v1924 = vld [vmem:[%s1901 + $0x58] sm:$0xf]
        %v1925 = vld [vmem:[%s1901 + $0x5c] sm:$0x1]
        %v1942 = vunpack.c.l.b16 %v1902
        %v1943 = vunpack.c.l.b16 %v1903
        %v1944 = vunpack.c.l.b16 %v1905
        %v1945 = vunpack.c.l.b16 %v1906
        %v1946 = vunpack.c.l.b16 %v1908
        %v1947 = vunpack.c.l.b16 %v1909
        %v1948 = vunpack.c.l.b16 %v1911
        %v1949 = vunpack.c.l.b16 %v1912
        %v1950 = vunpack.c.l.b16 %v1914
        %v1951 = vunpack.c.l.b16 %v1915
        %v1952 = vunpack.c.l.b16 %v1917
        %v1953 = vunpack.c.l.b16 %v1918
        %v1954 = vunpack.c.l.b16 %v1920
        %v1955 = vunpack.c.l.b16 %v1921
        %v1956 = vunpack.c.l.b16 %v1923
        %v1957 = vunpack.c.l.b16 %v1924
        %v1958 = vpack.c.b16 %v1943, %v1942
        %v1959 = vpack.c.b16 %v1945, %v1944
        %v1960 = vpack.c.b16 %v1947, %v1946
        %v1961 = vpack.c.b16 %v1949, %v1948
        %v1962 = vpack.c.b16 %v1951, %v1950
        %v1963 = vpack.c.b16 %v1953, %v1952
        %v1964 = vpack.c.b16 %v1955, %v1954
        %v1965 = vpack.c.b16 %v1957, %v1956
        %v1982 = vunpack.c.l.b16 %v1904
        %v1983 = vunpack.c.l.b16 %v1907
        %v1984 = vunpack.c.l.b16 %v1910
        %v1985 = vunpack.c.l.b16 %v1913
        %v1986 = vunpack.c.l.b16 %v1916
        %v1987 = vunpack.c.l.b16 %v1919
        %v1988 = vunpack.c.l.b16 %v1922
        %v1989 = vunpack.c.l.b16 %v1925
        %v1990 = vpack.c.b16 %v1982, %v1982
        %v1991 = vpack.c.b16 %v1983, %v1983
        %v1992 = vpack.c.b16 %v1984, %v1984
        %v1993 = vpack.c.b16 %v1985, %v1985
        %v1994 = vpack.c.b16 %v1986, %v1986
        %v1995 = vpack.c.b16 %v1987, %v1987
        %v1996 = vpack.c.b16 %v1988, %v1988
        %v1997 = vpack.c.b16 %v1989, %v1989
        %v1999 = vshrl.u32 %v1958, 16
        %v2001 = vshll.u32 %v1958, 16
        %v2003 = vrot.slane %v2001, 1
        %v2004 = vor.u32 %v1999, %v2003
        %v2006 = vshll.u32 %v1990, 16
        %v2008 = vrot.slane %v2006, 1
        %v2009 = vsel %vm845, %v2004, %v2008
        %v2011 = vshrl.u32 %v1959, 16
        %v2013 = vshll.u32 %v1959, 16
        %v2015 = vrot.slane %v2013, 1
        %v2016 = vor.u32 %v2011, %v2015
        %v2018 = vshll.u32 %v1991, 16
        %v2020 = vrot.slane %v2018, 1
        %v2021 = vsel %vm845, %v2016, %v2020
        %v2023 = vshrl.u32 %v1960, 16
        %v2025 = vshll.u32 %v1960, 16
        %v2027 = vrot.slane %v2025, 1
        %v2028 = vor.u32 %v2023, %v2027
        %v2030 = vshll.u32 %v1992, 16
        %v2032 = vrot.slane %v2030, 1
        %v2033 = vsel %vm845, %v2028, %v2032
        %v2035 = vshrl.u32 %v1961, 16
        %v2037 = vshll.u32 %v1961, 16
        %v2039 = vrot.slane %v2037, 1
        %v2040 = vor.u32 %v2035, %v2039
        %v2042 = vshll.u32 %v1993, 16
        %v2044 = vrot.slane %v2042, 1
        %v2045 = vsel %vm845, %v2040, %v2044
        %v2047 = vshrl.u32 %v1962, 16
        %v2049 = vshll.u32 %v1962, 16
        %v2051 = vrot.slane %v2049, 1
        %v2052 = vor.u32 %v2047, %v2051
        %v2054 = vshll.u32 %v1994, 16
        %v2056 = vrot.slane %v2054, 1
        %v2057 = vsel %vm845, %v2052, %v2056
        %v2059 = vshrl.u32 %v1963, 16
        %v2061 = vshll.u32 %v1963, 16
        %v2063 = vrot.slane %v2061, 1
        %v2064 = vor.u32 %v2059, %v2063
        %v2066 = vshll.u32 %v1995, 16
        %v2068 = vrot.slane %v2066, 1
        %v2069 = vsel %vm845, %v2064, %v2068
        %v2071 = vshrl.u32 %v1964, 16
        %v2073 = vshll.u32 %v1964, 16
        %v2075 = vrot.slane %v2073, 1
        %v2076 = vor.u32 %v2071, %v2075
        %v2078 = vshll.u32 %v1996, 16
        %v2080 = vrot.slane %v2078, 1
        %v2081 = vsel %vm845, %v2076, %v2080
        %v2083 = vshrl.u32 %v1965, 16
        %v2085 = vshll.u32 %v1965, 16
        %v2087 = vrot.slane %v2085, 1
        %v2088 = vor.u32 %v2083, %v2087
        %v2090 = vshll.u32 %v1997, 16
        %v2092 = vrot.slane %v2090, 1
        %v2093 = vsel %vm845, %v2088, %v2092
        %v2102 = vrot.slane %v1958, 1
        %v2103 = vrot.slane %v1990, 1
        %v2104 = vsel %vm950, %v2102, %v2103
        %v2105 = vrot.slane %v1959, 1
        %v2106 = vrot.slane %v1991, 1
        %v2107 = vsel %vm950, %v2105, %v2106
        %v2108 = vrot.slane %v1960, 1
        %v2109 = vrot.slane %v1992, 1
        %v2110 = vsel %vm950, %v2108, %v2109
        %v2111 = vrot.slane %v1961, 1
        %v2112 = vrot.slane %v1993, 1
        %v2113 = vsel %vm950, %v2111, %v2112
        %v2114 = vrot.slane %v1962, 1
        %v2115 = vrot.slane %v1994, 1
        %v2116 = vsel %vm950, %v2114, %v2115
        %v2117 = vrot.slane %v1963, 1
        %v2118 = vrot.slane %v1995, 1
        %v2119 = vsel %vm950, %v2117, %v2118
        %v2120 = vrot.slane %v1964, 1
        %v2121 = vrot.slane %v1996, 1
        %v2122 = vsel %vm950, %v2120, %v2121
        %v2123 = vrot.slane %v1965, 1
        %v2124 = vrot.slane %v1997, 1
        %v2125 = vsel %vm950, %v2123, %v2124
        %s2134 = scalar_lea.vmem [#allocation3], 384
        %v2135 = vld [vmem:[%s2134] sm:$0xf]
        %v2136 = vld [vmem:[%s2134 + $0x4] sm:$0xf]
        %v2137 = vld [vmem:[%s2134 + $0x8] sm:$0xf]
        %v2138 = vld [vmem:[%s2134 + $0xc] sm:$0xf]
        %v2139 = vld [vmem:[%s2134 + $0x10] sm:$0xf]
        %v2140 = vld [vmem:[%s2134 + $0x14] sm:$0xf]
        %v2141 = vld [vmem:[%s2134 + $0x18] sm:$0xf]
        %v2142 = vld [vmem:[%s2134 + $0x1c] sm:$0xf]
        %v2143 = vld [vmem:[%s2134 + $0x20] sm:$0xf]
        %v2144 = vld [vmem:[%s2134 + $0x24] sm:$0xf]
        %v2145 = vld [vmem:[%s2134 + $0x28] sm:$0xf]
        %v2146 = vld [vmem:[%s2134 + $0x2c] sm:$0xf]
        %v2147 = vld [vmem:[%s2134 + $0x30] sm:$0xf]
        %v2148 = vld [vmem:[%s2134 + $0x34] sm:$0xf]
        %v2149 = vld [vmem:[%s2134 + $0x38] sm:$0xf]
        %v2150 = vld [vmem:[%s2134 + $0x3c] sm:$0xf]
        %v2151 = vld [vmem:[%s2134 + $0x40] sm:$0xf]
        %v2152 = vld [vmem:[%s2134 + $0x44] sm:$0xf]
        %v2153 = vld [vmem:[%s2134 + $0x48] sm:$0xf]
        %v2154 = vld [vmem:[%s2134 + $0x4c] sm:$0xf]
        %v2155 = vld [vmem:[%s2134 + $0x50] sm:$0xf]
        %v2156 = vld [vmem:[%s2134 + $0x54] sm:$0xf]
        %v2157 = vld [vmem:[%s2134 + $0x58] sm:$0xf]
        %v2158 = vld [vmem:[%s2134 + $0x5c] sm:$0xf]
        %v2159 = vld [vmem:[%s2134 + $0x60] sm:$0xf]
        %v2160 = vld [vmem:[%s2134 + $0x64] sm:$0xf]
        %v2161 = vld [vmem:[%s2134 + $0x68] sm:$0xf]
        %v2162 = vld [vmem:[%s2134 + $0x6c] sm:$0xf]
        %v2163 = vld [vmem:[%s2134 + $0x70] sm:$0xf]
        %v2164 = vld [vmem:[%s2134 + $0x74] sm:$0xf]
        %v2165 = vld [vmem:[%s2134 + $0x78] sm:$0xf]
        %v2166 = vld [vmem:[%s2134 + $0x7c] sm:$0xf]
        %v2167 = vld [vmem:[%s2134 + $0x80] sm:$0xf]
        %v2168 = vld [vmem:[%s2134 + $0x84] sm:$0xf]
        %v2169 = vld [vmem:[%s2134 + $0x88] sm:$0xf]
        %v2170 = vld [vmem:[%s2134 + $0x8c] sm:$0xf]
        %v2171 = vld [vmem:[%s2134 + $0x90] sm:$0xf]
        %v2172 = vld [vmem:[%s2134 + $0x94] sm:$0xf]
        %v2173 = vld [vmem:[%s2134 + $0x98] sm:$0xf]
        %v2174 = vld [vmem:[%s2134 + $0x9c] sm:$0xf]
        %v2175 = vld [vmem:[%s2134 + $0xa0] sm:$0xf]
        %v2176 = vld [vmem:[%s2134 + $0xa4] sm:$0xf]
        %v2177 = vld [vmem:[%s2134 + $0xa8] sm:$0xf]
        %v2178 = vld [vmem:[%s2134 + $0xac] sm:$0xf]
        %v2179 = vld [vmem:[%s2134 + $0xb0] sm:$0xf]
        %v2180 = vld [vmem:[%s2134 + $0xb4] sm:$0xf]
        %v2181 = vld [vmem:[%s2134 + $0xb8] sm:$0xf]
        %v2182 = vld [vmem:[%s2134 + $0xbc] sm:$0xf]
        %v2231 = vunpack.c.l.b16 %v2135
        %v2232 = vunpack.c.l.b16 %v2136
        %v2233 = vunpack.c.l.b16 %v2137
        %v2234 = vunpack.c.l.b16 %v2138
        %v2235 = vunpack.c.l.b16 %v2139
        %v2236 = vunpack.c.l.b16 %v2140
        %v2237 = vunpack.c.l.b16 %v2141
        %v2238 = vunpack.c.l.b16 %v2142
        %v2239 = vunpack.c.l.b16 %v2143
        %v2240 = vunpack.c.l.b16 %v2144
        %v2241 = vunpack.c.l.b16 %v2145
        %v2242 = vunpack.c.l.b16 %v2146
        %v2243 = vunpack.c.l.b16 %v2147
        %v2244 = vunpack.c.l.b16 %v2148
        %v2245 = vunpack.c.l.b16 %v2149
        %v2246 = vunpack.c.l.b16 %v2150
        %v2247 = vunpack.c.l.b16 %v2151
        %v2248 = vunpack.c.l.b16 %v2152
        %v2249 = vunpack.c.l.b16 %v2153
        %v2250 = vunpack.c.l.b16 %v2154
        %v2251 = vunpack.c.l.b16 %v2155
        %v2252 = vunpack.c.l.b16 %v2156
        %v2253 = vunpack.c.l.b16 %v2157
        %v2254 = vunpack.c.l.b16 %v2158
        %v2255 = vunpack.c.l.b16 %v2159
        %v2256 = vunpack.c.l.b16 %v2160
        %v2257 = vunpack.c.l.b16 %v2161
        %v2258 = vunpack.c.l.b16 %v2162
        %v2259 = vunpack.c.l.b16 %v2163
        %v2260 = vunpack.c.l.b16 %v2164
        %v2261 = vunpack.c.l.b16 %v2165
        %v2262 = vunpack.c.l.b16 %v2166
        %v2263 = vunpack.c.l.b16 %v2167
        %v2264 = vunpack.c.l.b16 %v2168
        %v2265 = vunpack.c.l.b16 %v2169
        %v2266 = vunpack.c.l.b16 %v2170
        %v2267 = vunpack.c.l.b16 %v2171
        %v2268 = vunpack.c.l.b16 %v2172
        %v2269 = vunpack.c.l.b16 %v2173
        %v2270 = vunpack.c.l.b16 %v2174
        %v2271 = vunpack.c.l.b16 %v2175
        %v2272 = vunpack.c.l.b16 %v2176
        %v2273 = vunpack.c.l.b16 %v2177
        %v2274 = vunpack.c.l.b16 %v2178
        %v2275 = vunpack.c.l.b16 %v2179
        %v2276 = vunpack.c.l.b16 %v2180
        %v2277 = vunpack.c.l.b16 %v2181
        %v2278 = vunpack.c.l.b16 %v2182
        %v2279 = vpack.c.b16 %v2232, %v2231
        %v2280 = vpack.c.b16 %v2234, %v2233
        %v2281 = vpack.c.b16 %v2236, %v2235
        %v2282 = vpack.c.b16 %v2238, %v2237
        %v2283 = vpack.c.b16 %v2240, %v2239
        %v2284 = vpack.c.b16 %v2242, %v2241
        %v2285 = vpack.c.b16 %v2244, %v2243
        %v2286 = vpack.c.b16 %v2246, %v2245
        %v2287 = vpack.c.b16 %v2248, %v2247
        %v2288 = vpack.c.b16 %v2250, %v2249
        %v2289 = vpack.c.b16 %v2252, %v2251
        %v2290 = vpack.c.b16 %v2254, %v2253
        %v2291 = vpack.c.b16 %v2256, %v2255
        %v2292 = vpack.c.b16 %v2258, %v2257
        %v2293 = vpack.c.b16 %v2260, %v2259
        %v2294 = vpack.c.b16 %v2262, %v2261
        %v2295 = vpack.c.b16 %v2264, %v2263
        %v2296 = vpack.c.b16 %v2266, %v2265
        %v2297 = vpack.c.b16 %v2268, %v2267
        %v2298 = vpack.c.b16 %v2270, %v2269
        %v2299 = vpack.c.b16 %v2272, %v2271
        %v2300 = vpack.c.b16 %v2274, %v2273
        %v2301 = vpack.c.b16 %v2276, %v2275
        %v2302 = vpack.c.b16 %v2278, %v2277
        %2327 = vmatpush.bf16.msra.mxu0 %v2286
        %2328 = vmatpush.bf16.msra.mxu0 %v2285
        %2329 = vmatpush.bf16.msra.mxu0 %v2284
        %2330 = vmatpush.bf16.msra.mxu0 %v2283
        %2331 = vmatpush.bf16.msra.mxu0 %v2282
        %2332 = vmatpush.bf16.msra.mxu0 %v2281
        %2333 = vmatpush.bf16.msra.mxu0 %v2280
        %2334 = vmatpush.bf16.msra.mxu0 %v2279
        %2335 = vmatmul.bf16.gmra.mxu0 %v1958
        %v2336 = vpop.f32.mrf.mxu0
        %v2337 = vadd.f32 0.0, %v2336
        %v2338 = vpop.f32.mrf.mxu0
        %v2339 = vadd.f32 0.0, %v2338
        %2340 = vmatmul.bf16.gmra.mxu0 %v1959
        %v2341 = vpop.f32.mrf.mxu0
        %v2342 = vadd.f32 0.0, %v2341
        %v2343 = vpop.f32.mrf.mxu0
        %v2344 = vadd.f32 0.0, %v2343
        %2345 = vmatmul.bf16.gmra.mxu0 %v1960
        %v2346 = vpop.f32.mrf.mxu0
        %v2347 = vadd.f32 0.0, %v2346
        %v2348 = vpop.f32.mrf.mxu0
        %v2349 = vadd.f32 0.0, %v2348
        %2350 = vmatmul.bf16.gmra.mxu0 %v1961
        %v2351 = vpop.f32.mrf.mxu0
        %v2352 = vadd.f32 0.0, %v2351
        %v2353 = vpop.f32.mrf.mxu0
        %v2354 = vadd.f32 0.0, %v2353
        %2355 = vmatmul.bf16.gmra.mxu0 %v1962
        %v2356 = vpop.f32.mrf.mxu0
        %v2357 = vadd.f32 0.0, %v2356
        %v2358 = vpop.f32.mrf.mxu0
        %v2359 = vadd.f32 0.0, %v2358
        %2360 = vmatmul.bf16.gmra.mxu0 %v1963
        %v2361 = vpop.f32.mrf.mxu0
        %v2362 = vadd.f32 0.0, %v2361
        %v2363 = vpop.f32.mrf.mxu0
        %v2364 = vadd.f32 0.0, %v2363
        %2365 = vmatmul.bf16.gmra.mxu0 %v1964
        %v2366 = vpop.f32.mrf.mxu0
        %v2367 = vadd.f32 0.0, %v2366
        %v2368 = vpop.f32.mrf.mxu0
        %v2369 = vadd.f32 0.0, %v2368
        %2370 = vmatmul.bf16.gmra.mxu0 %v1965
        %v2371 = vpop.f32.mrf.mxu0
        %v2372 = vadd.f32 0.0, %v2371
        %v2373 = vpop.f32.mrf.mxu0
        %v2374 = vadd.f32 0.0, %v2373
        %2375 = vdwg.mxu0
        %2376 = vmatpush.bf16.msra.mxu0 %v2294
        %2377 = vmatpush.bf16.msra.mxu0 %v2293
        %2378 = vmatpush.bf16.msra.mxu0 %v2292
        %2379 = vmatpush.bf16.msra.mxu0 %v2291
        %2380 = vmatpush.bf16.msra.mxu0 %v2290
        %2381 = vmatpush.bf16.msra.mxu0 %v2289
        %2382 = vmatpush.bf16.msra.mxu0 %v2288
        %2383 = vmatpush.bf16.msra.mxu0 %v2287
        %2384 = vmatmul.bf16.gmra.mxu0 %v2009
        %v2385 = vpop.f32.mrf.mxu0
        %v2386 = vadd.f32 %v2337, %v2385
        %v2387 = vpop.f32.mrf.mxu0
        %v2388 = vadd.f32 %v2339, %v2387
        %2389 = vmatmul.bf16.gmra.mxu0 %v2021
        %v2390 = vpop.f32.mrf.mxu0
        %v2391 = vadd.f32 %v2342, %v2390
        %v2392 = vpop.f32.mrf.mxu0
        %v2393 = vadd.f32 %v2344, %v2392
        %2394 = vmatmul.bf16.gmra.mxu0 %v2033
        %v2395 = vpop.f32.mrf.mxu0
        %v2396 = vadd.f32 %v2347, %v2395
        %v2397 = vpop.f32.mrf.mxu0
        %v2398 = vadd.f32 %v2349, %v2397
        %2399 = vmatmul.bf16.gmra.mxu0 %v2045
        %v2400 = vpop.f32.mrf.mxu0
        %v2401 = vadd.f32 %v2352, %v2400
        %v2402 = vpop.f32.mrf.mxu0
        %v2403 = vadd.f32 %v2354, %v2402
        %2404 = vmatmul.bf16.gmra.mxu0 %v2057
        %v2405 = vpop.f32.mrf.mxu0
        %v2406 = vadd.f32 %v2357, %v2405
        %v2407 = vpop.f32.mrf.mxu0
        %v2408 = vadd.f32 %v2359, %v2407
        %2409 = vmatmul.bf16.gmra.mxu0 %v2069
        %v2410 = vpop.f32.mrf.mxu0
        %v2411 = vadd.f32 %v2362, %v2410
        %v2412 = vpop.f32.mrf.mxu0
        %v2413 = vadd.f32 %v2364, %v2412
        %2414 = vmatmul.bf16.gmra.mxu0 %v2081
        %v2415 = vpop.f32.mrf.mxu0
        %v2416 = vadd.f32 %v2367, %v2415
        %v2417 = vpop.f32.mrf.mxu0
        %v2418 = vadd.f32 %v2369, %v2417
        %2419 = vmatmul.bf16.gmra.mxu0 %v2093
        %v2420 = vpop.f32.mrf.mxu0
        %v2421 = vadd.f32 %v2372, %v2420
        %v2422 = vpop.f32.mrf.mxu0
        %v2423 = vadd.f32 %v2374, %v2422
        %2424 = vdwg.mxu0
        %2425 = vmatpush.bf16.msra.mxu0 %v2302
        %2426 = vmatpush.bf16.msra.mxu0 %v2301
        %2427 = vmatpush.bf16.msra.mxu0 %v2300
        %2428 = vmatpush.bf16.msra.mxu0 %v2299
        %2429 = vmatpush.bf16.msra.mxu0 %v2298
        %2430 = vmatpush.bf16.msra.mxu0 %v2297
        %2431 = vmatpush.bf16.msra.mxu0 %v2296
        %2432 = vmatpush.bf16.msra.mxu0 %v2295
        %2433 = vmatmul.bf16.gmra.mxu0 %v2104
        %v2434 = vpop.f32.mrf.mxu0
        %v2435 = vadd.f32 %v2386, %v2434
        %v2436 = vpop.f32.mrf.mxu0
        %v2437 = vadd.f32 %v2388, %v2436
        %2438 = vmatmul.bf16.gmra.mxu0 %v2107
        %v2439 = vpop.f32.mrf.mxu0
        %v2440 = vadd.f32 %v2391, %v2439
        %v2441 = vpop.f32.mrf.mxu0
        %v2442 = vadd.f32 %v2393, %v2441
        %2443 = vmatmul.bf16.gmra.mxu0 %v2110
        %v2444 = vpop.f32.mrf.mxu0
        %v2445 = vadd.f32 %v2396, %v2444
        %v2446 = vpop.f32.mrf.mxu0
        %v2447 = vadd.f32 %v2398, %v2446
        %2448 = vmatmul.bf16.gmra.mxu0 %v2113
        %v2449 = vpop.f32.mrf.mxu0
        %v2450 = vadd.f32 %v2401, %v2449
        %v2451 = vpop.f32.mrf.mxu0
        %v2452 = vadd.f32 %v2403, %v2451
        %2453 = vmatmul.bf16.gmra.mxu0 %v2116
        %v2454 = vpop.f32.mrf.mxu0
        %v2455 = vadd.f32 %v2406, %v2454
        %v2456 = vpop.f32.mrf.mxu0
        %v2457 = vadd.f32 %v2408, %v2456
        %2458 = vmatmul.bf16.gmra.mxu0 %v2119
        %v2459 = vpop.f32.mrf.mxu0
        %v2460 = vadd.f32 %v2411, %v2459
        %v2461 = vpop.f32.mrf.mxu0
        %v2462 = vadd.f32 %v2413, %v2461
        %2463 = vmatmul.bf16.gmra.mxu0 %v2122
        %v2464 = vpop.f32.mrf.mxu0
        %v2465 = vadd.f32 %v2416, %v2464
        %v2466 = vpop.f32.mrf.mxu0
        %v2467 = vadd.f32 %v2418, %v2466
        %2468 = vmatmul.bf16.gmra.mxu0 %v2125
        %v2469 = vpop.f32.mrf.mxu0
        %v2470 = vadd.f32 %v2421, %v2469
        %v2471 = vpop.f32.mrf.mxu0
        %v2472 = vadd.f32 %v2423, %v2471
        %2473 = vdwg.mxu0
        %v2474 = vadd.f32 %v1859, %v2435
        %v2475 = vadd.f32 %v1861, %v2437
        %v2476 = vadd.f32 %v1864, %v2440
        %v2477 = vadd.f32 %v1866, %v2442
        %v2478 = vadd.f32 %v1869, %v2445
        %v2479 = vadd.f32 %v1871, %v2447
        %v2480 = vadd.f32 %v1874, %v2450
        %v2481 = vadd.f32 %v1876, %v2452
        %v2482 = vadd.f32 %v1879, %v2455
        %v2483 = vadd.f32 %v1881, %v2457
        %v2484 = vadd.f32 %v1884, %v2460
        %v2485 = vadd.f32 %v1886, %v2462
        %v2486 = vadd.f32 %v1889, %v2465
        %v2487 = vadd.f32 %v1891, %v2467
        %v2488 = vadd.f32 %v1894, %v2470
        %v2489 = vadd.f32 %v1896, %v2472
        %v2490 = vld [vmem:[%s2] sm:$0x1]
        %v2492 = vperm.slane %v2490, 0
        %v2494 = vadd.f32 %v2474, %v2492
        %v2495 = vadd.f32 %v2475, %v2492
        %v2496 = vadd.f32 %v2476, %v2492
        %v2497 = vadd.f32 %v2477, %v2492
        %v2498 = vadd.f32 %v2478, %v2492
        %v2499 = vadd.f32 %v2479, %v2492
        %v2500 = vadd.f32 %v2480, %v2492
        %v2501 = vadd.f32 %v2481, %v2492
        %v2502 = vadd.f32 %v2482, %v2492
        %v2503 = vadd.f32 %v2483, %v2492
        %v2504 = vadd.f32 %v2484, %v2492
        %v2505 = vadd.f32 %v2485, %v2492
        %v2506 = vadd.f32 %v2486, %v2492
        %v2507 = vadd.f32 %v2487, %v2492
        %v2508 = vadd.f32 %v2488, %v2492
        %v2509 = vadd.f32 %v2489, %v2492
        %v2510 = vmul.f32 %v2494, 0.2
        %v2511 = vmul.f32 %v2495, 0.2
        %v2512 = vmul.f32 %v2496, 0.2
        %v2513 = vmul.f32 %v2497, 0.2
        %v2514 = vmul.f32 %v2498, 0.2
        %v2515 = vmul.f32 %v2499, 0.2
        %v2516 = vmul.f32 %v2500, 0.2
        %v2517 = vmul.f32 %v2501, 0.2
        %v2518 = vmul.f32 %v2502, 0.2
        %v2519 = vmul.f32 %v2503, 0.2
        %v2520 = vmul.f32 %v2504, 0.2
        %v2521 = vmul.f32 %v2505, 0.2
        %v2522 = vmul.f32 %v2506, 0.2
        %v2523 = vmul.f32 %v2507, 0.2
        %v2524 = vmul.f32 %v2508, 0.2
        %v2525 = vmul.f32 %v2509, 0.2
        %v2526 = vmax.f32 %v2494, %v2510
        %v2527 = vmax.f32 %v2495, %v2511
        %v2528 = vmax.f32 %v2496, %v2512
        %v2529 = vmax.f32 %v2497, %v2513
        %v2530 = vmax.f32 %v2498, %v2514
        %v2531 = vmax.f32 %v2499, %v2515
        %v2532 = vmax.f32 %v2500, %v2516
        %v2533 = vmax.f32 %v2501, %v2517
        %v2534 = vmax.f32 %v2502, %v2518
        %v2535 = vmax.f32 %v2503, %v2519
        %v2536 = vmax.f32 %v2504, %v2520
        %v2537 = vmax.f32 %v2505, %v2521
        %v2538 = vmax.f32 %v2506, %v2522
        %v2539 = vmax.f32 %v2507, %v2523
        %v2540 = vmax.f32 %v2508, %v2524
        %v2541 = vmax.f32 %v2509, %v2525
        %v2542 = vmul.f32 %v2526, %v2526
        %v2543 = vmul.f32 %v2527, %v2527
        %v2544 = vmul.f32 %v2528, %v2528
        %v2545 = vmul.f32 %v2529, %v2529
        %v2546 = vmul.f32 %v2530, %v2530
        %v2547 = vmul.f32 %v2531, %v2531
        %v2548 = vmul.f32 %v2532, %v2532
        %v2549 = vmul.f32 %v2533, %v2533
        %v2550 = vmul.f32 %v2534, %v2534
        %v2551 = vmul.f32 %v2535, %v2535
        %v2552 = vmul.f32 %v2536, %v2536
        %v2553 = vmul.f32 %v2537, %v2537
        %v2554 = vmul.f32 %v2538, %v2538
        %v2555 = vmul.f32 %v2539, %v2539
        %v2556 = vmul.f32 %v2540, %v2540
        %v2557 = vmul.f32 %v2541, %v2541
        %2558 = vadd.xlane.f32.xlu0 %v2542
        %v2559 = vpop.xlane.xlu0 %2558
        %2560 = vadd.xlane.f32.xlu0 %v2543
        %v2561 = vpop.xlane.xlu0 %2560
        %2562 = vadd.xlane.f32.xlu0 %v2544
        %v2563 = vpop.xlane.xlu0 %2562
        %2564 = vadd.xlane.f32.xlu0 %v2545
        %v2565 = vpop.xlane.xlu0 %2564
        %2566 = vadd.xlane.f32.xlu0 %v2546
        %v2567 = vpop.xlane.xlu0 %2566
        %2568 = vadd.xlane.f32.xlu0 %v2547
        %v2569 = vpop.xlane.xlu0 %2568
        %2570 = vadd.xlane.f32.xlu0 %v2548
        %v2571 = vpop.xlane.xlu0 %2570
        %2572 = vadd.xlane.f32.xlu0 %v2549
        %v2573 = vpop.xlane.xlu0 %2572
        %2574 = vadd.xlane.f32.xlu0 %v2550
        %v2575 = vpop.xlane.xlu0 %2574
        %2576 = vadd.xlane.f32.xlu0 %v2551
        %v2577 = vpop.xlane.xlu0 %2576
        %2578 = vadd.xlane.f32.xlu0 %v2552
        %v2579 = vpop.xlane.xlu0 %2578
        %2580 = vadd.xlane.f32.xlu0 %v2553
        %v2581 = vpop.xlane.xlu0 %2580
        %2582 = vadd.xlane.f32.xlu0 %v2554
        %v2583 = vpop.xlane.xlu0 %2582
        %2584 = vadd.xlane.f32.xlu0 %v2555
        %v2585 = vpop.xlane.xlu0 %2584
        %2586 = vadd.xlane.f32.xlu0 %v2556
        %v2587 = vpop.xlane.xlu0 %2586
        %2588 = vadd.xlane.f32.xlu0 %v2557
        %v2589 = vpop.xlane.xlu0 %2588
        %v2590 = vrcp.pop 128.0
        %v2591 = vmul.f32 128.0, %v2590
        %v2592 = vsub.f32 1.0, %v2591
        %v2593 = vmul.f32 %v2590, %v2592
        %v2594 = vadd.f32 %v2590, %v2593
        %vm2595 = vweird.f32 %v2590
        %v2596 = vsel %vm2595, %v2590, %v2594
        %v2597 = vmul.f32 %v2559, %v2596
        %v2598 = vmul.f32 %v2561, %v2596
        %v2599 = vmul.f32 %v2563, %v2596
        %v2600 = vmul.f32 %v2565, %v2596
        %v2601 = vmul.f32 %v2567, %v2596
        %v2602 = vmul.f32 %v2569, %v2596
        %v2603 = vmul.f32 %v2571, %v2596
        %v2604 = vmul.f32 %v2573, %v2596
        %v2605 = vmul.f32 %v2575, %v2596
        %v2606 = vmul.f32 %v2577, %v2596
        %v2607 = vmul.f32 %v2579, %v2596
        %v2608 = vmul.f32 %v2581, %v2596
        %v2609 = vmul.f32 %v2583, %v2596
        %v2610 = vmul.f32 %v2585, %v2596
        %v2611 = vmul.f32 %v2587, %v2596
        %v2612 = vmul.f32 %v2589, %v2596
        %v2613 = vadd.f32 %v2597, 1e-08
        %v2614 = vadd.f32 %v2598, 1e-08
        %v2615 = vadd.f32 %v2599, 1e-08
        %v2616 = vadd.f32 %v2600, 1e-08
        %v2617 = vadd.f32 %v2601, 1e-08
        %v2618 = vadd.f32 %v2602, 1e-08
        %v2619 = vadd.f32 %v2603, 1e-08
        %v2620 = vadd.f32 %v2604, 1e-08
        %v2621 = vadd.f32 %v2605, 1e-08
        %v2622 = vadd.f32 %v2606, 1e-08
        %v2623 = vadd.f32 %v2607, 1e-08
        %v2624 = vadd.f32 %v2608, 1e-08
        %v2625 = vadd.f32 %v2609, 1e-08
        %v2626 = vadd.f32 %v2610, 1e-08
        %v2627 = vadd.f32 %v2611, 1e-08
        %v2628 = vadd.f32 %v2612, 1e-08
        %v2629 = vrsqrt.pop %v2613
        %v2630 = vmul.f32 %v2629, %v2613
        %v2631 = vmul.f32 %v2630, %v2629
        %v2632 = vmul.f32 0.5, %v2631
        %v2633 = vsub.f32 1.5, %v2632
        %v2634 = vmul.f32 %v2629, %v2633
        %vm2635 = vweird.f32 %v2613
        %vm2636 = vweird.f32 %v2629
        %vm2637 = vmor %vm2635, %vm2636
        %v2638 = vsel %vm2637, %v2629, %v2634
        %v2639 = vrsqrt.pop %v2614
        %v2640 = vmul.f32 %v2639, %v2614
        %v2641 = vmul.f32 %v2640, %v2639
        %v2642 = vmul.f32 0.5, %v2641
        %v2643 = vsub.f32 1.5, %v2642
        %v2644 = vmul.f32 %v2639, %v2643
        %vm2645 = vweird.f32 %v2614
        %vm2646 = vweird.f32 %v2639
        %vm2647 = vmor %vm2645, %vm2646
        %v2648 = vsel %vm2647, %v2639, %v2644
        %v2649 = vrsqrt.pop %v2615
        %v2650 = vmul.f32 %v2649, %v2615
        %v2651 = vmul.f32 %v2650, %v2649
        %v2652 = vmul.f32 0.5, %v2651
        %v2653 = vsub.f32 1.5, %v2652
        %v2654 = vmul.f32 %v2649, %v2653
        %vm2655 = vweird.f32 %v2615
        %vm2656 = vweird.f32 %v2649
        %vm2657 = vmor %vm2655, %vm2656
        %v2658 = vsel %vm2657, %v2649, %v2654
        %v2659 = vrsqrt.pop %v2616
        %v2660 = vmul.f32 %v2659, %v2616
        %v2661 = vmul.f32 %v2660, %v2659
        %v2662 = vmul.f32 0.5, %v2661
        %v2663 = vsub.f32 1.5, %v2662
        %v2664 = vmul.f32 %v2659, %v2663
        %vm2665 = vweird.f32 %v2616
        %vm2666 = vweird.f32 %v2659
        %vm2667 = vmor %vm2665, %vm2666
        %v2668 = vsel %vm2667, %v2659, %v2664
        %v2669 = vrsqrt.pop %v2617
        %v2670 = vmul.f32 %v2669, %v2617
        %v2671 = vmul.f32 %v2670, %v2669
        %v2672 = vmul.f32 0.5, %v2671
        %v2673 = vsub.f32 1.5, %v2672
        %v2674 = vmul.f32 %v2669, %v2673
        %vm2675 = vweird.f32 %v2617
        %vm2676 = vweird.f32 %v2669
        %vm2677 = vmor %vm2675, %vm2676
        %v2678 = vsel %vm2677, %v2669, %v2674
        %v2679 = vrsqrt.pop %v2618
        %v2680 = vmul.f32 %v2679, %v2618
        %v2681 = vmul.f32 %v2680, %v2679
        %v2682 = vmul.f32 0.5, %v2681
        %v2683 = vsub.f32 1.5, %v2682
        %v2684 = vmul.f32 %v2679, %v2683
        %vm2685 = vweird.f32 %v2618
        %vm2686 = vweird.f32 %v2679
        %vm2687 = vmor %vm2685, %vm2686
        %v2688 = vsel %vm2687, %v2679, %v2684
        %v2689 = vrsqrt.pop %v2619
        %v2690 = vmul.f32 %v2689, %v2619
        %v2691 = vmul.f32 %v2690, %v2689
        %v2692 = vmul.f32 0.5, %v2691
        %v2693 = vsub.f32 1.5, %v2692
        %v2694 = vmul.f32 %v2689, %v2693
        %vm2695 = vweird.f32 %v2619
        %vm2696 = vweird.f32 %v2689
        %vm2697 = vmor %vm2695, %vm2696
        %v2698 = vsel %vm2697, %v2689, %v2694
        %v2699 = vrsqrt.pop %v2620
        %v2700 = vmul.f32 %v2699, %v2620
        %v2701 = vmul.f32 %v2700, %v2699
        %v2702 = vmul.f32 0.5, %v2701
        %v2703 = vsub.f32 1.5, %v2702
        %v2704 = vmul.f32 %v2699, %v2703
        %vm2705 = vweird.f32 %v2620
        %vm2706 = vweird.f32 %v2699
        %vm2707 = vmor %vm2705, %vm2706
        %v2708 = vsel %vm2707, %v2699, %v2704
        %v2709 = vrsqrt.pop %v2621
        %v2710 = vmul.f32 %v2709, %v2621
        %v2711 = vmul.f32 %v2710, %v2709
        %v2712 = vmul.f32 0.5, %v2711
        %v2713 = vsub.f32 1.5, %v2712
        %v2714 = vmul.f32 %v2709, %v2713
        %vm2715 = vweird.f32 %v2621
        %vm2716 = vweird.f32 %v2709
        %vm2717 = vmor %vm2715, %vm2716
        %v2718 = vsel %vm2717, %v2709, %v2714
        %v2719 = vrsqrt.pop %v2622
        %v2720 = vmul.f32 %v2719, %v2622
        %v2721 = vmul.f32 %v2720, %v2719
        %v2722 = vmul.f32 0.5, %v2721
        %v2723 = vsub.f32 1.5, %v2722
        %v2724 = vmul.f32 %v2719, %v2723
        %vm2725 = vweird.f32 %v2622
        %vm2726 = vweird.f32 %v2719
        %vm2727 = vmor %vm2725, %vm2726
        %v2728 = vsel %vm2727, %v2719, %v2724
        %v2729 = vrsqrt.pop %v2623
        %v2730 = vmul.f32 %v2729, %v2623
        %v2731 = vmul.f32 %v2730, %v2729
        %v2732 = vmul.f32 0.5, %v2731
        %v2733 = vsub.f32 1.5, %v2732
        %v2734 = vmul.f32 %v2729, %v2733
        %vm2735 = vweird.f32 %v2623
        %vm2736 = vweird.f32 %v2729
        %vm2737 = vmor %vm2735, %vm2736
        %v2738 = vsel %vm2737, %v2729, %v2734
        %v2739 = vrsqrt.pop %v2624
        %v2740 = vmul.f32 %v2739, %v2624
        %v2741 = vmul.f32 %v2740, %v2739
        %v2742 = vmul.f32 0.5, %v2741
        %v2743 = vsub.f32 1.5, %v2742
        %v2744 = vmul.f32 %v2739, %v2743
        %vm2745 = vweird.f32 %v2624
        %vm2746 = vweird.f32 %v2739
        %vm2747 = vmor %vm2745, %vm2746
        %v2748 = vsel %vm2747, %v2739, %v2744
        %v2749 = vrsqrt.pop %v2625
        %v2750 = vmul.f32 %v2749, %v2625
        %v2751 = vmul.f32 %v2750, %v2749
        %v2752 = vmul.f32 0.5, %v2751
        %v2753 = vsub.f32 1.5, %v2752
        %v2754 = vmul.f32 %v2749, %v2753
        %vm2755 = vweird.f32 %v2625
        %vm2756 = vweird.f32 %v2749
        %vm2757 = vmor %vm2755, %vm2756
        %v2758 = vsel %vm2757, %v2749, %v2754
        %v2759 = vrsqrt.pop %v2626
        %v2760 = vmul.f32 %v2759, %v2626
        %v2761 = vmul.f32 %v2760, %v2759
        %v2762 = vmul.f32 0.5, %v2761
        %v2763 = vsub.f32 1.5, %v2762
        %v2764 = vmul.f32 %v2759, %v2763
        %vm2765 = vweird.f32 %v2626
        %vm2766 = vweird.f32 %v2759
        %vm2767 = vmor %vm2765, %vm2766
        %v2768 = vsel %vm2767, %v2759, %v2764
        %v2769 = vrsqrt.pop %v2627
        %v2770 = vmul.f32 %v2769, %v2627
        %v2771 = vmul.f32 %v2770, %v2769
        %v2772 = vmul.f32 0.5, %v2771
        %v2773 = vsub.f32 1.5, %v2772
        %v2774 = vmul.f32 %v2769, %v2773
        %vm2775 = vweird.f32 %v2627
        %vm2776 = vweird.f32 %v2769
        %vm2777 = vmor %vm2775, %vm2776
        %v2778 = vsel %vm2777, %v2769, %v2774
        %v2779 = vrsqrt.pop %v2628
        %v2780 = vmul.f32 %v2779, %v2628
        %v2781 = vmul.f32 %v2780, %v2779
        %v2782 = vmul.f32 0.5, %v2781
        %v2783 = vsub.f32 1.5, %v2782
        %v2784 = vmul.f32 %v2779, %v2783
        %vm2785 = vweird.f32 %v2628
        %vm2786 = vweird.f32 %v2779
        %vm2787 = vmor %vm2785, %vm2786
        %v2788 = vsel %vm2787, %v2779, %v2784
        %v2789 = vmul.f32 %v2526, %v2638
        %v2790 = vmul.f32 %v2527, %v2648
        %v2791 = vmul.f32 %v2528, %v2658
        %v2792 = vmul.f32 %v2529, %v2668
        %v2793 = vmul.f32 %v2530, %v2678
        %v2794 = vmul.f32 %v2531, %v2688
        %v2795 = vmul.f32 %v2532, %v2698
        %v2796 = vmul.f32 %v2533, %v2708
        %v2797 = vmul.f32 %v2534, %v2718
        %v2798 = vmul.f32 %v2535, %v2728
        %v2799 = vmul.f32 %v2536, %v2738
        %v2800 = vmul.f32 %v2537, %v2748
        %v2801 = vmul.f32 %v2538, %v2758
        %v2802 = vmul.f32 %v2539, %v2768
        %v2803 = vmul.f32 %v2540, %v2778
        %v2804 = vmul.f32 %v2541, %v2788
        %v2805 = vpack.c.bf16 %v2789, %v2789
        %v2806 = vpack.c.bf16 %v2790, %v2790
        %v2807 = vpack.c.bf16 %v2791, %v2791
        %v2808 = vpack.c.bf16 %v2792, %v2792
        %v2809 = vpack.c.bf16 %v2793, %v2793
        %v2810 = vpack.c.bf16 %v2794, %v2794
        %v2811 = vpack.c.bf16 %v2795, %v2795
        %v2812 = vpack.c.bf16 %v2796, %v2796
        %v2813 = vpack.c.bf16 %v2797, %v2797
        %v2814 = vpack.c.bf16 %v2798, %v2798
        %v2815 = vpack.c.bf16 %v2799, %v2799
        %v2816 = vpack.c.bf16 %v2800, %v2800
        %v2817 = vpack.c.bf16 %v2801, %v2801
        %v2818 = vpack.c.bf16 %v2802, %v2802
        %v2819 = vpack.c.bf16 %v2803, %v2803
        %v2820 = vpack.c.bf16 %v2804, %v2804
        %2821 = vst [vmem:[%s211] sm:$0xf] %v2805
        %2822 = vst [vmem:[%s211 + $0x4] sm:$0xf] %v2806
        %2823 = vst [vmem:[%s211 + $0x8] sm:$0xf] %v2807
        %2824 = vst [vmem:[%s211 + $0xc] sm:$0xf] %v2808
        %2825 = vst [vmem:[%s211 + $0x10] sm:$0xf] %v2809
        %2826 = vst [vmem:[%s211 + $0x14] sm:$0xf] %v2810
        %2827 = vst [vmem:[%s211 + $0x18] sm:$0xf] %v2811
        %2828 = vst [vmem:[%s211 + $0x1c] sm:$0xf] %v2812
        %2829 = vst [vmem:[%s211 + $0x20] sm:$0xf] %v2813
        %2830 = vst [vmem:[%s211 + $0x24] sm:$0xf] %v2814
        %2831 = vst [vmem:[%s211 + $0x28] sm:$0xf] %v2815
        %2832 = vst [vmem:[%s211 + $0x2c] sm:$0xf] %v2816
        %2833 = vst [vmem:[%s211 + $0x30] sm:$0xf] %v2817
        %2834 = vst [vmem:[%s211 + $0x34] sm:$0xf] %v2818
        %2835 = vst [vmem:[%s211 + $0x38] sm:$0xf] %v2819
        %2836 = vst [vmem:[%s211 + $0x3c] sm:$0xf] %v2820
        %s2837 = smul.u32 8, %s20
        %p2838 = scmp.lt.s32.totalorder %s19, 1
        %s2839 = scalar_select %p2838, %s19, 1
        %p2840 = scmp.lt.s32.totalorder %s2837, 15
        %s2841 = scalar_select %p2840, %s2837, 15
        %s2842 = smul.addr %s2841, 2
        %s2843 = smul.addr %s2839, 32
        %s2844 = sadd.s32 %s2842, %s2843
        %s2845 = smul.addr %s2844, 4
        %s2846 = scalar_lea.vmem %s3, %s2845
        // Predicated region
        $region41: #{progan_gen_forward.12} parent=31 // pred_check
          %p2847 = pneg %p115
        $region42: #{progan_gen_forward.12} parent=31 // pred_check_branch
          %2849 = sbr.rel (%p2847) target = $region44
        $region43: #{progan_gen_forward.12} parent=31 // pred_region
          %s2850 = smul.u32 8, %s20
        $region44: #{progan_gen_forward.12} parent=31 // pred_fallthru
          _
      $region32: #{progan_gen_forward.12} parent=5 // pred_fallthru
        _
      %p2851 = scmp.le.s32.totalorder 2, %s10
      // Predicated region
      $region45: #{progan_gen_forward.12} parent=5 // pred_check
        %p2852 = pneg %p2851
      $region46: #{progan_gen_forward.12} parent=5 // pred_check_branch
        %2854 = sbr.rel (%p2852) target = $region48
      $region47: #{progan_gen_forward.12} parent=5 // pred_region
        %s2855 = ssub.s32 %s10, 2
        // Predicated region
        $region49: #{progan_gen_forward.12} parent=47 // pred_check
          %p2856 = pneg %p121
        $region50: #{progan_gen_forward.12} parent=47 // pred_check_branch
          %2858 = sbr.rel (%p2856) target = $region52
        $region51: #{progan_gen_forward.12} parent=47 // pred_region
          %s2859 = smul.u32 8, %s22
          %p2860 = scmp.lt.s32.totalorder %s21, 1
          %s2861 = scalar_select %p2860, %s21, 1
          %p2862 = scmp.lt.s32.totalorder %s2859, 15
          %s2863 = scalar_select %p2862, %s2859, 15
          %s2864 = smul.addr %s2863, 2
          %s2865 = smul.addr %s2861, 32
          %s2866 = sadd.s32 %s2864, %s2865
          %s2867 = smul.addr %s2866, 4
          %s2868 = scalar_lea.vmem %s3, %s2867
        $region52: #{progan_gen_forward.12} parent=47 // pred_fallthru
          _
      $region48: #{progan_gen_forward.12} parent=5 // pred_fallthru
        _
    $region6: #{progan_gen_forward.12} parent=1 // loop_footer
      %s14 = sadd.s32 1, %s10
    $region7: #{progan_gen_forward.12} parent=1 // loop_footer_branch
      %9 = sbr.rel target = $region3
    $region8: #{progan_gen_forward.12} parent=1 // loop_exit
      _
    %2869 = vsyncpa [#allocation4], 1
    %s2870 = scalar_lea.sflag [#allocation4], 1
    %2871 = vsyncpa %s2870, 1

</llo_original>
